<compile_context>
chip_gen: v7x
topology: tpu7x:2x2x1
jax: 0.10.0
libtpu: 0.0.40
codegen_flags: <defaults>
</compile_context>

<pallas_src>
import jax
import jax.numpy as jnp
from jax.experimental import pallas as pl
from jax.experimental.pallas import tpu as pltpu


# ------------------------------ Pallas kernel ------------------------------- #

def _fused_cnn_kernel(x_ref, w1_ref, b1_ref, w2_ref, b2_ref, w3_ref, b3_ref,
                      w4_ref, b4_ref, o_ref, xp_ref, act1_ref, act2_ref):
    # x_ref    : (B, H,    W,    3)   unpadded NHWC input block
    # w{1,2,3} : (9, Cin, Cout)       3x3 weights, tap index = kh*3 + kw
    # w4_ref   : (1, 1, 24), b*_ref biases ((1,C) / (1,1))
    # o_ref    : (B, H/4, W/4)        final output block (lane-dense, single store)
    # xp_ref   : (B, H+2,  W+2,  3)   VMEM scratch: zero-padded input
    # act1_ref : (B, H/2+2,W/2+2,24)  VMEM scratch: pooled stage-1 act (+zero halo)
    # act2_ref : (B, H/4+2,W/4+2,48)  VMEM scratch: pooled stage-2 act (+zero halo)
    B, H, W = x_ref.shape[0], x_ref.shape[1], x_ref.shape[2]
    H2, W2 = H // 2, W // 2
    H4, W4 = H // 4, W // 4
    f32 = jnp.float32

    # ---- zero ONLY the 1-pixel halos (interiors are fully overwritten below) ----
    def zero_halo(ref, b, h, w, c):
        zr = jnp.zeros((b, 1, w + 2, c), f32)
        zc = jnp.zeros((b, h + 2, 1, c), f32)
        ref[:, pl.ds(0, 1), :, :] = zr
        ref[:, pl.ds(h + 1, 1), :, :] = zr
        ref[:, :, pl.ds(0, 1), :] = zc
        ref[:, :, pl.ds(w + 1, 1), :] = zc

    zero_halo(xp_ref, B, H, W, 3)
    zero_halo(act1_ref, B, H2, W2, 24)
    zero_halo(act2_ref, B, H4, W4, 48)

    # in-kernel zero padding: copy input block into padded scratch interior
    xp_ref[:, pl.ds(1, H), pl.ds(1, W), :] = x_ref[...]

    # hoisted bias loads (once per kernel invocation)
    b1 = b1_ref[...]
    b2 = b2_ref[...]
    b3 = b3_ref[...]

    def conv3x3_relu(src_ref, b, h, w, cin, w_ref, bias):
        """3x3 'SAME' conv over the whole padded block: 9 accumulated per-tap
        matmuls with M = b*h*w.  Returns ReLU(conv + bias), flat (b*h*w, cout)."""
        acc = None
        for kh in range(3):
            for kw in range(3):
                lhs = src_ref[:, pl.ds(kh, h), pl.ds(kw, w), :]       # (b, h, w, cin)
                lhs = lhs.reshape(b * h * w, cin)
                p = jnp.dot(lhs, w_ref[kh * 3 + kw],
                            preferred_element_type=jnp.float32)       # (b*h*w, cout)
                acc = p if acc is None else acc + p
        return jnp.maximum(acc + bias, 0.0)

    def maxpool2(y, b, h, w, c):
        """MaxPool2d(2) on flat (b*h*w, c) rows ordered (b, h, w) -> (b,h/2,w/2,c).
        Pure VPU work (reshape + pairwise max), nothing goes through the MXU."""
        y = y.reshape(b * h * (w // 2), 2, c)            # pair adjacent W columns
        y = jnp.maximum(y[:, 0, :], y[:, 1, :])          # (b*h*w2, c)
        y = y.reshape(b * (h // 2), 2, (w // 2), c)      # pair adjacent H rows
        y = jnp.maximum(y[:, 0, :, :], y[:, 1, :, :])    # (b*h2, w2, c)
        return y.reshape(b, h // 2, w // 2, c)

    # Stage 1: Conv(3 -> 24) + ReLU + MaxPool2 ------------------------------- #
    y1 = conv3x3_relu(xp_ref, B, H, W, 3, w1_ref, b1)
    act1_ref[:, pl.ds(1, H2), pl.ds(1, W2), :] = maxpool2(y1, B, H, W, 24)

    # Stage 2: Conv(24 -> 48) + ReLU + MaxPool2 ------------------------------ #
    y2 = conv3x3_relu(act1_ref, B, H2, W2, 24, w2_ref, b2)
    act2_ref[:, pl.ds(1, H4), pl.ds(1, W4), :] = maxpool2(y2, B, H2, W2, 48)

    # Stage 3: Conv(48 -> 24) + ReLU ----------------------------------------- #
    y3 = conv3x3_relu(act2_ref, B, H4, W4, 48, w3_ref, b3)   # (B*H4*W4, 24)

    # Stage 4: 1x1 Conv(24 -> 1) as a channel (lane) reduction; single store -- #
    y3r = y3.reshape(B * H4, W4, 24)
    out = jnp.sum(y3r * w4_ref[...], axis=-1) + b4_ref[...]   # (B*H4, W4)
    o_ref[...] = out.reshape(B, H4, W4).astype(o_ref.dtype)


# ------------------------------ call wrapper -------------------------------- #

def _prep_w3x3(w_oihw):
    """PyTorch conv weight (Cout, Cin, 3, 3) -> (9, Cin, Cout), tap = kh*3 + kw."""
    co, ci, kh, kw = w_oihw.shape
    return jnp.transpose(w_oihw, (2, 3, 1, 0)).reshape(kh * kw, ci, co).astype(jnp.float32)


def _resident_spec(arr):
    """Full-array block with a constant index_map -> stays resident in VMEM."""
    nd = arr.ndim
    return pl.BlockSpec(arr.shape, lambda n, _nd=nd: (0,) * _nd)


def _pick_block_b(n):
    """Largest divisor of n giving >= 2 grid steps (feeds both v7x TensorCores)."""
    if n <= 1:
        return 1
    for bb in range(n // 2, 0, -1):
        if n % bb == 0:
            return bb
    return 1


def simple_cnn_forward(x_nchw, params, block_b=None):
    N, cin, H, W = x_nchw.shape
    assert cin == 3 and H % 4 == 0 and W % 4 == 0
    H2, W2, H4, W4 = H // 2, W // 2, H // 4, W // 4

    if block_b is None:
        block_b = _pick_block_b(N)
    assert N % block_b == 0
    grid = (N // block_b,)

    x = jnp.transpose(x_nchw, (0, 2, 3, 1)).astype(jnp.float32)    # NHWC, unpadded

    w1 = _prep_w3x3(params["w1"]); b1 = params["b1"].reshape(1, -1).astype(jnp.float32)
    w2 = _prep_w3x3(params["w2"]); b2 = params["b2"].reshape(1, -1).astype(jnp.float32)
    w3 = _prep_w3x3(params["w3"]); b3 = params["b3"].reshape(1, -1).astype(jnp.float32)
    w4 = params["w4"].reshape(1, 1, -1).astype(jnp.float32)        # (1, 1, 24)
    b4 = params["b4"].reshape(1, 1).astype(jnp.float32)            # (1, 1)

    out = pl.pallas_call(
        _fused_cnn_kernel,
        out_shape=jax.ShapeDtypeStruct((N, H4, W4), jnp.float32),
        grid_spec=pltpu.PrefetchScalarGridSpec(
            num_scalar_prefetch=0,
            grid=grid,
            in_specs=[
                pl.BlockSpec((block_b, H, W, 3), lambda n: (n, 0, 0, 0)),
                _resident_spec(w1), _resident_spec(b1),
                _resident_spec(w2), _resident_spec(b2),
                _resident_spec(w3), _resident_spec(b3),
                _resident_spec(w4), _resident_spec(b4),
            ],
            out_specs=pl.BlockSpec((block_b, H4, W4), lambda n: (n, 0, 0)),
            scratch_shapes=[
                pltpu.VMEM((block_b, H + 2, W + 2, 3), jnp.float32),
                pltpu.VMEM((block_b, H2 + 2, W2 + 2, 24), jnp.float32),
                pltpu.VMEM((block_b, H4 + 2, W4 + 2, 48), jnp.float32),
            ],
        ),
        compiler_params=pltpu.CompilerParams(dimension_semantics=("parallel",)),
    )(x, w1, b1, w2, b2, w3, b3, w4, b4)

    return out[:, None, :, :]                                      # NCHW (N, 1, H/4, W/4)


# --------------------------- reference (plain JAX) --------------------------- #

def ref_forward(x_nchw, params):
    x = jnp.transpose(x_nchw, (0, 2, 3, 1)).astype(jnp.float32)

    def conv(x, w_oihw, b, relu):
        w = jnp.transpose(w_oihw, (2, 3, 1, 0))   # HWIO
        y = jax.lax.conv_general_dilated(
            x, w, window_strides=(1, 1), padding="SAME",
            dimension_numbers=("NHWC", "HWIO", "NHWC"))
        y = y + b
        return jnp.maximum(y, 0.0) if relu else y

    def pool(x):
        return jax.lax.reduce_window(x, -jnp.inf, jax.lax.max,
                                     (1, 2, 2, 1), (1, 2, 2, 1), "VALID")

    y = pool(conv(x, params["w1"], params["b1"], True))
    y = pool(conv(y, params["w2"], params["b2"], True))
    y = conv(y, params["w3"], params["b3"], True)
    y = conv(y, params["w4"], params["b4"], False)
    return jnp.transpose(y, (0, 3, 1, 2))


# -------------------------------- params ------------------------------------ #

def init_params(key):
    def conv_init(kw_key, kb_key, cout, cin, k):
        fan_in = cin * k * k
        bound = 1.0 / (fan_in ** 0.5)
        w = jax.random.uniform(kw_key, (cout, cin, k, k), jnp.float32, -bound, bound)
        b = jax.random.uniform(kb_key, (cout,), jnp.float32, -bound, bound)
        return w, b

    ks = jax.random.split(key, 8)
    w1, b1 = conv_init(ks[0], ks[1], 24, 3, 3)
    w2, b2 = conv_init(ks[2], ks[3], 48, 24, 3)
    w3, b3 = conv_init(ks[4], ks[5], 24, 48, 3)
    w4, b4 = conv_init(ks[6], ks[7], 1, 24, 1)
    return dict(w1=w1, b1=b1, w2=w2, b2=b2, w3=w3, b3=b3, w4=w4, b4=b4)


if __name__ == "__main__":
    key = jax.random.PRNGKey(0)
    k_param, k_x = jax.random.split(key)
    params = init_params(k_param)

    # PyTorch-style NCHW input: batch=2, channels=3, spatial=16x16
    x = jax.random.normal(k_x, (2, 3, 16, 16), jnp.float32)

    out = jax.block_until_ready(jax.jit(simple_cnn_forward)(x, params))
    assert out.shape == (2, 1, 4, 4), out.shape

    ref = jax.block_until_ready(ref_forward(x, params))
    err = float(jnp.max(jnp.abs(out - ref)))
    assert err < 1e-3, f"max abs err vs reference: {err}"

    print("KERNEL_OK")
</pallas_src>

<mosaic_0001>
module attributes {stable_mosaic.version = 11 : i64} {
  func.func @_fused_cnn_kernel(%arg0: i32, %arg1: memref<1x16x16x3xf32, #tpu.memory_space<vmem>>, %arg2: memref<9x3x24xf32, #tpu.memory_space<vmem>>, %arg3: memref<1x24xf32, #tpu.memory_space<vmem>>, %arg4: memref<9x24x48xf32, #tpu.memory_space<vmem>>, %arg5: memref<1x48xf32, #tpu.memory_space<vmem>>, %arg6: memref<9x48x24xf32, #tpu.memory_space<vmem>>, %arg7: memref<1x24xf32, #tpu.memory_space<vmem>>, %arg8: memref<1x1x24xf32, #tpu.memory_space<vmem>>, %arg9: memref<1x1xf32, #tpu.memory_space<vmem>>, %arg10: memref<1x4x4xf32, #tpu.memory_space<vmem>>, %arg11: memref<1x18x18x3xf32, #tpu.memory_space<vmem>>, %arg12: memref<1x10x10x24xf32, #tpu.memory_space<vmem>>, %arg13: memref<1x6x6x48xf32, #tpu.memory_space<vmem>>) attributes {dimension_semantics = [#tpu.dimension_semantics<parallel>], iteration_bounds = array<i64: 2>, scalar_prefetch = 0 : i64, scratch_operands = 3 : i64, tpu.core_type = #tpu.core_type<tc>, window_params = [{transform_indices = @transform_0, window_bounds = array<i64: 1, 16, 16, 3>}, {pipeline_mode = #tpu.pipeline_mode<synchronous>, transform_indices = @transform_1, window_bounds = array<i64: 9, 3, 24>}, {pipeline_mode = #tpu.pipeline_mode<synchronous>, transform_indices = @transform_2, window_bounds = array<i64: 1, 24>}, {pipeline_mode = #tpu.pipeline_mode<synchronous>, transform_indices = @transform_3, window_bounds = array<i64: 9, 24, 48>}, {pipeline_mode = #tpu.pipeline_mode<synchronous>, transform_indices = @transform_4, window_bounds = array<i64: 1, 48>}, {pipeline_mode = #tpu.pipeline_mode<synchronous>, transform_indices = @transform_5, window_bounds = array<i64: 9, 48, 24>}, {pipeline_mode = #tpu.pipeline_mode<synchronous>, transform_indices = @transform_6, window_bounds = array<i64: 1, 24>}, {pipeline_mode = #tpu.pipeline_mode<synchronous>, transform_indices = @transform_7, window_bounds = array<i64: 1, 1, 24>}, {pipeline_mode = #tpu.pipeline_mode<synchronous>, transform_indices = @transform_8, window_bounds = array<i64: 1, 1>}, {transform_indices = @transform_9, window_bounds = array<i64: 1, 4, 4>}]} {
    %cst = arith.constant 0.000000e+00 : f32
    %0 = vector.broadcast %cst : f32 to vector<1x1x18x3xf32>
    %cst_0 = arith.constant 0.000000e+00 : f32
    %1 = vector.broadcast %cst_0 : f32 to vector<1x18x1x3xf32>
    %c0 = arith.constant 0 : index
    %c0_1 = arith.constant 0 : index
    %c0_2 = arith.constant 0 : index
    %c0_3 = arith.constant 0 : index
    %2 = vector.load %arg11[%c0, %c0_1, %c0_2, %c0_3] : memref<1x18x18x3xf32, #tpu.memory_space<vmem>>, vector<1x1x18x3xf32>
    tpu.vector_store %arg11[%c0, %c0_1, %c0_2, %c0_3], %0 {strides = array<i32>} : memref<1x18x18x3xf32, #tpu.memory_space<vmem>>, vector<1x1x18x3xf32>,
    %c0_4 = arith.constant 0 : index
    %c17 = arith.constant 17 : index
    %c0_5 = arith.constant 0 : index
    %c0_6 = arith.constant 0 : index
    %3 = vector.load %arg11[%c0_4, %c17, %c0_5, %c0_6] : memref<1x18x18x3xf32, #tpu.memory_space<vmem>>, vector<1x1x18x3xf32>
    tpu.vector_store %arg11[%c0_4, %c17, %c0_5, %c0_6], %0 {strides = array<i32>} : memref<1x18x18x3xf32, #tpu.memory_space<vmem>>, vector<1x1x18x3xf32>,
    %c0_7 = arith.constant 0 : index
    %c0_8 = arith.constant 0 : index
    %c0_9 = arith.constant 0 : index
    %c0_10 = arith.constant 0 : index
    %4 = vector.load %arg11[%c0_7, %c0_8, %c0_9, %c0_10] : memref<1x18x18x3xf32, #tpu.memory_space<vmem>>, vector<1x18x1x3xf32>
    tpu.vector_store %arg11[%c0_7, %c0_8, %c0_9, %c0_10], %1 {strides = array<i32>} : memref<1x18x18x3xf32, #tpu.memory_space<vmem>>, vector<1x18x1x3xf32>,
    %c0_11 = arith.constant 0 : index
    %c0_12 = arith.constant 0 : index
    %c17_13 = arith.constant 17 : index
    %c0_14 = arith.constant 0 : index
    %5 = vector.load %arg11[%c0_11, %c0_12, %c17_13, %c0_14] : memref<1x18x18x3xf32, #tpu.memory_space<vmem>>, vector<1x18x1x3xf32>
    tpu.vector_store %arg11[%c0_11, %c0_12, %c17_13, %c0_14], %1 {strides = array<i32>} : memref<1x18x18x3xf32, #tpu.memory_space<vmem>>, vector<1x18x1x3xf32>,
    %cst_15 = arith.constant 0.000000e+00 : f32
    %6 = vector.broadcast %cst_15 : f32 to vector<1x1x10x24xf32>
    %cst_16 = arith.constant 0.000000e+00 : f32
    %7 = vector.broadcast %cst_16 : f32 to vector<1x10x1x24xf32>
    %c0_17 = arith.constant 0 : index
    %c0_18 = arith.constant 0 : index
    %c0_19 = arith.constant 0 : index
    %c0_20 = arith.constant 0 : index
    %8 = vector.load %arg12[%c0_17, %c0_18, %c0_19, %c0_20] : memref<1x10x10x24xf32, #tpu.memory_space<vmem>>, vector<1x1x10x24xf32>
    tpu.vector_store %arg12[%c0_17, %c0_18, %c0_19, %c0_20], %6 {strides = array<i32>} : memref<1x10x10x24xf32, #tpu.memory_space<vmem>>, vector<1x1x10x24xf32>,
    %c0_21 = arith.constant 0 : index
    %c9 = arith.constant 9 : index
    %c0_22 = arith.constant 0 : index
    %c0_23 = arith.constant 0 : index
    %9 = vector.load %arg12[%c0_21, %c9, %c0_22, %c0_23] : memref<1x10x10x24xf32, #tpu.memory_space<vmem>>, vector<1x1x10x24xf32>
    tpu.vector_store %arg12[%c0_21, %c9, %c0_22, %c0_23], %6 {strides = array<i32>} : memref<1x10x10x24xf32, #tpu.memory_space<vmem>>, vector<1x1x10x24xf32>,
    %c0_24 = arith.constant 0 : index
    %c0_25 = arith.constant 0 : index
    %c0_26 = arith.constant 0 : index
    %c0_27 = arith.constant 0 : index
    %10 = vector.load %arg12[%c0_24, %c0_25, %c0_26, %c0_27] : memref<1x10x10x24xf32, #tpu.memory_space<vmem>>, vector<1x10x1x24xf32>
    tpu.vector_store %arg12[%c0_24, %c0_25, %c0_26, %c0_27], %7 {strides = array<i32>} : memref<1x10x10x24xf32, #tpu.memory_space<vmem>>, vector<1x10x1x24xf32>,
    %c0_28 = arith.constant 0 : index
    %c0_29 = arith.constant 0 : index
    %c9_30 = arith.constant 9 : index
    %c0_31 = arith.constant 0 : index
    %11 = vector.load %arg12[%c0_28, %c0_29, %c9_30, %c0_31] : memref<1x10x10x24xf32, #tpu.memory_space<vmem>>, vector<1x10x1x24xf32>
    tpu.vector_store %arg12[%c0_28, %c0_29, %c9_30, %c0_31], %7 {strides = array<i32>} : memref<1x10x10x24xf32, #tpu.memory_space<vmem>>, vector<1x10x1x24xf32>,
    %cst_32 = arith.constant 0.000000e+00 : f32
    %12 = vector.broadcast %cst_32 : f32 to vector<1x1x6x48xf32>
    %cst_33 = arith.constant 0.000000e+00 : f32
    %13 = vector.broadcast %cst_33 : f32 to vector<1x6x1x48xf32>
    %c0_34 = arith.constant 0 : index
    %c0_35 = arith.constant 0 : index
    %c0_36 = arith.constant 0 : index
    %c0_37 = arith.constant 0 : index
    %14 = vector.load %arg13[%c0_34, %c0_35, %c0_36, %c0_37] : memref<1x6x6x48xf32, #tpu.memory_space<vmem>>, vector<1x1x6x48xf32>
    tpu.vector_store %arg13[%c0_34, %c0_35, %c0_36, %c0_37], %12 {strides = array<i32>} : memref<1x6x6x48xf32, #tpu.memory_space<vmem>>, vector<1x1x6x48xf32>,
    %c0_38 = arith.constant 0 : index
    %c5 = arith.constant 5 : index
    %c0_39 = arith.constant 0 : index
    %c0_40 = arith.constant 0 : index
    %15 = vector.load %arg13[%c0_38, %c5, %c0_39, %c0_40] : memref<1x6x6x48xf32, #tpu.memory_space<vmem>>, vector<1x1x6x48xf32>
    tpu.vector_store %arg13[%c0_38, %c5, %c0_39, %c0_40], %12 {strides = array<i32>} : memref<1x6x6x48xf32, #tpu.memory_space<vmem>>, vector<1x1x6x48xf32>,
    %c0_41 = arith.constant 0 : index
    %c0_42 = arith.constant 0 : index
    %c0_43 = arith.constant 0 : index
    %c0_44 = arith.constant 0 : index
    %16 = vector.load %arg13[%c0_41, %c0_42, %c0_43, %c0_44] : memref<1x6x6x48xf32, #tpu.memory_space<vmem>>, vector<1x6x1x48xf32>
    tpu.vector_store %arg13[%c0_41, %c0_42, %c0_43, %c0_44], %13 {strides = array<i32>} : memref<1x6x6x48xf32, #tpu.memory_space<vmem>>, vector<1x6x1x48xf32>,
    %c0_45 = arith.constant 0 : index
    %c0_46 = arith.constant 0 : index
    %c5_47 = arith.constant 5 : index
    %c0_48 = arith.constant 0 : index
    %17 = vector.load %arg13[%c0_45, %c0_46, %c5_47, %c0_48] : memref<1x6x6x48xf32, #tpu.memory_space<vmem>>, vector<1x6x1x48xf32>
    tpu.vector_store %arg13[%c0_45, %c0_46, %c5_47, %c0_48], %13 {strides = array<i32>} : memref<1x6x6x48xf32, #tpu.memory_space<vmem>>, vector<1x6x1x48xf32>,
    %c0_49 = arith.constant 0 : index
    %c0_50 = arith.constant 0 : index
    %c0_51 = arith.constant 0 : index
    %c0_52 = arith.constant 0 : index
    %18 = vector.load %arg1[%c0_49, %c0_50, %c0_51, %c0_52] : memref<1x16x16x3xf32, #tpu.memory_space<vmem>>, vector<1x16x16x3xf32>
    %c0_53 = arith.constant 0 : index
    %c1 = arith.constant 1 : index
    %c1_54 = arith.constant 1 : index
    %c0_55 = arith.constant 0 : index
    %19 = vector.load %arg11[%c0_53, %c1, %c1_54, %c0_55] : memref<1x18x18x3xf32, #tpu.memory_space<vmem>>, vector<1x16x16x3xf32>
    tpu.vector_store %arg11[%c0_53, %c1, %c1_54, %c0_55], %18 {strides = array<i32>} : memref<1x18x18x3xf32, #tpu.memory_space<vmem>>, vector<1x16x16x3xf32>,
    %c0_56 = arith.constant 0 : index
    %c0_57 = arith.constant 0 : index
    %20 = vector.load %arg3[%c0_56, %c0_57] : memref<1x24xf32, #tpu.memory_space<vmem>>, vector<1x24xf32>
    %c0_58 = arith.constant 0 : index
    %c0_59 = arith.constant 0 : index
    %21 = vector.load %arg5[%c0_58, %c0_59] : memref<1x48xf32, #tpu.memory_space<vmem>>, vector<1x48xf32>
    %c0_60 = arith.constant 0 : index
    %c0_61 = arith.constant 0 : index
    %22 = vector.load %arg7[%c0_60, %c0_61] : memref<1x24xf32, #tpu.memory_space<vmem>>, vector<1x24xf32>
    %c0_62 = arith.constant 0 : index
    %c0_63 = arith.constant 0 : index
    %c0_64 = arith.constant 0 : index
    %c0_65 = arith.constant 0 : index
    %23 = vector.load %arg11[%c0_62, %c0_63, %c0_64, %c0_65] : memref<1x18x18x3xf32, #tpu.memory_space<vmem>>, vector<1x16x16x3xf32>
    %24 = vector.shape_cast %23 : vector<1x16x16x3xf32> to vector<256x3xf32>
    %c0_66 = arith.constant 0 : index
    %c0_67 = arith.constant 0 : index
    %c0_68 = arith.constant 0 : index
    %25 = vector.load %arg2[%c0_66, %c0_67, %c0_68] : memref<9x3x24xf32, #tpu.memory_space<vmem>>, vector<1x3x24xf32>
    %26 = vector.shape_cast %25 : vector<1x3x24xf32> to vector<3x24xf32>
    %cst_69 = arith.constant dense<0.000000e+00> : vector<256x24xf32>
    %27 = tpu.matmul %24, %26, %cst_69 {dimension_numbers = #tpu.dot_dimension_numbers<[1], [0], [0], [1], [0, 0, 1, 1], [], []>} : vector<256x3xf32>, vector<3x24xf32>, vector<256x24xf32> -> vector<256x24xf32>
    %c0_70 = arith.constant 0 : index
    %c0_71 = arith.constant 0 : index
    %c1_72 = arith.constant 1 : index
    %c0_73 = arith.constant 0 : index
    %28 = vector.load %arg11[%c0_70, %c0_71, %c1_72, %c0_73] : memref<1x18x18x3xf32, #tpu.memory_space<vmem>>, vector<1x16x16x3xf32>
    %29 = vector.shape_cast %28 : vector<1x16x16x3xf32> to vector<256x3xf32>
    %c1_74 = arith.constant 1 : index
    %c0_75 = arith.constant 0 : index
    %c0_76 = arith.constant 0 : index
    %30 = vector.load %arg2[%c1_74, %c0_75, %c0_76] : memref<9x3x24xf32, #tpu.memory_space<vmem>>, vector<1x3x24xf32>
    %31 = vector.shape_cast %30 : vector<1x3x24xf32> to vector<3x24xf32>
    %cst_77 = arith.constant dense<0.000000e+00> : vector<256x24xf32>
    %32 = tpu.matmul %29, %31, %cst_77 {dimension_numbers = #tpu.dot_dimension_numbers<[1], [0], [0], [1], [0, 0, 1, 1], [], []>} : vector<256x3xf32>, vector<3x24xf32>, vector<256x24xf32> -> vector<256x24xf32>
    %33 = arith.addf %27, %32 : vector<256x24xf32>
    %c0_78 = arith.constant 0 : index
    %c0_79 = arith.constant 0 : index
    %c2 = arith.constant 2 : index
    %c0_80 = arith.constant 0 : index
    %34 = vector.load %arg11[%c0_78, %c0_79, %c2, %c0_80] : memref<1x18x18x3xf32, #tpu.memory_space<vmem>>, vector<1x16x16x3xf32>
    %35 = vector.shape_cast %34 : vector<1x16x16x3xf32> to vector<256x3xf32>
    %c2_81 = arith.constant 2 : index
    %c0_82 = arith.constant 0 : index
    %c0_83 = arith.constant 0 : index
    %36 = vector.load %arg2[%c2_81, %c0_82, %c0_83] : memref<9x3x24xf32, #tpu.memory_space<vmem>>, vector<1x3x24xf32>
    %37 = vector.shape_cast %36 : vector<1x3x24xf32> to vector<3x24xf32>
    %cst_84 = arith.constant dense<0.000000e+00> : vector<256x24xf32>
    %38 = tpu.matmul %35, %37, %cst_84 {dimension_numbers = #tpu.dot_dimension_numbers<[1], [0], [0], [1], [0, 0, 1, 1], [], []>} : vector<256x3xf32>, vector<3x24xf32>, vector<256x24xf32> -> vector<256x24xf32>
    %39 = arith.addf %33, %38 : vector<256x24xf32>
    %c0_85 = arith.constant 0 : index
    %c1_86 = arith.constant 1 : index
    %c0_87 = arith.constant 0 : index
    %c0_88 = arith.constant 0 : index
    %40 = vector.load %arg11[%c0_85, %c1_86, %c0_87, %c0_88] : memref<1x18x18x3xf32, #tpu.memory_space<vmem>>, vector<1x16x16x3xf32>
    %41 = vector.shape_cast %40 : vector<1x16x16x3xf32> to vector<256x3xf32>
    %c3 = arith.constant 3 : index
    %c0_89 = arith.constant 0 : index
    %c0_90 = arith.constant 0 : index
    %42 = vector.load %arg2[%c3, %c0_89, %c0_90] : memref<9x3x24xf32, #tpu.memory_space<vmem>>, vector<1x3x24xf32>
    %43 = vector.shape_cast %42 : vector<1x3x24xf32> to vector<3x24xf32>
    %cst_91 = arith.constant dense<0.000000e+00> : vector<256x24xf32>
    %44 = tpu.matmul %41, %43, %cst_91 {dimension_numbers = #tpu.dot_dimension_numbers<[1], [0], [0], [1], [0, 0, 1, 1], [], []>} : vector<256x3xf32>, vector<3x24xf32>, vector<256x24xf32> -> vector<256x24xf32>
    %45 = arith.addf %39, %44 : vector<256x24xf32>
    %c0_92 = arith.constant 0 : index
    %c1_93 = arith.constant 1 : index
    %c1_94 = arith.constant 1 : index
    %c0_95 = arith.constant 0 : index
    %46 = vector.load %arg11[%c0_92, %c1_93, %c1_94, %c0_95] : memref<1x18x18x3xf32, #tpu.memory_space<vmem>>, vector<1x16x16x3xf32>
    %47 = vector.shape_cast %46 : vector<1x16x16x3xf32> to vector<256x3xf32>
    %c4 = arith.constant 4 : index
    %c0_96 = arith.constant 0 : index
    %c0_97 = arith.constant 0 : index
    %48 = vector.load %arg2[%c4, %c0_96, %c0_97] : memref<9x3x24xf32, #tpu.memory_space<vmem>>, vector<1x3x24xf32>
    %49 = vector.shape_cast %48 : vector<1x3x24xf32> to vector<3x24xf32>
    %cst_98 = arith.constant dense<0.000000e+00> : vector<256x24xf32>
    %50 = tpu.matmul %47, %49, %cst_98 {dimension_numbers = #tpu.dot_dimension_numbers<[1], [0], [0], [1], [0, 0, 1, 1], [], []>} : vector<256x3xf32>, vector<3x24xf32>, vector<256x24xf32> -> vector<256x24xf32>
    %51 = arith.addf %45, %50 : vector<256x24xf32>
    %c0_99 = arith.constant 0 : index
    %c1_100 = arith.constant 1 : index
    %c2_101 = arith.constant 2 : index
    %c0_102 = arith.constant 0 : index
    %52 = vector.load %arg11[%c0_99, %c1_100, %c2_101, %c0_102] : memref<1x18x18x3xf32, #tpu.memory_space<vmem>>, vector<1x16x16x3xf32>
    %53 = vector.shape_cast %52 : vector<1x16x16x3xf32> to vector<256x3xf32>
    %c5_103 = arith.constant 5 : index
    %c0_104 = arith.constant 0 : index
    %c0_105 = arith.constant 0 : index
    %54 = vector.load %arg2[%c5_103, %c0_104, %c0_105] : memref<9x3x24xf32, #tpu.memory_space<vmem>>, vector<1x3x24xf32>
    %55 = vector.shape_cast %54 : vector<1x3x24xf32> to vector<3x24xf32>
    %cst_106 = arith.constant dense<0.000000e+00> : vector<256x24xf32>
    %56 = tpu.matmul %53, %55, %cst_106 {dimension_numbers = #tpu.dot_dimension_numbers<[1], [0], [0], [1], [0, 0, 1, 1], [], []>} : vector<256x3xf32>, vector<3x24xf32>, vector<256x24xf32> -> vector<256x24xf32>
    %57 = arith.addf %51, %56 : vector<256x24xf32>
    %c0_107 = arith.constant 0 : index
    %c2_108 = arith.constant 2 : index
    %c0_109 = arith.constant 0 : index
    %c0_110 = arith.constant 0 : index
    %58 = vector.load %arg11[%c0_107, %c2_108, %c0_109, %c0_110] : memref<1x18x18x3xf32, #tpu.memory_space<vmem>>, vector<1x16x16x3xf32>
    %59 = vector.shape_cast %58 : vector<1x16x16x3xf32> to vector<256x3xf32>
    %c6 = arith.constant 6 : index
    %c0_111 = arith.constant 0 : index
    %c0_112 = arith.constant 0 : index
    %60 = vector.load %arg2[%c6, %c0_111, %c0_112] : memref<9x3x24xf32, #tpu.memory_space<vmem>>, vector<1x3x24xf32>
    %61 = vector.shape_cast %60 : vector<1x3x24xf32> to vector<3x24xf32>
    %cst_113 = arith.constant dense<0.000000e+00> : vector<256x24xf32>
    %62 = tpu.matmul %59, %61, %cst_113 {dimension_numbers = #tpu.dot_dimension_numbers<[1], [0], [0], [1], [0, 0, 1, 1], [], []>} : vector<256x3xf32>, vector<3x24xf32>, vector<256x24xf32> -> vector<256x24xf32>
    %63 = arith.addf %57, %62 : vector<256x24xf32>
    %c0_114 = arith.constant 0 : index
    %c2_115 = arith.constant 2 : index
    %c1_116 = arith.constant 1 : index
    %c0_117 = arith.constant 0 : index
    %64 = vector.load %arg11[%c0_114, %c2_115, %c1_116, %c0_117] : memref<1x18x18x3xf32, #tpu.memory_space<vmem>>, vector<1x16x16x3xf32>
    %65 = vector.shape_cast %64 : vector<1x16x16x3xf32> to vector<256x3xf32>
    %c7 = arith.constant 7 : index
    %c0_118 = arith.constant 0 : index
    %c0_119 = arith.constant 0 : index
    %66 = vector.load %arg2[%c7, %c0_118, %c0_119] : memref<9x3x24xf32, #tpu.memory_space<vmem>>, vector<1x3x24xf32>
    %67 = vector.shape_cast %66 : vector<1x3x24xf32> to vector<3x24xf32>
    %cst_120 = arith.constant dense<0.000000e+00> : vector<256x24xf32>
    %68 = tpu.matmul %65, %67, %cst_120 {dimension_numbers = #tpu.dot_dimension_numbers<[1], [0], [0], [1], [0, 0, 1, 1], [], []>} : vector<256x3xf32>, vector<3x24xf32>, vector<256x24xf32> -> vector<256x24xf32>
    %69 = arith.addf %63, %68 : vector<256x24xf32>
    %c0_121 = arith.constant 0 : index
    %c2_122 = arith.constant 2 : index
    %c2_123 = arith.constant 2 : index
    %c0_124 = arith.constant 0 : index
    %70 = vector.load %arg11[%c0_121, %c2_122, %c2_123, %c0_124] : memref<1x18x18x3xf32, #tpu.memory_space<vmem>>, vector<1x16x16x3xf32>
    %71 = vector.shape_cast %70 : vector<1x16x16x3xf32> to vector<256x3xf32>
    %c8 = arith.constant 8 : index
    %c0_125 = arith.constant 0 : index
    %c0_126 = arith.constant 0 : index
    %72 = vector.load %arg2[%c8, %c0_125, %c0_126] : memref<9x3x24xf32, #tpu.memory_space<vmem>>, vector<1x3x24xf32>
    %73 = vector.shape_cast %72 : vector<1x3x24xf32> to vector<3x24xf32>
    %cst_127 = arith.constant dense<0.000000e+00> : vector<256x24xf32>
    %74 = tpu.matmul %71, %73, %cst_127 {dimension_numbers = #tpu.dot_dimension_numbers<[1], [0], [0], [1], [0, 0, 1, 1], [], []>} : vector<256x3xf32>, vector<3x24xf32>, vector<256x24xf32> -> vector<256x24xf32>
    %75 = arith.addf %69, %74 : vector<256x24xf32>
    %76 = vector.broadcast %20 : vector<1x24xf32> to vector<256x24xf32>
    %77 = arith.addf %75, %76 : vector<256x24xf32>
    %cst_128 = arith.constant 0.000000e+00 : f32
    %78 = vector.broadcast %cst_128 : f32 to vector<256x24xf32>
    %79 = arith.maximumf %77, %78 : vector<256x24xf32>
    %80 = vector.shape_cast %79 : vector<256x24xf32> to vector<128x2x24xf32>
    %81 = vector.extract_strided_slice %80 {offsets = [0, 0, 0], sizes = [128, 1, 24], strides = [1, 1, 1]} : vector<128x2x24xf32> to vector<128x1x24xf32>
    %82 = vector.shape_cast %81 : vector<128x1x24xf32> to vector<128x24xf32>
    %83 = vector.extract_strided_slice %80 {offsets = [0, 1, 0], sizes = [128, 1, 24], strides = [1, 1, 1]} : vector<128x2x24xf32> to vector<128x1x24xf32>
    %84 = vector.shape_cast %83 : vector<128x1x24xf32> to vector<128x24xf32>
    %85 = arith.maximumf %82, %84 : vector<128x24xf32>
    %86 = vector.shape_cast %85 : vector<128x24xf32> to vector<8x2x8x24xf32>
    %87 = vector.extract_strided_slice %86 {offsets = [0, 0, 0, 0], sizes = [8, 1, 8, 24], strides = [1, 1, 1, 1]} : vector<8x2x8x24xf32> to vector<8x1x8x24xf32>
    %88 = vector.shape_cast %87 : vector<8x1x8x24xf32> to vector<8x8x24xf32>
    %89 = vector.extract_strided_slice %86 {offsets = [0, 1, 0, 0], sizes = [8, 1, 8, 24], strides = [1, 1, 1, 1]} : vector<8x2x8x24xf32> to vector<8x1x8x24xf32>
    %90 = vector.shape_cast %89 : vector<8x1x8x24xf32> to vector<8x8x24xf32>
    %91 = arith.maximumf %88, %90 : vector<8x8x24xf32>
    %92 = vector.shape_cast %91 : vector<8x8x24xf32> to vector<1x8x8x24xf32>
    %c0_129 = arith.constant 0 : index
    %c1_130 = arith.constant 1 : index
    %c1_131 = arith.constant 1 : index
    %c0_132 = arith.constant 0 : index
    %93 = vector.load %arg12[%c0_129, %c1_130, %c1_131, %c0_132] : memref<1x10x10x24xf32, #tpu.memory_space<vmem>>, vector<1x8x8x24xf32>
    tpu.vector_store %arg12[%c0_129, %c1_130, %c1_131, %c0_132], %92 {strides = array<i32>} : memref<1x10x10x24xf32, #tpu.memory_space<vmem>>, vector<1x8x8x24xf32>,
    %c0_133 = arith.constant 0 : index
    %c0_134 = arith.constant 0 : index
    %c0_135 = arith.constant 0 : index
    %c0_136 = arith.constant 0 : index
    %94 = vector.load %arg12[%c0_133, %c0_134, %c0_135, %c0_136] : memref<1x10x10x24xf32, #tpu.memory_space<vmem>>, vector<1x8x8x24xf32>
    %95 = vector.shape_cast %94 : vector<1x8x8x24xf32> to vector<64x24xf32>
    %c0_137 = arith.constant 0 : index
    %c0_138 = arith.constant 0 : index
    %c0_139 = arith.constant 0 : index
    %96 = vector.load %arg4[%c0_137, %c0_138, %c0_139] : memref<9x24x48xf32, #tpu.memory_space<vmem>>, vector<1x24x48xf32>
    %97 = vector.shape_cast %96 : vector<1x24x48xf32> to vector<24x48xf32>
    %cst_140 = arith.constant dense<0.000000e+00> : vector<64x48xf32>
    %98 = tpu.matmul %95, %97, %cst_140 {dimension_numbers = #tpu.dot_dimension_numbers<[1], [0], [0], [1], [0, 0, 1, 1], [], []>} : vector<64x24xf32>, vector<24x48xf32>, vector<64x48xf32> -> vector<64x48xf32>
    %c0_141 = arith.constant 0 : index
    %c0_142 = arith.constant 0 : index
    %c1_143 = arith.constant 1 : index
    %c0_144 = arith.constant 0 : index
    %99 = vector.load %arg12[%c0_141, %c0_142, %c1_143, %c0_144] : memref<1x10x10x24xf32, #tpu.memory_space<vmem>>, vector<1x8x8x24xf32>
    %100 = vector.shape_cast %99 : vector<1x8x8x24xf32> to vector<64x24xf32>
    %c1_145 = arith.constant 1 : index
    %c0_146 = arith.constant 0 : index
    %c0_147 = arith.constant 0 : index
    %101 = vector.load %arg4[%c1_145, %c0_146, %c0_147] : memref<9x24x48xf32, #tpu.memory_space<vmem>>, vector<1x24x48xf32>
    %102 = vector.shape_cast %101 : vector<1x24x48xf32> to vector<24x48xf32>
    %cst_148 = arith.constant dense<0.000000e+00> : vector<64x48xf32>
    %103 = tpu.matmul %100, %102, %cst_148 {dimension_numbers = #tpu.dot_dimension_numbers<[1], [0], [0], [1], [0, 0, 1, 1], [], []>} : vector<64x24xf32>, vector<24x48xf32>, vector<64x48xf32> -> vector<64x48xf32>
    %104 = arith.addf %98, %103 : vector<64x48xf32>
    %c0_149 = arith.constant 0 : index
    %c0_150 = arith.constant 0 : index
    %c2_151 = arith.constant 2 : index
    %c0_152 = arith.constant 0 : index
    %105 = vector.load %arg12[%c0_149, %c0_150, %c2_151, %c0_152] : memref<1x10x10x24xf32, #tpu.memory_space<vmem>>, vector<1x8x8x24xf32>
    %106 = vector.shape_cast %105 : vector<1x8x8x24xf32> to vector<64x24xf32>
    %c2_153 = arith.constant 2 : index
    %c0_154 = arith.constant 0 : index
    %c0_155 = arith.constant 0 : index
    %107 = vector.load %arg4[%c2_153, %c0_154, %c0_155] : memref<9x24x48xf32, #tpu.memory_space<vmem>>, vector<1x24x48xf32>
    %108 = vector.shape_cast %107 : vector<1x24x48xf32> to vector<24x48xf32>
    %cst_156 = arith.constant dense<0.000000e+00> : vector<64x48xf32>
    %109 = tpu.matmul %106, %108, %cst_156 {dimension_numbers = #tpu.dot_dimension_numbers<[1], [0], [0], [1], [0, 0, 1, 1], [], []>} : vector<64x24xf32>, vector<24x48xf32>, vector<64x48xf32> -> vector<64x48xf32>
    %110 = arith.addf %104, %109 : vector<64x48xf32>
    %c0_157 = arith.constant 0 : index
    %c1_158 = arith.constant 1 : index
    %c0_159 = arith.constant 0 : index
    %c0_160 = arith.constant 0 : index
    %111 = vector.load %arg12[%c0_157, %c1_158, %c0_159, %c0_160] : memref<1x10x10x24xf32, #tpu.memory_space<vmem>>, vector<1x8x8x24xf32>
    %112 = vector.shape_cast %111 : vector<1x8x8x24xf32> to vector<64x24xf32>
    %c3_161 = arith.constant 3 : index
    %c0_162 = arith.constant 0 : index
    %c0_163 = arith.constant 0 : index
    %113 = vector.load %arg4[%c3_161, %c0_162, %c0_163] : memref<9x24x48xf32, #tpu.memory_space<vmem>>, vector<1x24x48xf32>
    %114 = vector.shape_cast %113 : vector<1x24x48xf32> to vector<24x48xf32>
    %cst_164 = arith.constant dense<0.000000e+00> : vector<64x48xf32>
    %115 = tpu.matmul %112, %114, %cst_164 {dimension_numbers = #tpu.dot_dimension_numbers<[1], [0], [0], [1], [0, 0, 1, 1], [], []>} : vector<64x24xf32>, vector<24x48xf32>, vector<64x48xf32> -> vector<64x48xf32>
    %116 = arith.addf %110, %115 : vector<64x48xf32>
    %c0_165 = arith.constant 0 : index
    %c1_166 = arith.constant 1 : index
    %c1_167 = arith.constant 1 : index
    %c0_168 = arith.constant 0 : index
    %117 = vector.load %arg12[%c0_165, %c1_166, %c1_167, %c0_168] : memref<1x10x10x24xf32, #tpu.memory_space<vmem>>, vector<1x8x8x24xf32>
    %118 = vector.shape_cast %117 : vector<1x8x8x24xf32> to vector<64x24xf32>
    %c4_169 = arith.constant 4 : index
    %c0_170 = arith.constant 0 : index
    %c0_171 = arith.constant 0 : index
    %119 = vector.load %arg4[%c4_169, %c0_170, %c0_171] : memref<9x24x48xf32, #tpu.memory_space<vmem>>, vector<1x24x48xf32>
    %120 = vector.shape_cast %119 : vector<1x24x48xf32> to vector<24x48xf32>
    %cst_172 = arith.constant dense<0.000000e+00> : vector<64x48xf32>
    %121 = tpu.matmul %118, %120, %cst_172 {dimension_numbers = #tpu.dot_dimension_numbers<[1], [0], [0], [1], [0, 0, 1, 1], [], []>} : vector<64x24xf32>, vector<24x48xf32>, vector<64x48xf32> -> vector<64x48xf32>
    %122 = arith.addf %116, %121 : vector<64x48xf32>
    %c0_173 = arith.constant 0 : index
    %c1_174 = arith.constant 1 : index
    %c2_175 = arith.constant 2 : index
    %c0_176 = arith.constant 0 : index
    %123 = vector.load %arg12[%c0_173, %c1_174, %c2_175, %c0_176] : memref<1x10x10x24xf32, #tpu.memory_space<vmem>>, vector<1x8x8x24xf32>
    %124 = vector.shape_cast %123 : vector<1x8x8x24xf32> to vector<64x24xf32>
    %c5_177 = arith.constant 5 : index
    %c0_178 = arith.constant 0 : index
    %c0_179 = arith.constant 0 : index
    %125 = vector.load %arg4[%c5_177, %c0_178, %c0_179] : memref<9x24x48xf32, #tpu.memory_space<vmem>>, vector<1x24x48xf32>
    %126 = vector.shape_cast %125 : vector<1x24x48xf32> to vector<24x48xf32>
    %cst_180 = arith.constant dense<0.000000e+00> : vector<64x48xf32>
    %127 = tpu.matmul %124, %126, %cst_180 {dimension_numbers = #tpu.dot_dimension_numbers<[1], [0], [0], [1], [0, 0, 1, 1], [], []>} : vector<64x24xf32>, vector<24x48xf32>, vector<64x48xf32> -> vector<64x48xf32>
    %128 = arith.addf %122, %127 : vector<64x48xf32>
    %c0_181 = arith.constant 0 : index
    %c2_182 = arith.constant 2 : index
    %c0_183 = arith.constant 0 : index
    %c0_184 = arith.constant 0 : index
    %129 = vector.load %arg12[%c0_181, %c2_182, %c0_183, %c0_184] : memref<1x10x10x24xf32, #tpu.memory_space<vmem>>, vector<1x8x8x24xf32>
    %130 = vector.shape_cast %129 : vector<1x8x8x24xf32> to vector<64x24xf32>
    %c6_185 = arith.constant 6 : index
    %c0_186 = arith.constant 0 : index
    %c0_187 = arith.constant 0 : index
    %131 = vector.load %arg4[%c6_185, %c0_186, %c0_187] : memref<9x24x48xf32, #tpu.memory_space<vmem>>, vector<1x24x48xf32>
    %132 = vector.shape_cast %131 : vector<1x24x48xf32> to vector<24x48xf32>
    %cst_188 = arith.constant dense<0.000000e+00> : vector<64x48xf32>
    %133 = tpu.matmul %130, %132, %cst_188 {dimension_numbers = #tpu.dot_dimension_numbers<[1], [0], [0], [1], [0, 0, 1, 1], [], []>} : vector<64x24xf32>, vector<24x48xf32>, vector<64x48xf32> -> vector<64x48xf32>
    %134 = arith.addf %128, %133 : vector<64x48xf32>
    %c0_189 = arith.constant 0 : index
    %c2_190 = arith.constant 2 : index
    %c1_191 = arith.constant 1 : index
    %c0_192 = arith.constant 0 : index
    %135 = vector.load %arg12[%c0_189, %c2_190, %c1_191, %c0_192] : memref<1x10x10x24xf32, #tpu.memory_space<vmem>>, vector<1x8x8x24xf32>
    %136 = vector.shape_cast %135 : vector<1x8x8x24xf32> to vector<64x24xf32>
    %c7_193 = arith.constant 7 : index
    %c0_194 = arith.constant 0 : index
    %c0_195 = arith.constant 0 : index
    %137 = vector.load %arg4[%c7_193, %c0_194, %c0_195] : memref<9x24x48xf32, #tpu.memory_space<vmem>>, vector<1x24x48xf32>
    %138 = vector.shape_cast %137 : vector<1x24x48xf32> to vector<24x48xf32>
    %cst_196 = arith.constant dense<0.000000e+00> : vector<64x48xf32>
    %139 = tpu.matmul %136, %138, %cst_196 {dimension_numbers = #tpu.dot_dimension_numbers<[1], [0], [0], [1], [0, 0, 1, 1], [], []>} : vector<64x24xf32>, vector<24x48xf32>, vector<64x48xf32> -> vector<64x48xf32>
    %140 = arith.addf %134, %139 : vector<64x48xf32>
    %c0_197 = arith.constant 0 : index
    %c2_198 = arith.constant 2 : index
    %c2_199 = arith.constant 2 : index
    %c0_200 = arith.constant 0 : index
    %141 = vector.load %arg12[%c0_197, %c2_198, %c2_199, %c0_200] : memref<1x10x10x24xf32, #tpu.memory_space<vmem>>, vector<1x8x8x24xf32>
    %142 = vector.shape_cast %141 : vector<1x8x8x24xf32> to vector<64x24xf32>
    %c8_201 = arith.constant 8 : index
    %c0_202 = arith.constant 0 : index
    %c0_203 = arith.constant 0 : index
    %143 = vector.load %arg4[%c8_201, %c0_202, %c0_203] : memref<9x24x48xf32, #tpu.memory_space<vmem>>, vector<1x24x48xf32>
    %144 = vector.shape_cast %143 : vector<1x24x48xf32> to vector<24x48xf32>
    %cst_204 = arith.constant dense<0.000000e+00> : vector<64x48xf32>
    %145 = tpu.matmul %142, %144, %cst_204 {dimension_numbers = #tpu.dot_dimension_numbers<[1], [0], [0], [1], [0, 0, 1, 1], [], []>} : vector<64x24xf32>, vector<24x48xf32>, vector<64x48xf32> -> vector<64x48xf32>
    %146 = arith.addf %140, %145 : vector<64x48xf32>
    %147 = vector.broadcast %21 : vector<1x48xf32> to vector<64x48xf32>
    %148 = arith.addf %146, %147 : vector<64x48xf32>
    %cst_205 = arith.constant 0.000000e+00 : f32
    %149 = vector.broadcast %cst_205 : f32 to vector<64x48xf32>
    %150 = arith.maximumf %148, %149 : vector<64x48xf32>
    %151 = vector.shape_cast %150 : vector<64x48xf32> to vector<32x2x48xf32>
    %152 = vector.extract_strided_slice %151 {offsets = [0, 0, 0], sizes = [32, 1, 48], strides = [1, 1, 1]} : vector<32x2x48xf32> to vector<32x1x48xf32>
    %153 = vector.shape_cast %152 : vector<32x1x48xf32> to vector<32x48xf32>
    %154 = vector.extract_strided_slice %151 {offsets = [0, 1, 0], sizes = [32, 1, 48], strides = [1, 1, 1]} : vector<32x2x48xf32> to vector<32x1x48xf32>
    %155 = vector.shape_cast %154 : vector<32x1x48xf32> to vector<32x48xf32>
    %156 = arith.maximumf %153, %155 : vector<32x48xf32>
    %157 = vector.shape_cast %156 : vector<32x48xf32> to vector<4x2x4x48xf32>
    %158 = vector.extract_strided_slice %157 {offsets = [0, 0, 0, 0], sizes = [4, 1, 4, 48], strides = [1, 1, 1, 1]} : vector<4x2x4x48xf32> to vector<4x1x4x48xf32>
    %159 = vector.shape_cast %158 : vector<4x1x4x48xf32> to vector<4x4x48xf32>
    %160 = vector.extract_strided_slice %157 {offsets = [0, 1, 0, 0], sizes = [4, 1, 4, 48], strides = [1, 1, 1, 1]} : vector<4x2x4x48xf32> to vector<4x1x4x48xf32>
    %161 = vector.shape_cast %160 : vector<4x1x4x48xf32> to vector<4x4x48xf32>
    %162 = arith.maximumf %159, %161 : vector<4x4x48xf32>
    %163 = vector.shape_cast %162 : vector<4x4x48xf32> to vector<1x4x4x48xf32>
    %c0_206 = arith.constant 0 : index
    %c1_207 = arith.constant 1 : index
    %c1_208 = arith.constant 1 : index
    %c0_209 = arith.constant 0 : index
    %164 = vector.load %arg13[%c0_206, %c1_207, %c1_208, %c0_209] : memref<1x6x6x48xf32, #tpu.memory_space<vmem>>, vector<1x4x4x48xf32>
    tpu.vector_store %arg13[%c0_206, %c1_207, %c1_208, %c0_209], %163 {strides = array<i32>} : memref<1x6x6x48xf32, #tpu.memory_space<vmem>>, vector<1x4x4x48xf32>,
    %c0_210 = arith.constant 0 : index
    %c0_211 = arith.constant 0 : index
    %c0_212 = arith.constant 0 : index
    %c0_213 = arith.constant 0 : index
    %165 = vector.load %arg13[%c0_210, %c0_211, %c0_212, %c0_213] : memref<1x6x6x48xf32, #tpu.memory_space<vmem>>, vector<1x4x4x48xf32>
    %166 = vector.shape_cast %165 : vector<1x4x4x48xf32> to vector<16x48xf32>
    %c0_214 = arith.constant 0 : index
    %c0_215 = arith.constant 0 : index
    %c0_216 = arith.constant 0 : index
    %167 = vector.load %arg6[%c0_214, %c0_215, %c0_216] : memref<9x48x24xf32, #tpu.memory_space<vmem>>, vector<1x48x24xf32>
    %168 = vector.shape_cast %167 : vector<1x48x24xf32> to vector<48x24xf32>
    %cst_217 = arith.constant dense<0.000000e+00> : vector<16x24xf32>
    %169 = tpu.matmul %166, %168, %cst_217 {dimension_numbers = #tpu.dot_dimension_numbers<[1], [0], [0], [1], [0, 0, 1, 1], [], []>} : vector<16x48xf32>, vector<48x24xf32>, vector<16x24xf32> -> vector<16x24xf32>
    %c0_218 = arith.constant 0 : index
    %c0_219 = arith.constant 0 : index
    %c1_220 = arith.constant 1 : index
    %c0_221 = arith.constant 0 : index
    %170 = vector.load %arg13[%c0_218, %c0_219, %c1_220, %c0_221] : memref<1x6x6x48xf32, #tpu.memory_space<vmem>>, vector<1x4x4x48xf32>
    %171 = vector.shape_cast %170 : vector<1x4x4x48xf32> to vector<16x48xf32>
    %c1_222 = arith.constant 1 : index
    %c0_223 = arith.constant 0 : index
    %c0_224 = arith.constant 0 : index
    %172 = vector.load %arg6[%c1_222, %c0_223, %c0_224] : memref<9x48x24xf32, #tpu.memory_space<vmem>>, vector<1x48x24xf32>
    %173 = vector.shape_cast %172 : vector<1x48x24xf32> to vector<48x24xf32>
    %cst_225 = arith.constant dense<0.000000e+00> : vector<16x24xf32>
    %174 = tpu.matmul %171, %173, %cst_225 {dimension_numbers = #tpu.dot_dimension_numbers<[1], [0], [0], [1], [0, 0, 1, 1], [], []>} : vector<16x48xf32>, vector<48x24xf32>, vector<16x24xf32> -> vector<16x24xf32>
    %175 = arith.addf %169, %174 : vector<16x24xf32>
    %c0_226 = arith.constant 0 : index
    %c0_227 = arith.constant 0 : index
    %c2_228 = arith.constant 2 : index
    %c0_229 = arith.constant 0 : index
    %176 = vector.load %arg13[%c0_226, %c0_227, %c2_228, %c0_229] : memref<1x6x6x48xf32, #tpu.memory_space<vmem>>, vector<1x4x4x48xf32>
    %177 = vector.shape_cast %176 : vector<1x4x4x48xf32> to vector<16x48xf32>
    %c2_230 = arith.constant 2 : index
    %c0_231 = arith.constant 0 : index
    %c0_232 = arith.constant 0 : index
    %178 = vector.load %arg6[%c2_230, %c0_231, %c0_232] : memref<9x48x24xf32, #tpu.memory_space<vmem>>, vector<1x48x24xf32>
    %179 = vector.shape_cast %178 : vector<1x48x24xf32> to vector<48x24xf32>
    %cst_233 = arith.constant dense<0.000000e+00> : vector<16x24xf32>
    %180 = tpu.matmul %177, %179, %cst_233 {dimension_numbers = #tpu.dot_dimension_numbers<[1], [0], [0], [1], [0, 0, 1, 1], [], []>} : vector<16x48xf32>, vector<48x24xf32>, vector<16x24xf32> -> vector<16x24xf32>
    %181 = arith.addf %175, %180 : vector<16x24xf32>
    %c0_234 = arith.constant 0 : index
    %c1_235 = arith.constant 1 : index
    %c0_236 = arith.constant 0 : index
    %c0_237 = arith.constant 0 : index
    %182 = vector.load %arg13[%c0_234, %c1_235, %c0_236, %c0_237] : memref<1x6x6x48xf32, #tpu.memory_space<vmem>>, vector<1x4x4x48xf32>
    %183 = vector.shape_cast %182 : vector<1x4x4x48xf32> to vector<16x48xf32>
    %c3_238 = arith.constant 3 : index
    %c0_239 = arith.constant 0 : index
    %c0_240 = arith.constant 0 : index
    %184 = vector.load %arg6[%c3_238, %c0_239, %c0_240] : memref<9x48x24xf32, #tpu.memory_space<vmem>>, vector<1x48x24xf32>
    %185 = vector.shape_cast %184 : vector<1x48x24xf32> to vector<48x24xf32>
    %cst_241 = arith.constant dense<0.000000e+00> : vector<16x24xf32>
    %186 = tpu.matmul %183, %185, %cst_241 {dimension_numbers = #tpu.dot_dimension_numbers<[1], [0], [0], [1], [0, 0, 1, 1], [], []>} : vector<16x48xf32>, vector<48x24xf32>, vector<16x24xf32> -> vector<16x24xf32>
    %187 = arith.addf %181, %186 : vector<16x24xf32>
    %c0_242 = arith.constant 0 : index
    %c1_243 = arith.constant 1 : index
    %c1_244 = arith.constant 1 : index
    %c0_245 = arith.constant 0 : index
    %188 = vector.load %arg13[%c0_242, %c1_243, %c1_244, %c0_245] : memref<1x6x6x48xf32, #tpu.memory_space<vmem>>, vector<1x4x4x48xf32>
    %189 = vector.shape_cast %188 : vector<1x4x4x48xf32> to vector<16x48xf32>
    %c4_246 = arith.constant 4 : index
    %c0_247 = arith.constant 0 : index
    %c0_248 = arith.constant 0 : index
    %190 = vector.load %arg6[%c4_246, %c0_247, %c0_248] : memref<9x48x24xf32, #tpu.memory_space<vmem>>, vector<1x48x24xf32>
    %191 = vector.shape_cast %190 : vector<1x48x24xf32> to vector<48x24xf32>
    %cst_249 = arith.constant dense<0.000000e+00> : vector<16x24xf32>
    %192 = tpu.matmul %189, %191, %cst_249 {dimension_numbers = #tpu.dot_dimension_numbers<[1], [0], [0], [1], [0, 0, 1, 1], [], []>} : vector<16x48xf32>, vector<48x24xf32>, vector<16x24xf32> -> vector<16x24xf32>
    %193 = arith.addf %187, %192 : vector<16x24xf32>
    %c0_250 = arith.constant 0 : index
    %c1_251 = arith.constant 1 : index
    %c2_252 = arith.constant 2 : index
    %c0_253 = arith.constant 0 : index
    %194 = vector.load %arg13[%c0_250, %c1_251, %c2_252, %c0_253] : memref<1x6x6x48xf32, #tpu.memory_space<vmem>>, vector<1x4x4x48xf32>
    %195 = vector.shape_cast %194 : vector<1x4x4x48xf32> to vector<16x48xf32>
    %c5_254 = arith.constant 5 : index
    %c0_255 = arith.constant 0 : index
    %c0_256 = arith.constant 0 : index
    %196 = vector.load %arg6[%c5_254, %c0_255, %c0_256] : memref<9x48x24xf32, #tpu.memory_space<vmem>>, vector<1x48x24xf32>
    %197 = vector.shape_cast %196 : vector<1x48x24xf32> to vector<48x24xf32>
    %cst_257 = arith.constant dense<0.000000e+00> : vector<16x24xf32>
    %198 = tpu.matmul %195, %197, %cst_257 {dimension_numbers = #tpu.dot_dimension_numbers<[1], [0], [0], [1], [0, 0, 1, 1], [], []>} : vector<16x48xf32>, vector<48x24xf32>, vector<16x24xf32> -> vector<16x24xf32>
    %199 = arith.addf %193, %198 : vector<16x24xf32>
    %c0_258 = arith.constant 0 : index
    %c2_259 = arith.constant 2 : index
    %c0_260 = arith.constant 0 : index
    %c0_261 = arith.constant 0 : index
    %200 = vector.load %arg13[%c0_258, %c2_259, %c0_260, %c0_261] : memref<1x6x6x48xf32, #tpu.memory_space<vmem>>, vector<1x4x4x48xf32>
    %201 = vector.shape_cast %200 : vector<1x4x4x48xf32> to vector<16x48xf32>
    %c6_262 = arith.constant 6 : index
    %c0_263 = arith.constant 0 : index
    %c0_264 = arith.constant 0 : index
    %202 = vector.load %arg6[%c6_262, %c0_263, %c0_264] : memref<9x48x24xf32, #tpu.memory_space<vmem>>, vector<1x48x24xf32>
    %203 = vector.shape_cast %202 : vector<1x48x24xf32> to vector<48x24xf32>
    %cst_265 = arith.constant dense<0.000000e+00> : vector<16x24xf32>
    %204 = tpu.matmul %201, %203, %cst_265 {dimension_numbers = #tpu.dot_dimension_numbers<[1], [0], [0], [1], [0, 0, 1, 1], [], []>} : vector<16x48xf32>, vector<48x24xf32>, vector<16x24xf32> -> vector<16x24xf32>
    %205 = arith.addf %199, %204 : vector<16x24xf32>
    %c0_266 = arith.constant 0 : index
    %c2_267 = arith.constant 2 : index
    %c1_268 = arith.constant 1 : index
    %c0_269 = arith.constant 0 : index
    %206 = vector.load %arg13[%c0_266, %c2_267, %c1_268, %c0_269] : memref<1x6x6x48xf32, #tpu.memory_space<vmem>>, vector<1x4x4x48xf32>
    %207 = vector.shape_cast %206 : vector<1x4x4x48xf32> to vector<16x48xf32>
    %c7_270 = arith.constant 7 : index
    %c0_271 = arith.constant 0 : index
    %c0_272 = arith.constant 0 : index
    %208 = vector.load %arg6[%c7_270, %c0_271, %c0_272] : memref<9x48x24xf32, #tpu.memory_space<vmem>>, vector<1x48x24xf32>
    %209 = vector.shape_cast %208 : vector<1x48x24xf32> to vector<48x24xf32>
    %cst_273 = arith.constant dense<0.000000e+00> : vector<16x24xf32>
    %210 = tpu.matmul %207, %209, %cst_273 {dimension_numbers = #tpu.dot_dimension_numbers<[1], [0], [0], [1], [0, 0, 1, 1], [], []>} : vector<16x48xf32>, vector<48x24xf32>, vector<16x24xf32> -> vector<16x24xf32>
    %211 = arith.addf %205, %210 : vector<16x24xf32>
    %c0_274 = arith.constant 0 : index
    %c2_275 = arith.constant 2 : index
    %c2_276 = arith.constant 2 : index
    %c0_277 = arith.constant 0 : index
    %212 = vector.load %arg13[%c0_274, %c2_275, %c2_276, %c0_277] : memref<1x6x6x48xf32, #tpu.memory_space<vmem>>, vector<1x4x4x48xf32>
    %213 = vector.shape_cast %212 : vector<1x4x4x48xf32> to vector<16x48xf32>
    %c8_278 = arith.constant 8 : index
    %c0_279 = arith.constant 0 : index
    %c0_280 = arith.constant 0 : index
    %214 = vector.load %arg6[%c8_278, %c0_279, %c0_280] : memref<9x48x24xf32, #tpu.memory_space<vmem>>, vector<1x48x24xf32>
    %215 = vector.shape_cast %214 : vector<1x48x24xf32> to vector<48x24xf32>
    %cst_281 = arith.constant dense<0.000000e+00> : vector<16x24xf32>
    %216 = tpu.matmul %213, %215, %cst_281 {dimension_numbers = #tpu.dot_dimension_numbers<[1], [0], [0], [1], [0, 0, 1, 1], [], []>} : vector<16x48xf32>, vector<48x24xf32>, vector<16x24xf32> -> vector<16x24xf32>
    %217 = arith.addf %211, %216 : vector<16x24xf32>
    %218 = vector.broadcast %22 : vector<1x24xf32> to vector<16x24xf32>
    %219 = arith.addf %217, %218 : vector<16x24xf32>
    %cst_282 = arith.constant 0.000000e+00 : f32
    %220 = vector.broadcast %cst_282 : f32 to vector<16x24xf32>
    %221 = arith.maximumf %219, %220 : vector<16x24xf32>
    %222 = vector.shape_cast %221 : vector<16x24xf32> to vector<4x4x24xf32>
    %c0_283 = arith.constant 0 : index
    %c0_284 = arith.constant 0 : index
    %c0_285 = arith.constant 0 : index
    %223 = vector.load %arg8[%c0_283, %c0_284, %c0_285] : memref<1x1x24xf32, #tpu.memory_space<vmem>>, vector<1x1x24xf32>
    %224 = vector.broadcast %223 : vector<1x1x24xf32> to vector<4x4x24xf32>
    %225 = arith.mulf %222, %224 : vector<4x4x24xf32>
    %cst_286 = arith.constant dense<0.000000e+00> : vector<4x4xf32>
    %226 = vector.multi_reduction <add>, %225, %cst_286 [2] : vector<4x4x24xf32> to vector<4x4xf32>
    %c0_287 = arith.constant 0 : index
    %c0_288 = arith.constant 0 : index
    %227 = vector.load %arg9[%c0_287, %c0_288] : memref<1x1xf32, #tpu.memory_space<vmem>>, vector<1x1xf32>
    %228 = vector.broadcast %227 : vector<1x1xf32> to vector<4x4xf32>
    %229 = arith.addf %226, %228 : vector<4x4xf32>
    %230 = vector.shape_cast %229 : vector<4x4xf32> to vector<1x4x4xf32>
    %c0_289 = arith.constant 0 : index
    %c0_290 = arith.constant 0 : index
    %c0_291 = arith.constant 0 : index
    %231 = vector.load %arg10[%c0_289, %c0_290, %c0_291] : memref<1x4x4xf32, #tpu.memory_space<vmem>>, vector<1x4x4xf32>
    tpu.vector_store %arg10[%c0_289, %c0_290, %c0_291], %230 {strides = array<i32>} : memref<1x4x4xf32, #tpu.memory_space<vmem>>, vector<1x4x4xf32>,
    return
  }
  func.func @transform_0(%arg0: i32) -> (i32, i32, i32, i32) {
    %c0_i32 = arith.constant 0 : i32
    %c0_i32_0 = arith.constant 0 : i32
    %c0_i32_1 = arith.constant 0 : i32
    %c0_i32_2 = arith.constant 0 : i32
    return %arg0, %c0_i32, %c0_i32_0, %c0_i32_1 : i32, i32, i32, i32
  }
  func.func @transform_1(%arg0: i32) -> (i32, i32, i32) {
    %c0_i32 = arith.constant 0 : i32
    %c0_i32_0 = arith.constant 0 : i32
    %c0_i32_1 = arith.constant 0 : i32
    %c0_i32_2 = arith.constant 0 : i32
    return %c0_i32, %c0_i32_0, %c0_i32_1 : i32, i32, i32
  }
  func.func @transform_2(%arg0: i32) -> (i32, i32) {
    %c0_i32 = arith.constant 0 : i32
    %c0_i32_0 = arith.constant 0 : i32
    %c0_i32_1 = arith.constant 0 : i32
    return %c0_i32, %c0_i32_0 : i32, i32
  }
  func.func @transform_3(%arg0: i32) -> (i32, i32, i32) {
    %c0_i32 = arith.constant 0 : i32
    %c0_i32_0 = arith.constant 0 : i32
    %c0_i32_1 = arith.constant 0 : i32
    %c0_i32_2 = arith.constant 0 : i32
    return %c0_i32, %c0_i32_0, %c0_i32_1 : i32, i32, i32
  }
  func.func @transform_4(%arg0: i32) -> (i32, i32) {
    %c0_i32 = arith.constant 0 : i32
    %c0_i32_0 = arith.constant 0 : i32
    %c0_i32_1 = arith.constant 0 : i32
    return %c0_i32, %c0_i32_0 : i32, i32
  }
  func.func @transform_5(%arg0: i32) -> (i32, i32, i32) {
    %c0_i32 = arith.constant 0 : i32
    %c0_i32_0 = arith.constant 0 : i32
    %c0_i32_1 = arith.constant 0 : i32
    %c0_i32_2 = arith.constant 0 : i32
    return %c0_i32, %c0_i32_0, %c0_i32_1 : i32, i32, i32
  }
  func.func @transform_6(%arg0: i32) -> (i32, i32) {
    %c0_i32 = arith.constant 0 : i32
    %c0_i32_0 = arith.constant 0 : i32
    %c0_i32_1 = arith.constant 0 : i32
    return %c0_i32, %c0_i32_0 : i32, i32
  }
  func.func @transform_7(%arg0: i32) -> (i32, i32, i32) {
    %c0_i32 = arith.constant 0 : i32
    %c0_i32_0 = arith.constant 0 : i32
    %c0_i32_1 = arith.constant 0 : i32
    %c0_i32_2 = arith.constant 0 : i32
    return %c0_i32, %c0_i32_0, %c0_i32_1 : i32, i32, i32
  }
  func.func @transform_8(%arg0: i32) -> (i32, i32) {
    %c0_i32 = arith.constant 0 : i32
    %c0_i32_0 = arith.constant 0 : i32
    %c0_i32_1 = arith.constant 0 : i32
    return %c0_i32, %c0_i32_0 : i32, i32
  }
  func.func @transform_9(%arg0: i32) -> (i32, i32, i32) {
    %c0_i32 = arith.constant 0 : i32
    %c0_i32_0 = arith.constant 0 : i32
    %c0_i32_1 = arith.constant 0 : i32
    return %arg0, %c0_i32, %c0_i32_0 : i32, i32, i32
  }
}

</mosaic_0001>

<llo_original>
// kernel: simple_cnn_forward.1
$region0: #{simple_cnn_forward.1}
  #allocation0 [shape = 'u32[]', space=smem, size = 0x4, offset = 0x4, fixed_abs, tag = 'smem constant byte address 0x4 - core index']
  #allocation1 [shape = 'u32[144,128]{1,0:T(1,128)}', space=vmem, size = 0x12000, scoped, tag = 'internal scratch']
  #allocation2 [shape = 'f32[1,18,18,3]{3,2,1,0:T(8,128)}', space=vmem, size = 0x36000, scoped, tag = 'scratch operand']
  #allocation3 [shape = 'f32[1,10,10,24]{3,2,1,0:T(8,128)}', space=vmem, size = 0x14000, scoped, tag = 'scratch operand']
  #allocation4 [shape = 'f32[1,6,6,48]{3,2,1,0:T(8,128)}', space=vmem, size = 0x6000, scoped, tag = 'scratch operand']
  #allocation5 [shape = 'f32[1,1]{1,0:T(1,128)S(1)}', space=vmem, size = 0x200, scoped, tag = 'scoped memory for simple_cnn_forward.1']
  %s0 = inlined_call_operand.vmem [shape: f32[2,16,16,3], index: 0, kind: input, shape index: {}]
  %s1 = inlined_call_operand.vmem [shape: f32[9,3,24], index: 1, kind: input, shape index: {}]
  %s2 = inlined_call_operand.vmem [shape: f32[1,24], index: 2, kind: input, shape index: {}]
  %s3 = inlined_call_operand.vmem [shape: f32[9,24,48], index: 3, kind: input, shape index: {}]
  %s4 = inlined_call_operand.vmem [shape: f32[1,48], index: 4, kind: input, shape index: {}]
  %s5 = inlined_call_operand.vmem [shape: f32[9,48,24], index: 5, kind: input, shape index: {}]
  %s6 = inlined_call_operand.vmem [shape: f32[1,24], index: 6, kind: input, shape index: {}]
  %s7 = inlined_call_operand.vmem [shape: f32[1,1,24], index: 7, kind: input, shape index: {}]
  %s8 = inlined_call_operand.<no memory space> [shape: f32[1,1], index: 8, kind: input, shape index: {}]
  %s9 = inlined_call_operand.hbm [shape: f32[2,4,4], index: 9, kind: output, shape index: {}]
  %s10 = sld [smem:[#allocation0]]
  $region69: #{simple_cnn_forward.1} parent=0
    _
  %s12 = ssub.s32 1, %s10
  %s13 = scalar_select 0, %s12, %s10
  %v14 = vstv %s8
  %15 = vst [vmem:[#allocation5] sm:$0x1] %v14
  $region1: #{simple_cnn_forward.1} parent=0
    #allocation6 [shape = 'u8[4096]{0}', space=vmem, size = 0x1000, scoped, tag = 'output window, operand 0']
    #allocation7 [shape = 's32[2]{0}', space=sflag, size = 0x8, scoped, tag = 'scoped memory for simple_cnn_forward.1']
    %16 = vsyncpa [#allocation7], 0
    %s17 = scalar_lea.sflag [#allocation7], 1
    %18 = vsyncpa %s17, 0
    loop: start=0, step=1, limit=4
    $region2: #{simple_cnn_forward.1} parent=1 // loop_pre_header
      _
    $region3: #{simple_cnn_forward.1} parent=1 // loop_header
      %s20 = sphi 0, %s24
      %p21 = scmp.ge.s32.totalorder %s20, 4
      %s30 = sphi 0, %s32
      %s33 = sphi 0, %s30
      %s34 = sphi 0, %s33
      %s50 = sphi 0, %s34
      %s54 = sphi 0, %s54
      %s56 = sphi 0, %s54
      %s57 = sphi 0, %s56
      %s71 = sphi 0, %s57
      %s75 = sphi 0, %s75
      %s77 = sphi 0, %s75
      %s78 = sphi 0, %s77
      %s92 = sphi 0, %s78
      %s96 = sphi 0, %s96
      %s98 = sphi 0, %s96
      %s99 = sphi 0, %s98
      %s113 = sphi 0, %s99
      %s117 = sphi 0, %s117
      %s119 = sphi 0, %s117
      %s120 = sphi 0, %s119
      %s134 = sphi 0, %s120
      %s138 = sphi 0, %s138
      %s140 = sphi 0, %s138
      %s141 = sphi 0, %s140
      %s155 = sphi 0, %s141
      %s159 = sphi 0, %s159
      %s161 = sphi 0, %s159
      %s162 = sphi 0, %s161
      %s176 = sphi 0, %s162
      %s180 = sphi 0, %s180
      %s182 = sphi 0, %s180
      %s183 = sphi 0, %s182
      %s197 = sphi 0, %s183
      %s201 = sphi 0, %s201
      %s203 = sphi 0, %s201
      %s204 = sphi 0, %s203
      %s218 = sphi 0, %s204
      %s224 = sphi 0, %s226
      %s227 = sphi 0, %s224
      %s228 = sphi 0, %s227
      %s244 = sphi 0, %s228
    $region4: #{simple_cnn_forward.1} parent=1 // loop_header_branch
      %23 = sbr.rel (%p21) target = $region8
    $region5: #{simple_cnn_forward.1} parent=1 // loop_body
      %s25 = ssub.s32 %s20, 1
      %s26 = ssub.s32 %s20, 2
      %s27 = sadd.s32 %s20, 1
      %s28 = ssub.s32 %s20, %s27
      %p29 = scmp.eq.s32.totalorder %s28, 0
      %s31 = sadd.s32 %s30, 1
      %s32 = scalar_select %p29, %s30, %s31
      %p35 = pneg %p29
      %p36 = scmp.eq.s32.totalorder %s20, 1
      %p37 = por %p35, %p36
      %p38 = scmp.ne.s32.totalorder %s30, %s33
      %p39 = scmp.eq.s32.totalorder %s20, 0
      %p40 = por %p38, %p39
      %p41 = scmp.ne.s32.totalorder %s30, %s33
      %p42 = scmp.eq.s32.totalorder %s25, 1
      %p43 = por %p41, %p42
      %p44 = scmp.ne.s32.totalorder %s33, %s34
      %p45 = scmp.eq.s32.totalorder %s25, 0
      %p46 = por %p44, %p45
      %p47 = scmp.ne.s32.totalorder %s33, %s34
      %p48 = scmp.eq.s32.totalorder %s26, 1
      %p49 = por %p47, %p48
      %p51 = scmp.ne.s32.totalorder %s34, %s50
      %p52 = scmp.eq.s32.totalorder %s26, 0
      %p53 = por %p51, %p52
      %s55 = sadd.s32 %s54, 1
      %p58 = scmp.eq.s32.totalorder %s20, 1
      %p59 = scmp.ne.s32.totalorder %s54, %s56
      %p60 = scmp.eq.s32.totalorder %s20, 0
      %p61 = por %p59, %p60
      %p62 = scmp.ne.s32.totalorder %s54, %s56
      %p63 = scmp.eq.s32.totalorder %s25, 1
      %p64 = por %p62, %p63
      %p65 = scmp.ne.s32.totalorder %s56, %s57
      %p66 = scmp.eq.s32.totalorder %s25, 0
      %p67 = por %p65, %p66
      %p68 = scmp.ne.s32.totalorder %s56, %s57
      %p69 = scmp.eq.s32.totalorder %s26, 1
      %p70 = por %p68, %p69
      %p72 = scmp.ne.s32.totalorder %s57, %s71
      %p73 = scmp.eq.s32.totalorder %s26, 0
      %p74 = por %p72, %p73
      %s76 = sadd.s32 %s75, 1
      %p79 = scmp.eq.s32.totalorder %s20, 1
      %p80 = scmp.ne.s32.totalorder %s75, %s77
      %p81 = scmp.eq.s32.totalorder %s20, 0
      %p82 = por %p80, %p81
      %p83 = scmp.ne.s32.totalorder %s75, %s77
      %p84 = scmp.eq.s32.totalorder %s25, 1
      %p85 = por %p83, %p84
      %p86 = scmp.ne.s32.totalorder %s77, %s78
      %p87 = scmp.eq.s32.totalorder %s25, 0
      %p88 = por %p86, %p87
      %p89 = scmp.ne.s32.totalorder %s77, %s78
      %p90 = scmp.eq.s32.totalorder %s26, 1
      %p91 = por %p89, %p90
      %p93 = scmp.ne.s32.totalorder %s78, %s92
      %p94 = scmp.eq.s32.totalorder %s26, 0
      %p95 = por %p93, %p94
      %s97 = sadd.s32 %s96, 1
      %p100 = scmp.eq.s32.totalorder %s20, 1
      %p101 = scmp.ne.s32.totalorder %s96, %s98
      %p102 = scmp.eq.s32.totalorder %s20, 0
      %p103 = por %p101, %p102
      %p104 = scmp.ne.s32.totalorder %s96, %s98
      %p105 = scmp.eq.s32.totalorder %s25, 1
      %p106 = por %p104, %p105
      %p107 = scmp.ne.s32.totalorder %s98, %s99
      %p108 = scmp.eq.s32.totalorder %s25, 0
      %p109 = por %p107, %p108
      %p110 = scmp.ne.s32.totalorder %s98, %s99
      %p111 = scmp.eq.s32.totalorder %s26, 1
      %p112 = por %p110, %p111
      %p114 = scmp.ne.s32.totalorder %s99, %s113
      %p115 = scmp.eq.s32.totalorder %s26, 0
      %p116 = por %p114, %p115
      %s118 = sadd.s32 %s117, 1
      %p121 = scmp.eq.s32.totalorder %s20, 1
      %p122 = scmp.ne.s32.totalorder %s117, %s119
      %p123 = scmp.eq.s32.totalorder %s20, 0
      %p124 = por %p122, %p123
      %p125 = scmp.ne.s32.totalorder %s117, %s119
      %p126 = scmp.eq.s32.totalorder %s25, 1
      %p127 = por %p125, %p126
      %p128 = scmp.ne.s32.totalorder %s119, %s120
      %p129 = scmp.eq.s32.totalorder %s25, 0
      %p130 = por %p128, %p129
      %p131 = scmp.ne.s32.totalorder %s119, %s120
      %p132 = scmp.eq.s32.totalorder %s26, 1
      %p133 = por %p131, %p132
      %p135 = scmp.ne.s32.totalorder %s120, %s134
      %p136 = scmp.eq.s32.totalorder %s26, 0
      %p137 = por %p135, %p136
      %s139 = sadd.s32 %s138, 1
      %p142 = scmp.eq.s32.totalorder %s20, 1
      %p143 = scmp.ne.s32.totalorder %s138, %s140
      %p144 = scmp.eq.s32.totalorder %s20, 0
      %p145 = por %p143, %p144
      %p146 = scmp.ne.s32.totalorder %s138, %s140
      %p147 = scmp.eq.s32.totalorder %s25, 1
      %p148 = por %p146, %p147
      %p149 = scmp.ne.s32.totalorder %s140, %s141
      %p150 = scmp.eq.s32.totalorder %s25, 0
      %p151 = por %p149, %p150
      %p152 = scmp.ne.s32.totalorder %s140, %s141
      %p153 = scmp.eq.s32.totalorder %s26, 1
      %p154 = por %p152, %p153
      %p156 = scmp.ne.s32.totalorder %s141, %s155
      %p157 = scmp.eq.s32.totalorder %s26, 0
      %p158 = por %p156, %p157
      %s160 = sadd.s32 %s159, 1
      %p163 = scmp.eq.s32.totalorder %s20, 1
      %p164 = scmp.ne.s32.totalorder %s159, %s161
      %p165 = scmp.eq.s32.totalorder %s20, 0
      %p166 = por %p164, %p165
      %p167 = scmp.ne.s32.totalorder %s159, %s161
      %p168 = scmp.eq.s32.totalorder %s25, 1
      %p169 = por %p167, %p168
      %p170 = scmp.ne.s32.totalorder %s161, %s162
      %p171 = scmp.eq.s32.totalorder %s25, 0
      %p172 = por %p170, %p171
      %p173 = scmp.ne.s32.totalorder %s161, %s162
      %p174 = scmp.eq.s32.totalorder %s26, 1
      %p175 = por %p173, %p174
      %p177 = scmp.ne.s32.totalorder %s162, %s176
      %p178 = scmp.eq.s32.totalorder %s26, 0
      %p179 = por %p177, %p178
      %s181 = sadd.s32 %s180, 1
      %p184 = scmp.eq.s32.totalorder %s20, 1
      %p185 = scmp.ne.s32.totalorder %s180, %s182
      %p186 = scmp.eq.s32.totalorder %s20, 0
      %p187 = por %p185, %p186
      %p188 = scmp.ne.s32.totalorder %s180, %s182
      %p189 = scmp.eq.s32.totalorder %s25, 1
      %p190 = por %p188, %p189
      %p191 = scmp.ne.s32.totalorder %s182, %s183
      %p192 = scmp.eq.s32.totalorder %s25, 0
      %p193 = por %p191, %p192
      %p194 = scmp.ne.s32.totalorder %s182, %s183
      %p195 = scmp.eq.s32.totalorder %s26, 1
      %p196 = por %p194, %p195
      %p198 = scmp.ne.s32.totalorder %s183, %s197
      %p199 = scmp.eq.s32.totalorder %s26, 0
      %p200 = por %p198, %p199
      %s202 = sadd.s32 %s201, 1
      %p205 = scmp.eq.s32.totalorder %s20, 1
      %p206 = scmp.ne.s32.totalorder %s201, %s203
      %p207 = scmp.eq.s32.totalorder %s20, 0
      %p208 = por %p206, %p207
      %p209 = scmp.ne.s32.totalorder %s201, %s203
      %p210 = scmp.eq.s32.totalorder %s25, 1
      %p211 = por %p209, %p210
      %p212 = scmp.ne.s32.totalorder %s203, %s204
      %p213 = scmp.eq.s32.totalorder %s25, 0
      %p214 = por %p212, %p213
      %p215 = scmp.ne.s32.totalorder %s203, %s204
      %p216 = scmp.eq.s32.totalorder %s26, 1
      %p217 = por %p215, %p216
      %p219 = scmp.ne.s32.totalorder %s204, %s218
      %p220 = scmp.eq.s32.totalorder %s26, 0
      %p221 = por %p219, %p220
      %s222 = ssub.s32 %s20, %s27
      %p223 = scmp.eq.s32.totalorder %s222, 0
      %s225 = sadd.s32 %s224, 1
      %s226 = scalar_select %p223, %s224, %s225
      %p229 = pneg %p223
      %p230 = scmp.eq.s32.totalorder %s20, 1
      %p231 = por %p229, %p230
      %p232 = scmp.ne.s32.totalorder %s224, %s227
      %p233 = scmp.eq.s32.totalorder %s20, 0
      %p234 = por %p232, %p233
      %p235 = scmp.ne.s32.totalorder %s224, %s227
      %p236 = scmp.eq.s32.totalorder %s25, 1
      %p237 = por %p235, %p236
      %p238 = scmp.ne.s32.totalorder %s227, %s228
      %p239 = scmp.eq.s32.totalorder %s25, 0
      %p240 = por %p238, %p239
      %p241 = scmp.ne.s32.totalorder %s227, %s228
      %p242 = scmp.eq.s32.totalorder %s26, 1
      %p243 = por %p241, %p242
      %p245 = scmp.ne.s32.totalorder %s228, %s244
      %p246 = scmp.eq.s32.totalorder %s26, 0
      %p247 = por %p245, %p246
      %p248 = scmp.le.s32.totalorder 1, %s20
      %p249 = scmp.lt.s32.totalorder %s20, 3
      %p250 = pnand %p248, %p249
      %p251 = pneg %p250
      // Predicated region
      $region9: #{simple_cnn_forward.1} parent=5 // pred_check
        _
      $region10: #{simple_cnn_forward.1} parent=5 // pred_check_branch
        %253 = sbr.rel (%p250) target = $region12
      $region11: #{simple_cnn_forward.1} parent=5 // pred_region
        %s254 = ssub.s32 %s20, 1
        // Predicated region
        $region13: #{simple_cnn_forward.1} parent=11 // pred_check
          %p255 = pneg %p67
        $region14: #{simple_cnn_forward.1} parent=11 // pred_check_branch
          %257 = sbr.rel (%p255) target = $region16
        $region15: #{simple_cnn_forward.1} parent=11 // pred_region
          _
        $region16: #{simple_cnn_forward.1} parent=11 // pred_fallthru
          _
        // Predicated region
        $region17: #{simple_cnn_forward.1} parent=11 // pred_check
          %p258 = pneg %p88
        $region18: #{simple_cnn_forward.1} parent=11 // pred_check_branch
          %260 = sbr.rel (%p258) target = $region20
        $region19: #{simple_cnn_forward.1} parent=11 // pred_region
          _
        $region20: #{simple_cnn_forward.1} parent=11 // pred_fallthru
          _
        // Predicated region
        $region21: #{simple_cnn_forward.1} parent=11 // pred_check
          %p261 = pneg %p109
        $region22: #{simple_cnn_forward.1} parent=11 // pred_check_branch
          %263 = sbr.rel (%p261) target = $region24
        $region23: #{simple_cnn_forward.1} parent=11 // pred_region
          _
        $region24: #{simple_cnn_forward.1} parent=11 // pred_fallthru
          _
        // Predicated region
        $region25: #{simple_cnn_forward.1} parent=11 // pred_check
          %p264 = pneg %p130
        $region26: #{simple_cnn_forward.1} parent=11 // pred_check_branch
          %266 = sbr.rel (%p264) target = $region28
        $region27: #{simple_cnn_forward.1} parent=11 // pred_region
          _
        $region28: #{simple_cnn_forward.1} parent=11 // pred_fallthru
          _
        // Predicated region
        $region29: #{simple_cnn_forward.1} parent=11 // pred_check
          %p267 = pneg %p151
        $region30: #{simple_cnn_forward.1} parent=11 // pred_check_branch
          %269 = sbr.rel (%p267) target = $region32
        $region31: #{simple_cnn_forward.1} parent=11 // pred_region
          _
        $region32: #{simple_cnn_forward.1} parent=11 // pred_fallthru
          _
        // Predicated region
        $region33: #{simple_cnn_forward.1} parent=11 // pred_check
          %p270 = pneg %p172
        $region34: #{simple_cnn_forward.1} parent=11 // pred_check_branch
          %272 = sbr.rel (%p270) target = $region36
        $region35: #{simple_cnn_forward.1} parent=11 // pred_region
          _
        $region36: #{simple_cnn_forward.1} parent=11 // pred_fallthru
          _
        // Predicated region
        $region37: #{simple_cnn_forward.1} parent=11 // pred_check
          %p273 = pneg %p193
        $region38: #{simple_cnn_forward.1} parent=11 // pred_check_branch
          %275 = sbr.rel (%p273) target = $region40
        $region39: #{simple_cnn_forward.1} parent=11 // pred_region
          _
        $region40: #{simple_cnn_forward.1} parent=11 // pred_fallthru
          _
        // Predicated region
        $region41: #{simple_cnn_forward.1} parent=11 // pred_check
          %p276 = pneg %p214
        $region42: #{simple_cnn_forward.1} parent=11 // pred_check_branch
          %278 = sbr.rel (%p276) target = $region44
        $region43: #{simple_cnn_forward.1} parent=11 // pred_region
          _
        $region44: #{simple_cnn_forward.1} parent=11 // pred_fallthru
          _
      $region12: #{simple_cnn_forward.1} parent=5 // pred_fallthru
        _
      %p279 = scmp.lt.s32.totalorder %s20, 2
      // Predicated region
      $region45: #{simple_cnn_forward.1} parent=5 // pred_check
        %p280 = pneg %p279
      $region46: #{simple_cnn_forward.1} parent=5 // pred_check_branch
        %282 = sbr.rel (%p280) target = $region48
      $region47: #{simple_cnn_forward.1} parent=5 // pred_region
        // Predicated region
        $region49: #{simple_cnn_forward.1} parent=47 // pred_check
          %p283 = pneg %p40
        $region50: #{simple_cnn_forward.1} parent=47 // pred_check_branch
          %285 = sbr.rel (%p283) target = $region52
        $region51: #{simple_cnn_forward.1} parent=47 // pred_region
          %p286 = scmp.lt.s32.totalorder %s20, 1
          %s287 = scalar_select %p286, %s20, 1
          %s288 = smul.addr %s287, 32
          %s289 = smul.addr %s288, 8
          %s290 = scalar_lea.vmem %s0, %s289
        $region52: #{simple_cnn_forward.1} parent=47 // pred_fallthru
          _
      $region48: #{simple_cnn_forward.1} parent=5 // pred_fallthru
        _
      %p291 = scmp.le.s32.totalorder 1, %s20
      %p292 = scmp.lt.s32.totalorder %s20, 3
      %p293 = pnand %p291, %p292
      %p294 = pneg %p293
      // Predicated region
      $region53: #{simple_cnn_forward.1} parent=5 // pred_check
        _
      $region54: #{simple_cnn_forward.1} parent=5 // pred_check_branch
        %296 = sbr.rel (%p293) target = $region56
      $region55: #{simple_cnn_forward.1} parent=5 // pred_region
        %s297 = ssub.s32 %s20, 1
        %p298 = scmp.lt.s32.totalorder %s25, 1
        %s299 = scalar_select %p298, %s25, 1
        %s300 = smul.addr %s299, 32
        %s301 = smul.addr %s300, 8
        %s302 = scalar_lea.vmem %s0, %s301
        %p303 = pneg %p46
        %p304 = pneg %p43
        %p305 = pneg %p67
        %p306 = pneg %p64
        %p307 = pneg %p88
        %p308 = pneg %p85
        %p309 = pneg %p109
        %p310 = pneg %p106
        %p311 = pneg %p130
        %p312 = pneg %p127
        %p313 = pneg %p151
        %p314 = pneg %p148
        %p315 = pneg %p172
        %p316 = pneg %p169
        %p317 = pneg %p193
        %p318 = pneg %p190
        %p319 = pneg %p214
        %p320 = pneg %p211
        %p321 = pneg %p240
        %p322 = pneg %p237
        %s323 = sand.u32 %s227, 1
        %s324 = scalar_lea.sflag [#allocation7], %s323
        %s325 = sand.u32 %s227, 1
        %s326 = smul.addr %s325, 4
        %s327 = scalar_lea.vmem [#allocation6], %s326
        %p328 = scmp.lt.s32.totalorder %s25, 1
        %s329 = scalar_select %p328, %s25, 1
        %s330 = smul.addr %s329, 32
        %s331 = smul.addr %s330, 8
        %s332 = scalar_lea.vmem %s0, %s331
        %vm333 = vcmask 23552
        %334 = vst.msk [vmem:[#allocation2] sm:$0xff] %vm333, 0.0
        %335 = vst.msk [vmem:[#allocation2 + $0x8] sm:$0xff] %vm333, 0.0
        %vm336 = vcmask 17408
        %337 = vst.msk [vmem:[#allocation2 + $0x10] sm:$0x3] %vm336, 0.0
        %s338 = scalar_lea.vmem [#allocation2], 408
        %339 = vst.msk [vmem:[%s338] sm:$0xff] %vm333, 0.0
        %340 = vst.msk [vmem:[%s338 + $0x8] sm:$0xff] %vm333, 0.0
        %341 = vst.msk [vmem:[%s338 + $0x10] sm:$0x3] %vm336, 0.0
        %vm342 = vcmask 16384
        %343 = vst.msk [vmem:[#allocation2] sm:$0x1] %vm342, 0.0
        %344 = vst.msk [vmem:[#allocation2 + $0x18] sm:$0x1] %vm342, 0.0
        %345 = vst.msk [vmem:[#allocation2 + $0x30] sm:$0x1] %vm342, 0.0
        %346 = vst.msk [vmem:[#allocation2 + $0x48] sm:$0x1] %vm342, 0.0
        %347 = vst.msk [vmem:[#allocation2 + $0x60] sm:$0x1] %vm342, 0.0
        %348 = vst.msk [vmem:[#allocation2 + $0x78] sm:$0x1] %vm342, 0.0
        %349 = vst.msk [vmem:[#allocation2 + $0x90] sm:$0x1] %vm342, 0.0
        %350 = vst.msk [vmem:[#allocation2 + $0xa8] sm:$0x1] %vm342, 0.0
        %351 = vst.msk [vmem:[#allocation2 + $0xc0] sm:$0x1] %vm342, 0.0
        %352 = vst.msk [vmem:[#allocation2 + $0xd8] sm:$0x1] %vm342, 0.0
        %353 = vst.msk [vmem:[#allocation2 + $0xf0] sm:$0x1] %vm342, 0.0
        %354 = vst.msk [vmem:[#allocation2 + $0x108] sm:$0x1] %vm342, 0.0
        %355 = vst.msk [vmem:[#allocation2 + $0x120] sm:$0x1] %vm342, 0.0
        %356 = vst.msk [vmem:[#allocation2 + $0x138] sm:$0x1] %vm342, 0.0
        %357 = vst.msk [vmem:[#allocation2 + $0x150] sm:$0x1] %vm342, 0.0
        %358 = vst.msk [vmem:[#allocation2 + $0x168] sm:$0x1] %vm342, 0.0
        %359 = vst.msk [vmem:[#allocation2 + $0x180] sm:$0x1] %vm342, 0.0
        %360 = vst.msk [vmem:[#allocation2 + $0x198] sm:$0x1] %vm342, 0.0
        %361 = vst.msk [vmem:[#allocation2 + $0x11] sm:$0x1] %vm342, 0.0
        %362 = vst.msk [vmem:[#allocation2 + $0x29] sm:$0x1] %vm342, 0.0
        %363 = vst.msk [vmem:[#allocation2 + $0x41] sm:$0x1] %vm342, 0.0
        %364 = vst.msk [vmem:[#allocation2 + $0x59] sm:$0x1] %vm342, 0.0
        %365 = vst.msk [vmem:[#allocation2 + $0x71] sm:$0x1] %vm342, 0.0
        %366 = vst.msk [vmem:[#allocation2 + $0x89] sm:$0x1] %vm342, 0.0
        %367 = vst.msk [vmem:[#allocation2 + $0xa1] sm:$0x1] %vm342, 0.0
        %368 = vst.msk [vmem:[#allocation2 + $0xb9] sm:$0x1] %vm342, 0.0
        %369 = vst.msk [vmem:[#allocation2 + $0xd1] sm:$0x1] %vm342, 0.0
        %370 = vst.msk [vmem:[#allocation2 + $0xe9] sm:$0x1] %vm342, 0.0
        %371 = vst.msk [vmem:[#allocation2 + $0x101] sm:$0x1] %vm342, 0.0
        %372 = vst.msk [vmem:[#allocation2 + $0x119] sm:$0x1] %vm342, 0.0
        %373 = vst.msk [vmem:[#allocation2 + $0x131] sm:$0x1] %vm342, 0.0
        %374 = vst.msk [vmem:[#allocation2 + $0x149] sm:$0x1] %vm342, 0.0
        %375 = vst.msk [vmem:[#allocation2 + $0x161] sm:$0x1] %vm342, 0.0
        %376 = vst.msk [vmem:[#allocation2 + $0x179] sm:$0x1] %vm342, 0.0
        %377 = vst.msk [vmem:[#allocation2 + $0x191] sm:$0x1] %vm342, 0.0
        %378 = vst.msk [vmem:[#allocation2 + $0x1a9] sm:$0x1] %vm342, 0.0
        %vm379 = vcmask 195584
        %380 = vst.msk [vmem:[#allocation3] sm:$0xff] %vm379, 0.0
        %vm381 = vcmask 189440
        %382 = vst.msk [vmem:[#allocation3 + $0x8] sm:$0x3] %vm381, 0.0
        %s383 = scalar_lea.vmem [#allocation3], 144
        %384 = vst.msk [vmem:[%s383] sm:$0xff] %vm379, 0.0
        %385 = vst.msk [vmem:[%s383 + $0x8] sm:$0x3] %vm381, 0.0
        %vm386 = vcmask 188416
        %387 = vst.msk [vmem:[#allocation3] sm:$0x1] %vm386, 0.0
        %388 = vst.msk [vmem:[#allocation3 + $0x10] sm:$0x1] %vm386, 0.0
        %389 = vst.msk [vmem:[#allocation3 + $0x20] sm:$0x1] %vm386, 0.0
        %390 = vst.msk [vmem:[#allocation3 + $0x30] sm:$0x1] %vm386, 0.0
        %391 = vst.msk [vmem:[#allocation3 + $0x40] sm:$0x1] %vm386, 0.0
        %392 = vst.msk [vmem:[#allocation3 + $0x50] sm:$0x1] %vm386, 0.0
        %393 = vst.msk [vmem:[#allocation3 + $0x60] sm:$0x1] %vm386, 0.0
        %394 = vst.msk [vmem:[#allocation3 + $0x70] sm:$0x1] %vm386, 0.0
        %395 = vst.msk [vmem:[#allocation3 + $0x80] sm:$0x1] %vm386, 0.0
        %396 = vst.msk [vmem:[#allocation3 + $0x90] sm:$0x1] %vm386, 0.0
        %397 = vst.msk [vmem:[#allocation3 + $0x9] sm:$0x1] %vm386, 0.0
        %398 = vst.msk [vmem:[#allocation3 + $0x19] sm:$0x1] %vm386, 0.0
        %399 = vst.msk [vmem:[#allocation3 + $0x29] sm:$0x1] %vm386, 0.0
        %400 = vst.msk [vmem:[#allocation3 + $0x39] sm:$0x1] %vm386, 0.0
        %401 = vst.msk [vmem:[#allocation3 + $0x49] sm:$0x1] %vm386, 0.0
        %402 = vst.msk [vmem:[#allocation3 + $0x59] sm:$0x1] %vm386, 0.0
        %403 = vst.msk [vmem:[#allocation3 + $0x69] sm:$0x1] %vm386, 0.0
        %404 = vst.msk [vmem:[#allocation3 + $0x79] sm:$0x1] %vm386, 0.0
        %405 = vst.msk [vmem:[#allocation3 + $0x89] sm:$0x1] %vm386, 0.0
        %406 = vst.msk [vmem:[#allocation3 + $0x99] sm:$0x1] %vm386, 0.0
        %vm407 = vcmask 390144
        %408 = vst.msk [vmem:[#allocation4] sm:$0x3f] %vm407, 0.0
        %s409 = scalar_lea.vmem [#allocation4], 40
        %410 = vst.msk [vmem:[%s409] sm:$0x3f] %vm407, 0.0
        %vm411 = vcmask 385024
        %412 = vst.msk [vmem:[#allocation4] sm:$0x1] %vm411, 0.0
        %413 = vst.msk [vmem:[#allocation4 + $0x8] sm:$0x1] %vm411, 0.0
        %414 = vst.msk [vmem:[#allocation4 + $0x10] sm:$0x1] %vm411, 0.0
        %415 = vst.msk [vmem:[#allocation4 + $0x18] sm:$0x1] %vm411, 0.0
        %416 = vst.msk [vmem:[#allocation4 + $0x20] sm:$0x1] %vm411, 0.0
        %417 = vst.msk [vmem:[#allocation4 + $0x28] sm:$0x1] %vm411, 0.0
        %418 = vst.msk [vmem:[#allocation4 + $0x5] sm:$0x1] %vm411, 0.0
        %419 = vst.msk [vmem:[#allocation4 + $0xd] sm:$0x1] %vm411, 0.0
        %420 = vst.msk [vmem:[#allocation4 + $0x15] sm:$0x1] %vm411, 0.0
        %421 = vst.msk [vmem:[#allocation4 + $0x1d] sm:$0x1] %vm411, 0.0
        %422 = vst.msk [vmem:[#allocation4 + $0x25] sm:$0x1] %vm411, 0.0
        %423 = vst.msk [vmem:[#allocation4 + $0x2d] sm:$0x1] %vm411, 0.0
        %v424 = vld [vmem:[%s332] sm:$0xff]
        %v425 = vld [vmem:[%s332 + $0x8] sm:$0xff]
        %v426 = vld [vmem:[%s332 + $0x10] sm:$0xff]
        %v427 = vld [vmem:[%s332 + $0x18] sm:$0xff]
        %v428 = vld [vmem:[%s332 + $0x20] sm:$0xff]
        %v429 = vld [vmem:[%s332 + $0x28] sm:$0xff]
        %v430 = vld [vmem:[%s332 + $0x30] sm:$0xff]
        %v431 = vld [vmem:[%s332 + $0x38] sm:$0xff]
        %v432 = vld [vmem:[%s332 + $0x40] sm:$0xff]
        %v433 = vld [vmem:[%s332 + $0x48] sm:$0xff]
        %v434 = vld [vmem:[%s332 + $0x50] sm:$0xff]
        %v435 = vld [vmem:[%s332 + $0x58] sm:$0xff]
        %v436 = vld [vmem:[%s332 + $0x60] sm:$0xff]
        %v437 = vld [vmem:[%s332 + $0x68] sm:$0xff]
        %v438 = vld [vmem:[%s332 + $0x70] sm:$0xff]
        %v439 = vld [vmem:[%s332 + $0x78] sm:$0xff]
        %v440 = vld [vmem:[%s332 + $0x80] sm:$0xff]
        %v441 = vld [vmem:[%s332 + $0x88] sm:$0xff]
        %v442 = vld [vmem:[%s332 + $0x90] sm:$0xff]
        %v443 = vld [vmem:[%s332 + $0x98] sm:$0xff]
        %v444 = vld [vmem:[%s332 + $0xa0] sm:$0xff]
        %v445 = vld [vmem:[%s332 + $0xa8] sm:$0xff]
        %v446 = vld [vmem:[%s332 + $0xb0] sm:$0xff]
        %v447 = vld [vmem:[%s332 + $0xb8] sm:$0xff]
        %v448 = vld [vmem:[%s332 + $0xc0] sm:$0xff]
        %v449 = vld [vmem:[%s332 + $0xc8] sm:$0xff]
        %v450 = vld [vmem:[%s332 + $0xd0] sm:$0xff]
        %v451 = vld [vmem:[%s332 + $0xd8] sm:$0xff]
        %v452 = vld [vmem:[%s332 + $0xe0] sm:$0xff]
        %v453 = vld [vmem:[%s332 + $0xe8] sm:$0xff]
        %v454 = vld [vmem:[%s332 + $0xf0] sm:$0xff]
        %v455 = vld [vmem:[%s332 + $0xf8] sm:$0xff]
        %s456 = scalar_lea.vmem [#allocation2], 24
        %457 = vst.msk [vmem:[%s456 + $0x1] sm:$0xff] %vm333, %v424
        %458 = vst.msk [vmem:[%s456 + $0x9] sm:$0xff] %vm333, %v425
        %459 = vst.msk [vmem:[%s456 + $0x19] sm:$0xff] %vm333, %v426
        %460 = vst.msk [vmem:[%s456 + $0x21] sm:$0xff] %vm333, %v427
        %461 = vst.msk [vmem:[%s456 + $0x31] sm:$0xff] %vm333, %v428
        %462 = vst.msk [vmem:[%s456 + $0x39] sm:$0xff] %vm333, %v429
        %463 = vst.msk [vmem:[%s456 + $0x49] sm:$0xff] %vm333, %v430
        %464 = vst.msk [vmem:[%s456 + $0x51] sm:$0xff] %vm333, %v431
        %465 = vst.msk [vmem:[%s456 + $0x61] sm:$0xff] %vm333, %v432
        %466 = vst.msk [vmem:[%s456 + $0x69] sm:$0xff] %vm333, %v433
        %467 = vst.msk [vmem:[%s456 + $0x79] sm:$0xff] %vm333, %v434
        %468 = vst.msk [vmem:[%s456 + $0x81] sm:$0xff] %vm333, %v435
        %469 = vst.msk [vmem:[%s456 + $0x91] sm:$0xff] %vm333, %v436
        %470 = vst.msk [vmem:[%s456 + $0x99] sm:$0xff] %vm333, %v437
        %471 = vst.msk [vmem:[%s456 + $0xa9] sm:$0xff] %vm333, %v438
        %472 = vst.msk [vmem:[%s456 + $0xb1] sm:$0xff] %vm333, %v439
        %473 = vst.msk [vmem:[%s456 + $0xc1] sm:$0xff] %vm333, %v440
        %474 = vst.msk [vmem:[%s456 + $0xc9] sm:$0xff] %vm333, %v441
        %475 = vst.msk [vmem:[%s456 + $0xd9] sm:$0xff] %vm333, %v442
        %476 = vst.msk [vmem:[%s456 + $0xe1] sm:$0xff] %vm333, %v443
        %477 = vst.msk [vmem:[%s456 + $0xf1] sm:$0xff] %vm333, %v444
        %478 = vst.msk [vmem:[%s456 + $0xf9] sm:$0xff] %vm333, %v445
        %479 = vst.msk [vmem:[%s456 + $0x109] sm:$0xff] %vm333, %v446
        %480 = vst.msk [vmem:[%s456 + $0x111] sm:$0xff] %vm333, %v447
        %481 = vst.msk [vmem:[%s456 + $0x121] sm:$0xff] %vm333, %v448
        %482 = vst.msk [vmem:[%s456 + $0x129] sm:$0xff] %vm333, %v449
        %483 = vst.msk [vmem:[%s456 + $0x139] sm:$0xff] %vm333, %v450
        %484 = vst.msk [vmem:[%s456 + $0x141] sm:$0xff] %vm333, %v451
        %485 = vst.msk [vmem:[%s456 + $0x151] sm:$0xff] %vm333, %v452
        %486 = vst.msk [vmem:[%s456 + $0x159] sm:$0xff] %vm333, %v453
        %487 = vst.msk [vmem:[%s456 + $0x169] sm:$0xff] %vm333, %v454
        %488 = vst.msk [vmem:[%s456 + $0x171] sm:$0xff] %vm333, %v455
        %v489 = vld [vmem:[%s2] sm:$0x1]
        %v490 = vld [vmem:[%s4] sm:$0x1]
        %v491 = vld [vmem:[%s6] sm:$0x1]
        %v492 = vld [vmem:[#allocation2] sm:$0xff]
        %v493 = vld [vmem:[#allocation2 + $0x8] sm:$0xff]
        %v494 = vld [vmem:[#allocation2 + $0x18] sm:$0xff]
        %v495 = vld [vmem:[#allocation2 + $0x20] sm:$0xff]
        %v496 = vld [vmem:[#allocation2 + $0x30] sm:$0xff]
        %v497 = vld [vmem:[#allocation2 + $0x38] sm:$0xff]
        %v498 = vld [vmem:[#allocation2 + $0x48] sm:$0xff]
        %v499 = vld [vmem:[#allocation2 + $0x50] sm:$0xff]
        %v500 = vld [vmem:[#allocation2 + $0x60] sm:$0xff]
        %v501 = vld [vmem:[#allocation2 + $0x68] sm:$0xff]
        %v502 = vld [vmem:[#allocation2 + $0x78] sm:$0xff]
        %v503 = vld [vmem:[#allocation2 + $0x80] sm:$0xff]
        %v504 = vld [vmem:[#allocation2 + $0x90] sm:$0xff]
        %v505 = vld [vmem:[#allocation2 + $0x98] sm:$0xff]
        %v506 = vld [vmem:[#allocation2 + $0xa8] sm:$0xff]
        %v507 = vld [vmem:[#allocation2 + $0xb0] sm:$0xff]
        %v508 = vld [vmem:[#allocation2 + $0xc0] sm:$0xff]
        %v509 = vld [vmem:[#allocation2 + $0xc8] sm:$0xff]
        %v510 = vld [vmem:[#allocation2 + $0xd8] sm:$0xff]
        %v511 = vld [vmem:[#allocation2 + $0xe0] sm:$0xff]
        %v512 = vld [vmem:[#allocation2 + $0xf0] sm:$0xff]
        %v513 = vld [vmem:[#allocation2 + $0xf8] sm:$0xff]
        %v514 = vld [vmem:[#allocation2 + $0x108] sm:$0xff]
        %v515 = vld [vmem:[#allocation2 + $0x110] sm:$0xff]
        %v516 = vld [vmem:[#allocation2 + $0x120] sm:$0xff]
        %v517 = vld [vmem:[#allocation2 + $0x128] sm:$0xff]
        %v518 = vld [vmem:[#allocation2 + $0x138] sm:$0xff]
        %v519 = vld [vmem:[#allocation2 + $0x140] sm:$0xff]
        %v520 = vld [vmem:[#allocation2 + $0x150] sm:$0xff]
        %v521 = vld [vmem:[#allocation2 + $0x158] sm:$0xff]
        %v522 = vld [vmem:[#allocation2 + $0x168] sm:$0xff]
        %v523 = vld [vmem:[#allocation2 + $0x170] sm:$0xff]
        %v524 = vld [vmem:[%s1] sm:$0x7]
        %v525 = vld [vmem:[#allocation2 + $0x1] sm:$0xff]
        %v526 = vld [vmem:[#allocation2 + $0x9] sm:$0xff]
        %v527 = vld [vmem:[#allocation2 + $0x19] sm:$0xff]
        %v528 = vld [vmem:[#allocation2 + $0x21] sm:$0xff]
        %v529 = vld [vmem:[#allocation2 + $0x31] sm:$0xff]
        %v530 = vld [vmem:[#allocation2 + $0x39] sm:$0xff]
        %v531 = vld [vmem:[#allocation2 + $0x49] sm:$0xff]
        %v532 = vld [vmem:[#allocation2 + $0x51] sm:$0xff]
        %v533 = vld [vmem:[#allocation2 + $0x61] sm:$0xff]
        %v534 = vld [vmem:[#allocation2 + $0x69] sm:$0xff]
        %v535 = vld [vmem:[#allocation2 + $0x79] sm:$0xff]
        %v536 = vld [vmem:[#allocation2 + $0x81] sm:$0xff]
        %v537 = vld [vmem:[#allocation2 + $0x91] sm:$0xff]
        %v538 = vld [vmem:[#allocation2 + $0x99] sm:$0xff]
        %v539 = vld [vmem:[#allocation2 + $0xa9] sm:$0xff]
        %v540 = vld [vmem:[#allocation2 + $0xb1] sm:$0xff]
        %v541 = vld [vmem:[#allocation2 + $0xc1] sm:$0xff]
        %v542 = vld [vmem:[#allocation2 + $0xc9] sm:$0xff]
        %v543 = vld [vmem:[#allocation2 + $0xd9] sm:$0xff]
        %v544 = vld [vmem:[#allocation2 + $0xe1] sm:$0xff]
        %v545 = vld [vmem:[#allocation2 + $0xf1] sm:$0xff]
        %v546 = vld [vmem:[#allocation2 + $0xf9] sm:$0xff]
        %v547 = vld [vmem:[#allocation2 + $0x109] sm:$0xff]
        %v548 = vld [vmem:[#allocation2 + $0x111] sm:$0xff]
        %v549 = vld [vmem:[#allocation2 + $0x121] sm:$0xff]
        %v550 = vld [vmem:[#allocation2 + $0x129] sm:$0xff]
        %v551 = vld [vmem:[#allocation2 + $0x139] sm:$0xff]
        %v552 = vld [vmem:[#allocation2 + $0x141] sm:$0xff]
        %v553 = vld [vmem:[#allocation2 + $0x151] sm:$0xff]
        %v554 = vld [vmem:[#allocation2 + $0x159] sm:$0xff]
        %v555 = vld [vmem:[#allocation2 + $0x169] sm:$0xff]
        %v556 = vld [vmem:[#allocation2 + $0x171] sm:$0xff]
        %s557 = scalar_lea.vmem %s1, 4
        %v558 = vld [vmem:[%s557] sm:$0x7]
        %v560 = vsel %vm333, %v525, 0
        %v563 = vsel %vm333, %v526, 0
        %v566 = vsel %vm333, %v527, 0
        %v569 = vsel %vm333, %v528, 0
        %v572 = vsel %vm333, %v529, 0
        %v575 = vsel %vm333, %v530, 0
        %v578 = vsel %vm333, %v531, 0
        %v581 = vsel %vm333, %v532, 0
        %v584 = vsel %vm333, %v533, 0
        %v587 = vsel %vm333, %v534, 0
        %v590 = vsel %vm333, %v535, 0
        %v593 = vsel %vm333, %v536, 0
        %v596 = vsel %vm333, %v537, 0
        %v599 = vsel %vm333, %v538, 0
        %v602 = vsel %vm333, %v539, 0
        %v605 = vsel %vm333, %v540, 0
        %v608 = vsel %vm333, %v541, 0
        %v611 = vsel %vm333, %v542, 0
        %v614 = vsel %vm333, %v543, 0
        %v617 = vsel %vm333, %v544, 0
        %v620 = vsel %vm333, %v545, 0
        %v623 = vsel %vm333, %v546, 0
        %v626 = vsel %vm333, %v547, 0
        %v629 = vsel %vm333, %v548, 0
        %v632 = vsel %vm333, %v549, 0
        %v635 = vsel %vm333, %v550, 0
        %v638 = vsel %vm333, %v551, 0
        %v641 = vsel %vm333, %v552, 0
        %v644 = vsel %vm333, %v553, 0
        %v647 = vsel %vm333, %v554, 0
        %v650 = vsel %vm333, %v555, 0
        %v653 = vsel %vm333, %v556, 0
        %vm655 = vcmask 1042432
        %v657 = vsel %vm655, %v558, 0
        %659 = vmatprep.subr.mxu0 0.0
        %660 = vmatpush1.msra.mxu0 %v657
        %661 = vmatprep.subr.mxu0 0.0
        %662 = vmatpush1.msra.mxu0 0.0
        %663 = vmatprep.subr.mxu0 0.0
        %664 = vmatpush1.msra.mxu0 0.0
        %665 = vmatprep.subr.mxu0 0.0
        %666 = vmatpush1.msra.mxu0 0.0
        %667 = vmatprep.subr.mxu0 0.0
        %668 = vmatpush1.msra.mxu0 0.0
        %669 = vmatprep.subr.mxu0 0.0
        %670 = vmatpush1.msra.mxu0 0.0
        %671 = vmatprep.subr.mxu0 0.0
        %672 = vmatpush1.msra.mxu0 0.0
        %673 = vmatprep.subr.mxu0 0.0
        %674 = vmatpush1.msra.mxu0 0.0
        %675 = vmatprep.subr.mxu0 0.0
        %676 = vmatpush1.msra.mxu0 0.0
        %677 = vmatprep.subr.mxu0 0.0
        %678 = vmatpush1.msra.mxu0 0.0
        %679 = vmatprep.subr.mxu0 0.0
        %680 = vmatpush1.msra.mxu0 0.0
        %681 = vmatprep.subr.mxu0 0.0
        %682 = vmatpush1.msra.mxu0 0.0
        %683 = vmatprep.subr.mxu0 0.0
        %684 = vmatpush1.msra.mxu0 0.0
        %685 = vmatprep.subr.mxu0 0.0
        %686 = vmatpush1.msra.mxu0 0.0
        %687 = vmatprep.subr.mxu0 0.0
        %688 = vmatpush1.msra.mxu0 0.0
        %689 = vmatprep.subr.mxu0 0.0
        %690 = vmatpush1.msra.mxu0 0.0
        %691 = vmatprep.subr.mxu0 0.0
        %692 = vmatpush1.msra.mxu0 0.0
        %693 = vmatprep.subr.mxu0 0.0
        %694 = vmatpush1.msra.mxu0 0.0
        %695 = vmatprep.subr.mxu0 0.0
        %696 = vmatpush1.msra.mxu0 0.0
        %697 = vmatprep.subr.mxu0 0.0
        %698 = vmatpush1.msra.mxu0 0.0
        %699 = vmatprep.subr.mxu0 0.0
        %700 = vmatpush1.msra.mxu0 0.0
        %701 = vmatprep.subr.mxu0 0.0
        %702 = vmatpush1.msra.mxu0 0.0
        %703 = vmatprep.subr.mxu0 0.0
        %704 = vmatpush1.msra.mxu0 0.0
        %705 = vmatprep.subr.mxu0 0.0
        %706 = vmatpush1.msra.mxu0 0.0
        %707 = vmatprep.subr.mxu0 0.0
        %708 = vmatpush1.msra.mxu0 0.0
        %709 = vmatprep.subr.mxu0 0.0
        %710 = vmatpush1.msra.mxu0 0.0
        %711 = vmatprep.subr.mxu0 0.0
        %712 = vmatpush1.msra.mxu0 0.0
        %713 = vmatprep.subr.mxu0 0.0
        %714 = vmatpush1.msra.mxu0 0.0
        %715 = vmatprep.subr.mxu0 0.0
        %716 = vmatpush1.msra.mxu0 0.0
        %717 = vmatprep.subr.mxu0 0.0
        %718 = vmatpush1.msra.mxu0 0.0
        %719 = vmatprep.subr.mxu0 0.0
        %720 = vmatpush1.msra.mxu0 0.0
        %721 = vmatprep.subr.mxu0 0.0
        %722 = vmatpush1.msra.mxu0 0.0
        %723 = vmatprep.mubr.f32.mxu0 0.0
        %724 = vmatmul.mubr.f32.gmra.mrb[0].mxu0 %v560
        %v725 = vpop.f32.mrb[0].mxu0
        %v726 = vadd.f32 0.0, %v725
        %v727 = vpop.f32.mrb[0].mxu0
        %728 = vmatprep.mubr.f32.mxu0 0.0
        %729 = vmatmul.mubr.f32.gmra.mrb[0].mxu0 %v563
        %v730 = vpop.f32.mrb[0].mxu0
        %v731 = vadd.f32 0.0, %v730
        %v732 = vpop.f32.mrb[0].mxu0
        %733 = vmatprep.mubr.f32.mxu0 0.0
        %734 = vmatmul.mubr.f32.gmra.mrb[0].mxu0 %v566
        %v735 = vpop.f32.mrb[0].mxu0
        %v736 = vadd.f32 0.0, %v735
        %v737 = vpop.f32.mrb[0].mxu0
        %738 = vmatprep.mubr.f32.mxu0 0.0
        %739 = vmatmul.mubr.f32.gmra.mrb[0].mxu0 %v569
        %v740 = vpop.f32.mrb[0].mxu0
        %v741 = vadd.f32 0.0, %v740
        %v742 = vpop.f32.mrb[0].mxu0
        %743 = vmatprep.mubr.f32.mxu0 0.0
        %744 = vmatmul.mubr.f32.gmra.mrb[0].mxu0 %v572
        %v745 = vpop.f32.mrb[0].mxu0
        %v746 = vadd.f32 0.0, %v745
        %v747 = vpop.f32.mrb[0].mxu0
        %748 = vmatprep.mubr.f32.mxu0 0.0
        %749 = vmatmul.mubr.f32.gmra.mrb[0].mxu0 %v575
        %v750 = vpop.f32.mrb[0].mxu0
        %v751 = vadd.f32 0.0, %v750
        %v752 = vpop.f32.mrb[0].mxu0
        %753 = vmatprep.mubr.f32.mxu0 0.0
        %754 = vmatmul.mubr.f32.gmra.mrb[0].mxu0 %v578
        %v755 = vpop.f32.mrb[0].mxu0
        %v756 = vadd.f32 0.0, %v755
        %v757 = vpop.f32.mrb[0].mxu0
        %758 = vmatprep.mubr.f32.mxu0 0.0
        %759 = vmatmul.mubr.f32.gmra.mrb[0].mxu0 %v581
        %v760 = vpop.f32.mrb[0].mxu0
        %v761 = vadd.f32 0.0, %v760
        %v762 = vpop.f32.mrb[0].mxu0
        %763 = vmatprep.mubr.f32.mxu0 0.0
        %764 = vmatmul.mubr.f32.gmra.mrb[0].mxu0 %v584
        %v765 = vpop.f32.mrb[0].mxu0
        %v766 = vadd.f32 0.0, %v765
        %v767 = vpop.f32.mrb[0].mxu0
        %768 = vmatprep.mubr.f32.mxu0 0.0
        %769 = vmatmul.mubr.f32.gmra.mrb[0].mxu0 %v587
        %v770 = vpop.f32.mrb[0].mxu0
        %v771 = vadd.f32 0.0, %v770
        %v772 = vpop.f32.mrb[0].mxu0
        %773 = vmatprep.mubr.f32.mxu0 0.0
        %774 = vmatmul.mubr.f32.gmra.mrb[0].mxu0 %v590
        %v775 = vpop.f32.mrb[0].mxu0
        %v776 = vadd.f32 0.0, %v775
        %v777 = vpop.f32.mrb[0].mxu0
        %778 = vmatprep.mubr.f32.mxu0 0.0
        %779 = vmatmul.mubr.f32.gmra.mrb[0].mxu0 %v593
        %v780 = vpop.f32.mrb[0].mxu0
        %v781 = vadd.f32 0.0, %v780
        %v782 = vpop.f32.mrb[0].mxu0
        %783 = vmatprep.mubr.f32.mxu0 0.0
        %784 = vmatmul.mubr.f32.gmra.mrb[0].mxu0 %v596
        %v785 = vpop.f32.mrb[0].mxu0
        %v786 = vadd.f32 0.0, %v785
        %v787 = vpop.f32.mrb[0].mxu0
        %788 = vmatprep.mubr.f32.mxu0 0.0
        %789 = vmatmul.mubr.f32.gmra.mrb[0].mxu0 %v599
        %v790 = vpop.f32.mrb[0].mxu0
        %v791 = vadd.f32 0.0, %v790
        %v792 = vpop.f32.mrb[0].mxu0
        %793 = vmatprep.mubr.f32.mxu0 0.0
        %794 = vmatmul.mubr.f32.gmra.mrb[0].mxu0 %v602
        %v795 = vpop.f32.mrb[0].mxu0
        %v796 = vadd.f32 0.0, %v795
        %v797 = vpop.f32.mrb[0].mxu0
        %798 = vmatprep.mubr.f32.mxu0 0.0
        %799 = vmatmul.mubr.f32.gmra.mrb[0].mxu0 %v605
        %v800 = vpop.f32.mrb[0].mxu0
        %v801 = vadd.f32 0.0, %v800
        %v802 = vpop.f32.mrb[0].mxu0
        %803 = vmatprep.mubr.f32.mxu0 0.0
        %804 = vmatmul.mubr.f32.gmra.mrb[0].mxu0 %v608
        %v805 = vpop.f32.mrb[0].mxu0
        %v806 = vadd.f32 0.0, %v805
        %v807 = vpop.f32.mrb[0].mxu0
        %808 = vmatprep.mubr.f32.mxu0 0.0
        %809 = vmatmul.mubr.f32.gmra.mrb[0].mxu0 %v611
        %v810 = vpop.f32.mrb[0].mxu0
        %v811 = vadd.f32 0.0, %v810
        %v812 = vpop.f32.mrb[0].mxu0
        %813 = vmatprep.mubr.f32.mxu0 0.0
        %814 = vmatmul.mubr.f32.gmra.mrb[0].mxu0 %v614
        %v815 = vpop.f32.mrb[0].mxu0
        %v816 = vadd.f32 0.0, %v815
        %v817 = vpop.f32.mrb[0].mxu0
        %818 = vmatprep.mubr.f32.mxu0 0.0
        %819 = vmatmul.mubr.f32.gmra.mrb[0].mxu0 %v617
        %v820 = vpop.f32.mrb[0].mxu0
        %v821 = vadd.f32 0.0, %v820
        %v822 = vpop.f32.mrb[0].mxu0
        %823 = vmatprep.mubr.f32.mxu0 0.0
        %824 = vmatmul.mubr.f32.gmra.mrb[0].mxu0 %v620
        %v825 = vpop.f32.mrb[0].mxu0
        %v826 = vadd.f32 0.0, %v825
        %v827 = vpop.f32.mrb[0].mxu0
        %828 = vmatprep.mubr.f32.mxu0 0.0
        %829 = vmatmul.mubr.f32.gmra.mrb[0].mxu0 %v623
        %v830 = vpop.f32.mrb[0].mxu0
        %v831 = vadd.f32 0.0, %v830
        %v832 = vpop.f32.mrb[0].mxu0
        %833 = vmatprep.mubr.f32.mxu0 0.0
        %834 = vmatmul.mubr.f32.gmra.mrb[0].mxu0 %v626
        %v835 = vpop.f32.mrb[0].mxu0
        %v836 = vadd.f32 0.0, %v835
        %v837 = vpop.f32.mrb[0].mxu0
        %838 = vmatprep.mubr.f32.mxu0 0.0
        %839 = vmatmul.mubr.f32.gmra.mrb[0].mxu0 %v629
        %v840 = vpop.f32.mrb[0].mxu0
        %v841 = vadd.f32 0.0, %v840
        %v842 = vpop.f32.mrb[0].mxu0
        %843 = vmatprep.mubr.f32.mxu0 0.0
        %844 = vmatmul.mubr.f32.gmra.mrb[0].mxu0 %v632
        %v845 = vpop.f32.mrb[0].mxu0
        %v846 = vadd.f32 0.0, %v845
        %v847 = vpop.f32.mrb[0].mxu0
        %848 = vmatprep.mubr.f32.mxu0 0.0
        %849 = vmatmul.mubr.f32.gmra.mrb[0].mxu0 %v635
        %v850 = vpop.f32.mrb[0].mxu0
        %v851 = vadd.f32 0.0, %v850
        %v852 = vpop.f32.mrb[0].mxu0
        %853 = vmatprep.mubr.f32.mxu0 0.0
        %854 = vmatmul.mubr.f32.gmra.mrb[0].mxu0 %v638
        %v855 = vpop.f32.mrb[0].mxu0
        %v856 = vadd.f32 0.0, %v855
        %v857 = vpop.f32.mrb[0].mxu0
        %858 = vmatprep.mubr.f32.mxu0 0.0
        %859 = vmatmul.mubr.f32.gmra.mrb[0].mxu0 %v641
        %v860 = vpop.f32.mrb[0].mxu0
        %v861 = vadd.f32 0.0, %v860
        %v862 = vpop.f32.mrb[0].mxu0
        %863 = vmatprep.mubr.f32.mxu0 0.0
        %864 = vmatmul.mubr.f32.gmra.mrb[0].mxu0 %v644
        %v865 = vpop.f32.mrb[0].mxu0
        %v866 = vadd.f32 0.0, %v865
        %v867 = vpop.f32.mrb[0].mxu0
        %868 = vmatprep.mubr.f32.mxu0 0.0
        %869 = vmatmul.mubr.f32.gmra.mrb[0].mxu0 %v647
        %v870 = vpop.f32.mrb[0].mxu0
        %v871 = vadd.f32 0.0, %v870
        %v872 = vpop.f32.mrb[0].mxu0
        %873 = vmatprep.mubr.f32.mxu0 0.0
        %874 = vmatmul.mubr.f32.gmra.mrb[0].mxu0 %v650
        %v875 = vpop.f32.mrb[0].mxu0
        %v876 = vadd.f32 0.0, %v875
        %v877 = vpop.f32.mrb[0].mxu0
        %878 = vmatprep.mubr.f32.mxu0 0.0
        %879 = vmatmul.mubr.f32.gmra.mrb[0].mxu0 %v653
        %v880 = vpop.f32.mrb[0].mxu0
        %v881 = vadd.f32 0.0, %v880
        %v882 = vpop.f32.mrb[0].mxu0
        %883 = vdwg.mxu0
        %v885 = vsel %vm333, %v492, 0
        %v888 = vsel %vm333, %v493, 0
        %v891 = vsel %vm333, %v494, 0
        %v894 = vsel %vm333, %v495, 0
        %v897 = vsel %vm333, %v496, 0
        %v900 = vsel %vm333, %v497, 0
        %v903 = vsel %vm333, %v498, 0
        %v906 = vsel %vm333, %v499, 0
        %v909 = vsel %vm333, %v500, 0
        %v912 = vsel %vm333, %v501, 0
        %v915 = vsel %vm333, %v502, 0
        %v918 = vsel %vm333, %v503, 0
        %v921 = vsel %vm333, %v504, 0
        %v924 = vsel %vm333, %v505, 0
        %v927 = vsel %vm333, %v506, 0
        %v930 = vsel %vm333, %v507, 0
        %v933 = vsel %vm333, %v508, 0
        %v936 = vsel %vm333, %v509, 0
        %v939 = vsel %vm333, %v510, 0
        %v942 = vsel %vm333, %v511, 0
        %v945 = vsel %vm333, %v512, 0
        %v948 = vsel %vm333, %v513, 0
        %v951 = vsel %vm333, %v514, 0
        %v954 = vsel %vm333, %v515, 0
        %v957 = vsel %vm333, %v516, 0
        %v960 = vsel %vm333, %v517, 0
        %v963 = vsel %vm333, %v518, 0
        %v966 = vsel %vm333, %v519, 0
        %v969 = vsel %vm333, %v520, 0
        %v972 = vsel %vm333, %v521, 0
        %v975 = vsel %vm333, %v522, 0
        %v978 = vsel %vm333, %v523, 0
        %v981 = vsel %vm655, %v524, 0
        %983 = vmatprep.subr.mxu0 0.0
        %984 = vmatpush1.msra.mxu0 %v981
        %985 = vmatprep.subr.mxu0 0.0
        %986 = vmatpush1.msra.mxu0 0.0
        %987 = vmatprep.subr.mxu0 0.0
        %988 = vmatpush1.msra.mxu0 0.0
        %989 = vmatprep.subr.mxu0 0.0
        %990 = vmatpush1.msra.mxu0 0.0
        %991 = vmatprep.subr.mxu0 0.0
        %992 = vmatpush1.msra.mxu0 0.0
        %993 = vmatprep.subr.mxu0 0.0
        %994 = vmatpush1.msra.mxu0 0.0
        %995 = vmatprep.subr.mxu0 0.0
        %996 = vmatpush1.msra.mxu0 0.0
        %997 = vmatprep.subr.mxu0 0.0
        %998 = vmatpush1.msra.mxu0 0.0
        %999 = vmatprep.subr.mxu0 0.0
        %1000 = vmatpush1.msra.mxu0 0.0
        %1001 = vmatprep.subr.mxu0 0.0
        %1002 = vmatpush1.msra.mxu0 0.0
        %1003 = vmatprep.subr.mxu0 0.0
        %1004 = vmatpush1.msra.mxu0 0.0
        %1005 = vmatprep.subr.mxu0 0.0
        %1006 = vmatpush1.msra.mxu0 0.0
        %1007 = vmatprep.subr.mxu0 0.0
        %1008 = vmatpush1.msra.mxu0 0.0
        %1009 = vmatprep.subr.mxu0 0.0
        %1010 = vmatpush1.msra.mxu0 0.0
        %1011 = vmatprep.subr.mxu0 0.0
        %1012 = vmatpush1.msra.mxu0 0.0
        %1013 = vmatprep.subr.mxu0 0.0
        %1014 = vmatpush1.msra.mxu0 0.0
        %1015 = vmatprep.subr.mxu0 0.0
        %1016 = vmatpush1.msra.mxu0 0.0
        %1017 = vmatprep.subr.mxu0 0.0
        %1018 = vmatpush1.msra.mxu0 0.0
        %1019 = vmatprep.subr.mxu0 0.0
        %1020 = vmatpush1.msra.mxu0 0.0
        %1021 = vmatprep.subr.mxu0 0.0
        %1022 = vmatpush1.msra.mxu0 0.0
        %1023 = vmatprep.subr.mxu0 0.0
        %1024 = vmatpush1.msra.mxu0 0.0
        %1025 = vmatprep.subr.mxu0 0.0
        %1026 = vmatpush1.msra.mxu0 0.0
        %1027 = vmatprep.subr.mxu0 0.0
        %1028 = vmatpush1.msra.mxu0 0.0
        %1029 = vmatprep.subr.mxu0 0.0
        %1030 = vmatpush1.msra.mxu0 0.0
        %1031 = vmatprep.subr.mxu0 0.0
        %1032 = vmatpush1.msra.mxu0 0.0
        %1033 = vmatprep.subr.mxu0 0.0
        %1034 = vmatpush1.msra.mxu0 0.0
        %1035 = vmatprep.subr.mxu0 0.0
        %1036 = vmatpush1.msra.mxu0 0.0
        %1037 = vmatprep.subr.mxu0 0.0
        %1038 = vmatpush1.msra.mxu0 0.0
        %1039 = vmatprep.subr.mxu0 0.0
        %1040 = vmatpush1.msra.mxu0 0.0
        %1041 = vmatprep.subr.mxu0 0.0
        %1042 = vmatpush1.msra.mxu0 0.0
        %1043 = vmatprep.subr.mxu0 0.0
        %1044 = vmatpush1.msra.mxu0 0.0
        %1045 = vmatprep.subr.mxu0 0.0
        %1046 = vmatpush1.msra.mxu0 0.0
        %1047 = vmatprep.mubr.f32.mxu0 0.0
        %1048 = vmatmul.mubr.f32.gmra.mrb[0].mxu0 %v885
        %v1049 = vpop.f32.mrb[0].mxu0
        %v1050 = vadd.f32 %v726, %v1049
        %v1051 = vpop.f32.mrb[0].mxu0
        %1052 = vmatprep.mubr.f32.mxu0 0.0
        %1053 = vmatmul.mubr.f32.gmra.mrb[0].mxu0 %v888
        %v1054 = vpop.f32.mrb[0].mxu0
        %v1055 = vadd.f32 %v731, %v1054
        %v1056 = vpop.f32.mrb[0].mxu0
        %1057 = vmatprep.mubr.f32.mxu0 0.0
        %1058 = vmatmul.mubr.f32.gmra.mrb[0].mxu0 %v891
        %v1059 = vpop.f32.mrb[0].mxu0
        %v1060 = vadd.f32 %v736, %v1059
        %v1061 = vpop.f32.mrb[0].mxu0
        %1062 = vmatprep.mubr.f32.mxu0 0.0
        %1063 = vmatmul.mubr.f32.gmra.mrb[0].mxu0 %v894
        %v1064 = vpop.f32.mrb[0].mxu0
        %v1065 = vadd.f32 %v741, %v1064
        %v1066 = vpop.f32.mrb[0].mxu0
        %1067 = vmatprep.mubr.f32.mxu0 0.0
        %1068 = vmatmul.mubr.f32.gmra.mrb[0].mxu0 %v897
        %v1069 = vpop.f32.mrb[0].mxu0
        %v1070 = vadd.f32 %v746, %v1069
        %v1071 = vpop.f32.mrb[0].mxu0
        %1072 = vmatprep.mubr.f32.mxu0 0.0
        %1073 = vmatmul.mubr.f32.gmra.mrb[0].mxu0 %v900
        %v1074 = vpop.f32.mrb[0].mxu0
        %v1075 = vadd.f32 %v751, %v1074
        %v1076 = vpop.f32.mrb[0].mxu0
        %1077 = vmatprep.mubr.f32.mxu0 0.0
        %1078 = vmatmul.mubr.f32.gmra.mrb[0].mxu0 %v903
        %v1079 = vpop.f32.mrb[0].mxu0
        %v1080 = vadd.f32 %v756, %v1079
        %v1081 = vpop.f32.mrb[0].mxu0
        %1082 = vmatprep.mubr.f32.mxu0 0.0
        %1083 = vmatmul.mubr.f32.gmra.mrb[0].mxu0 %v906
        %v1084 = vpop.f32.mrb[0].mxu0
        %v1085 = vadd.f32 %v761, %v1084
        %v1086 = vpop.f32.mrb[0].mxu0
        %1087 = vmatprep.mubr.f32.mxu0 0.0
        %1088 = vmatmul.mubr.f32.gmra.mrb[0].mxu0 %v909
        %v1089 = vpop.f32.mrb[0].mxu0
        %v1090 = vadd.f32 %v766, %v1089
        %v1091 = vpop.f32.mrb[0].mxu0
        %1092 = vmatprep.mubr.f32.mxu0 0.0
        %1093 = vmatmul.mubr.f32.gmra.mrb[0].mxu0 %v912
        %v1094 = vpop.f32.mrb[0].mxu0
        %v1095 = vadd.f32 %v771, %v1094
        %v1096 = vpop.f32.mrb[0].mxu0
        %1097 = vmatprep.mubr.f32.mxu0 0.0
        %1098 = vmatmul.mubr.f32.gmra.mrb[0].mxu0 %v915
        %v1099 = vpop.f32.mrb[0].mxu0
        %v1100 = vadd.f32 %v776, %v1099
        %v1101 = vpop.f32.mrb[0].mxu0
        %1102 = vmatprep.mubr.f32.mxu0 0.0
        %1103 = vmatmul.mubr.f32.gmra.mrb[0].mxu0 %v918
        %v1104 = vpop.f32.mrb[0].mxu0
        %v1105 = vadd.f32 %v781, %v1104
        %v1106 = vpop.f32.mrb[0].mxu0
        %1107 = vmatprep.mubr.f32.mxu0 0.0
        %1108 = vmatmul.mubr.f32.gmra.mrb[0].mxu0 %v921
        %v1109 = vpop.f32.mrb[0].mxu0
        %v1110 = vadd.f32 %v786, %v1109
        %v1111 = vpop.f32.mrb[0].mxu0
        %1112 = vmatprep.mubr.f32.mxu0 0.0
        %1113 = vmatmul.mubr.f32.gmra.mrb[0].mxu0 %v924
        %v1114 = vpop.f32.mrb[0].mxu0
        %v1115 = vadd.f32 %v791, %v1114
        %v1116 = vpop.f32.mrb[0].mxu0
        %1117 = vmatprep.mubr.f32.mxu0 0.0
        %1118 = vmatmul.mubr.f32.gmra.mrb[0].mxu0 %v927
        %v1119 = vpop.f32.mrb[0].mxu0
        %v1120 = vadd.f32 %v796, %v1119
        %v1121 = vpop.f32.mrb[0].mxu0
        %1122 = vmatprep.mubr.f32.mxu0 0.0
        %1123 = vmatmul.mubr.f32.gmra.mrb[0].mxu0 %v930
        %v1124 = vpop.f32.mrb[0].mxu0
        %v1125 = vadd.f32 %v801, %v1124
        %v1126 = vpop.f32.mrb[0].mxu0
        %1127 = vmatprep.mubr.f32.mxu0 0.0
        %1128 = vmatmul.mubr.f32.gmra.mrb[0].mxu0 %v933
        %v1129 = vpop.f32.mrb[0].mxu0
        %v1130 = vadd.f32 %v806, %v1129
        %v1131 = vpop.f32.mrb[0].mxu0
        %1132 = vmatprep.mubr.f32.mxu0 0.0
        %1133 = vmatmul.mubr.f32.gmra.mrb[0].mxu0 %v936
        %v1134 = vpop.f32.mrb[0].mxu0
        %v1135 = vadd.f32 %v811, %v1134
        %v1136 = vpop.f32.mrb[0].mxu0
        %1137 = vmatprep.mubr.f32.mxu0 0.0
        %1138 = vmatmul.mubr.f32.gmra.mrb[0].mxu0 %v939
        %v1139 = vpop.f32.mrb[0].mxu0
        %v1140 = vadd.f32 %v816, %v1139
        %v1141 = vpop.f32.mrb[0].mxu0
        %1142 = vmatprep.mubr.f32.mxu0 0.0
        %1143 = vmatmul.mubr.f32.gmra.mrb[0].mxu0 %v942
        %v1144 = vpop.f32.mrb[0].mxu0
        %v1145 = vadd.f32 %v821, %v1144
        %v1146 = vpop.f32.mrb[0].mxu0
        %1147 = vmatprep.mubr.f32.mxu0 0.0
        %1148 = vmatmul.mubr.f32.gmra.mrb[0].mxu0 %v945
        %v1149 = vpop.f32.mrb[0].mxu0
        %v1150 = vadd.f32 %v826, %v1149
        %v1151 = vpop.f32.mrb[0].mxu0
        %1152 = vmatprep.mubr.f32.mxu0 0.0
        %1153 = vmatmul.mubr.f32.gmra.mrb[0].mxu0 %v948
        %v1154 = vpop.f32.mrb[0].mxu0
        %v1155 = vadd.f32 %v831, %v1154
        %v1156 = vpop.f32.mrb[0].mxu0
        %1157 = vmatprep.mubr.f32.mxu0 0.0
        %1158 = vmatmul.mubr.f32.gmra.mrb[0].mxu0 %v951
        %v1159 = vpop.f32.mrb[0].mxu0
        %v1160 = vadd.f32 %v836, %v1159
        %v1161 = vpop.f32.mrb[0].mxu0
        %1162 = vmatprep.mubr.f32.mxu0 0.0
        %1163 = vmatmul.mubr.f32.gmra.mrb[0].mxu0 %v954
        %v1164 = vpop.f32.mrb[0].mxu0
        %v1165 = vadd.f32 %v841, %v1164
        %v1166 = vpop.f32.mrb[0].mxu0
        %1167 = vmatprep.mubr.f32.mxu0 0.0
        %1168 = vmatmul.mubr.f32.gmra.mrb[0].mxu0 %v957
        %v1169 = vpop.f32.mrb[0].mxu0
        %v1170 = vadd.f32 %v846, %v1169
        %v1171 = vpop.f32.mrb[0].mxu0
        %1172 = vmatprep.mubr.f32.mxu0 0.0
        %1173 = vmatmul.mubr.f32.gmra.mrb[0].mxu0 %v960
        %v1174 = vpop.f32.mrb[0].mxu0
        %v1175 = vadd.f32 %v851, %v1174
        %v1176 = vpop.f32.mrb[0].mxu0
        %1177 = vmatprep.mubr.f32.mxu0 0.0
        %1178 = vmatmul.mubr.f32.gmra.mrb[0].mxu0 %v963
        %v1179 = vpop.f32.mrb[0].mxu0
        %v1180 = vadd.f32 %v856, %v1179
        %v1181 = vpop.f32.mrb[0].mxu0
        %1182 = vmatprep.mubr.f32.mxu0 0.0
        %1183 = vmatmul.mubr.f32.gmra.mrb[0].mxu0 %v966
        %v1184 = vpop.f32.mrb[0].mxu0
        %v1185 = vadd.f32 %v861, %v1184
        %v1186 = vpop.f32.mrb[0].mxu0
        %1187 = vmatprep.mubr.f32.mxu0 0.0
        %1188 = vmatmul.mubr.f32.gmra.mrb[0].mxu0 %v969
        %v1189 = vpop.f32.mrb[0].mxu0
        %v1190 = vadd.f32 %v866, %v1189
        %v1191 = vpop.f32.mrb[0].mxu0
        %1192 = vmatprep.mubr.f32.mxu0 0.0
        %1193 = vmatmul.mubr.f32.gmra.mrb[0].mxu0 %v972
        %v1194 = vpop.f32.mrb[0].mxu0
        %v1195 = vadd.f32 %v871, %v1194
        %v1196 = vpop.f32.mrb[0].mxu0
        %1197 = vmatprep.mubr.f32.mxu0 0.0
        %1198 = vmatmul.mubr.f32.gmra.mrb[0].mxu0 %v975
        %v1199 = vpop.f32.mrb[0].mxu0
        %v1200 = vadd.f32 %v876, %v1199
        %v1201 = vpop.f32.mrb[0].mxu0
        %1202 = vmatprep.mubr.f32.mxu0 0.0
        %1203 = vmatmul.mubr.f32.gmra.mrb[0].mxu0 %v978
        %v1204 = vpop.f32.mrb[0].mxu0
        %v1205 = vadd.f32 %v881, %v1204
        %v1206 = vpop.f32.mrb[0].mxu0
        %1207 = vdwg.mxu0
        %v1208 = vld [vmem:[#allocation2 + $0x2] sm:$0xff]
        %v1209 = vld [vmem:[#allocation2 + $0xa] sm:$0xff]
        %v1210 = vld [vmem:[#allocation2 + $0x1a] sm:$0xff]
        %v1211 = vld [vmem:[#allocation2 + $0x22] sm:$0xff]
        %v1212 = vld [vmem:[#allocation2 + $0x32] sm:$0xff]
        %v1213 = vld [vmem:[#allocation2 + $0x3a] sm:$0xff]
        %v1214 = vld [vmem:[#allocation2 + $0x4a] sm:$0xff]
        %v1215 = vld [vmem:[#allocation2 + $0x52] sm:$0xff]
        %v1216 = vld [vmem:[#allocation2 + $0x62] sm:$0xff]
        %v1217 = vld [vmem:[#allocation2 + $0x6a] sm:$0xff]
        %v1218 = vld [vmem:[#allocation2 + $0x7a] sm:$0xff]
        %v1219 = vld [vmem:[#allocation2 + $0x82] sm:$0xff]
        %v1220 = vld [vmem:[#allocation2 + $0x92] sm:$0xff]
        %v1221 = vld [vmem:[#allocation2 + $0x9a] sm:$0xff]
        %v1222 = vld [vmem:[#allocation2 + $0xaa] sm:$0xff]
        %v1223 = vld [vmem:[#allocation2 + $0xb2] sm:$0xff]
        %v1224 = vld [vmem:[#allocation2 + $0xc2] sm:$0xff]
        %v1225 = vld [vmem:[#allocation2 + $0xca] sm:$0xff]
        %v1226 = vld [vmem:[#allocation2 + $0xda] sm:$0xff]
        %v1227 = vld [vmem:[#allocation2 + $0xe2] sm:$0xff]
        %v1228 = vld [vmem:[#allocation2 + $0xf2] sm:$0xff]
        %v1229 = vld [vmem:[#allocation2 + $0xfa] sm:$0xff]
        %v1230 = vld [vmem:[#allocation2 + $0x10a] sm:$0xff]
        %v1231 = vld [vmem:[#allocation2 + $0x112] sm:$0xff]
        %v1232 = vld [vmem:[#allocation2 + $0x122] sm:$0xff]
        %v1233 = vld [vmem:[#allocation2 + $0x12a] sm:$0xff]
        %v1234 = vld [vmem:[#allocation2 + $0x13a] sm:$0xff]
        %v1235 = vld [vmem:[#allocation2 + $0x142] sm:$0xff]
        %v1236 = vld [vmem:[#allocation2 + $0x152] sm:$0xff]
        %v1237 = vld [vmem:[#allocation2 + $0x15a] sm:$0xff]
        %v1238 = vld [vmem:[#allocation2 + $0x16a] sm:$0xff]
        %v1239 = vld [vmem:[#allocation2 + $0x172] sm:$0xff]
        %s1240 = scalar_lea.vmem %s1, 8
        %v1241 = vld [vmem:[%s1240] sm:$0x7]
        %v1243 = vsel %vm333, %v1208, 0
        %v1246 = vsel %vm333, %v1209, 0
        %v1249 = vsel %vm333, %v1210, 0
        %v1252 = vsel %vm333, %v1211, 0
        %v1255 = vsel %vm333, %v1212, 0
        %v1258 = vsel %vm333, %v1213, 0
        %v1261 = vsel %vm333, %v1214, 0
        %v1264 = vsel %vm333, %v1215, 0
        %v1267 = vsel %vm333, %v1216, 0
        %v1270 = vsel %vm333, %v1217, 0
        %v1273 = vsel %vm333, %v1218, 0
        %v1276 = vsel %vm333, %v1219, 0
        %v1279 = vsel %vm333, %v1220, 0
        %v1282 = vsel %vm333, %v1221, 0
        %v1285 = vsel %vm333, %v1222, 0
        %v1288 = vsel %vm333, %v1223, 0
        %v1291 = vsel %vm333, %v1224, 0
        %v1294 = vsel %vm333, %v1225, 0
        %v1297 = vsel %vm333, %v1226, 0
        %v1300 = vsel %vm333, %v1227, 0
        %v1303 = vsel %vm333, %v1228, 0
        %v1306 = vsel %vm333, %v1229, 0
        %v1309 = vsel %vm333, %v1230, 0
        %v1312 = vsel %vm333, %v1231, 0
        %v1315 = vsel %vm333, %v1232, 0
        %v1318 = vsel %vm333, %v1233, 0
        %v1321 = vsel %vm333, %v1234, 0
        %v1324 = vsel %vm333, %v1235, 0
        %v1327 = vsel %vm333, %v1236, 0
        %v1330 = vsel %vm333, %v1237, 0
        %v1333 = vsel %vm333, %v1238, 0
        %v1336 = vsel %vm333, %v1239, 0
        %v1339 = vsel %vm655, %v1241, 0
        %1341 = vmatprep.subr.mxu0 0.0
        %1342 = vmatpush1.msra.mxu0 %v1339
        %1343 = vmatprep.subr.mxu0 0.0
        %1344 = vmatpush1.msra.mxu0 0.0
        %1345 = vmatprep.subr.mxu0 0.0
        %1346 = vmatpush1.msra.mxu0 0.0
        %1347 = vmatprep.subr.mxu0 0.0
        %1348 = vmatpush1.msra.mxu0 0.0
        %1349 = vmatprep.subr.mxu0 0.0
        %1350 = vmatpush1.msra.mxu0 0.0
        %1351 = vmatprep.subr.mxu0 0.0
        %1352 = vmatpush1.msra.mxu0 0.0
        %1353 = vmatprep.subr.mxu0 0.0
        %1354 = vmatpush1.msra.mxu0 0.0
        %1355 = vmatprep.subr.mxu0 0.0
        %1356 = vmatpush1.msra.mxu0 0.0
        %1357 = vmatprep.subr.mxu0 0.0
        %1358 = vmatpush1.msra.mxu0 0.0
        %1359 = vmatprep.subr.mxu0 0.0
        %1360 = vmatpush1.msra.mxu0 0.0
        %1361 = vmatprep.subr.mxu0 0.0
        %1362 = vmatpush1.msra.mxu0 0.0
        %1363 = vmatprep.subr.mxu0 0.0
        %1364 = vmatpush1.msra.mxu0 0.0
        %1365 = vmatprep.subr.mxu0 0.0
        %1366 = vmatpush1.msra.mxu0 0.0
        %1367 = vmatprep.subr.mxu0 0.0
        %1368 = vmatpush1.msra.mxu0 0.0
        %1369 = vmatprep.subr.mxu0 0.0
        %1370 = vmatpush1.msra.mxu0 0.0
        %1371 = vmatprep.subr.mxu0 0.0
        %1372 = vmatpush1.msra.mxu0 0.0
        %1373 = vmatprep.subr.mxu0 0.0
        %1374 = vmatpush1.msra.mxu0 0.0
        %1375 = vmatprep.subr.mxu0 0.0
        %1376 = vmatpush1.msra.mxu0 0.0
        %1377 = vmatprep.subr.mxu0 0.0
        %1378 = vmatpush1.msra.mxu0 0.0
        %1379 = vmatprep.subr.mxu0 0.0
        %1380 = vmatpush1.msra.mxu0 0.0
        %1381 = vmatprep.subr.mxu0 0.0
        %1382 = vmatpush1.msra.mxu0 0.0
        %1383 = vmatprep.subr.mxu0 0.0
        %1384 = vmatpush1.msra.mxu0 0.0
        %1385 = vmatprep.subr.mxu0 0.0
        %1386 = vmatpush1.msra.mxu0 0.0
        %1387 = vmatprep.subr.mxu0 0.0
        %1388 = vmatpush1.msra.mxu0 0.0
        %1389 = vmatprep.subr.mxu0 0.0
        %1390 = vmatpush1.msra.mxu0 0.0
        %1391 = vmatprep.subr.mxu0 0.0
        %1392 = vmatpush1.msra.mxu0 0.0
        %1393 = vmatprep.subr.mxu0 0.0
        %1394 = vmatpush1.msra.mxu0 0.0
        %1395 = vmatprep.subr.mxu0 0.0
        %1396 = vmatpush1.msra.mxu0 0.0
        %1397 = vmatprep.subr.mxu0 0.0
        %1398 = vmatpush1.msra.mxu0 0.0
        %1399 = vmatprep.subr.mxu0 0.0
        %1400 = vmatpush1.msra.mxu0 0.0
        %1401 = vmatprep.subr.mxu0 0.0
        %1402 = vmatpush1.msra.mxu0 0.0
        %1403 = vmatprep.subr.mxu0 0.0
        %1404 = vmatpush1.msra.mxu0 0.0
        %1405 = vmatprep.mubr.f32.mxu0 0.0
        %1406 = vmatmul.mubr.f32.gmra.mrb[0].mxu0 %v1243
        %v1407 = vpop.f32.mrb[0].mxu0
        %v1408 = vadd.f32 0.0, %v1407
        %v1409 = vpop.f32.mrb[0].mxu0
        %1410 = vmatprep.mubr.f32.mxu0 0.0
        %1411 = vmatmul.mubr.f32.gmra.mrb[0].mxu0 %v1246
        %v1412 = vpop.f32.mrb[0].mxu0
        %v1413 = vadd.f32 0.0, %v1412
        %v1414 = vpop.f32.mrb[0].mxu0
        %1415 = vmatprep.mubr.f32.mxu0 0.0
        %1416 = vmatmul.mubr.f32.gmra.mrb[0].mxu0 %v1249
        %v1417 = vpop.f32.mrb[0].mxu0
        %v1418 = vadd.f32 0.0, %v1417
        %v1419 = vpop.f32.mrb[0].mxu0
        %1420 = vmatprep.mubr.f32.mxu0 0.0
        %1421 = vmatmul.mubr.f32.gmra.mrb[0].mxu0 %v1252
        %v1422 = vpop.f32.mrb[0].mxu0
        %v1423 = vadd.f32 0.0, %v1422
        %v1424 = vpop.f32.mrb[0].mxu0
        %1425 = vmatprep.mubr.f32.mxu0 0.0
        %1426 = vmatmul.mubr.f32.gmra.mrb[0].mxu0 %v1255
        %v1427 = vpop.f32.mrb[0].mxu0
        %v1428 = vadd.f32 0.0, %v1427
        %v1429 = vpop.f32.mrb[0].mxu0
        %1430 = vmatprep.mubr.f32.mxu0 0.0
        %1431 = vmatmul.mubr.f32.gmra.mrb[0].mxu0 %v1258
        %v1432 = vpop.f32.mrb[0].mxu0
        %v1433 = vadd.f32 0.0, %v1432
        %v1434 = vpop.f32.mrb[0].mxu0
        %1435 = vmatprep.mubr.f32.mxu0 0.0
        %1436 = vmatmul.mubr.f32.gmra.mrb[0].mxu0 %v1261
        %v1437 = vpop.f32.mrb[0].mxu0
        %v1438 = vadd.f32 0.0, %v1437
        %v1439 = vpop.f32.mrb[0].mxu0
        %1440 = vmatprep.mubr.f32.mxu0 0.0
        %1441 = vmatmul.mubr.f32.gmra.mrb[0].mxu0 %v1264
        %v1442 = vpop.f32.mrb[0].mxu0
        %v1443 = vadd.f32 0.0, %v1442
        %v1444 = vpop.f32.mrb[0].mxu0
        %1445 = vmatprep.mubr.f32.mxu0 0.0
        %1446 = vmatmul.mubr.f32.gmra.mrb[0].mxu0 %v1267
        %v1447 = vpop.f32.mrb[0].mxu0
        %v1448 = vadd.f32 0.0, %v1447
        %v1449 = vpop.f32.mrb[0].mxu0
        %1450 = vmatprep.mubr.f32.mxu0 0.0
        %1451 = vmatmul.mubr.f32.gmra.mrb[0].mxu0 %v1270
        %v1452 = vpop.f32.mrb[0].mxu0
        %v1453 = vadd.f32 0.0, %v1452
        %v1454 = vpop.f32.mrb[0].mxu0
        %1455 = vmatprep.mubr.f32.mxu0 0.0
        %1456 = vmatmul.mubr.f32.gmra.mrb[0].mxu0 %v1273
        %v1457 = vpop.f32.mrb[0].mxu0
        %v1458 = vadd.f32 0.0, %v1457
        %v1459 = vpop.f32.mrb[0].mxu0
        %1460 = vmatprep.mubr.f32.mxu0 0.0
        %1461 = vmatmul.mubr.f32.gmra.mrb[0].mxu0 %v1276
        %v1462 = vpop.f32.mrb[0].mxu0
        %v1463 = vadd.f32 0.0, %v1462
        %v1464 = vpop.f32.mrb[0].mxu0
        %1465 = vmatprep.mubr.f32.mxu0 0.0
        %1466 = vmatmul.mubr.f32.gmra.mrb[0].mxu0 %v1279
        %v1467 = vpop.f32.mrb[0].mxu0
        %v1468 = vadd.f32 0.0, %v1467
        %v1469 = vpop.f32.mrb[0].mxu0
        %1470 = vmatprep.mubr.f32.mxu0 0.0
        %1471 = vmatmul.mubr.f32.gmra.mrb[0].mxu0 %v1282
        %v1472 = vpop.f32.mrb[0].mxu0
        %v1473 = vadd.f32 0.0, %v1472
        %v1474 = vpop.f32.mrb[0].mxu0
        %1475 = vmatprep.mubr.f32.mxu0 0.0
        %1476 = vmatmul.mubr.f32.gmra.mrb[0].mxu0 %v1285
        %v1477 = vpop.f32.mrb[0].mxu0
        %v1478 = vadd.f32 0.0, %v1477
        %v1479 = vpop.f32.mrb[0].mxu0
        %1480 = vmatprep.mubr.f32.mxu0 0.0
        %1481 = vmatmul.mubr.f32.gmra.mrb[0].mxu0 %v1288
        %v1482 = vpop.f32.mrb[0].mxu0
        %v1483 = vadd.f32 0.0, %v1482
        %v1484 = vpop.f32.mrb[0].mxu0
        %1485 = vmatprep.mubr.f32.mxu0 0.0
        %1486 = vmatmul.mubr.f32.gmra.mrb[0].mxu0 %v1291
        %v1487 = vpop.f32.mrb[0].mxu0
        %v1488 = vadd.f32 0.0, %v1487
        %v1489 = vpop.f32.mrb[0].mxu0
        %1490 = vmatprep.mubr.f32.mxu0 0.0
        %1491 = vmatmul.mubr.f32.gmra.mrb[0].mxu0 %v1294
        %v1492 = vpop.f32.mrb[0].mxu0
        %v1493 = vadd.f32 0.0, %v1492
        %v1494 = vpop.f32.mrb[0].mxu0
        %1495 = vmatprep.mubr.f32.mxu0 0.0
        %1496 = vmatmul.mubr.f32.gmra.mrb[0].mxu0 %v1297
        %v1497 = vpop.f32.mrb[0].mxu0
        %v1498 = vadd.f32 0.0, %v1497
        %v1499 = vpop.f32.mrb[0].mxu0
        %1500 = vmatprep.mubr.f32.mxu0 0.0
        %1501 = vmatmul.mubr.f32.gmra.mrb[0].mxu0 %v1300
        %v1502 = vpop.f32.mrb[0].mxu0
        %v1503 = vadd.f32 0.0, %v1502
        %v1504 = vpop.f32.mrb[0].mxu0
        %1505 = vmatprep.mubr.f32.mxu0 0.0
        %1506 = vmatmul.mubr.f32.gmra.mrb[0].mxu0 %v1303
        %v1507 = vpop.f32.mrb[0].mxu0
        %v1508 = vadd.f32 0.0, %v1507
        %v1509 = vpop.f32.mrb[0].mxu0
        %1510 = vmatprep.mubr.f32.mxu0 0.0
        %1511 = vmatmul.mubr.f32.gmra.mrb[0].mxu0 %v1306
        %v1512 = vpop.f32.mrb[0].mxu0
        %v1513 = vadd.f32 0.0, %v1512
        %v1514 = vpop.f32.mrb[0].mxu0
        %1515 = vmatprep.mubr.f32.mxu0 0.0
        %1516 = vmatmul.mubr.f32.gmra.mrb[0].mxu0 %v1309
        %v1517 = vpop.f32.mrb[0].mxu0
        %v1518 = vadd.f32 0.0, %v1517
        %v1519 = vpop.f32.mrb[0].mxu0
        %1520 = vmatprep.mubr.f32.mxu0 0.0
        %1521 = vmatmul.mubr.f32.gmra.mrb[0].mxu0 %v1312
        %v1522 = vpop.f32.mrb[0].mxu0
        %v1523 = vadd.f32 0.0, %v1522
        %v1524 = vpop.f32.mrb[0].mxu0
        %1525 = vmatprep.mubr.f32.mxu0 0.0
        %1526 = vmatmul.mubr.f32.gmra.mrb[0].mxu0 %v1315
        %v1527 = vpop.f32.mrb[0].mxu0
        %v1528 = vadd.f32 0.0, %v1527
        %v1529 = vpop.f32.mrb[0].mxu0
        %1530 = vmatprep.mubr.f32.mxu0 0.0
        %1531 = vmatmul.mubr.f32.gmra.mrb[0].mxu0 %v1318
        %v1532 = vpop.f32.mrb[0].mxu0
        %v1533 = vadd.f32 0.0, %v1532
        %v1534 = vpop.f32.mrb[0].mxu0
        %1535 = vmatprep.mubr.f32.mxu0 0.0
        %1536 = vmatmul.mubr.f32.gmra.mrb[0].mxu0 %v1321
        %v1537 = vpop.f32.mrb[0].mxu0
        %v1538 = vadd.f32 0.0, %v1537
        %v1539 = vpop.f32.mrb[0].mxu0
        %1540 = vmatprep.mubr.f32.mxu0 0.0
        %1541 = vmatmul.mubr.f32.gmra.mrb[0].mxu0 %v1324
        %v1542 = vpop.f32.mrb[0].mxu0
        %v1543 = vadd.f32 0.0, %v1542
        %v1544 = vpop.f32.mrb[0].mxu0
        %1545 = vmatprep.mubr.f32.mxu0 0.0
        %1546 = vmatmul.mubr.f32.gmra.mrb[0].mxu0 %v1327
        %v1547 = vpop.f32.mrb[0].mxu0
        %v1548 = vadd.f32 0.0, %v1547
        %v1549 = vpop.f32.mrb[0].mxu0
        %1550 = vmatprep.mubr.f32.mxu0 0.0
        %1551 = vmatmul.mubr.f32.gmra.mrb[0].mxu0 %v1330
        %v1552 = vpop.f32.mrb[0].mxu0
        %v1553 = vadd.f32 0.0, %v1552
        %v1554 = vpop.f32.mrb[0].mxu0
        %1555 = vmatprep.mubr.f32.mxu0 0.0
        %1556 = vmatmul.mubr.f32.gmra.mrb[0].mxu0 %v1333
        %v1557 = vpop.f32.mrb[0].mxu0
        %v1558 = vadd.f32 0.0, %v1557
        %v1559 = vpop.f32.mrb[0].mxu0
        %1560 = vmatprep.mubr.f32.mxu0 0.0
        %1561 = vmatmul.mubr.f32.gmra.mrb[0].mxu0 %v1336
        %v1562 = vpop.f32.mrb[0].mxu0
        %v1563 = vadd.f32 0.0, %v1562
        %v1564 = vpop.f32.mrb[0].mxu0
        %1565 = vdwg.mxu0
        %v1566 = vadd.f32 %v1050, %v1408
        %v1567 = vadd.f32 %v1055, %v1413
        %v1568 = vadd.f32 %v1060, %v1418
        %v1569 = vadd.f32 %v1065, %v1423
        %v1570 = vadd.f32 %v1070, %v1428
        %v1571 = vadd.f32 %v1075, %v1433
        %v1572 = vadd.f32 %v1080, %v1438
        %v1573 = vadd.f32 %v1085, %v1443
        %v1574 = vadd.f32 %v1090, %v1448
        %v1575 = vadd.f32 %v1095, %v1453
        %v1576 = vadd.f32 %v1100, %v1458
        %v1577 = vadd.f32 %v1105, %v1463
        %v1578 = vadd.f32 %v1110, %v1468
        %v1579 = vadd.f32 %v1115, %v1473
        %v1580 = vadd.f32 %v1120, %v1478
        %v1581 = vadd.f32 %v1125, %v1483
        %v1582 = vadd.f32 %v1130, %v1488
        %v1583 = vadd.f32 %v1135, %v1493
        %v1584 = vadd.f32 %v1140, %v1498
        %v1585 = vadd.f32 %v1145, %v1503
        %v1586 = vadd.f32 %v1150, %v1508
        %v1587 = vadd.f32 %v1155, %v1513
        %v1588 = vadd.f32 %v1160, %v1518
        %v1589 = vadd.f32 %v1165, %v1523
        %v1590 = vadd.f32 %v1170, %v1528
        %v1591 = vadd.f32 %v1175, %v1533
        %v1592 = vadd.f32 %v1180, %v1538
        %v1593 = vadd.f32 %v1185, %v1543
        %v1594 = vadd.f32 %v1190, %v1548
        %v1595 = vadd.f32 %v1195, %v1553
        %v1596 = vadd.f32 %v1200, %v1558
        %v1597 = vadd.f32 %v1205, %v1563
        %v1598 = vld [vmem:[%s456] sm:$0xff]
        %v1599 = vld [vmem:[%s456 + $0x8] sm:$0xff]
        %v1600 = vld [vmem:[%s456 + $0x18] sm:$0xff]
        %v1601 = vld [vmem:[%s456 + $0x20] sm:$0xff]
        %v1602 = vld [vmem:[%s456 + $0x30] sm:$0xff]
        %v1603 = vld [vmem:[%s456 + $0x38] sm:$0xff]
        %v1604 = vld [vmem:[%s456 + $0x48] sm:$0xff]
        %v1605 = vld [vmem:[%s456 + $0x50] sm:$0xff]
        %v1606 = vld [vmem:[%s456 + $0x60] sm:$0xff]
        %v1607 = vld [vmem:[%s456 + $0x68] sm:$0xff]
        %v1608 = vld [vmem:[%s456 + $0x78] sm:$0xff]
        %v1609 = vld [vmem:[%s456 + $0x80] sm:$0xff]
        %v1610 = vld [vmem:[%s456 + $0x90] sm:$0xff]
        %v1611 = vld [vmem:[%s456 + $0x98] sm:$0xff]
        %v1612 = vld [vmem:[%s456 + $0xa8] sm:$0xff]
        %v1613 = vld [vmem:[%s456 + $0xb0] sm:$0xff]
        %v1614 = vld [vmem:[%s456 + $0xc0] sm:$0xff]
        %v1615 = vld [vmem:[%s456 + $0xc8] sm:$0xff]
        %v1616 = vld [vmem:[%s456 + $0xd8] sm:$0xff]
        %v1617 = vld [vmem:[%s456 + $0xe0] sm:$0xff]
        %v1618 = vld [vmem:[%s456 + $0xf0] sm:$0xff]
        %v1619 = vld [vmem:[%s456 + $0xf8] sm:$0xff]
        %v1620 = vld [vmem:[%s456 + $0x108] sm:$0xff]
        %v1621 = vld [vmem:[%s456 + $0x110] sm:$0xff]
        %v1622 = vld [vmem:[%s456 + $0x120] sm:$0xff]
        %v1623 = vld [vmem:[%s456 + $0x128] sm:$0xff]
        %v1624 = vld [vmem:[%s456 + $0x138] sm:$0xff]
        %v1625 = vld [vmem:[%s456 + $0x140] sm:$0xff]
        %v1626 = vld [vmem:[%s456 + $0x150] sm:$0xff]
        %v1627 = vld [vmem:[%s456 + $0x158] sm:$0xff]
        %v1628 = vld [vmem:[%s456 + $0x168] sm:$0xff]
        %v1629 = vld [vmem:[%s456 + $0x170] sm:$0xff]
        %s1630 = scalar_lea.vmem %s1, 12
        %v1631 = vld [vmem:[%s1630] sm:$0x7]
        %v1633 = vsel %vm333, %v1598, 0
        %v1636 = vsel %vm333, %v1599, 0
        %v1639 = vsel %vm333, %v1600, 0
        %v1642 = vsel %vm333, %v1601, 0
        %v1645 = vsel %vm333, %v1602, 0
        %v1648 = vsel %vm333, %v1603, 0
        %v1651 = vsel %vm333, %v1604, 0
        %v1654 = vsel %vm333, %v1605, 0
        %v1657 = vsel %vm333, %v1606, 0
        %v1660 = vsel %vm333, %v1607, 0
        %v1663 = vsel %vm333, %v1608, 0
        %v1666 = vsel %vm333, %v1609, 0
        %v1669 = vsel %vm333, %v1610, 0
        %v1672 = vsel %vm333, %v1611, 0
        %v1675 = vsel %vm333, %v1612, 0
        %v1678 = vsel %vm333, %v1613, 0
        %v1681 = vsel %vm333, %v1614, 0
        %v1684 = vsel %vm333, %v1615, 0
        %v1687 = vsel %vm333, %v1616, 0
        %v1690 = vsel %vm333, %v1617, 0
        %v1693 = vsel %vm333, %v1618, 0
        %v1696 = vsel %vm333, %v1619, 0
        %v1699 = vsel %vm333, %v1620, 0
        %v1702 = vsel %vm333, %v1621, 0
        %v1705 = vsel %vm333, %v1622, 0
        %v1708 = vsel %vm333, %v1623, 0
        %v1711 = vsel %vm333, %v1624, 0
        %v1714 = vsel %vm333, %v1625, 0
        %v1717 = vsel %vm333, %v1626, 0
        %v1720 = vsel %vm333, %v1627, 0
        %v1723 = vsel %vm333, %v1628, 0
        %v1726 = vsel %vm333, %v1629, 0
        %v1729 = vsel %vm655, %v1631, 0
        %1731 = vmatprep.subr.mxu0 0.0
        %1732 = vmatpush1.msra.mxu0 %v1729
        %1733 = vmatprep.subr.mxu0 0.0
        %1734 = vmatpush1.msra.mxu0 0.0
        %1735 = vmatprep.subr.mxu0 0.0
        %1736 = vmatpush1.msra.mxu0 0.0
        %1737 = vmatprep.subr.mxu0 0.0
        %1738 = vmatpush1.msra.mxu0 0.0
        %1739 = vmatprep.subr.mxu0 0.0
        %1740 = vmatpush1.msra.mxu0 0.0
        %1741 = vmatprep.subr.mxu0 0.0
        %1742 = vmatpush1.msra.mxu0 0.0
        %1743 = vmatprep.subr.mxu0 0.0
        %1744 = vmatpush1.msra.mxu0 0.0
        %1745 = vmatprep.subr.mxu0 0.0
        %1746 = vmatpush1.msra.mxu0 0.0
        %1747 = vmatprep.subr.mxu0 0.0
        %1748 = vmatpush1.msra.mxu0 0.0
        %1749 = vmatprep.subr.mxu0 0.0
        %1750 = vmatpush1.msra.mxu0 0.0
        %1751 = vmatprep.subr.mxu0 0.0
        %1752 = vmatpush1.msra.mxu0 0.0
        %1753 = vmatprep.subr.mxu0 0.0
        %1754 = vmatpush1.msra.mxu0 0.0
        %1755 = vmatprep.subr.mxu0 0.0
        %1756 = vmatpush1.msra.mxu0 0.0
        %1757 = vmatprep.subr.mxu0 0.0
        %1758 = vmatpush1.msra.mxu0 0.0
        %1759 = vmatprep.subr.mxu0 0.0
        %1760 = vmatpush1.msra.mxu0 0.0
        %1761 = vmatprep.subr.mxu0 0.0
        %1762 = vmatpush1.msra.mxu0 0.0
        %1763 = vmatprep.subr.mxu0 0.0
        %1764 = vmatpush1.msra.mxu0 0.0
        %1765 = vmatprep.subr.mxu0 0.0
        %1766 = vmatpush1.msra.mxu0 0.0
        %1767 = vmatprep.subr.mxu0 0.0
        %1768 = vmatpush1.msra.mxu0 0.0
        %1769 = vmatprep.subr.mxu0 0.0
        %1770 = vmatpush1.msra.mxu0 0.0
        %1771 = vmatprep.subr.mxu0 0.0
        %1772 = vmatpush1.msra.mxu0 0.0
        %1773 = vmatprep.subr.mxu0 0.0
        %1774 = vmatpush1.msra.mxu0 0.0
        %1775 = vmatprep.subr.mxu0 0.0
        %1776 = vmatpush1.msra.mxu0 0.0
        %1777 = vmatprep.subr.mxu0 0.0
        %1778 = vmatpush1.msra.mxu0 0.0
        %1779 = vmatprep.subr.mxu0 0.0
        %1780 = vmatpush1.msra.mxu0 0.0
        %1781 = vmatprep.subr.mxu0 0.0
        %1782 = vmatpush1.msra.mxu0 0.0
        %1783 = vmatprep.subr.mxu0 0.0
        %1784 = vmatpush1.msra.mxu0 0.0
        %1785 = vmatprep.subr.mxu0 0.0
        %1786 = vmatpush1.msra.mxu0 0.0
        %1787 = vmatprep.subr.mxu0 0.0
        %1788 = vmatpush1.msra.mxu0 0.0
        %1789 = vmatprep.subr.mxu0 0.0
        %1790 = vmatpush1.msra.mxu0 0.0
        %1791 = vmatprep.subr.mxu0 0.0
        %1792 = vmatpush1.msra.mxu0 0.0
        %1793 = vmatprep.subr.mxu0 0.0
        %1794 = vmatpush1.msra.mxu0 0.0
        %1795 = vmatprep.mubr.f32.mxu0 0.0
        %1796 = vmatmul.mubr.f32.gmra.mrb[0].mxu0 %v1633
        %v1797 = vpop.f32.mrb[0].mxu0
        %v1798 = vadd.f32 0.0, %v1797
        %v1799 = vpop.f32.mrb[0].mxu0
        %1800 = vmatprep.mubr.f32.mxu0 0.0
        %1801 = vmatmul.mubr.f32.gmra.mrb[0].mxu0 %v1636
        %v1802 = vpop.f32.mrb[0].mxu0
        %v1803 = vadd.f32 0.0, %v1802
        %v1804 = vpop.f32.mrb[0].mxu0
        %1805 = vmatprep.mubr.f32.mxu0 0.0
        %1806 = vmatmul.mubr.f32.gmra.mrb[0].mxu0 %v1639
        %v1807 = vpop.f32.mrb[0].mxu0
        %v1808 = vadd.f32 0.0, %v1807
        %v1809 = vpop.f32.mrb[0].mxu0
        %1810 = vmatprep.mubr.f32.mxu0 0.0
        %1811 = vmatmul.mubr.f32.gmra.mrb[0].mxu0 %v1642
        %v1812 = vpop.f32.mrb[0].mxu0
        %v1813 = vadd.f32 0.0, %v1812
        %v1814 = vpop.f32.mrb[0].mxu0
        %1815 = vmatprep.mubr.f32.mxu0 0.0
        %1816 = vmatmul.mubr.f32.gmra.mrb[0].mxu0 %v1645
        %v1817 = vpop.f32.mrb[0].mxu0
        %v1818 = vadd.f32 0.0, %v1817
        %v1819 = vpop.f32.mrb[0].mxu0
        %1820 = vmatprep.mubr.f32.mxu0 0.0
        %1821 = vmatmul.mubr.f32.gmra.mrb[0].mxu0 %v1648
        %v1822 = vpop.f32.mrb[0].mxu0
        %v1823 = vadd.f32 0.0, %v1822
        %v1824 = vpop.f32.mrb[0].mxu0
        %1825 = vmatprep.mubr.f32.mxu0 0.0
        %1826 = vmatmul.mubr.f32.gmra.mrb[0].mxu0 %v1651
        %v1827 = vpop.f32.mrb[0].mxu0
        %v1828 = vadd.f32 0.0, %v1827
        %v1829 = vpop.f32.mrb[0].mxu0
        %1830 = vmatprep.mubr.f32.mxu0 0.0
        %1831 = vmatmul.mubr.f32.gmra.mrb[0].mxu0 %v1654
        %v1832 = vpop.f32.mrb[0].mxu0
        %v1833 = vadd.f32 0.0, %v1832
        %v1834 = vpop.f32.mrb[0].mxu0
        %1835 = vmatprep.mubr.f32.mxu0 0.0
        %1836 = vmatmul.mubr.f32.gmra.mrb[0].mxu0 %v1657
        %v1837 = vpop.f32.mrb[0].mxu0
        %v1838 = vadd.f32 0.0, %v1837
        %v1839 = vpop.f32.mrb[0].mxu0
        %1840 = vmatprep.mubr.f32.mxu0 0.0
        %1841 = vmatmul.mubr.f32.gmra.mrb[0].mxu0 %v1660
        %v1842 = vpop.f32.mrb[0].mxu0
        %v1843 = vadd.f32 0.0, %v1842
        %v1844 = vpop.f32.mrb[0].mxu0
        %1845 = vmatprep.mubr.f32.mxu0 0.0
        %1846 = vmatmul.mubr.f32.gmra.mrb[0].mxu0 %v1663
        %v1847 = vpop.f32.mrb[0].mxu0
        %v1848 = vadd.f32 0.0, %v1847
        %v1849 = vpop.f32.mrb[0].mxu0
        %1850 = vmatprep.mubr.f32.mxu0 0.0
        %1851 = vmatmul.mubr.f32.gmra.mrb[0].mxu0 %v1666
        %v1852 = vpop.f32.mrb[0].mxu0
        %v1853 = vadd.f32 0.0, %v1852
        %v1854 = vpop.f32.mrb[0].mxu0
        %1855 = vmatprep.mubr.f32.mxu0 0.0
        %1856 = vmatmul.mubr.f32.gmra.mrb[0].mxu0 %v1669
        %v1857 = vpop.f32.mrb[0].mxu0
        %v1858 = vadd.f32 0.0, %v1857
        %v1859 = vpop.f32.mrb[0].mxu0
        %1860 = vmatprep.mubr.f32.mxu0 0.0
        %1861 = vmatmul.mubr.f32.gmra.mrb[0].mxu0 %v1672
        %v1862 = vpop.f32.mrb[0].mxu0
        %v1863 = vadd.f32 0.0, %v1862
        %v1864 = vpop.f32.mrb[0].mxu0
        %1865 = vmatprep.mubr.f32.mxu0 0.0
        %1866 = vmatmul.mubr.f32.gmra.mrb[0].mxu0 %v1675
        %v1867 = vpop.f32.mrb[0].mxu0
        %v1868 = vadd.f32 0.0, %v1867
        %v1869 = vpop.f32.mrb[0].mxu0
        %1870 = vmatprep.mubr.f32.mxu0 0.0
        %1871 = vmatmul.mubr.f32.gmra.mrb[0].mxu0 %v1678
        %v1872 = vpop.f32.mrb[0].mxu0
        %v1873 = vadd.f32 0.0, %v1872
        %v1874 = vpop.f32.mrb[0].mxu0
        %1875 = vmatprep.mubr.f32.mxu0 0.0
        %1876 = vmatmul.mubr.f32.gmra.mrb[0].mxu0 %v1681
        %v1877 = vpop.f32.mrb[0].mxu0
        %v1878 = vadd.f32 0.0, %v1877
        %v1879 = vpop.f32.mrb[0].mxu0
        %1880 = vmatprep.mubr.f32.mxu0 0.0
        %1881 = vmatmul.mubr.f32.gmra.mrb[0].mxu0 %v1684
        %v1882 = vpop.f32.mrb[0].mxu0
        %v1883 = vadd.f32 0.0, %v1882
        %v1884 = vpop.f32.mrb[0].mxu0
        %1885 = vmatprep.mubr.f32.mxu0 0.0
        %1886 = vmatmul.mubr.f32.gmra.mrb[0].mxu0 %v1687
        %v1887 = vpop.f32.mrb[0].mxu0
        %v1888 = vadd.f32 0.0, %v1887
        %v1889 = vpop.f32.mrb[0].mxu0
        %1890 = vmatprep.mubr.f32.mxu0 0.0
        %1891 = vmatmul.mubr.f32.gmra.mrb[0].mxu0 %v1690
        %v1892 = vpop.f32.mrb[0].mxu0
        %v1893 = vadd.f32 0.0, %v1892
        %v1894 = vpop.f32.mrb[0].mxu0
        %1895 = vmatprep.mubr.f32.mxu0 0.0
        %1896 = vmatmul.mubr.f32.gmra.mrb[0].mxu0 %v1693
        %v1897 = vpop.f32.mrb[0].mxu0
        %v1898 = vadd.f32 0.0, %v1897
        %v1899 = vpop.f32.mrb[0].mxu0
        %1900 = vmatprep.mubr.f32.mxu0 0.0
        %1901 = vmatmul.mubr.f32.gmra.mrb[0].mxu0 %v1696
        %v1902 = vpop.f32.mrb[0].mxu0
        %v1903 = vadd.f32 0.0, %v1902
        %v1904 = vpop.f32.mrb[0].mxu0
        %1905 = vmatprep.mubr.f32.mxu0 0.0
        %1906 = vmatmul.mubr.f32.gmra.mrb[0].mxu0 %v1699
        %v1907 = vpop.f32.mrb[0].mxu0
        %v1908 = vadd.f32 0.0, %v1907
        %v1909 = vpop.f32.mrb[0].mxu0
        %1910 = vmatprep.mubr.f32.mxu0 0.0
        %1911 = vmatmul.mubr.f32.gmra.mrb[0].mxu0 %v1702
        %v1912 = vpop.f32.mrb[0].mxu0
        %v1913 = vadd.f32 0.0, %v1912
        %v1914 = vpop.f32.mrb[0].mxu0
        %1915 = vmatprep.mubr.f32.mxu0 0.0
        %1916 = vmatmul.mubr.f32.gmra.mrb[0].mxu0 %v1705
        %v1917 = vpop.f32.mrb[0].mxu0
        %v1918 = vadd.f32 0.0, %v1917
        %v1919 = vpop.f32.mrb[0].mxu0
        %1920 = vmatprep.mubr.f32.mxu0 0.0
        %1921 = vmatmul.mubr.f32.gmra.mrb[0].mxu0 %v1708
        %v1922 = vpop.f32.mrb[0].mxu0
        %v1923 = vadd.f32 0.0, %v1922
        %v1924 = vpop.f32.mrb[0].mxu0
        %1925 = vmatprep.mubr.f32.mxu0 0.0
        %1926 = vmatmul.mubr.f32.gmra.mrb[0].mxu0 %v1711
        %v1927 = vpop.f32.mrb[0].mxu0
        %v1928 = vadd.f32 0.0, %v1927
        %v1929 = vpop.f32.mrb[0].mxu0
        %1930 = vmatprep.mubr.f32.mxu0 0.0
        %1931 = vmatmul.mubr.f32.gmra.mrb[0].mxu0 %v1714
        %v1932 = vpop.f32.mrb[0].mxu0
        %v1933 = vadd.f32 0.0, %v1932
        %v1934 = vpop.f32.mrb[0].mxu0
        %1935 = vmatprep.mubr.f32.mxu0 0.0
        %1936 = vmatmul.mubr.f32.gmra.mrb[0].mxu0 %v1717
        %v1937 = vpop.f32.mrb[0].mxu0
        %v1938 = vadd.f32 0.0, %v1937
        %v1939 = vpop.f32.mrb[0].mxu0
        %1940 = vmatprep.mubr.f32.mxu0 0.0
        %1941 = vmatmul.mubr.f32.gmra.mrb[0].mxu0 %v1720
        %v1942 = vpop.f32.mrb[0].mxu0
        %v1943 = vadd.f32 0.0, %v1942
        %v1944 = vpop.f32.mrb[0].mxu0
        %1945 = vmatprep.mubr.f32.mxu0 0.0
        %1946 = vmatmul.mubr.f32.gmra.mrb[0].mxu0 %v1723
        %v1947 = vpop.f32.mrb[0].mxu0
        %v1948 = vadd.f32 0.0, %v1947
        %v1949 = vpop.f32.mrb[0].mxu0
        %1950 = vmatprep.mubr.f32.mxu0 0.0
        %1951 = vmatmul.mubr.f32.gmra.mrb[0].mxu0 %v1726
        %v1952 = vpop.f32.mrb[0].mxu0
        %v1953 = vadd.f32 0.0, %v1952
        %v1954 = vpop.f32.mrb[0].mxu0
        %1955 = vdwg.mxu0
        %v1956 = vadd.f32 %v1566, %v1798
        %v1957 = vadd.f32 %v1567, %v1803
        %v1958 = vadd.f32 %v1568, %v1808
        %v1959 = vadd.f32 %v1569, %v1813
        %v1960 = vadd.f32 %v1570, %v1818
        %v1961 = vadd.f32 %v1571, %v1823
        %v1962 = vadd.f32 %v1572, %v1828
        %v1963 = vadd.f32 %v1573, %v1833
        %v1964 = vadd.f32 %v1574, %v1838
        %v1965 = vadd.f32 %v1575, %v1843
        %v1966 = vadd.f32 %v1576, %v1848
        %v1967 = vadd.f32 %v1577, %v1853
        %v1968 = vadd.f32 %v1578, %v1858
        %v1969 = vadd.f32 %v1579, %v1863
        %v1970 = vadd.f32 %v1580, %v1868
        %v1971 = vadd.f32 %v1581, %v1873
        %v1972 = vadd.f32 %v1582, %v1878
        %v1973 = vadd.f32 %v1583, %v1883
        %v1974 = vadd.f32 %v1584, %v1888
        %v1975 = vadd.f32 %v1585, %v1893
        %v1976 = vadd.f32 %v1586, %v1898
        %v1977 = vadd.f32 %v1587, %v1903
        %v1978 = vadd.f32 %v1588, %v1908
        %v1979 = vadd.f32 %v1589, %v1913
        %v1980 = vadd.f32 %v1590, %v1918
        %v1981 = vadd.f32 %v1591, %v1923
        %v1982 = vadd.f32 %v1592, %v1928
        %v1983 = vadd.f32 %v1593, %v1933
        %v1984 = vadd.f32 %v1594, %v1938
        %v1985 = vadd.f32 %v1595, %v1943
        %v1986 = vadd.f32 %v1596, %v1948
        %v1987 = vadd.f32 %v1597, %v1953
        %v1988 = vld [vmem:[%s456 + $0x1] sm:$0xff]
        %v1989 = vld [vmem:[%s456 + $0x9] sm:$0xff]
        %v1990 = vld [vmem:[%s456 + $0x19] sm:$0xff]
        %v1991 = vld [vmem:[%s456 + $0x21] sm:$0xff]
        %v1992 = vld [vmem:[%s456 + $0x31] sm:$0xff]
        %v1993 = vld [vmem:[%s456 + $0x39] sm:$0xff]
        %v1994 = vld [vmem:[%s456 + $0x49] sm:$0xff]
        %v1995 = vld [vmem:[%s456 + $0x51] sm:$0xff]
        %v1996 = vld [vmem:[%s456 + $0x61] sm:$0xff]
        %v1997 = vld [vmem:[%s456 + $0x69] sm:$0xff]
        %v1998 = vld [vmem:[%s456 + $0x79] sm:$0xff]
        %v1999 = vld [vmem:[%s456 + $0x81] sm:$0xff]
        %v2000 = vld [vmem:[%s456 + $0x91] sm:$0xff]
        %v2001 = vld [vmem:[%s456 + $0x99] sm:$0xff]
        %v2002 = vld [vmem:[%s456 + $0xa9] sm:$0xff]
        %v2003 = vld [vmem:[%s456 + $0xb1] sm:$0xff]
        %v2004 = vld [vmem:[%s456 + $0xc1] sm:$0xff]
        %v2005 = vld [vmem:[%s456 + $0xc9] sm:$0xff]
        %v2006 = vld [vmem:[%s456 + $0xd9] sm:$0xff]
        %v2007 = vld [vmem:[%s456 + $0xe1] sm:$0xff]
        %v2008 = vld [vmem:[%s456 + $0xf1] sm:$0xff]
        %v2009 = vld [vmem:[%s456 + $0xf9] sm:$0xff]
        %v2010 = vld [vmem:[%s456 + $0x109] sm:$0xff]
        %v2011 = vld [vmem:[%s456 + $0x111] sm:$0xff]
        %v2012 = vld [vmem:[%s456 + $0x121] sm:$0xff]
        %v2013 = vld [vmem:[%s456 + $0x129] sm:$0xff]
        %v2014 = vld [vmem:[%s456 + $0x139] sm:$0xff]
        %v2015 = vld [vmem:[%s456 + $0x141] sm:$0xff]
        %v2016 = vld [vmem:[%s456 + $0x151] sm:$0xff]
        %v2017 = vld [vmem:[%s456 + $0x159] sm:$0xff]
        %v2018 = vld [vmem:[%s456 + $0x169] sm:$0xff]
        %v2019 = vld [vmem:[%s456 + $0x171] sm:$0xff]
        %s2020 = scalar_lea.vmem %s1, 16
        %v2021 = vld [vmem:[%s2020] sm:$0x7]
        %v2023 = vsel %vm333, %v1988, 0
        %v2026 = vsel %vm333, %v1989, 0
        %v2029 = vsel %vm333, %v1990, 0
        %v2032 = vsel %vm333, %v1991, 0
        %v2035 = vsel %vm333, %v1992, 0
        %v2038 = vsel %vm333, %v1993, 0
        %v2041 = vsel %vm333, %v1994, 0
        %v2044 = vsel %vm333, %v1995, 0
        %v2047 = vsel %vm333, %v1996, 0
        %v2050 = vsel %vm333, %v1997, 0
        %v2053 = vsel %vm333, %v1998, 0
        %v2056 = vsel %vm333, %v1999, 0
        %v2059 = vsel %vm333, %v2000, 0
        %v2062 = vsel %vm333, %v2001, 0
        %v2065 = vsel %vm333, %v2002, 0
        %v2068 = vsel %vm333, %v2003, 0
        %v2071 = vsel %vm333, %v2004, 0
        %v2074 = vsel %vm333, %v2005, 0
        %v2077 = vsel %vm333, %v2006, 0
        %v2080 = vsel %vm333, %v2007, 0
        %v2083 = vsel %vm333, %v2008, 0
        %v2086 = vsel %vm333, %v2009, 0
        %v2089 = vsel %vm333, %v2010, 0
        %v2092 = vsel %vm333, %v2011, 0
        %v2095 = vsel %vm333, %v2012, 0
        %v2098 = vsel %vm333, %v2013, 0
        %v2101 = vsel %vm333, %v2014, 0
        %v2104 = vsel %vm333, %v2015, 0
        %v2107 = vsel %vm333, %v2016, 0
        %v2110 = vsel %vm333, %v2017, 0
        %v2113 = vsel %vm333, %v2018, 0
        %v2116 = vsel %vm333, %v2019, 0
        %v2119 = vsel %vm655, %v2021, 0
        %2121 = vmatprep.subr.mxu0 0.0
        %2122 = vmatpush1.msra.mxu0 %v2119
        %2123 = vmatprep.subr.mxu0 0.0
        %2124 = vmatpush1.msra.mxu0 0.0
        %2125 = vmatprep.subr.mxu0 0.0
        %2126 = vmatpush1.msra.mxu0 0.0
        %2127 = vmatprep.subr.mxu0 0.0
        %2128 = vmatpush1.msra.mxu0 0.0
        %2129 = vmatprep.subr.mxu0 0.0
        %2130 = vmatpush1.msra.mxu0 0.0
        %2131 = vmatprep.subr.mxu0 0.0
        %2132 = vmatpush1.msra.mxu0 0.0
        %2133 = vmatprep.subr.mxu0 0.0
        %2134 = vmatpush1.msra.mxu0 0.0
        %2135 = vmatprep.subr.mxu0 0.0
        %2136 = vmatpush1.msra.mxu0 0.0
        %2137 = vmatprep.subr.mxu0 0.0
        %2138 = vmatpush1.msra.mxu0 0.0
        %2139 = vmatprep.subr.mxu0 0.0
        %2140 = vmatpush1.msra.mxu0 0.0
        %2141 = vmatprep.subr.mxu0 0.0
        %2142 = vmatpush1.msra.mxu0 0.0
        %2143 = vmatprep.subr.mxu0 0.0
        %2144 = vmatpush1.msra.mxu0 0.0
        %2145 = vmatprep.subr.mxu0 0.0
        %2146 = vmatpush1.msra.mxu0 0.0
        %2147 = vmatprep.subr.mxu0 0.0
        %2148 = vmatpush1.msra.mxu0 0.0
        %2149 = vmatprep.subr.mxu0 0.0
        %2150 = vmatpush1.msra.mxu0 0.0
        %2151 = vmatprep.subr.mxu0 0.0
        %2152 = vmatpush1.msra.mxu0 0.0
        %2153 = vmatprep.subr.mxu0 0.0
        %2154 = vmatpush1.msra.mxu0 0.0
        %2155 = vmatprep.subr.mxu0 0.0
        %2156 = vmatpush1.msra.mxu0 0.0
        %2157 = vmatprep.subr.mxu0 0.0
        %2158 = vmatpush1.msra.mxu0 0.0
        %2159 = vmatprep.subr.mxu0 0.0
        %2160 = vmatpush1.msra.mxu0 0.0
        %2161 = vmatprep.subr.mxu0 0.0
        %2162 = vmatpush1.msra.mxu0 0.0
        %2163 = vmatprep.subr.mxu0 0.0
        %2164 = vmatpush1.msra.mxu0 0.0
        %2165 = vmatprep.subr.mxu0 0.0
        %2166 = vmatpush1.msra.mxu0 0.0
        %2167 = vmatprep.subr.mxu0 0.0
        %2168 = vmatpush1.msra.mxu0 0.0
        %2169 = vmatprep.subr.mxu0 0.0
        %2170 = vmatpush1.msra.mxu0 0.0
        %2171 = vmatprep.subr.mxu0 0.0
        %2172 = vmatpush1.msra.mxu0 0.0
        %2173 = vmatprep.subr.mxu0 0.0
        %2174 = vmatpush1.msra.mxu0 0.0
        %2175 = vmatprep.subr.mxu0 0.0
        %2176 = vmatpush1.msra.mxu0 0.0
        %2177 = vmatprep.subr.mxu0 0.0
        %2178 = vmatpush1.msra.mxu0 0.0
        %2179 = vmatprep.subr.mxu0 0.0
        %2180 = vmatpush1.msra.mxu0 0.0
        %2181 = vmatprep.subr.mxu0 0.0
        %2182 = vmatpush1.msra.mxu0 0.0
        %2183 = vmatprep.subr.mxu0 0.0
        %2184 = vmatpush1.msra.mxu0 0.0
        %2185 = vmatprep.mubr.f32.mxu0 0.0
        %2186 = vmatmul.mubr.f32.gmra.mrb[0].mxu0 %v2023
        %v2187 = vpop.f32.mrb[0].mxu0
        %v2188 = vadd.f32 0.0, %v2187
        %v2189 = vpop.f32.mrb[0].mxu0
        %2190 = vmatprep.mubr.f32.mxu0 0.0
        %2191 = vmatmul.mubr.f32.gmra.mrb[0].mxu0 %v2026
        %v2192 = vpop.f32.mrb[0].mxu0
        %v2193 = vadd.f32 0.0, %v2192
        %v2194 = vpop.f32.mrb[0].mxu0
        %2195 = vmatprep.mubr.f32.mxu0 0.0
        %2196 = vmatmul.mubr.f32.gmra.mrb[0].mxu0 %v2029
        %v2197 = vpop.f32.mrb[0].mxu0
        %v2198 = vadd.f32 0.0, %v2197
        %v2199 = vpop.f32.mrb[0].mxu0
        %2200 = vmatprep.mubr.f32.mxu0 0.0
        %2201 = vmatmul.mubr.f32.gmra.mrb[0].mxu0 %v2032
        %v2202 = vpop.f32.mrb[0].mxu0
        %v2203 = vadd.f32 0.0, %v2202
        %v2204 = vpop.f32.mrb[0].mxu0
        %2205 = vmatprep.mubr.f32.mxu0 0.0
        %2206 = vmatmul.mubr.f32.gmra.mrb[0].mxu0 %v2035
        %v2207 = vpop.f32.mrb[0].mxu0
        %v2208 = vadd.f32 0.0, %v2207
        %v2209 = vpop.f32.mrb[0].mxu0
        %2210 = vmatprep.mubr.f32.mxu0 0.0
        %2211 = vmatmul.mubr.f32.gmra.mrb[0].mxu0 %v2038
        %v2212 = vpop.f32.mrb[0].mxu0
        %v2213 = vadd.f32 0.0, %v2212
        %v2214 = vpop.f32.mrb[0].mxu0
        %2215 = vmatprep.mubr.f32.mxu0 0.0
        %2216 = vmatmul.mubr.f32.gmra.mrb[0].mxu0 %v2041
        %v2217 = vpop.f32.mrb[0].mxu0
        %v2218 = vadd.f32 0.0, %v2217
        %v2219 = vpop.f32.mrb[0].mxu0
        %2220 = vmatprep.mubr.f32.mxu0 0.0
        %2221 = vmatmul.mubr.f32.gmra.mrb[0].mxu0 %v2044
        %v2222 = vpop.f32.mrb[0].mxu0
        %v2223 = vadd.f32 0.0, %v2222
        %v2224 = vpop.f32.mrb[0].mxu0
        %2225 = vmatprep.mubr.f32.mxu0 0.0
        %2226 = vmatmul.mubr.f32.gmra.mrb[0].mxu0 %v2047
        %v2227 = vpop.f32.mrb[0].mxu0
        %v2228 = vadd.f32 0.0, %v2227
        %v2229 = vpop.f32.mrb[0].mxu0
        %2230 = vmatprep.mubr.f32.mxu0 0.0
        %2231 = vmatmul.mubr.f32.gmra.mrb[0].mxu0 %v2050
        %v2232 = vpop.f32.mrb[0].mxu0
        %v2233 = vadd.f32 0.0, %v2232
        %v2234 = vpop.f32.mrb[0].mxu0
        %2235 = vmatprep.mubr.f32.mxu0 0.0
        %2236 = vmatmul.mubr.f32.gmra.mrb[0].mxu0 %v2053
        %v2237 = vpop.f32.mrb[0].mxu0
        %v2238 = vadd.f32 0.0, %v2237
        %v2239 = vpop.f32.mrb[0].mxu0
        %2240 = vmatprep.mubr.f32.mxu0 0.0
        %2241 = vmatmul.mubr.f32.gmra.mrb[0].mxu0 %v2056
        %v2242 = vpop.f32.mrb[0].mxu0
        %v2243 = vadd.f32 0.0, %v2242
        %v2244 = vpop.f32.mrb[0].mxu0
        %2245 = vmatprep.mubr.f32.mxu0 0.0
        %2246 = vmatmul.mubr.f32.gmra.mrb[0].mxu0 %v2059
        %v2247 = vpop.f32.mrb[0].mxu0
        %v2248 = vadd.f32 0.0, %v2247
        %v2249 = vpop.f32.mrb[0].mxu0
        %2250 = vmatprep.mubr.f32.mxu0 0.0
        %2251 = vmatmul.mubr.f32.gmra.mrb[0].mxu0 %v2062
        %v2252 = vpop.f32.mrb[0].mxu0
        %v2253 = vadd.f32 0.0, %v2252
        %v2254 = vpop.f32.mrb[0].mxu0
        %2255 = vmatprep.mubr.f32.mxu0 0.0
        %2256 = vmatmul.mubr.f32.gmra.mrb[0].mxu0 %v2065
        %v2257 = vpop.f32.mrb[0].mxu0
        %v2258 = vadd.f32 0.0, %v2257
        %v2259 = vpop.f32.mrb[0].mxu0
        %2260 = vmatprep.mubr.f32.mxu0 0.0
        %2261 = vmatmul.mubr.f32.gmra.mrb[0].mxu0 %v2068
        %v2262 = vpop.f32.mrb[0].mxu0
        %v2263 = vadd.f32 0.0, %v2262
        %v2264 = vpop.f32.mrb[0].mxu0
        %2265 = vmatprep.mubr.f32.mxu0 0.0
        %2266 = vmatmul.mubr.f32.gmra.mrb[0].mxu0 %v2071
        %v2267 = vpop.f32.mrb[0].mxu0
        %v2268 = vadd.f32 0.0, %v2267
        %v2269 = vpop.f32.mrb[0].mxu0
        %2270 = vmatprep.mubr.f32.mxu0 0.0
        %2271 = vmatmul.mubr.f32.gmra.mrb[0].mxu0 %v2074
        %v2272 = vpop.f32.mrb[0].mxu0
        %v2273 = vadd.f32 0.0, %v2272
        %v2274 = vpop.f32.mrb[0].mxu0
        %2275 = vmatprep.mubr.f32.mxu0 0.0
        %2276 = vmatmul.mubr.f32.gmra.mrb[0].mxu0 %v2077
        %v2277 = vpop.f32.mrb[0].mxu0
        %v2278 = vadd.f32 0.0, %v2277
        %v2279 = vpop.f32.mrb[0].mxu0
        %2280 = vmatprep.mubr.f32.mxu0 0.0
        %2281 = vmatmul.mubr.f32.gmra.mrb[0].mxu0 %v2080
        %v2282 = vpop.f32.mrb[0].mxu0
        %v2283 = vadd.f32 0.0, %v2282
        %v2284 = vpop.f32.mrb[0].mxu0
        %2285 = vmatprep.mubr.f32.mxu0 0.0
        %2286 = vmatmul.mubr.f32.gmra.mrb[0].mxu0 %v2083
        %v2287 = vpop.f32.mrb[0].mxu0
        %v2288 = vadd.f32 0.0, %v2287
        %v2289 = vpop.f32.mrb[0].mxu0
        %2290 = vmatprep.mubr.f32.mxu0 0.0
        %2291 = vmatmul.mubr.f32.gmra.mrb[0].mxu0 %v2086
        %v2292 = vpop.f32.mrb[0].mxu0
        %v2293 = vadd.f32 0.0, %v2292
        %v2294 = vpop.f32.mrb[0].mxu0
        %2295 = vmatprep.mubr.f32.mxu0 0.0
        %2296 = vmatmul.mubr.f32.gmra.mrb[0].mxu0 %v2089
        %v2297 = vpop.f32.mrb[0].mxu0
        %v2298 = vadd.f32 0.0, %v2297
        %v2299 = vpop.f32.mrb[0].mxu0
        %2300 = vmatprep.mubr.f32.mxu0 0.0
        %2301 = vmatmul.mubr.f32.gmra.mrb[0].mxu0 %v2092
        %v2302 = vpop.f32.mrb[0].mxu0
        %v2303 = vadd.f32 0.0, %v2302
        %v2304 = vpop.f32.mrb[0].mxu0
        %2305 = vmatprep.mubr.f32.mxu0 0.0
        %2306 = vmatmul.mubr.f32.gmra.mrb[0].mxu0 %v2095
        %v2307 = vpop.f32.mrb[0].mxu0
        %v2308 = vadd.f32 0.0, %v2307
        %v2309 = vpop.f32.mrb[0].mxu0
        %2310 = vmatprep.mubr.f32.mxu0 0.0
        %2311 = vmatmul.mubr.f32.gmra.mrb[0].mxu0 %v2098
        %v2312 = vpop.f32.mrb[0].mxu0
        %v2313 = vadd.f32 0.0, %v2312
        %v2314 = vpop.f32.mrb[0].mxu0
        %2315 = vmatprep.mubr.f32.mxu0 0.0
        %2316 = vmatmul.mubr.f32.gmra.mrb[0].mxu0 %v2101
        %v2317 = vpop.f32.mrb[0].mxu0
        %v2318 = vadd.f32 0.0, %v2317
        %v2319 = vpop.f32.mrb[0].mxu0
        %2320 = vmatprep.mubr.f32.mxu0 0.0
        %2321 = vmatmul.mubr.f32.gmra.mrb[0].mxu0 %v2104
        %v2322 = vpop.f32.mrb[0].mxu0
        %v2323 = vadd.f32 0.0, %v2322
        %v2324 = vpop.f32.mrb[0].mxu0
        %2325 = vmatprep.mubr.f32.mxu0 0.0
        %2326 = vmatmul.mubr.f32.gmra.mrb[0].mxu0 %v2107
        %v2327 = vpop.f32.mrb[0].mxu0
        %v2328 = vadd.f32 0.0, %v2327
        %v2329 = vpop.f32.mrb[0].mxu0
        %2330 = vmatprep.mubr.f32.mxu0 0.0
        %2331 = vmatmul.mubr.f32.gmra.mrb[0].mxu0 %v2110
        %v2332 = vpop.f32.mrb[0].mxu0
        %v2333 = vadd.f32 0.0, %v2332
        %v2334 = vpop.f32.mrb[0].mxu0
        %2335 = vmatprep.mubr.f32.mxu0 0.0
        %2336 = vmatmul.mubr.f32.gmra.mrb[0].mxu0 %v2113
        %v2337 = vpop.f32.mrb[0].mxu0
        %v2338 = vadd.f32 0.0, %v2337
        %v2339 = vpop.f32.mrb[0].mxu0
        %2340 = vmatprep.mubr.f32.mxu0 0.0
        %2341 = vmatmul.mubr.f32.gmra.mrb[0].mxu0 %v2116
        %v2342 = vpop.f32.mrb[0].mxu0
        %v2343 = vadd.f32 0.0, %v2342
        %v2344 = vpop.f32.mrb[0].mxu0
        %2345 = vdwg.mxu0
        %v2346 = vadd.f32 %v1956, %v2188
        %v2347 = vadd.f32 %v1957, %v2193
        %v2348 = vadd.f32 %v1958, %v2198
        %v2349 = vadd.f32 %v1959, %v2203
        %v2350 = vadd.f32 %v1960, %v2208
        %v2351 = vadd.f32 %v1961, %v2213
        %v2352 = vadd.f32 %v1962, %v2218
        %v2353 = vadd.f32 %v1963, %v2223
        %v2354 = vadd.f32 %v1964, %v2228
        %v2355 = vadd.f32 %v1965, %v2233
        %v2356 = vadd.f32 %v1966, %v2238
        %v2357 = vadd.f32 %v1967, %v2243
        %v2358 = vadd.f32 %v1968, %v2248
        %v2359 = vadd.f32 %v1969, %v2253
        %v2360 = vadd.f32 %v1970, %v2258
        %v2361 = vadd.f32 %v1971, %v2263
        %v2362 = vadd.f32 %v1972, %v2268
        %v2363 = vadd.f32 %v1973, %v2273
        %v2364 = vadd.f32 %v1974, %v2278
        %v2365 = vadd.f32 %v1975, %v2283
        %v2366 = vadd.f32 %v1976, %v2288
        %v2367 = vadd.f32 %v1977, %v2293
        %v2368 = vadd.f32 %v1978, %v2298
        %v2369 = vadd.f32 %v1979, %v2303
        %v2370 = vadd.f32 %v1980, %v2308
        %v2371 = vadd.f32 %v1981, %v2313
        %v2372 = vadd.f32 %v1982, %v2318
        %v2373 = vadd.f32 %v1983, %v2323
        %v2374 = vadd.f32 %v1984, %v2328
        %v2375 = vadd.f32 %v1985, %v2333
        %v2376 = vadd.f32 %v1986, %v2338
        %v2377 = vadd.f32 %v1987, %v2343
        %v2378 = vld [vmem:[%s456 + $0x2] sm:$0xff]
        %v2379 = vld [vmem:[%s456 + $0xa] sm:$0xff]
        %v2380 = vld [vmem:[%s456 + $0x1a] sm:$0xff]
        %v2381 = vld [vmem:[%s456 + $0x22] sm:$0xff]
        %v2382 = vld [vmem:[%s456 + $0x32] sm:$0xff]
        %v2383 = vld [vmem:[%s456 + $0x3a] sm:$0xff]
        %v2384 = vld [vmem:[%s456 + $0x4a] sm:$0xff]
        %v2385 = vld [vmem:[%s456 + $0x52] sm:$0xff]
        %v2386 = vld [vmem:[%s456 + $0x62] sm:$0xff]
        %v2387 = vld [vmem:[%s456 + $0x6a] sm:$0xff]
        %v2388 = vld [vmem:[%s456 + $0x7a] sm:$0xff]
        %v2389 = vld [vmem:[%s456 + $0x82] sm:$0xff]
        %v2390 = vld [vmem:[%s456 + $0x92] sm:$0xff]
        %v2391 = vld [vmem:[%s456 + $0x9a] sm:$0xff]
        %v2392 = vld [vmem:[%s456 + $0xaa] sm:$0xff]
        %v2393 = vld [vmem:[%s456 + $0xb2] sm:$0xff]
        %v2394 = vld [vmem:[%s456 + $0xc2] sm:$0xff]
        %v2395 = vld [vmem:[%s456 + $0xca] sm:$0xff]
        %v2396 = vld [vmem:[%s456 + $0xda] sm:$0xff]
        %v2397 = vld [vmem:[%s456 + $0xe2] sm:$0xff]
        %v2398 = vld [vmem:[%s456 + $0xf2] sm:$0xff]
        %v2399 = vld [vmem:[%s456 + $0xfa] sm:$0xff]
        %v2400 = vld [vmem:[%s456 + $0x10a] sm:$0xff]
        %v2401 = vld [vmem:[%s456 + $0x112] sm:$0xff]
        %v2402 = vld [vmem:[%s456 + $0x122] sm:$0xff]
        %v2403 = vld [vmem:[%s456 + $0x12a] sm:$0xff]
        %v2404 = vld [vmem:[%s456 + $0x13a] sm:$0xff]
        %v2405 = vld [vmem:[%s456 + $0x142] sm:$0xff]
        %v2406 = vld [vmem:[%s456 + $0x152] sm:$0xff]
        %v2407 = vld [vmem:[%s456 + $0x15a] sm:$0xff]
        %v2408 = vld [vmem:[%s456 + $0x16a] sm:$0xff]
        %v2409 = vld [vmem:[%s456 + $0x172] sm:$0xff]
        %s2410 = scalar_lea.vmem %s1, 20
        %v2411 = vld [vmem:[%s2410] sm:$0x7]
        %v2413 = vsel %vm333, %v2378, 0
        %v2416 = vsel %vm333, %v2379, 0
        %v2419 = vsel %vm333, %v2380, 0
        %v2422 = vsel %vm333, %v2381, 0
        %v2425 = vsel %vm333, %v2382, 0
        %v2428 = vsel %vm333, %v2383, 0
        %v2431 = vsel %vm333, %v2384, 0
        %v2434 = vsel %vm333, %v2385, 0
        %v2437 = vsel %vm333, %v2386, 0
        %v2440 = vsel %vm333, %v2387, 0
        %v2443 = vsel %vm333, %v2388, 0
        %v2446 = vsel %vm333, %v2389, 0
        %v2449 = vsel %vm333, %v2390, 0
        %v2452 = vsel %vm333, %v2391, 0
        %v2455 = vsel %vm333, %v2392, 0
        %v2458 = vsel %vm333, %v2393, 0
        %v2461 = vsel %vm333, %v2394, 0
        %v2464 = vsel %vm333, %v2395, 0
        %v2467 = vsel %vm333, %v2396, 0
        %v2470 = vsel %vm333, %v2397, 0
        %v2473 = vsel %vm333, %v2398, 0
        %v2476 = vsel %vm333, %v2399, 0
        %v2479 = vsel %vm333, %v2400, 0
        %v2482 = vsel %vm333, %v2401, 0
        %v2485 = vsel %vm333, %v2402, 0
        %v2488 = vsel %vm333, %v2403, 0
        %v2491 = vsel %vm333, %v2404, 0
        %v2494 = vsel %vm333, %v2405, 0
        %v2497 = vsel %vm333, %v2406, 0
        %v2500 = vsel %vm333, %v2407, 0
        %v2503 = vsel %vm333, %v2408, 0
        %v2506 = vsel %vm333, %v2409, 0
        %v2509 = vsel %vm655, %v2411, 0
        %2511 = vmatprep.subr.mxu0 0.0
        %2512 = vmatpush1.msra.mxu0 %v2509
        %2513 = vmatprep.subr.mxu0 0.0
        %2514 = vmatpush1.msra.mxu0 0.0
        %2515 = vmatprep.subr.mxu0 0.0
        %2516 = vmatpush1.msra.mxu0 0.0
        %2517 = vmatprep.subr.mxu0 0.0
        %2518 = vmatpush1.msra.mxu0 0.0
        %2519 = vmatprep.subr.mxu0 0.0
        %2520 = vmatpush1.msra.mxu0 0.0
        %2521 = vmatprep.subr.mxu0 0.0
        %2522 = vmatpush1.msra.mxu0 0.0
        %2523 = vmatprep.subr.mxu0 0.0
        %2524 = vmatpush1.msra.mxu0 0.0
        %2525 = vmatprep.subr.mxu0 0.0
        %2526 = vmatpush1.msra.mxu0 0.0
        %2527 = vmatprep.subr.mxu0 0.0
        %2528 = vmatpush1.msra.mxu0 0.0
        %2529 = vmatprep.subr.mxu0 0.0
        %2530 = vmatpush1.msra.mxu0 0.0
        %2531 = vmatprep.subr.mxu0 0.0
        %2532 = vmatpush1.msra.mxu0 0.0
        %2533 = vmatprep.subr.mxu0 0.0
        %2534 = vmatpush1.msra.mxu0 0.0
        %2535 = vmatprep.subr.mxu0 0.0
        %2536 = vmatpush1.msra.mxu0 0.0
        %2537 = vmatprep.subr.mxu0 0.0
        %2538 = vmatpush1.msra.mxu0 0.0
        %2539 = vmatprep.subr.mxu0 0.0
        %2540 = vmatpush1.msra.mxu0 0.0
        %2541 = vmatprep.subr.mxu0 0.0
        %2542 = vmatpush1.msra.mxu0 0.0
        %2543 = vmatprep.subr.mxu0 0.0
        %2544 = vmatpush1.msra.mxu0 0.0
        %2545 = vmatprep.subr.mxu0 0.0
        %2546 = vmatpush1.msra.mxu0 0.0
        %2547 = vmatprep.subr.mxu0 0.0
        %2548 = vmatpush1.msra.mxu0 0.0
        %2549 = vmatprep.subr.mxu0 0.0
        %2550 = vmatpush1.msra.mxu0 0.0
        %2551 = vmatprep.subr.mxu0 0.0
        %2552 = vmatpush1.msra.mxu0 0.0
        %2553 = vmatprep.subr.mxu0 0.0
        %2554 = vmatpush1.msra.mxu0 0.0
        %2555 = vmatprep.subr.mxu0 0.0
        %2556 = vmatpush1.msra.mxu0 0.0
        %2557 = vmatprep.subr.mxu0 0.0
        %2558 = vmatpush1.msra.mxu0 0.0
        %2559 = vmatprep.subr.mxu0 0.0
        %2560 = vmatpush1.msra.mxu0 0.0
        %2561 = vmatprep.subr.mxu0 0.0
        %2562 = vmatpush1.msra.mxu0 0.0
        %2563 = vmatprep.subr.mxu0 0.0
        %2564 = vmatpush1.msra.mxu0 0.0
        %2565 = vmatprep.subr.mxu0 0.0
        %2566 = vmatpush1.msra.mxu0 0.0
        %2567 = vmatprep.subr.mxu0 0.0
        %2568 = vmatpush1.msra.mxu0 0.0
        %2569 = vmatprep.subr.mxu0 0.0
        %2570 = vmatpush1.msra.mxu0 0.0
        %2571 = vmatprep.subr.mxu0 0.0
        %2572 = vmatpush1.msra.mxu0 0.0
        %2573 = vmatprep.subr.mxu0 0.0
        %2574 = vmatpush1.msra.mxu0 0.0
        %2575 = vmatprep.mubr.f32.mxu0 0.0
        %2576 = vmatmul.mubr.f32.gmra.mrb[0].mxu0 %v2413
        %v2577 = vpop.f32.mrb[0].mxu0
        %v2578 = vadd.f32 0.0, %v2577
        %v2579 = vpop.f32.mrb[0].mxu0
        %2580 = vmatprep.mubr.f32.mxu0 0.0
        %2581 = vmatmul.mubr.f32.gmra.mrb[0].mxu0 %v2416
        %v2582 = vpop.f32.mrb[0].mxu0
        %v2583 = vadd.f32 0.0, %v2582
        %v2584 = vpop.f32.mrb[0].mxu0
        %2585 = vmatprep.mubr.f32.mxu0 0.0
        %2586 = vmatmul.mubr.f32.gmra.mrb[0].mxu0 %v2419
        %v2587 = vpop.f32.mrb[0].mxu0
        %v2588 = vadd.f32 0.0, %v2587
        %v2589 = vpop.f32.mrb[0].mxu0
        %2590 = vmatprep.mubr.f32.mxu0 0.0
        %2591 = vmatmul.mubr.f32.gmra.mrb[0].mxu0 %v2422
        %v2592 = vpop.f32.mrb[0].mxu0
        %v2593 = vadd.f32 0.0, %v2592
        %v2594 = vpop.f32.mrb[0].mxu0
        %2595 = vmatprep.mubr.f32.mxu0 0.0
        %2596 = vmatmul.mubr.f32.gmra.mrb[0].mxu0 %v2425
        %v2597 = vpop.f32.mrb[0].mxu0
        %v2598 = vadd.f32 0.0, %v2597
        %v2599 = vpop.f32.mrb[0].mxu0
        %2600 = vmatprep.mubr.f32.mxu0 0.0
        %2601 = vmatmul.mubr.f32.gmra.mrb[0].mxu0 %v2428
        %v2602 = vpop.f32.mrb[0].mxu0
        %v2603 = vadd.f32 0.0, %v2602
        %v2604 = vpop.f32.mrb[0].mxu0
        %2605 = vmatprep.mubr.f32.mxu0 0.0
        %2606 = vmatmul.mubr.f32.gmra.mrb[0].mxu0 %v2431
        %v2607 = vpop.f32.mrb[0].mxu0
        %v2608 = vadd.f32 0.0, %v2607
        %v2609 = vpop.f32.mrb[0].mxu0
        %2610 = vmatprep.mubr.f32.mxu0 0.0
        %2611 = vmatmul.mubr.f32.gmra.mrb[0].mxu0 %v2434
        %v2612 = vpop.f32.mrb[0].mxu0
        %v2613 = vadd.f32 0.0, %v2612
        %v2614 = vpop.f32.mrb[0].mxu0
        %2615 = vmatprep.mubr.f32.mxu0 0.0
        %2616 = vmatmul.mubr.f32.gmra.mrb[0].mxu0 %v2437
        %v2617 = vpop.f32.mrb[0].mxu0
        %v2618 = vadd.f32 0.0, %v2617
        %v2619 = vpop.f32.mrb[0].mxu0
        %2620 = vmatprep.mubr.f32.mxu0 0.0
        %2621 = vmatmul.mubr.f32.gmra.mrb[0].mxu0 %v2440
        %v2622 = vpop.f32.mrb[0].mxu0
        %v2623 = vadd.f32 0.0, %v2622
        %v2624 = vpop.f32.mrb[0].mxu0
        %2625 = vmatprep.mubr.f32.mxu0 0.0
        %2626 = vmatmul.mubr.f32.gmra.mrb[0].mxu0 %v2443
        %v2627 = vpop.f32.mrb[0].mxu0
        %v2628 = vadd.f32 0.0, %v2627
        %v2629 = vpop.f32.mrb[0].mxu0
        %2630 = vmatprep.mubr.f32.mxu0 0.0
        %2631 = vmatmul.mubr.f32.gmra.mrb[0].mxu0 %v2446
        %v2632 = vpop.f32.mrb[0].mxu0
        %v2633 = vadd.f32 0.0, %v2632
        %v2634 = vpop.f32.mrb[0].mxu0
        %2635 = vmatprep.mubr.f32.mxu0 0.0
        %2636 = vmatmul.mubr.f32.gmra.mrb[0].mxu0 %v2449
        %v2637 = vpop.f32.mrb[0].mxu0
        %v2638 = vadd.f32 0.0, %v2637
        %v2639 = vpop.f32.mrb[0].mxu0
        %2640 = vmatprep.mubr.f32.mxu0 0.0
        %2641 = vmatmul.mubr.f32.gmra.mrb[0].mxu0 %v2452
        %v2642 = vpop.f32.mrb[0].mxu0
        %v2643 = vadd.f32 0.0, %v2642
        %v2644 = vpop.f32.mrb[0].mxu0
        %2645 = vmatprep.mubr.f32.mxu0 0.0
        %2646 = vmatmul.mubr.f32.gmra.mrb[0].mxu0 %v2455
        %v2647 = vpop.f32.mrb[0].mxu0
        %v2648 = vadd.f32 0.0, %v2647
        %v2649 = vpop.f32.mrb[0].mxu0
        %2650 = vmatprep.mubr.f32.mxu0 0.0
        %2651 = vmatmul.mubr.f32.gmra.mrb[0].mxu0 %v2458
        %v2652 = vpop.f32.mrb[0].mxu0
        %v2653 = vadd.f32 0.0, %v2652
        %v2654 = vpop.f32.mrb[0].mxu0
        %2655 = vmatprep.mubr.f32.mxu0 0.0
        %2656 = vmatmul.mubr.f32.gmra.mrb[0].mxu0 %v2461
        %v2657 = vpop.f32.mrb[0].mxu0
        %v2658 = vadd.f32 0.0, %v2657
        %v2659 = vpop.f32.mrb[0].mxu0
        %2660 = vmatprep.mubr.f32.mxu0 0.0
        %2661 = vmatmul.mubr.f32.gmra.mrb[0].mxu0 %v2464
        %v2662 = vpop.f32.mrb[0].mxu0
        %v2663 = vadd.f32 0.0, %v2662
        %v2664 = vpop.f32.mrb[0].mxu0
        %2665 = vmatprep.mubr.f32.mxu0 0.0
        %2666 = vmatmul.mubr.f32.gmra.mrb[0].mxu0 %v2467
        %v2667 = vpop.f32.mrb[0].mxu0
        %v2668 = vadd.f32 0.0, %v2667
        %v2669 = vpop.f32.mrb[0].mxu0
        %2670 = vmatprep.mubr.f32.mxu0 0.0
        %2671 = vmatmul.mubr.f32.gmra.mrb[0].mxu0 %v2470
        %v2672 = vpop.f32.mrb[0].mxu0
        %v2673 = vadd.f32 0.0, %v2672
        %v2674 = vpop.f32.mrb[0].mxu0
        %2675 = vmatprep.mubr.f32.mxu0 0.0
        %2676 = vmatmul.mubr.f32.gmra.mrb[0].mxu0 %v2473
        %v2677 = vpop.f32.mrb[0].mxu0
        %v2678 = vadd.f32 0.0, %v2677
        %v2679 = vpop.f32.mrb[0].mxu0
        %2680 = vmatprep.mubr.f32.mxu0 0.0
        %2681 = vmatmul.mubr.f32.gmra.mrb[0].mxu0 %v2476
        %v2682 = vpop.f32.mrb[0].mxu0
        %v2683 = vadd.f32 0.0, %v2682
        %v2684 = vpop.f32.mrb[0].mxu0
        %2685 = vmatprep.mubr.f32.mxu0 0.0
        %2686 = vmatmul.mubr.f32.gmra.mrb[0].mxu0 %v2479
        %v2687 = vpop.f32.mrb[0].mxu0
        %v2688 = vadd.f32 0.0, %v2687
        %v2689 = vpop.f32.mrb[0].mxu0
        %2690 = vmatprep.mubr.f32.mxu0 0.0
        %2691 = vmatmul.mubr.f32.gmra.mrb[0].mxu0 %v2482
        %v2692 = vpop.f32.mrb[0].mxu0
        %v2693 = vadd.f32 0.0, %v2692
        %v2694 = vpop.f32.mrb[0].mxu0
        %2695 = vmatprep.mubr.f32.mxu0 0.0
        %2696 = vmatmul.mubr.f32.gmra.mrb[0].mxu0 %v2485
        %v2697 = vpop.f32.mrb[0].mxu0
        %v2698 = vadd.f32 0.0, %v2697
        %v2699 = vpop.f32.mrb[0].mxu0
        %2700 = vmatprep.mubr.f32.mxu0 0.0
        %2701 = vmatmul.mubr.f32.gmra.mrb[0].mxu0 %v2488
        %v2702 = vpop.f32.mrb[0].mxu0
        %v2703 = vadd.f32 0.0, %v2702
        %v2704 = vpop.f32.mrb[0].mxu0
        %2705 = vmatprep.mubr.f32.mxu0 0.0
        %2706 = vmatmul.mubr.f32.gmra.mrb[0].mxu0 %v2491
        %v2707 = vpop.f32.mrb[0].mxu0
        %v2708 = vadd.f32 0.0, %v2707
        %v2709 = vpop.f32.mrb[0].mxu0
        %2710 = vmatprep.mubr.f32.mxu0 0.0
        %2711 = vmatmul.mubr.f32.gmra.mrb[0].mxu0 %v2494
        %v2712 = vpop.f32.mrb[0].mxu0
        %v2713 = vadd.f32 0.0, %v2712
        %v2714 = vpop.f32.mrb[0].mxu0
        %2715 = vmatprep.mubr.f32.mxu0 0.0
        %2716 = vmatmul.mubr.f32.gmra.mrb[0].mxu0 %v2497
        %v2717 = vpop.f32.mrb[0].mxu0
        %v2718 = vadd.f32 0.0, %v2717
        %v2719 = vpop.f32.mrb[0].mxu0
        %2720 = vmatprep.mubr.f32.mxu0 0.0
        %2721 = vmatmul.mubr.f32.gmra.mrb[0].mxu0 %v2500
        %v2722 = vpop.f32.mrb[0].mxu0
        %v2723 = vadd.f32 0.0, %v2722
        %v2724 = vpop.f32.mrb[0].mxu0
        %2725 = vmatprep.mubr.f32.mxu0 0.0
        %2726 = vmatmul.mubr.f32.gmra.mrb[0].mxu0 %v2503
        %v2727 = vpop.f32.mrb[0].mxu0
        %v2728 = vadd.f32 0.0, %v2727
        %v2729 = vpop.f32.mrb[0].mxu0
        %2730 = vmatprep.mubr.f32.mxu0 0.0
        %2731 = vmatmul.mubr.f32.gmra.mrb[0].mxu0 %v2506
        %v2732 = vpop.f32.mrb[0].mxu0
        %v2733 = vadd.f32 0.0, %v2732
        %v2734 = vpop.f32.mrb[0].mxu0
        %2735 = vdwg.mxu0
        %v2736 = vadd.f32 %v2346, %v2578
        %v2737 = vadd.f32 %v2347, %v2583
        %v2738 = vadd.f32 %v2348, %v2588
        %v2739 = vadd.f32 %v2349, %v2593
        %v2740 = vadd.f32 %v2350, %v2598
        %v2741 = vadd.f32 %v2351, %v2603
        %v2742 = vadd.f32 %v2352, %v2608
        %v2743 = vadd.f32 %v2353, %v2613
        %v2744 = vadd.f32 %v2354, %v2618
        %v2745 = vadd.f32 %v2355, %v2623
        %v2746 = vadd.f32 %v2356, %v2628
        %v2747 = vadd.f32 %v2357, %v2633
        %v2748 = vadd.f32 %v2358, %v2638
        %v2749 = vadd.f32 %v2359, %v2643
        %v2750 = vadd.f32 %v2360, %v2648
        %v2751 = vadd.f32 %v2361, %v2653
        %v2752 = vadd.f32 %v2362, %v2658
        %v2753 = vadd.f32 %v2363, %v2663
        %v2754 = vadd.f32 %v2364, %v2668
        %v2755 = vadd.f32 %v2365, %v2673
        %v2756 = vadd.f32 %v2366, %v2678
        %v2757 = vadd.f32 %v2367, %v2683
        %v2758 = vadd.f32 %v2368, %v2688
        %v2759 = vadd.f32 %v2369, %v2693
        %v2760 = vadd.f32 %v2370, %v2698
        %v2761 = vadd.f32 %v2371, %v2703
        %v2762 = vadd.f32 %v2372, %v2708
        %v2763 = vadd.f32 %v2373, %v2713
        %v2764 = vadd.f32 %v2374, %v2718
        %v2765 = vadd.f32 %v2375, %v2723
        %v2766 = vadd.f32 %v2376, %v2728
        %v2767 = vadd.f32 %v2377, %v2733
        %s2768 = scalar_lea.vmem [#allocation2], 48
        %v2769 = vld [vmem:[%s2768] sm:$0xff]
        %v2770 = vld [vmem:[%s2768 + $0x8] sm:$0xff]
        %v2771 = vld [vmem:[%s2768 + $0x18] sm:$0xff]
        %v2772 = vld [vmem:[%s2768 + $0x20] sm:$0xff]
        %v2773 = vld [vmem:[%s2768 + $0x30] sm:$0xff]
        %v2774 = vld [vmem:[%s2768 + $0x38] sm:$0xff]
        %v2775 = vld [vmem:[%s2768 + $0x48] sm:$0xff]
        %v2776 = vld [vmem:[%s2768 + $0x50] sm:$0xff]
        %v2777 = vld [vmem:[%s2768 + $0x60] sm:$0xff]
        %v2778 = vld [vmem:[%s2768 + $0x68] sm:$0xff]
        %v2779 = vld [vmem:[%s2768 + $0x78] sm:$0xff]
        %v2780 = vld [vmem:[%s2768 + $0x80] sm:$0xff]
        %v2781 = vld [vmem:[%s2768 + $0x90] sm:$0xff]
        %v2782 = vld [vmem:[%s2768 + $0x98] sm:$0xff]
        %v2783 = vld [vmem:[%s2768 + $0xa8] sm:$0xff]
        %v2784 = vld [vmem:[%s2768 + $0xb0] sm:$0xff]
        %v2785 = vld [vmem:[%s2768 + $0xc0] sm:$0xff]
        %v2786 = vld [vmem:[%s2768 + $0xc8] sm:$0xff]
        %v2787 = vld [vmem:[%s2768 + $0xd8] sm:$0xff]
        %v2788 = vld [vmem:[%s2768 + $0xe0] sm:$0xff]
        %v2789 = vld [vmem:[%s2768 + $0xf0] sm:$0xff]
        %v2790 = vld [vmem:[%s2768 + $0xf8] sm:$0xff]
        %v2791 = vld [vmem:[%s2768 + $0x108] sm:$0xff]
        %v2792 = vld [vmem:[%s2768 + $0x110] sm:$0xff]
        %v2793 = vld [vmem:[%s2768 + $0x120] sm:$0xff]
        %v2794 = vld [vmem:[%s2768 + $0x128] sm:$0xff]
        %v2795 = vld [vmem:[%s2768 + $0x138] sm:$0xff]
        %v2796 = vld [vmem:[%s2768 + $0x140] sm:$0xff]
        %v2797 = vld [vmem:[%s2768 + $0x150] sm:$0xff]
        %v2798 = vld [vmem:[%s2768 + $0x158] sm:$0xff]
        %v2799 = vld [vmem:[%s2768 + $0x168] sm:$0xff]
        %v2800 = vld [vmem:[%s2768 + $0x170] sm:$0xff]
        %s2801 = scalar_lea.vmem %s1, 24
        %v2802 = vld [vmem:[%s2801] sm:$0x7]
        %v2804 = vsel %vm333, %v2769, 0
        %v2807 = vsel %vm333, %v2770, 0
        %v2810 = vsel %vm333, %v2771, 0
        %v2813 = vsel %vm333, %v2772, 0
        %v2816 = vsel %vm333, %v2773, 0
        %v2819 = vsel %vm333, %v2774, 0
        %v2822 = vsel %vm333, %v2775, 0
        %v2825 = vsel %vm333, %v2776, 0
        %v2828 = vsel %vm333, %v2777, 0
        %v2831 = vsel %vm333, %v2778, 0
        %v2834 = vsel %vm333, %v2779, 0
        %v2837 = vsel %vm333, %v2780, 0
        %v2840 = vsel %vm333, %v2781, 0
        %v2843 = vsel %vm333, %v2782, 0
        %v2846 = vsel %vm333, %v2783, 0
        %v2849 = vsel %vm333, %v2784, 0
        %v2852 = vsel %vm333, %v2785, 0
        %v2855 = vsel %vm333, %v2786, 0
        %v2858 = vsel %vm333, %v2787, 0
        %v2861 = vsel %vm333, %v2788, 0
        %v2864 = vsel %vm333, %v2789, 0
        %v2867 = vsel %vm333, %v2790, 0
        %v2870 = vsel %vm333, %v2791, 0
        %v2873 = vsel %vm333, %v2792, 0
        %v2876 = vsel %vm333, %v2793, 0
        %v2879 = vsel %vm333, %v2794, 0
        %v2882 = vsel %vm333, %v2795, 0
        %v2885 = vsel %vm333, %v2796, 0
        %v2888 = vsel %vm333, %v2797, 0
        %v2891 = vsel %vm333, %v2798, 0
        %v2894 = vsel %vm333, %v2799, 0
        %v2897 = vsel %vm333, %v2800, 0
        %v2900 = vsel %vm655, %v2802, 0
        %2902 = vmatprep.subr.mxu0 0.0
        %2903 = vmatpush1.msra.mxu0 %v2900
        %2904 = vmatprep.subr.mxu0 0.0
        %2905 = vmatpush1.msra.mxu0 0.0
        %2906 = vmatprep.subr.mxu0 0.0
        %2907 = vmatpush1.msra.mxu0 0.0
        %2908 = vmatprep.subr.mxu0 0.0
        %2909 = vmatpush1.msra.mxu0 0.0
        %2910 = vmatprep.subr.mxu0 0.0
        %2911 = vmatpush1.msra.mxu0 0.0
        %2912 = vmatprep.subr.mxu0 0.0
        %2913 = vmatpush1.msra.mxu0 0.0
        %2914 = vmatprep.subr.mxu0 0.0
        %2915 = vmatpush1.msra.mxu0 0.0
        %2916 = vmatprep.subr.mxu0 0.0
        %2917 = vmatpush1.msra.mxu0 0.0
        %2918 = vmatprep.subr.mxu0 0.0
        %2919 = vmatpush1.msra.mxu0 0.0
        %2920 = vmatprep.subr.mxu0 0.0
        %2921 = vmatpush1.msra.mxu0 0.0
        %2922 = vmatprep.subr.mxu0 0.0
        %2923 = vmatpush1.msra.mxu0 0.0
        %2924 = vmatprep.subr.mxu0 0.0
        %2925 = vmatpush1.msra.mxu0 0.0
        %2926 = vmatprep.subr.mxu0 0.0
        %2927 = vmatpush1.msra.mxu0 0.0
        %2928 = vmatprep.subr.mxu0 0.0
        %2929 = vmatpush1.msra.mxu0 0.0
        %2930 = vmatprep.subr.mxu0 0.0
        %2931 = vmatpush1.msra.mxu0 0.0
        %2932 = vmatprep.subr.mxu0 0.0
        %2933 = vmatpush1.msra.mxu0 0.0
        %2934 = vmatprep.subr.mxu0 0.0
        %2935 = vmatpush1.msra.mxu0 0.0
        %2936 = vmatprep.subr.mxu0 0.0
        %2937 = vmatpush1.msra.mxu0 0.0
        %2938 = vmatprep.subr.mxu0 0.0
        %2939 = vmatpush1.msra.mxu0 0.0
        %2940 = vmatprep.subr.mxu0 0.0
        %2941 = vmatpush1.msra.mxu0 0.0
        %2942 = vmatprep.subr.mxu0 0.0
        %2943 = vmatpush1.msra.mxu0 0.0
        %2944 = vmatprep.subr.mxu0 0.0
        %2945 = vmatpush1.msra.mxu0 0.0
        %2946 = vmatprep.subr.mxu0 0.0
        %2947 = vmatpush1.msra.mxu0 0.0
        %2948 = vmatprep.subr.mxu0 0.0
        %2949 = vmatpush1.msra.mxu0 0.0
        %2950 = vmatprep.subr.mxu0 0.0
        %2951 = vmatpush1.msra.mxu0 0.0
        %2952 = vmatprep.subr.mxu0 0.0
        %2953 = vmatpush1.msra.mxu0 0.0
        %2954 = vmatprep.subr.mxu0 0.0
        %2955 = vmatpush1.msra.mxu0 0.0
        %2956 = vmatprep.subr.mxu0 0.0
        %2957 = vmatpush1.msra.mxu0 0.0
        %2958 = vmatprep.subr.mxu0 0.0
        %2959 = vmatpush1.msra.mxu0 0.0
        %2960 = vmatprep.subr.mxu0 0.0
        %2961 = vmatpush1.msra.mxu0 0.0
        %2962 = vmatprep.subr.mxu0 0.0
        %2963 = vmatpush1.msra.mxu0 0.0
        %2964 = vmatprep.subr.mxu0 0.0
        %2965 = vmatpush1.msra.mxu0 0.0
        %2966 = vmatprep.mubr.f32.mxu0 0.0
        %2967 = vmatmul.mubr.f32.gmra.mrb[0].mxu0 %v2804
        %v2968 = vpop.f32.mrb[0].mxu0
        %v2969 = vadd.f32 0.0, %v2968
        %v2970 = vpop.f32.mrb[0].mxu0
        %2971 = vmatprep.mubr.f32.mxu0 0.0
        %2972 = vmatmul.mubr.f32.gmra.mrb[0].mxu0 %v2807
        %v2973 = vpop.f32.mrb[0].mxu0
        %v2974 = vadd.f32 0.0, %v2973
        %v2975 = vpop.f32.mrb[0].mxu0
        %2976 = vmatprep.mubr.f32.mxu0 0.0
        %2977 = vmatmul.mubr.f32.gmra.mrb[0].mxu0 %v2810
        %v2978 = vpop.f32.mrb[0].mxu0
        %v2979 = vadd.f32 0.0, %v2978
        %v2980 = vpop.f32.mrb[0].mxu0
        %2981 = vmatprep.mubr.f32.mxu0 0.0
        %2982 = vmatmul.mubr.f32.gmra.mrb[0].mxu0 %v2813
        %v2983 = vpop.f32.mrb[0].mxu0
        %v2984 = vadd.f32 0.0, %v2983
        %v2985 = vpop.f32.mrb[0].mxu0
        %2986 = vmatprep.mubr.f32.mxu0 0.0
        %2987 = vmatmul.mubr.f32.gmra.mrb[0].mxu0 %v2816
        %v2988 = vpop.f32.mrb[0].mxu0
        %v2989 = vadd.f32 0.0, %v2988
        %v2990 = vpop.f32.mrb[0].mxu0
        %2991 = vmatprep.mubr.f32.mxu0 0.0
        %2992 = vmatmul.mubr.f32.gmra.mrb[0].mxu0 %v2819
        %v2993 = vpop.f32.mrb[0].mxu0
        %v2994 = vadd.f32 0.0, %v2993
        %v2995 = vpop.f32.mrb[0].mxu0
        %2996 = vmatprep.mubr.f32.mxu0 0.0
        %2997 = vmatmul.mubr.f32.gmra.mrb[0].mxu0 %v2822
        %v2998 = vpop.f32.mrb[0].mxu0
        %v2999 = vadd.f32 0.0, %v2998
        %v3000 = vpop.f32.mrb[0].mxu0
        %3001 = vmatprep.mubr.f32.mxu0 0.0
        %3002 = vmatmul.mubr.f32.gmra.mrb[0].mxu0 %v2825
        %v3003 = vpop.f32.mrb[0].mxu0
        %v3004 = vadd.f32 0.0, %v3003
        %v3005 = vpop.f32.mrb[0].mxu0
        %3006 = vmatprep.mubr.f32.mxu0 0.0
        %3007 = vmatmul.mubr.f32.gmra.mrb[0].mxu0 %v2828
        %v3008 = vpop.f32.mrb[0].mxu0
        %v3009 = vadd.f32 0.0, %v3008
        %v3010 = vpop.f32.mrb[0].mxu0
        %3011 = vmatprep.mubr.f32.mxu0 0.0
        %3012 = vmatmul.mubr.f32.gmra.mrb[0].mxu0 %v2831
        %v3013 = vpop.f32.mrb[0].mxu0
        %v3014 = vadd.f32 0.0, %v3013
        %v3015 = vpop.f32.mrb[0].mxu0
        %3016 = vmatprep.mubr.f32.mxu0 0.0
        %3017 = vmatmul.mubr.f32.gmra.mrb[0].mxu0 %v2834
        %v3018 = vpop.f32.mrb[0].mxu0
        %v3019 = vadd.f32 0.0, %v3018
        %v3020 = vpop.f32.mrb[0].mxu0
        %3021 = vmatprep.mubr.f32.mxu0 0.0
        %3022 = vmatmul.mubr.f32.gmra.mrb[0].mxu0 %v2837
        %v3023 = vpop.f32.mrb[0].mxu0
        %v3024 = vadd.f32 0.0, %v3023
        %v3025 = vpop.f32.mrb[0].mxu0
        %3026 = vmatprep.mubr.f32.mxu0 0.0
        %3027 = vmatmul.mubr.f32.gmra.mrb[0].mxu0 %v2840
        %v3028 = vpop.f32.mrb[0].mxu0
        %v3029 = vadd.f32 0.0, %v3028
        %v3030 = vpop.f32.mrb[0].mxu0
        %3031 = vmatprep.mubr.f32.mxu0 0.0
        %3032 = vmatmul.mubr.f32.gmra.mrb[0].mxu0 %v2843
        %v3033 = vpop.f32.mrb[0].mxu0
        %v3034 = vadd.f32 0.0, %v3033
        %v3035 = vpop.f32.mrb[0].mxu0
        %3036 = vmatprep.mubr.f32.mxu0 0.0
        %3037 = vmatmul.mubr.f32.gmra.mrb[0].mxu0 %v2846
        %v3038 = vpop.f32.mrb[0].mxu0
        %v3039 = vadd.f32 0.0, %v3038
        %v3040 = vpop.f32.mrb[0].mxu0
        %3041 = vmatprep.mubr.f32.mxu0 0.0
        %3042 = vmatmul.mubr.f32.gmra.mrb[0].mxu0 %v2849
        %v3043 = vpop.f32.mrb[0].mxu0
        %v3044 = vadd.f32 0.0, %v3043
        %v3045 = vpop.f32.mrb[0].mxu0
        %3046 = vmatprep.mubr.f32.mxu0 0.0
        %3047 = vmatmul.mubr.f32.gmra.mrb[0].mxu0 %v2852
        %v3048 = vpop.f32.mrb[0].mxu0
        %v3049 = vadd.f32 0.0, %v3048
        %v3050 = vpop.f32.mrb[0].mxu0
        %3051 = vmatprep.mubr.f32.mxu0 0.0
        %3052 = vmatmul.mubr.f32.gmra.mrb[0].mxu0 %v2855
        %v3053 = vpop.f32.mrb[0].mxu0
        %v3054 = vadd.f32 0.0, %v3053
        %v3055 = vpop.f32.mrb[0].mxu0
        %3056 = vmatprep.mubr.f32.mxu0 0.0
        %3057 = vmatmul.mubr.f32.gmra.mrb[0].mxu0 %v2858
        %v3058 = vpop.f32.mrb[0].mxu0
        %v3059 = vadd.f32 0.0, %v3058
        %v3060 = vpop.f32.mrb[0].mxu0
        %3061 = vmatprep.mubr.f32.mxu0 0.0
        %3062 = vmatmul.mubr.f32.gmra.mrb[0].mxu0 %v2861
        %v3063 = vpop.f32.mrb[0].mxu0
        %v3064 = vadd.f32 0.0, %v3063
        %v3065 = vpop.f32.mrb[0].mxu0
        %3066 = vmatprep.mubr.f32.mxu0 0.0
        %3067 = vmatmul.mubr.f32.gmra.mrb[0].mxu0 %v2864
        %v3068 = vpop.f32.mrb[0].mxu0
        %v3069 = vadd.f32 0.0, %v3068
        %v3070 = vpop.f32.mrb[0].mxu0
        %3071 = vmatprep.mubr.f32.mxu0 0.0
        %3072 = vmatmul.mubr.f32.gmra.mrb[0].mxu0 %v2867
        %v3073 = vpop.f32.mrb[0].mxu0
        %v3074 = vadd.f32 0.0, %v3073
        %v3075 = vpop.f32.mrb[0].mxu0
        %3076 = vmatprep.mubr.f32.mxu0 0.0
        %3077 = vmatmul.mubr.f32.gmra.mrb[0].mxu0 %v2870
        %v3078 = vpop.f32.mrb[0].mxu0
        %v3079 = vadd.f32 0.0, %v3078
        %v3080 = vpop.f32.mrb[0].mxu0
        %3081 = vmatprep.mubr.f32.mxu0 0.0
        %3082 = vmatmul.mubr.f32.gmra.mrb[0].mxu0 %v2873
        %v3083 = vpop.f32.mrb[0].mxu0
        %v3084 = vadd.f32 0.0, %v3083
        %v3085 = vpop.f32.mrb[0].mxu0
        %3086 = vmatprep.mubr.f32.mxu0 0.0
        %3087 = vmatmul.mubr.f32.gmra.mrb[0].mxu0 %v2876
        %v3088 = vpop.f32.mrb[0].mxu0
        %v3089 = vadd.f32 0.0, %v3088
        %v3090 = vpop.f32.mrb[0].mxu0
        %3091 = vmatprep.mubr.f32.mxu0 0.0
        %3092 = vmatmul.mubr.f32.gmra.mrb[0].mxu0 %v2879
        %v3093 = vpop.f32.mrb[0].mxu0
        %v3094 = vadd.f32 0.0, %v3093
        %v3095 = vpop.f32.mrb[0].mxu0
        %3096 = vmatprep.mubr.f32.mxu0 0.0
        %3097 = vmatmul.mubr.f32.gmra.mrb[0].mxu0 %v2882
        %v3098 = vpop.f32.mrb[0].mxu0
        %v3099 = vadd.f32 0.0, %v3098
        %v3100 = vpop.f32.mrb[0].mxu0
        %3101 = vmatprep.mubr.f32.mxu0 0.0
        %3102 = vmatmul.mubr.f32.gmra.mrb[0].mxu0 %v2885
        %v3103 = vpop.f32.mrb[0].mxu0
        %v3104 = vadd.f32 0.0, %v3103
        %v3105 = vpop.f32.mrb[0].mxu0
        %3106 = vmatprep.mubr.f32.mxu0 0.0
        %3107 = vmatmul.mubr.f32.gmra.mrb[0].mxu0 %v2888
        %v3108 = vpop.f32.mrb[0].mxu0
        %v3109 = vadd.f32 0.0, %v3108
        %v3110 = vpop.f32.mrb[0].mxu0
        %3111 = vmatprep.mubr.f32.mxu0 0.0
        %3112 = vmatmul.mubr.f32.gmra.mrb[0].mxu0 %v2891
        %v3113 = vpop.f32.mrb[0].mxu0
        %v3114 = vadd.f32 0.0, %v3113
        %v3115 = vpop.f32.mrb[0].mxu0
        %3116 = vmatprep.mubr.f32.mxu0 0.0
        %3117 = vmatmul.mubr.f32.gmra.mrb[0].mxu0 %v2894
        %v3118 = vpop.f32.mrb[0].mxu0
        %v3119 = vadd.f32 0.0, %v3118
        %v3120 = vpop.f32.mrb[0].mxu0
        %3121 = vmatprep.mubr.f32.mxu0 0.0
        %3122 = vmatmul.mubr.f32.gmra.mrb[0].mxu0 %v2897
        %v3123 = vpop.f32.mrb[0].mxu0
        %v3124 = vadd.f32 0.0, %v3123
        %v3125 = vpop.f32.mrb[0].mxu0
        %3126 = vdwg.mxu0
        %v3127 = vadd.f32 %v2736, %v2969
        %v3128 = vadd.f32 %v2737, %v2974
        %v3129 = vadd.f32 %v2738, %v2979
        %v3130 = vadd.f32 %v2739, %v2984
        %v3131 = vadd.f32 %v2740, %v2989
        %v3132 = vadd.f32 %v2741, %v2994
        %v3133 = vadd.f32 %v2742, %v2999
        %v3134 = vadd.f32 %v2743, %v3004
        %v3135 = vadd.f32 %v2744, %v3009
        %v3136 = vadd.f32 %v2745, %v3014
        %v3137 = vadd.f32 %v2746, %v3019
        %v3138 = vadd.f32 %v2747, %v3024
        %v3139 = vadd.f32 %v2748, %v3029
        %v3140 = vadd.f32 %v2749, %v3034
        %v3141 = vadd.f32 %v2750, %v3039
        %v3142 = vadd.f32 %v2751, %v3044
        %v3143 = vadd.f32 %v2752, %v3049
        %v3144 = vadd.f32 %v2753, %v3054
        %v3145 = vadd.f32 %v2754, %v3059
        %v3146 = vadd.f32 %v2755, %v3064
        %v3147 = vadd.f32 %v2756, %v3069
        %v3148 = vadd.f32 %v2757, %v3074
        %v3149 = vadd.f32 %v2758, %v3079
        %v3150 = vadd.f32 %v2759, %v3084
        %v3151 = vadd.f32 %v2760, %v3089
        %v3152 = vadd.f32 %v2761, %v3094
        %v3153 = vadd.f32 %v2762, %v3099
        %v3154 = vadd.f32 %v2763, %v3104
        %v3155 = vadd.f32 %v2764, %v3109
        %v3156 = vadd.f32 %v2765, %v3114
        %v3157 = vadd.f32 %v2766, %v3119
        %v3158 = vadd.f32 %v2767, %v3124
        %v3159 = vld [vmem:[%s2768 + $0x1] sm:$0xff]
        %v3160 = vld [vmem:[%s2768 + $0x9] sm:$0xff]
        %v3161 = vld [vmem:[%s2768 + $0x19] sm:$0xff]
        %v3162 = vld [vmem:[%s2768 + $0x21] sm:$0xff]
        %v3163 = vld [vmem:[%s2768 + $0x31] sm:$0xff]
        %v3164 = vld [vmem:[%s2768 + $0x39] sm:$0xff]
        %v3165 = vld [vmem:[%s2768 + $0x49] sm:$0xff]
        %v3166 = vld [vmem:[%s2768 + $0x51] sm:$0xff]
        %v3167 = vld [vmem:[%s2768 + $0x61] sm:$0xff]
        %v3168 = vld [vmem:[%s2768 + $0x69] sm:$0xff]
        %v3169 = vld [vmem:[%s2768 + $0x79] sm:$0xff]
        %v3170 = vld [vmem:[%s2768 + $0x81] sm:$0xff]
        %v3171 = vld [vmem:[%s2768 + $0x91] sm:$0xff]
        %v3172 = vld [vmem:[%s2768 + $0x99] sm:$0xff]
        %v3173 = vld [vmem:[%s2768 + $0xa9] sm:$0xff]
        %v3174 = vld [vmem:[%s2768 + $0xb1] sm:$0xff]
        %v3175 = vld [vmem:[%s2768 + $0xc1] sm:$0xff]
        %v3176 = vld [vmem:[%s2768 + $0xc9] sm:$0xff]
        %v3177 = vld [vmem:[%s2768 + $0xd9] sm:$0xff]
        %v3178 = vld [vmem:[%s2768 + $0xe1] sm:$0xff]
        %v3179 = vld [vmem:[%s2768 + $0xf1] sm:$0xff]
        %v3180 = vld [vmem:[%s2768 + $0xf9] sm:$0xff]
        %v3181 = vld [vmem:[%s2768 + $0x109] sm:$0xff]
        %v3182 = vld [vmem:[%s2768 + $0x111] sm:$0xff]
        %v3183 = vld [vmem:[%s2768 + $0x121] sm:$0xff]
        %v3184 = vld [vmem:[%s2768 + $0x129] sm:$0xff]
        %v3185 = vld [vmem:[%s2768 + $0x139] sm:$0xff]
        %v3186 = vld [vmem:[%s2768 + $0x141] sm:$0xff]
        %v3187 = vld [vmem:[%s2768 + $0x151] sm:$0xff]
        %v3188 = vld [vmem:[%s2768 + $0x159] sm:$0xff]
        %v3189 = vld [vmem:[%s2768 + $0x169] sm:$0xff]
        %v3190 = vld [vmem:[%s2768 + $0x171] sm:$0xff]
        %s3191 = scalar_lea.vmem %s1, 28
        %v3192 = vld [vmem:[%s3191] sm:$0x7]
        %v3194 = vsel %vm333, %v3159, 0
        %v3197 = vsel %vm333, %v3160, 0
        %v3200 = vsel %vm333, %v3161, 0
        %v3203 = vsel %vm333, %v3162, 0
        %v3206 = vsel %vm333, %v3163, 0
        %v3209 = vsel %vm333, %v3164, 0
        %v3212 = vsel %vm333, %v3165, 0
        %v3215 = vsel %vm333, %v3166, 0
        %v3218 = vsel %vm333, %v3167, 0
        %v3221 = vsel %vm333, %v3168, 0
        %v3224 = vsel %vm333, %v3169, 0
        %v3227 = vsel %vm333, %v3170, 0
        %v3230 = vsel %vm333, %v3171, 0
        %v3233 = vsel %vm333, %v3172, 0
        %v3236 = vsel %vm333, %v3173, 0
        %v3239 = vsel %vm333, %v3174, 0
        %v3242 = vsel %vm333, %v3175, 0
        %v3245 = vsel %vm333, %v3176, 0
        %v3248 = vsel %vm333, %v3177, 0
        %v3251 = vsel %vm333, %v3178, 0
        %v3254 = vsel %vm333, %v3179, 0
        %v3257 = vsel %vm333, %v3180, 0
        %v3260 = vsel %vm333, %v3181, 0
        %v3263 = vsel %vm333, %v3182, 0
        %v3266 = vsel %vm333, %v3183, 0
        %v3269 = vsel %vm333, %v3184, 0
        %v3272 = vsel %vm333, %v3185, 0
        %v3275 = vsel %vm333, %v3186, 0
        %v3278 = vsel %vm333, %v3187, 0
        %v3281 = vsel %vm333, %v3188, 0
        %v3284 = vsel %vm333, %v3189, 0
        %v3287 = vsel %vm333, %v3190, 0
        %v3290 = vsel %vm655, %v3192, 0
        %3292 = vmatprep.subr.mxu0 0.0
        %3293 = vmatpush1.msra.mxu0 %v3290
        %3294 = vmatprep.subr.mxu0 0.0
        %3295 = vmatpush1.msra.mxu0 0.0
        %3296 = vmatprep.subr.mxu0 0.0
        %3297 = vmatpush1.msra.mxu0 0.0
        %3298 = vmatprep.subr.mxu0 0.0
        %3299 = vmatpush1.msra.mxu0 0.0
        %3300 = vmatprep.subr.mxu0 0.0
        %3301 = vmatpush1.msra.mxu0 0.0
        %3302 = vmatprep.subr.mxu0 0.0
        %3303 = vmatpush1.msra.mxu0 0.0
        %3304 = vmatprep.subr.mxu0 0.0
        %3305 = vmatpush1.msra.mxu0 0.0
        %3306 = vmatprep.subr.mxu0 0.0
        %3307 = vmatpush1.msra.mxu0 0.0
        %3308 = vmatprep.subr.mxu0 0.0
        %3309 = vmatpush1.msra.mxu0 0.0
        %3310 = vmatprep.subr.mxu0 0.0
        %3311 = vmatpush1.msra.mxu0 0.0
        %3312 = vmatprep.subr.mxu0 0.0
        %3313 = vmatpush1.msra.mxu0 0.0
        %3314 = vmatprep.subr.mxu0 0.0
        %3315 = vmatpush1.msra.mxu0 0.0
        %3316 = vmatprep.subr.mxu0 0.0
        %3317 = vmatpush1.msra.mxu0 0.0
        %3318 = vmatprep.subr.mxu0 0.0
        %3319 = vmatpush1.msra.mxu0 0.0
        %3320 = vmatprep.subr.mxu0 0.0
        %3321 = vmatpush1.msra.mxu0 0.0
        %3322 = vmatprep.subr.mxu0 0.0
        %3323 = vmatpush1.msra.mxu0 0.0
        %3324 = vmatprep.subr.mxu0 0.0
        %3325 = vmatpush1.msra.mxu0 0.0
        %3326 = vmatprep.subr.mxu0 0.0
        %3327 = vmatpush1.msra.mxu0 0.0
        %3328 = vmatprep.subr.mxu0 0.0
        %3329 = vmatpush1.msra.mxu0 0.0
        %3330 = vmatprep.subr.mxu0 0.0
        %3331 = vmatpush1.msra.mxu0 0.0
        %3332 = vmatprep.subr.mxu0 0.0
        %3333 = vmatpush1.msra.mxu0 0.0
        %3334 = vmatprep.subr.mxu0 0.0
        %3335 = vmatpush1.msra.mxu0 0.0
        %3336 = vmatprep.subr.mxu0 0.0
        %3337 = vmatpush1.msra.mxu0 0.0
        %3338 = vmatprep.subr.mxu0 0.0
        %3339 = vmatpush1.msra.mxu0 0.0
        %3340 = vmatprep.subr.mxu0 0.0
        %3341 = vmatpush1.msra.mxu0 0.0
        %3342 = vmatprep.subr.mxu0 0.0
        %3343 = vmatpush1.msra.mxu0 0.0
        %3344 = vmatprep.subr.mxu0 0.0
        %3345 = vmatpush1.msra.mxu0 0.0
        %3346 = vmatprep.subr.mxu0 0.0
        %3347 = vmatpush1.msra.mxu0 0.0
        %3348 = vmatprep.subr.mxu0 0.0
        %3349 = vmatpush1.msra.mxu0 0.0
        %3350 = vmatprep.subr.mxu0 0.0
        %3351 = vmatpush1.msra.mxu0 0.0
        %3352 = vmatprep.subr.mxu0 0.0
        %3353 = vmatpush1.msra.mxu0 0.0
        %3354 = vmatprep.subr.mxu0 0.0
        %3355 = vmatpush1.msra.mxu0 0.0
        %3356 = vmatprep.mubr.f32.mxu0 0.0
        %3357 = vmatmul.mubr.f32.gmra.mrb[0].mxu0 %v3194
        %v3358 = vpop.f32.mrb[0].mxu0
        %v3359 = vadd.f32 0.0, %v3358
        %v3360 = vpop.f32.mrb[0].mxu0
        %3361 = vmatprep.mubr.f32.mxu0 0.0
        %3362 = vmatmul.mubr.f32.gmra.mrb[0].mxu0 %v3197
        %v3363 = vpop.f32.mrb[0].mxu0
        %v3364 = vadd.f32 0.0, %v3363
        %v3365 = vpop.f32.mrb[0].mxu0
        %3366 = vmatprep.mubr.f32.mxu0 0.0
        %3367 = vmatmul.mubr.f32.gmra.mrb[0].mxu0 %v3200
        %v3368 = vpop.f32.mrb[0].mxu0
        %v3369 = vadd.f32 0.0, %v3368
        %v3370 = vpop.f32.mrb[0].mxu0
        %3371 = vmatprep.mubr.f32.mxu0 0.0
        %3372 = vmatmul.mubr.f32.gmra.mrb[0].mxu0 %v3203
        %v3373 = vpop.f32.mrb[0].mxu0
        %v3374 = vadd.f32 0.0, %v3373
        %v3375 = vpop.f32.mrb[0].mxu0
        %3376 = vmatprep.mubr.f32.mxu0 0.0
        %3377 = vmatmul.mubr.f32.gmra.mrb[0].mxu0 %v3206
        %v3378 = vpop.f32.mrb[0].mxu0
        %v3379 = vadd.f32 0.0, %v3378
        %v3380 = vpop.f32.mrb[0].mxu0
        %3381 = vmatprep.mubr.f32.mxu0 0.0
        %3382 = vmatmul.mubr.f32.gmra.mrb[0].mxu0 %v3209
        %v3383 = vpop.f32.mrb[0].mxu0
        %v3384 = vadd.f32 0.0, %v3383
        %v3385 = vpop.f32.mrb[0].mxu0
        %3386 = vmatprep.mubr.f32.mxu0 0.0
        %3387 = vmatmul.mubr.f32.gmra.mrb[0].mxu0 %v3212
        %v3388 = vpop.f32.mrb[0].mxu0
        %v3389 = vadd.f32 0.0, %v3388
        %v3390 = vpop.f32.mrb[0].mxu0
        %3391 = vmatprep.mubr.f32.mxu0 0.0
        %3392 = vmatmul.mubr.f32.gmra.mrb[0].mxu0 %v3215
        %v3393 = vpop.f32.mrb[0].mxu0
        %v3394 = vadd.f32 0.0, %v3393
        %v3395 = vpop.f32.mrb[0].mxu0
        %3396 = vmatprep.mubr.f32.mxu0 0.0
        %3397 = vmatmul.mubr.f32.gmra.mrb[0].mxu0 %v3218
        %v3398 = vpop.f32.mrb[0].mxu0
        %v3399 = vadd.f32 0.0, %v3398
        %v3400 = vpop.f32.mrb[0].mxu0
        %3401 = vmatprep.mubr.f32.mxu0 0.0
        %3402 = vmatmul.mubr.f32.gmra.mrb[0].mxu0 %v3221
        %v3403 = vpop.f32.mrb[0].mxu0
        %v3404 = vadd.f32 0.0, %v3403
        %v3405 = vpop.f32.mrb[0].mxu0
        %3406 = vmatprep.mubr.f32.mxu0 0.0
        %3407 = vmatmul.mubr.f32.gmra.mrb[0].mxu0 %v3224
        %v3408 = vpop.f32.mrb[0].mxu0
        %v3409 = vadd.f32 0.0, %v3408
        %v3410 = vpop.f32.mrb[0].mxu0
        %3411 = vmatprep.mubr.f32.mxu0 0.0
        %3412 = vmatmul.mubr.f32.gmra.mrb[0].mxu0 %v3227
        %v3413 = vpop.f32.mrb[0].mxu0
        %v3414 = vadd.f32 0.0, %v3413
        %v3415 = vpop.f32.mrb[0].mxu0
        %3416 = vmatprep.mubr.f32.mxu0 0.0
        %3417 = vmatmul.mubr.f32.gmra.mrb[0].mxu0 %v3230
        %v3418 = vpop.f32.mrb[0].mxu0
        %v3419 = vadd.f32 0.0, %v3418
        %v3420 = vpop.f32.mrb[0].mxu0
        %3421 = vmatprep.mubr.f32.mxu0 0.0
        %3422 = vmatmul.mubr.f32.gmra.mrb[0].mxu0 %v3233
        %v3423 = vpop.f32.mrb[0].mxu0
        %v3424 = vadd.f32 0.0, %v3423
        %v3425 = vpop.f32.mrb[0].mxu0
        %3426 = vmatprep.mubr.f32.mxu0 0.0
        %3427 = vmatmul.mubr.f32.gmra.mrb[0].mxu0 %v3236
        %v3428 = vpop.f32.mrb[0].mxu0
        %v3429 = vadd.f32 0.0, %v3428
        %v3430 = vpop.f32.mrb[0].mxu0
        %3431 = vmatprep.mubr.f32.mxu0 0.0
        %3432 = vmatmul.mubr.f32.gmra.mrb[0].mxu0 %v3239
        %v3433 = vpop.f32.mrb[0].mxu0
        %v3434 = vadd.f32 0.0, %v3433
        %v3435 = vpop.f32.mrb[0].mxu0
        %3436 = vmatprep.mubr.f32.mxu0 0.0
        %3437 = vmatmul.mubr.f32.gmra.mrb[0].mxu0 %v3242
        %v3438 = vpop.f32.mrb[0].mxu0
        %v3439 = vadd.f32 0.0, %v3438
        %v3440 = vpop.f32.mrb[0].mxu0
        %3441 = vmatprep.mubr.f32.mxu0 0.0
        %3442 = vmatmul.mubr.f32.gmra.mrb[0].mxu0 %v3245
        %v3443 = vpop.f32.mrb[0].mxu0
        %v3444 = vadd.f32 0.0, %v3443
        %v3445 = vpop.f32.mrb[0].mxu0
        %3446 = vmatprep.mubr.f32.mxu0 0.0
        %3447 = vmatmul.mubr.f32.gmra.mrb[0].mxu0 %v3248
        %v3448 = vpop.f32.mrb[0].mxu0
        %v3449 = vadd.f32 0.0, %v3448
        %v3450 = vpop.f32.mrb[0].mxu0
        %3451 = vmatprep.mubr.f32.mxu0 0.0
        %3452 = vmatmul.mubr.f32.gmra.mrb[0].mxu0 %v3251
        %v3453 = vpop.f32.mrb[0].mxu0
        %v3454 = vadd.f32 0.0, %v3453
        %v3455 = vpop.f32.mrb[0].mxu0
        %3456 = vmatprep.mubr.f32.mxu0 0.0
        %3457 = vmatmul.mubr.f32.gmra.mrb[0].mxu0 %v3254
        %v3458 = vpop.f32.mrb[0].mxu0
        %v3459 = vadd.f32 0.0, %v3458
        %v3460 = vpop.f32.mrb[0].mxu0
        %3461 = vmatprep.mubr.f32.mxu0 0.0
        %3462 = vmatmul.mubr.f32.gmra.mrb[0].mxu0 %v3257
        %v3463 = vpop.f32.mrb[0].mxu0
        %v3464 = vadd.f32 0.0, %v3463
        %v3465 = vpop.f32.mrb[0].mxu0
        %3466 = vmatprep.mubr.f32.mxu0 0.0
        %3467 = vmatmul.mubr.f32.gmra.mrb[0].mxu0 %v3260
        %v3468 = vpop.f32.mrb[0].mxu0
        %v3469 = vadd.f32 0.0, %v3468
        %v3470 = vpop.f32.mrb[0].mxu0
        %3471 = vmatprep.mubr.f32.mxu0 0.0
        %3472 = vmatmul.mubr.f32.gmra.mrb[0].mxu0 %v3263
        %v3473 = vpop.f32.mrb[0].mxu0
        %v3474 = vadd.f32 0.0, %v3473
        %v3475 = vpop.f32.mrb[0].mxu0
        %3476 = vmatprep.mubr.f32.mxu0 0.0
        %3477 = vmatmul.mubr.f32.gmra.mrb[0].mxu0 %v3266
        %v3478 = vpop.f32.mrb[0].mxu0
        %v3479 = vadd.f32 0.0, %v3478
        %v3480 = vpop.f32.mrb[0].mxu0
        %3481 = vmatprep.mubr.f32.mxu0 0.0
        %3482 = vmatmul.mubr.f32.gmra.mrb[0].mxu0 %v3269
        %v3483 = vpop.f32.mrb[0].mxu0
        %v3484 = vadd.f32 0.0, %v3483
        %v3485 = vpop.f32.mrb[0].mxu0
        %3486 = vmatprep.mubr.f32.mxu0 0.0
        %3487 = vmatmul.mubr.f32.gmra.mrb[0].mxu0 %v3272
        %v3488 = vpop.f32.mrb[0].mxu0
        %v3489 = vadd.f32 0.0, %v3488
        %v3490 = vpop.f32.mrb[0].mxu0
        %3491 = vmatprep.mubr.f32.mxu0 0.0
        %3492 = vmatmul.mubr.f32.gmra.mrb[0].mxu0 %v3275
        %v3493 = vpop.f32.mrb[0].mxu0
        %v3494 = vadd.f32 0.0, %v3493
        %v3495 = vpop.f32.mrb[0].mxu0
        %3496 = vmatprep.mubr.f32.mxu0 0.0
        %3497 = vmatmul.mubr.f32.gmra.mrb[0].mxu0 %v3278
        %v3498 = vpop.f32.mrb[0].mxu0
        %v3499 = vadd.f32 0.0, %v3498
        %v3500 = vpop.f32.mrb[0].mxu0
        %3501 = vmatprep.mubr.f32.mxu0 0.0
        %3502 = vmatmul.mubr.f32.gmra.mrb[0].mxu0 %v3281
        %v3503 = vpop.f32.mrb[0].mxu0
        %v3504 = vadd.f32 0.0, %v3503
        %v3505 = vpop.f32.mrb[0].mxu0
        %3506 = vmatprep.mubr.f32.mxu0 0.0
        %3507 = vmatmul.mubr.f32.gmra.mrb[0].mxu0 %v3284
        %v3508 = vpop.f32.mrb[0].mxu0
        %v3509 = vadd.f32 0.0, %v3508
        %v3510 = vpop.f32.mrb[0].mxu0
        %3511 = vmatprep.mubr.f32.mxu0 0.0
        %3512 = vmatmul.mubr.f32.gmra.mrb[0].mxu0 %v3287
        %v3513 = vpop.f32.mrb[0].mxu0
        %v3514 = vadd.f32 0.0, %v3513
        %v3515 = vpop.f32.mrb[0].mxu0
        %3516 = vdwg.mxu0
        %v3517 = vadd.f32 %v3127, %v3359
        %v3518 = vadd.f32 %v3128, %v3364
        %v3519 = vadd.f32 %v3129, %v3369
        %v3520 = vadd.f32 %v3130, %v3374
        %v3521 = vadd.f32 %v3131, %v3379
        %v3522 = vadd.f32 %v3132, %v3384
        %v3523 = vadd.f32 %v3133, %v3389
        %v3524 = vadd.f32 %v3134, %v3394
        %v3525 = vadd.f32 %v3135, %v3399
        %v3526 = vadd.f32 %v3136, %v3404
        %v3527 = vadd.f32 %v3137, %v3409
        %v3528 = vadd.f32 %v3138, %v3414
        %v3529 = vadd.f32 %v3139, %v3419
        %v3530 = vadd.f32 %v3140, %v3424
        %v3531 = vadd.f32 %v3141, %v3429
        %v3532 = vadd.f32 %v3142, %v3434
        %v3533 = vadd.f32 %v3143, %v3439
        %v3534 = vadd.f32 %v3144, %v3444
        %v3535 = vadd.f32 %v3145, %v3449
        %v3536 = vadd.f32 %v3146, %v3454
        %v3537 = vadd.f32 %v3147, %v3459
        %v3538 = vadd.f32 %v3148, %v3464
        %v3539 = vadd.f32 %v3149, %v3469
        %v3540 = vadd.f32 %v3150, %v3474
        %v3541 = vadd.f32 %v3151, %v3479
        %v3542 = vadd.f32 %v3152, %v3484
        %v3543 = vadd.f32 %v3153, %v3489
        %v3544 = vadd.f32 %v3154, %v3494
        %v3545 = vadd.f32 %v3155, %v3499
        %v3546 = vadd.f32 %v3156, %v3504
        %v3547 = vadd.f32 %v3157, %v3509
        %v3548 = vadd.f32 %v3158, %v3514
        %v3549 = vld [vmem:[%s2768 + $0x2] sm:$0xff]
        %v3550 = vld [vmem:[%s2768 + $0xa] sm:$0xff]
        %v3551 = vld [vmem:[%s2768 + $0x1a] sm:$0xff]
        %v3552 = vld [vmem:[%s2768 + $0x22] sm:$0xff]
        %v3553 = vld [vmem:[%s2768 + $0x32] sm:$0xff]
        %v3554 = vld [vmem:[%s2768 + $0x3a] sm:$0xff]
        %v3555 = vld [vmem:[%s2768 + $0x4a] sm:$0xff]
        %v3556 = vld [vmem:[%s2768 + $0x52] sm:$0xff]
        %v3557 = vld [vmem:[%s2768 + $0x62] sm:$0xff]
        %v3558 = vld [vmem:[%s2768 + $0x6a] sm:$0xff]
        %v3559 = vld [vmem:[%s2768 + $0x7a] sm:$0xff]
        %v3560 = vld [vmem:[%s2768 + $0x82] sm:$0xff]
        %v3561 = vld [vmem:[%s2768 + $0x92] sm:$0xff]
        %v3562 = vld [vmem:[%s2768 + $0x9a] sm:$0xff]
        %v3563 = vld [vmem:[%s2768 + $0xaa] sm:$0xff]
        %v3564 = vld [vmem:[%s2768 + $0xb2] sm:$0xff]
        %v3565 = vld [vmem:[%s2768 + $0xc2] sm:$0xff]
        %v3566 = vld [vmem:[%s2768 + $0xca] sm:$0xff]
        %v3567 = vld [vmem:[%s2768 + $0xda] sm:$0xff]
        %v3568 = vld [vmem:[%s2768 + $0xe2] sm:$0xff]
        %v3569 = vld [vmem:[%s2768 + $0xf2] sm:$0xff]
        %v3570 = vld [vmem:[%s2768 + $0xfa] sm:$0xff]
        %v3571 = vld [vmem:[%s2768 + $0x10a] sm:$0xff]
        %v3572 = vld [vmem:[%s2768 + $0x112] sm:$0xff]
        %v3573 = vld [vmem:[%s2768 + $0x122] sm:$0xff]
        %v3574 = vld [vmem:[%s2768 + $0x12a] sm:$0xff]
        %v3575 = vld [vmem:[%s2768 + $0x13a] sm:$0xff]
        %v3576 = vld [vmem:[%s2768 + $0x142] sm:$0xff]
        %v3577 = vld [vmem:[%s2768 + $0x152] sm:$0xff]
        %v3578 = vld [vmem:[%s2768 + $0x15a] sm:$0xff]
        %v3579 = vld [vmem:[%s2768 + $0x16a] sm:$0xff]
        %v3580 = vld [vmem:[%s2768 + $0x172] sm:$0xff]
        %s3581 = scalar_lea.vmem %s1, 32
        %v3582 = vld [vmem:[%s3581] sm:$0x7]
        %v3584 = vsel %vm333, %v3549, 0
        %v3587 = vsel %vm333, %v3550, 0
        %v3590 = vsel %vm333, %v3551, 0
        %v3593 = vsel %vm333, %v3552, 0
        %v3596 = vsel %vm333, %v3553, 0
        %v3599 = vsel %vm333, %v3554, 0
        %v3602 = vsel %vm333, %v3555, 0
        %v3605 = vsel %vm333, %v3556, 0
        %v3608 = vsel %vm333, %v3557, 0
        %v3611 = vsel %vm333, %v3558, 0
        %v3614 = vsel %vm333, %v3559, 0
        %v3617 = vsel %vm333, %v3560, 0
        %v3620 = vsel %vm333, %v3561, 0
        %v3623 = vsel %vm333, %v3562, 0
        %v3626 = vsel %vm333, %v3563, 0
        %v3629 = vsel %vm333, %v3564, 0
        %v3632 = vsel %vm333, %v3565, 0
        %v3635 = vsel %vm333, %v3566, 0
        %v3638 = vsel %vm333, %v3567, 0
        %v3641 = vsel %vm333, %v3568, 0
        %v3644 = vsel %vm333, %v3569, 0
        %v3647 = vsel %vm333, %v3570, 0
        %v3650 = vsel %vm333, %v3571, 0
        %v3653 = vsel %vm333, %v3572, 0
        %v3656 = vsel %vm333, %v3573, 0
        %v3659 = vsel %vm333, %v3574, 0
        %v3662 = vsel %vm333, %v3575, 0
        %v3665 = vsel %vm333, %v3576, 0
        %v3668 = vsel %vm333, %v3577, 0
        %v3671 = vsel %vm333, %v3578, 0
        %v3674 = vsel %vm333, %v3579, 0
        %v3677 = vsel %vm333, %v3580, 0
        %v3680 = vsel %vm655, %v3582, 0
        %3682 = vmatprep.subr.mxu0 0.0
        %3683 = vmatpush1.msra.mxu0 %v3680
        %3684 = vmatprep.subr.mxu0 0.0
        %3685 = vmatpush1.msra.mxu0 0.0
        %3686 = vmatprep.subr.mxu0 0.0
        %3687 = vmatpush1.msra.mxu0 0.0
        %3688 = vmatprep.subr.mxu0 0.0
        %3689 = vmatpush1.msra.mxu0 0.0
        %3690 = vmatprep.subr.mxu0 0.0
        %3691 = vmatpush1.msra.mxu0 0.0
        %3692 = vmatprep.subr.mxu0 0.0
        %3693 = vmatpush1.msra.mxu0 0.0
        %3694 = vmatprep.subr.mxu0 0.0
        %3695 = vmatpush1.msra.mxu0 0.0
        %3696 = vmatprep.subr.mxu0 0.0
        %3697 = vmatpush1.msra.mxu0 0.0
        %3698 = vmatprep.subr.mxu0 0.0
        %3699 = vmatpush1.msra.mxu0 0.0
        %3700 = vmatprep.subr.mxu0 0.0
        %3701 = vmatpush1.msra.mxu0 0.0
        %3702 = vmatprep.subr.mxu0 0.0
        %3703 = vmatpush1.msra.mxu0 0.0
        %3704 = vmatprep.subr.mxu0 0.0
        %3705 = vmatpush1.msra.mxu0 0.0
        %3706 = vmatprep.subr.mxu0 0.0
        %3707 = vmatpush1.msra.mxu0 0.0
        %3708 = vmatprep.subr.mxu0 0.0
        %3709 = vmatpush1.msra.mxu0 0.0
        %3710 = vmatprep.subr.mxu0 0.0
        %3711 = vmatpush1.msra.mxu0 0.0
        %3712 = vmatprep.subr.mxu0 0.0
        %3713 = vmatpush1.msra.mxu0 0.0
        %3714 = vmatprep.subr.mxu0 0.0
        %3715 = vmatpush1.msra.mxu0 0.0
        %3716 = vmatprep.subr.mxu0 0.0
        %3717 = vmatpush1.msra.mxu0 0.0
        %3718 = vmatprep.subr.mxu0 0.0
        %3719 = vmatpush1.msra.mxu0 0.0
        %3720 = vmatprep.subr.mxu0 0.0
        %3721 = vmatpush1.msra.mxu0 0.0
        %3722 = vmatprep.subr.mxu0 0.0
        %3723 = vmatpush1.msra.mxu0 0.0
        %3724 = vmatprep.subr.mxu0 0.0
        %3725 = vmatpush1.msra.mxu0 0.0
        %3726 = vmatprep.subr.mxu0 0.0
        %3727 = vmatpush1.msra.mxu0 0.0
        %3728 = vmatprep.subr.mxu0 0.0
        %3729 = vmatpush1.msra.mxu0 0.0
        %3730 = vmatprep.subr.mxu0 0.0
        %3731 = vmatpush1.msra.mxu0 0.0
        %3732 = vmatprep.subr.mxu0 0.0
        %3733 = vmatpush1.msra.mxu0 0.0
        %3734 = vmatprep.subr.mxu0 0.0
        %3735 = vmatpush1.msra.mxu0 0.0
        %3736 = vmatprep.subr.mxu0 0.0
        %3737 = vmatpush1.msra.mxu0 0.0
        %3738 = vmatprep.subr.mxu0 0.0
        %3739 = vmatpush1.msra.mxu0 0.0
        %3740 = vmatprep.subr.mxu0 0.0
        %3741 = vmatpush1.msra.mxu0 0.0
        %3742 = vmatprep.subr.mxu0 0.0
        %3743 = vmatpush1.msra.mxu0 0.0
        %3744 = vmatprep.subr.mxu0 0.0
        %3745 = vmatpush1.msra.mxu0 0.0
        %3746 = vmatprep.mubr.f32.mxu0 0.0
        %3747 = vmatmul.mubr.f32.gmra.mrb[0].mxu0 %v3584
        %v3748 = vpop.f32.mrb[0].mxu0
        %v3749 = vadd.f32 0.0, %v3748
        %v3750 = vpop.f32.mrb[0].mxu0
        %3751 = vmatprep.mubr.f32.mxu0 0.0
        %3752 = vmatmul.mubr.f32.gmra.mrb[0].mxu0 %v3587
        %v3753 = vpop.f32.mrb[0].mxu0
        %v3754 = vadd.f32 0.0, %v3753
        %v3755 = vpop.f32.mrb[0].mxu0
        %3756 = vmatprep.mubr.f32.mxu0 0.0
        %3757 = vmatmul.mubr.f32.gmra.mrb[0].mxu0 %v3590
        %v3758 = vpop.f32.mrb[0].mxu0
        %v3759 = vadd.f32 0.0, %v3758
        %v3760 = vpop.f32.mrb[0].mxu0
        %3761 = vmatprep.mubr.f32.mxu0 0.0
        %3762 = vmatmul.mubr.f32.gmra.mrb[0].mxu0 %v3593
        %v3763 = vpop.f32.mrb[0].mxu0
        %v3764 = vadd.f32 0.0, %v3763
        %v3765 = vpop.f32.mrb[0].mxu0
        %3766 = vmatprep.mubr.f32.mxu0 0.0
        %3767 = vmatmul.mubr.f32.gmra.mrb[0].mxu0 %v3596
        %v3768 = vpop.f32.mrb[0].mxu0
        %v3769 = vadd.f32 0.0, %v3768
        %v3770 = vpop.f32.mrb[0].mxu0
        %3771 = vmatprep.mubr.f32.mxu0 0.0
        %3772 = vmatmul.mubr.f32.gmra.mrb[0].mxu0 %v3599
        %v3773 = vpop.f32.mrb[0].mxu0
        %v3774 = vadd.f32 0.0, %v3773
        %v3775 = vpop.f32.mrb[0].mxu0
        %3776 = vmatprep.mubr.f32.mxu0 0.0
        %3777 = vmatmul.mubr.f32.gmra.mrb[0].mxu0 %v3602
        %v3778 = vpop.f32.mrb[0].mxu0
        %v3779 = vadd.f32 0.0, %v3778
        %v3780 = vpop.f32.mrb[0].mxu0
        %3781 = vmatprep.mubr.f32.mxu0 0.0
        %3782 = vmatmul.mubr.f32.gmra.mrb[0].mxu0 %v3605
        %v3783 = vpop.f32.mrb[0].mxu0
        %v3784 = vadd.f32 0.0, %v3783
        %v3785 = vpop.f32.mrb[0].mxu0
        %3786 = vmatprep.mubr.f32.mxu0 0.0
        %3787 = vmatmul.mubr.f32.gmra.mrb[0].mxu0 %v3608
        %v3788 = vpop.f32.mrb[0].mxu0
        %v3789 = vadd.f32 0.0, %v3788
        %v3790 = vpop.f32.mrb[0].mxu0
        %3791 = vmatprep.mubr.f32.mxu0 0.0
        %3792 = vmatmul.mubr.f32.gmra.mrb[0].mxu0 %v3611
        %v3793 = vpop.f32.mrb[0].mxu0
        %v3794 = vadd.f32 0.0, %v3793
        %v3795 = vpop.f32.mrb[0].mxu0
        %3796 = vmatprep.mubr.f32.mxu0 0.0
        %3797 = vmatmul.mubr.f32.gmra.mrb[0].mxu0 %v3614
        %v3798 = vpop.f32.mrb[0].mxu0
        %v3799 = vadd.f32 0.0, %v3798
        %v3800 = vpop.f32.mrb[0].mxu0
        %3801 = vmatprep.mubr.f32.mxu0 0.0
        %3802 = vmatmul.mubr.f32.gmra.mrb[0].mxu0 %v3617
        %v3803 = vpop.f32.mrb[0].mxu0
        %v3804 = vadd.f32 0.0, %v3803
        %v3805 = vpop.f32.mrb[0].mxu0
        %3806 = vmatprep.mubr.f32.mxu0 0.0
        %3807 = vmatmul.mubr.f32.gmra.mrb[0].mxu0 %v3620
        %v3808 = vpop.f32.mrb[0].mxu0
        %v3809 = vadd.f32 0.0, %v3808
        %v3810 = vpop.f32.mrb[0].mxu0
        %3811 = vmatprep.mubr.f32.mxu0 0.0
        %3812 = vmatmul.mubr.f32.gmra.mrb[0].mxu0 %v3623
        %v3813 = vpop.f32.mrb[0].mxu0
        %v3814 = vadd.f32 0.0, %v3813
        %v3815 = vpop.f32.mrb[0].mxu0
        %3816 = vmatprep.mubr.f32.mxu0 0.0
        %3817 = vmatmul.mubr.f32.gmra.mrb[0].mxu0 %v3626
        %v3818 = vpop.f32.mrb[0].mxu0
        %v3819 = vadd.f32 0.0, %v3818
        %v3820 = vpop.f32.mrb[0].mxu0
        %3821 = vmatprep.mubr.f32.mxu0 0.0
        %3822 = vmatmul.mubr.f32.gmra.mrb[0].mxu0 %v3629
        %v3823 = vpop.f32.mrb[0].mxu0
        %v3824 = vadd.f32 0.0, %v3823
        %v3825 = vpop.f32.mrb[0].mxu0
        %3826 = vmatprep.mubr.f32.mxu0 0.0
        %3827 = vmatmul.mubr.f32.gmra.mrb[0].mxu0 %v3632
        %v3828 = vpop.f32.mrb[0].mxu0
        %v3829 = vadd.f32 0.0, %v3828
        %v3830 = vpop.f32.mrb[0].mxu0
        %3831 = vmatprep.mubr.f32.mxu0 0.0
        %3832 = vmatmul.mubr.f32.gmra.mrb[0].mxu0 %v3635
        %v3833 = vpop.f32.mrb[0].mxu0
        %v3834 = vadd.f32 0.0, %v3833
        %v3835 = vpop.f32.mrb[0].mxu0
        %3836 = vmatprep.mubr.f32.mxu0 0.0
        %3837 = vmatmul.mubr.f32.gmra.mrb[0].mxu0 %v3638
        %v3838 = vpop.f32.mrb[0].mxu0
        %v3839 = vadd.f32 0.0, %v3838
        %v3840 = vpop.f32.mrb[0].mxu0
        %3841 = vmatprep.mubr.f32.mxu0 0.0
        %3842 = vmatmul.mubr.f32.gmra.mrb[0].mxu0 %v3641
        %v3843 = vpop.f32.mrb[0].mxu0
        %v3844 = vadd.f32 0.0, %v3843
        %v3845 = vpop.f32.mrb[0].mxu0
        %3846 = vmatprep.mubr.f32.mxu0 0.0
        %3847 = vmatmul.mubr.f32.gmra.mrb[0].mxu0 %v3644
        %v3848 = vpop.f32.mrb[0].mxu0
        %v3849 = vadd.f32 0.0, %v3848
        %v3850 = vpop.f32.mrb[0].mxu0
        %3851 = vmatprep.mubr.f32.mxu0 0.0
        %3852 = vmatmul.mubr.f32.gmra.mrb[0].mxu0 %v3647
        %v3853 = vpop.f32.mrb[0].mxu0
        %v3854 = vadd.f32 0.0, %v3853
        %v3855 = vpop.f32.mrb[0].mxu0
        %3856 = vmatprep.mubr.f32.mxu0 0.0
        %3857 = vmatmul.mubr.f32.gmra.mrb[0].mxu0 %v3650
        %v3858 = vpop.f32.mrb[0].mxu0
        %v3859 = vadd.f32 0.0, %v3858
        %v3860 = vpop.f32.mrb[0].mxu0
        %3861 = vmatprep.mubr.f32.mxu0 0.0
        %3862 = vmatmul.mubr.f32.gmra.mrb[0].mxu0 %v3653
        %v3863 = vpop.f32.mrb[0].mxu0
        %v3864 = vadd.f32 0.0, %v3863
        %v3865 = vpop.f32.mrb[0].mxu0
        %3866 = vmatprep.mubr.f32.mxu0 0.0
        %3867 = vmatmul.mubr.f32.gmra.mrb[0].mxu0 %v3656
        %v3868 = vpop.f32.mrb[0].mxu0
        %v3869 = vadd.f32 0.0, %v3868
        %v3870 = vpop.f32.mrb[0].mxu0
        %3871 = vmatprep.mubr.f32.mxu0 0.0
        %3872 = vmatmul.mubr.f32.gmra.mrb[0].mxu0 %v3659
        %v3873 = vpop.f32.mrb[0].mxu0
        %v3874 = vadd.f32 0.0, %v3873
        %v3875 = vpop.f32.mrb[0].mxu0
        %3876 = vmatprep.mubr.f32.mxu0 0.0
        %3877 = vmatmul.mubr.f32.gmra.mrb[0].mxu0 %v3662
        %v3878 = vpop.f32.mrb[0].mxu0
        %v3879 = vadd.f32 0.0, %v3878
        %v3880 = vpop.f32.mrb[0].mxu0
        %3881 = vmatprep.mubr.f32.mxu0 0.0
        %3882 = vmatmul.mubr.f32.gmra.mrb[0].mxu0 %v3665
        %v3883 = vpop.f32.mrb[0].mxu0
        %v3884 = vadd.f32 0.0, %v3883
        %v3885 = vpop.f32.mrb[0].mxu0
        %3886 = vmatprep.mubr.f32.mxu0 0.0
        %3887 = vmatmul.mubr.f32.gmra.mrb[0].mxu0 %v3668
        %v3888 = vpop.f32.mrb[0].mxu0
        %v3889 = vadd.f32 0.0, %v3888
        %v3890 = vpop.f32.mrb[0].mxu0
        %3891 = vmatprep.mubr.f32.mxu0 0.0
        %3892 = vmatmul.mubr.f32.gmra.mrb[0].mxu0 %v3671
        %v3893 = vpop.f32.mrb[0].mxu0
        %v3894 = vadd.f32 0.0, %v3893
        %v3895 = vpop.f32.mrb[0].mxu0
        %3896 = vmatprep.mubr.f32.mxu0 0.0
        %3897 = vmatmul.mubr.f32.gmra.mrb[0].mxu0 %v3674
        %v3898 = vpop.f32.mrb[0].mxu0
        %v3899 = vadd.f32 0.0, %v3898
        %v3900 = vpop.f32.mrb[0].mxu0
        %3901 = vmatprep.mubr.f32.mxu0 0.0
        %3902 = vmatmul.mubr.f32.gmra.mrb[0].mxu0 %v3677
        %v3903 = vpop.f32.mrb[0].mxu0
        %v3904 = vadd.f32 0.0, %v3903
        %v3905 = vpop.f32.mrb[0].mxu0
        %3906 = vdwg.mxu0
        %v3907 = vadd.f32 %v3517, %v3749
        %v3908 = vadd.f32 %v3518, %v3754
        %v3909 = vadd.f32 %v3519, %v3759
        %v3910 = vadd.f32 %v3520, %v3764
        %v3911 = vadd.f32 %v3521, %v3769
        %v3912 = vadd.f32 %v3522, %v3774
        %v3913 = vadd.f32 %v3523, %v3779
        %v3914 = vadd.f32 %v3524, %v3784
        %v3915 = vadd.f32 %v3525, %v3789
        %v3916 = vadd.f32 %v3526, %v3794
        %v3917 = vadd.f32 %v3527, %v3799
        %v3918 = vadd.f32 %v3528, %v3804
        %v3919 = vadd.f32 %v3529, %v3809
        %v3920 = vadd.f32 %v3530, %v3814
        %v3921 = vadd.f32 %v3531, %v3819
        %v3922 = vadd.f32 %v3532, %v3824
        %v3923 = vadd.f32 %v3533, %v3829
        %v3924 = vadd.f32 %v3534, %v3834
        %v3925 = vadd.f32 %v3535, %v3839
        %v3926 = vadd.f32 %v3536, %v3844
        %v3927 = vadd.f32 %v3537, %v3849
        %v3928 = vadd.f32 %v3538, %v3854
        %v3929 = vadd.f32 %v3539, %v3859
        %v3930 = vadd.f32 %v3540, %v3864
        %v3931 = vadd.f32 %v3541, %v3869
        %v3932 = vadd.f32 %v3542, %v3874
        %v3933 = vadd.f32 %v3543, %v3879
        %v3934 = vadd.f32 %v3544, %v3884
        %v3935 = vadd.f32 %v3545, %v3889
        %v3936 = vadd.f32 %v3546, %v3894
        %v3937 = vadd.f32 %v3547, %v3899
        %v3938 = vadd.f32 %v3548, %v3904
        %v3940 = vlaneseq
        %v3941 = vshrl.u32 %v3940, 7
        %v3942 = vsub.s32 0, %v3941
        %v3943 = vrot.slane %v489, %v3942
        %v3945 = vadd.f32 %v3907, %v3943
        %v3946 = vadd.f32 %v3908, %v3943
        %v3947 = vadd.f32 %v3909, %v3943
        %v3948 = vadd.f32 %v3910, %v3943
        %v3949 = vadd.f32 %v3911, %v3943
        %v3950 = vadd.f32 %v3912, %v3943
        %v3951 = vadd.f32 %v3913, %v3943
        %v3952 = vadd.f32 %v3914, %v3943
        %v3953 = vadd.f32 %v3915, %v3943
        %v3954 = vadd.f32 %v3916, %v3943
        %v3955 = vadd.f32 %v3917, %v3943
        %v3956 = vadd.f32 %v3918, %v3943
        %v3957 = vadd.f32 %v3919, %v3943
        %v3958 = vadd.f32 %v3920, %v3943
        %v3959 = vadd.f32 %v3921, %v3943
        %v3960 = vadd.f32 %v3922, %v3943
        %v3961 = vadd.f32 %v3923, %v3943
        %v3962 = vadd.f32 %v3924, %v3943
        %v3963 = vadd.f32 %v3925, %v3943
        %v3964 = vadd.f32 %v3926, %v3943
        %v3965 = vadd.f32 %v3927, %v3943
        %v3966 = vadd.f32 %v3928, %v3943
        %v3967 = vadd.f32 %v3929, %v3943
        %v3968 = vadd.f32 %v3930, %v3943
        %v3969 = vadd.f32 %v3931, %v3943
        %v3970 = vadd.f32 %v3932, %v3943
        %v3971 = vadd.f32 %v3933, %v3943
        %v3972 = vadd.f32 %v3934, %v3943
        %v3973 = vadd.f32 %v3935, %v3943
        %v3974 = vadd.f32 %v3936, %v3943
        %v3975 = vadd.f32 %v3937, %v3943
        %v3976 = vadd.f32 %v3938, %v3943
        %v3977 = vmax.f32 %v3945, 0.0
        %v3978 = vmax.f32 %v3946, 0.0
        %v3979 = vmax.f32 %v3947, 0.0
        %v3980 = vmax.f32 %v3948, 0.0
        %v3981 = vmax.f32 %v3949, 0.0
        %v3982 = vmax.f32 %v3950, 0.0
        %v3983 = vmax.f32 %v3951, 0.0
        %v3984 = vmax.f32 %v3952, 0.0
        %v3985 = vmax.f32 %v3953, 0.0
        %v3986 = vmax.f32 %v3954, 0.0
        %v3987 = vmax.f32 %v3955, 0.0
        %v3988 = vmax.f32 %v3956, 0.0
        %v3989 = vmax.f32 %v3957, 0.0
        %v3990 = vmax.f32 %v3958, 0.0
        %v3991 = vmax.f32 %v3959, 0.0
        %v3992 = vmax.f32 %v3960, 0.0
        %v3993 = vmax.f32 %v3961, 0.0
        %v3994 = vmax.f32 %v3962, 0.0
        %v3995 = vmax.f32 %v3963, 0.0
        %v3996 = vmax.f32 %v3964, 0.0
        %v3997 = vmax.f32 %v3965, 0.0
        %v3998 = vmax.f32 %v3966, 0.0
        %v3999 = vmax.f32 %v3967, 0.0
        %v4000 = vmax.f32 %v3968, 0.0
        %v4001 = vmax.f32 %v3969, 0.0
        %v4002 = vmax.f32 %v3970, 0.0
        %v4003 = vmax.f32 %v3971, 0.0
        %v4004 = vmax.f32 %v3972, 0.0
        %v4005 = vmax.f32 %v3973, 0.0
        %v4006 = vmax.f32 %v3974, 0.0
        %v4007 = vmax.f32 %v3975, 0.0
        %v4008 = vmax.f32 %v3976, 0.0
        %v4041 = vcombine.high %v3977, %v3977
        %v4043 = vunpack.c.l.s4 1983009808
        %v4044 = vunpack.c.0.s8 %v4043
        %v4045 = vlaneseq
        %v4046 = vshrl.u32 %v4045, 7
        %v4047 = vsub.s32 %v4044, %v4046
        %v4048 = vrot.slane %v3977, %v4047
        %v4050 = vunpack.c.l.s4 1983009808
        %v4051 = vunpack.c.0.s8 %v4050
        %v4052 = vlaneseq
        %v4053 = vshrl.u32 %v4052, 7
        %v4054 = vsub.s32 %v4051, %v4053
        %v4055 = vrot.slane %v4041, %v4054
        %v4056 = vcombine.high %v4048, %v4048
        %v4057 = vcombine.high %v4055, %v4055
        %v4058 = vcombine.high %v3978, %v3978
        %v4060 = vunpack.c.l.s4 1983009808
        %v4061 = vunpack.c.0.s8 %v4060
        %v4062 = vlaneseq
        %v4063 = vshrl.u32 %v4062, 7
        %v4064 = vsub.s32 %v4061, %v4063
        %v4065 = vrot.slane %v3978, %v4064
        %v4067 = vunpack.c.l.s4 1983009808
        %v4068 = vunpack.c.0.s8 %v4067
        %v4069 = vlaneseq
        %v4070 = vshrl.u32 %v4069, 7
        %v4071 = vsub.s32 %v4068, %v4070
        %v4072 = vrot.slane %v4058, %v4071
        %v4073 = vcombine.high %v4065, %v4065
        %v4074 = vcombine.high %v4072, %v4072
        %v4075 = vcombine.high %v3979, %v3979
        %v4077 = vunpack.c.l.s4 1983009808
        %v4078 = vunpack.c.0.s8 %v4077
        %v4079 = vlaneseq
        %v4080 = vshrl.u32 %v4079, 7
        %v4081 = vsub.s32 %v4078, %v4080
        %v4082 = vrot.slane %v3979, %v4081
        %v4084 = vunpack.c.l.s4 1983009808
        %v4085 = vunpack.c.0.s8 %v4084
        %v4086 = vlaneseq
        %v4087 = vshrl.u32 %v4086, 7
        %v4088 = vsub.s32 %v4085, %v4087
        %v4089 = vrot.slane %v4075, %v4088
        %v4090 = vcombine.high %v4082, %v4082
        %v4091 = vcombine.high %v4089, %v4089
        %v4092 = vcombine.high %v3980, %v3980
        %v4094 = vunpack.c.l.s4 1983009808
        %v4095 = vunpack.c.0.s8 %v4094
        %v4096 = vlaneseq
        %v4097 = vshrl.u32 %v4096, 7
        %v4098 = vsub.s32 %v4095, %v4097
        %v4099 = vrot.slane %v3980, %v4098
        %v4101 = vunpack.c.l.s4 1983009808
        %v4102 = vunpack.c.0.s8 %v4101
        %v4103 = vlaneseq
        %v4104 = vshrl.u32 %v4103, 7
        %v4105 = vsub.s32 %v4102, %v4104
        %v4106 = vrot.slane %v4092, %v4105
        %v4107 = vcombine.high %v4099, %v4099
        %v4108 = vcombine.high %v4106, %v4106
        %v4109 = vcombine.high %v3981, %v3981
        %v4111 = vunpack.c.l.s4 1983009808
        %v4112 = vunpack.c.0.s8 %v4111
        %v4113 = vlaneseq
        %v4114 = vshrl.u32 %v4113, 7
        %v4115 = vsub.s32 %v4112, %v4114
        %v4116 = vrot.slane %v3981, %v4115
        %v4118 = vunpack.c.l.s4 1983009808
        %v4119 = vunpack.c.0.s8 %v4118
        %v4120 = vlaneseq
        %v4121 = vshrl.u32 %v4120, 7
        %v4122 = vsub.s32 %v4119, %v4121
        %v4123 = vrot.slane %v4109, %v4122
        %v4124 = vcombine.high %v4116, %v4116
        %v4125 = vcombine.high %v4123, %v4123
        %v4126 = vcombine.high %v3982, %v3982
        %v4128 = vunpack.c.l.s4 1983009808
        %v4129 = vunpack.c.0.s8 %v4128
        %v4130 = vlaneseq
        %v4131 = vshrl.u32 %v4130, 7
        %v4132 = vsub.s32 %v4129, %v4131
        %v4133 = vrot.slane %v3982, %v4132
        %v4135 = vunpack.c.l.s4 1983009808
        %v4136 = vunpack.c.0.s8 %v4135
        %v4137 = vlaneseq
        %v4138 = vshrl.u32 %v4137, 7
        %v4139 = vsub.s32 %v4136, %v4138
        %v4140 = vrot.slane %v4126, %v4139
        %v4141 = vcombine.high %v4133, %v4133
        %v4142 = vcombine.high %v4140, %v4140
        %v4143 = vcombine.high %v3983, %v3983
        %v4145 = vunpack.c.l.s4 1983009808
        %v4146 = vunpack.c.0.s8 %v4145
        %v4147 = vlaneseq
        %v4148 = vshrl.u32 %v4147, 7
        %v4149 = vsub.s32 %v4146, %v4148
        %v4150 = vrot.slane %v3983, %v4149
        %v4152 = vunpack.c.l.s4 1983009808
        %v4153 = vunpack.c.0.s8 %v4152
        %v4154 = vlaneseq
        %v4155 = vshrl.u32 %v4154, 7
        %v4156 = vsub.s32 %v4153, %v4155
        %v4157 = vrot.slane %v4143, %v4156
        %v4158 = vcombine.high %v4150, %v4150
        %v4159 = vcombine.high %v4157, %v4157
        %v4160 = vcombine.high %v3984, %v3984
        %v4162 = vunpack.c.l.s4 1983009808
        %v4163 = vunpack.c.0.s8 %v4162
        %v4164 = vlaneseq
        %v4165 = vshrl.u32 %v4164, 7
        %v4166 = vsub.s32 %v4163, %v4165
        %v4167 = vrot.slane %v3984, %v4166
        %v4169 = vunpack.c.l.s4 1983009808
        %v4170 = vunpack.c.0.s8 %v4169
        %v4171 = vlaneseq
        %v4172 = vshrl.u32 %v4171, 7
        %v4173 = vsub.s32 %v4170, %v4172
        %v4174 = vrot.slane %v4160, %v4173
        %v4175 = vcombine.high %v4167, %v4167
        %v4176 = vcombine.high %v4174, %v4174
        %v4177 = vcombine.high %v3985, %v3985
        %v4179 = vunpack.c.l.s4 1983009808
        %v4180 = vunpack.c.0.s8 %v4179
        %v4181 = vlaneseq
        %v4182 = vshrl.u32 %v4181, 7
        %v4183 = vsub.s32 %v4180, %v4182
        %v4184 = vrot.slane %v3985, %v4183
        %v4186 = vunpack.c.l.s4 1983009808
        %v4187 = vunpack.c.0.s8 %v4186
        %v4188 = vlaneseq
        %v4189 = vshrl.u32 %v4188, 7
        %v4190 = vsub.s32 %v4187, %v4189
        %v4191 = vrot.slane %v4177, %v4190
        %v4192 = vcombine.high %v4184, %v4184
        %v4193 = vcombine.high %v4191, %v4191
        %v4194 = vcombine.high %v3986, %v3986
        %v4196 = vunpack.c.l.s4 1983009808
        %v4197 = vunpack.c.0.s8 %v4196
        %v4198 = vlaneseq
        %v4199 = vshrl.u32 %v4198, 7
        %v4200 = vsub.s32 %v4197, %v4199
        %v4201 = vrot.slane %v3986, %v4200
        %v4203 = vunpack.c.l.s4 1983009808
        %v4204 = vunpack.c.0.s8 %v4203
        %v4205 = vlaneseq
        %v4206 = vshrl.u32 %v4205, 7
        %v4207 = vsub.s32 %v4204, %v4206
        %v4208 = vrot.slane %v4194, %v4207
        %v4209 = vcombine.high %v4201, %v4201
        %v4210 = vcombine.high %v4208, %v4208
        %v4211 = vcombine.high %v3987, %v3987
        %v4213 = vunpack.c.l.s4 1983009808
        %v4214 = vunpack.c.0.s8 %v4213
        %v4215 = vlaneseq
        %v4216 = vshrl.u32 %v4215, 7
        %v4217 = vsub.s32 %v4214, %v4216
        %v4218 = vrot.slane %v3987, %v4217
        %v4220 = vunpack.c.l.s4 1983009808
        %v4221 = vunpack.c.0.s8 %v4220
        %v4222 = vlaneseq
        %v4223 = vshrl.u32 %v4222, 7
        %v4224 = vsub.s32 %v4221, %v4223
        %v4225 = vrot.slane %v4211, %v4224
        %v4226 = vcombine.high %v4218, %v4218
        %v4227 = vcombine.high %v4225, %v4225
        %v4228 = vcombine.high %v3988, %v3988
        %v4230 = vunpack.c.l.s4 1983009808
        %v4231 = vunpack.c.0.s8 %v4230
        %v4232 = vlaneseq
        %v4233 = vshrl.u32 %v4232, 7
        %v4234 = vsub.s32 %v4231, %v4233
        %v4235 = vrot.slane %v3988, %v4234
        %v4237 = vunpack.c.l.s4 1983009808
        %v4238 = vunpack.c.0.s8 %v4237
        %v4239 = vlaneseq
        %v4240 = vshrl.u32 %v4239, 7
        %v4241 = vsub.s32 %v4238, %v4240
        %v4242 = vrot.slane %v4228, %v4241
        %v4243 = vcombine.high %v4235, %v4235
        %v4244 = vcombine.high %v4242, %v4242
        %v4245 = vcombine.high %v3989, %v3989
        %v4247 = vunpack.c.l.s4 1983009808
        %v4248 = vunpack.c.0.s8 %v4247
        %v4249 = vlaneseq
        %v4250 = vshrl.u32 %v4249, 7
        %v4251 = vsub.s32 %v4248, %v4250
        %v4252 = vrot.slane %v3989, %v4251
        %v4254 = vunpack.c.l.s4 1983009808
        %v4255 = vunpack.c.0.s8 %v4254
        %v4256 = vlaneseq
        %v4257 = vshrl.u32 %v4256, 7
        %v4258 = vsub.s32 %v4255, %v4257
        %v4259 = vrot.slane %v4245, %v4258
        %v4260 = vcombine.high %v4252, %v4252
        %v4261 = vcombine.high %v4259, %v4259
        %v4262 = vcombine.high %v3990, %v3990
        %v4264 = vunpack.c.l.s4 1983009808
        %v4265 = vunpack.c.0.s8 %v4264
        %v4266 = vlaneseq
        %v4267 = vshrl.u32 %v4266, 7
        %v4268 = vsub.s32 %v4265, %v4267
        %v4269 = vrot.slane %v3990, %v4268
        %v4271 = vunpack.c.l.s4 1983009808
        %v4272 = vunpack.c.0.s8 %v4271
        %v4273 = vlaneseq
        %v4274 = vshrl.u32 %v4273, 7
        %v4275 = vsub.s32 %v4272, %v4274
        %v4276 = vrot.slane %v4262, %v4275
        %v4277 = vcombine.high %v4269, %v4269
        %v4278 = vcombine.high %v4276, %v4276
        %v4279 = vcombine.high %v3991, %v3991
        %v4281 = vunpack.c.l.s4 1983009808
        %v4282 = vunpack.c.0.s8 %v4281
        %v4283 = vlaneseq
        %v4284 = vshrl.u32 %v4283, 7
        %v4285 = vsub.s32 %v4282, %v4284
        %v4286 = vrot.slane %v3991, %v4285
        %v4288 = vunpack.c.l.s4 1983009808
        %v4289 = vunpack.c.0.s8 %v4288
        %v4290 = vlaneseq
        %v4291 = vshrl.u32 %v4290, 7
        %v4292 = vsub.s32 %v4289, %v4291
        %v4293 = vrot.slane %v4279, %v4292
        %v4294 = vcombine.high %v4286, %v4286
        %v4295 = vcombine.high %v4293, %v4293
        %v4296 = vcombine.high %v3992, %v3992
        %v4298 = vunpack.c.l.s4 1983009808
        %v4299 = vunpack.c.0.s8 %v4298
        %v4300 = vlaneseq
        %v4301 = vshrl.u32 %v4300, 7
        %v4302 = vsub.s32 %v4299, %v4301
        %v4303 = vrot.slane %v3992, %v4302
        %v4305 = vunpack.c.l.s4 1983009808
        %v4306 = vunpack.c.0.s8 %v4305
        %v4307 = vlaneseq
        %v4308 = vshrl.u32 %v4307, 7
        %v4309 = vsub.s32 %v4306, %v4308
        %v4310 = vrot.slane %v4296, %v4309
        %v4311 = vcombine.high %v4303, %v4303
        %v4312 = vcombine.high %v4310, %v4310
        %v4313 = vcombine.high %v3993, %v3993
        %v4315 = vunpack.c.l.s4 1983009808
        %v4316 = vunpack.c.0.s8 %v4315
        %v4317 = vlaneseq
        %v4318 = vshrl.u32 %v4317, 7
        %v4319 = vsub.s32 %v4316, %v4318
        %v4320 = vrot.slane %v3993, %v4319
        %v4322 = vunpack.c.l.s4 1983009808
        %v4323 = vunpack.c.0.s8 %v4322
        %v4324 = vlaneseq
        %v4325 = vshrl.u32 %v4324, 7
        %v4326 = vsub.s32 %v4323, %v4325
        %v4327 = vrot.slane %v4313, %v4326
        %v4328 = vcombine.high %v4320, %v4320
        %v4329 = vcombine.high %v4327, %v4327
        %v4330 = vcombine.high %v3994, %v3994
        %v4332 = vunpack.c.l.s4 1983009808
        %v4333 = vunpack.c.0.s8 %v4332
        %v4334 = vlaneseq
        %v4335 = vshrl.u32 %v4334, 7
        %v4336 = vsub.s32 %v4333, %v4335
        %v4337 = vrot.slane %v3994, %v4336
        %v4339 = vunpack.c.l.s4 1983009808
        %v4340 = vunpack.c.0.s8 %v4339
        %v4341 = vlaneseq
        %v4342 = vshrl.u32 %v4341, 7
        %v4343 = vsub.s32 %v4340, %v4342
        %v4344 = vrot.slane %v4330, %v4343
        %v4345 = vcombine.high %v4337, %v4337
        %v4346 = vcombine.high %v4344, %v4344
        %v4347 = vcombine.high %v3995, %v3995
        %v4349 = vunpack.c.l.s4 1983009808
        %v4350 = vunpack.c.0.s8 %v4349
        %v4351 = vlaneseq
        %v4352 = vshrl.u32 %v4351, 7
        %v4353 = vsub.s32 %v4350, %v4352
        %v4354 = vrot.slane %v3995, %v4353
        %v4356 = vunpack.c.l.s4 1983009808
        %v4357 = vunpack.c.0.s8 %v4356
        %v4358 = vlaneseq
        %v4359 = vshrl.u32 %v4358, 7
        %v4360 = vsub.s32 %v4357, %v4359
        %v4361 = vrot.slane %v4347, %v4360
        %v4362 = vcombine.high %v4354, %v4354
        %v4363 = vcombine.high %v4361, %v4361
        %v4364 = vcombine.high %v3996, %v3996
        %v4366 = vunpack.c.l.s4 1983009808
        %v4367 = vunpack.c.0.s8 %v4366
        %v4368 = vlaneseq
        %v4369 = vshrl.u32 %v4368, 7
        %v4370 = vsub.s32 %v4367, %v4369
        %v4371 = vrot.slane %v3996, %v4370
        %v4373 = vunpack.c.l.s4 1983009808
        %v4374 = vunpack.c.0.s8 %v4373
        %v4375 = vlaneseq
        %v4376 = vshrl.u32 %v4375, 7
        %v4377 = vsub.s32 %v4374, %v4376
        %v4378 = vrot.slane %v4364, %v4377
        %v4379 = vcombine.high %v4371, %v4371
        %v4380 = vcombine.high %v4378, %v4378
        %v4381 = vcombine.high %v3997, %v3997
        %v4383 = vunpack.c.l.s4 1983009808
        %v4384 = vunpack.c.0.s8 %v4383
        %v4385 = vlaneseq
        %v4386 = vshrl.u32 %v4385, 7
        %v4387 = vsub.s32 %v4384, %v4386
        %v4388 = vrot.slane %v3997, %v4387
        %v4390 = vunpack.c.l.s4 1983009808
        %v4391 = vunpack.c.0.s8 %v4390
        %v4392 = vlaneseq
        %v4393 = vshrl.u32 %v4392, 7
        %v4394 = vsub.s32 %v4391, %v4393
        %v4395 = vrot.slane %v4381, %v4394
        %v4396 = vcombine.high %v4388, %v4388
        %v4397 = vcombine.high %v4395, %v4395
        %v4398 = vcombine.high %v3998, %v3998
        %v4400 = vunpack.c.l.s4 1983009808
        %v4401 = vunpack.c.0.s8 %v4400
        %v4402 = vlaneseq
        %v4403 = vshrl.u32 %v4402, 7
        %v4404 = vsub.s32 %v4401, %v4403
        %v4405 = vrot.slane %v3998, %v4404
        %v4407 = vunpack.c.l.s4 1983009808
        %v4408 = vunpack.c.0.s8 %v4407
        %v4409 = vlaneseq
        %v4410 = vshrl.u32 %v4409, 7
        %v4411 = vsub.s32 %v4408, %v4410
        %v4412 = vrot.slane %v4398, %v4411
        %v4413 = vcombine.high %v4405, %v4405
        %v4414 = vcombine.high %v4412, %v4412
        %v4415 = vcombine.high %v3999, %v3999
        %v4417 = vunpack.c.l.s4 1983009808
        %v4418 = vunpack.c.0.s8 %v4417
        %v4419 = vlaneseq
        %v4420 = vshrl.u32 %v4419, 7
        %v4421 = vsub.s32 %v4418, %v4420
        %v4422 = vrot.slane %v3999, %v4421
        %v4424 = vunpack.c.l.s4 1983009808
        %v4425 = vunpack.c.0.s8 %v4424
        %v4426 = vlaneseq
        %v4427 = vshrl.u32 %v4426, 7
        %v4428 = vsub.s32 %v4425, %v4427
        %v4429 = vrot.slane %v4415, %v4428
        %v4430 = vcombine.high %v4422, %v4422
        %v4431 = vcombine.high %v4429, %v4429
        %v4432 = vcombine.high %v4000, %v4000
        %v4434 = vunpack.c.l.s4 1983009808
        %v4435 = vunpack.c.0.s8 %v4434
        %v4436 = vlaneseq
        %v4437 = vshrl.u32 %v4436, 7
        %v4438 = vsub.s32 %v4435, %v4437
        %v4439 = vrot.slane %v4000, %v4438
        %v4441 = vunpack.c.l.s4 1983009808
        %v4442 = vunpack.c.0.s8 %v4441
        %v4443 = vlaneseq
        %v4444 = vshrl.u32 %v4443, 7
        %v4445 = vsub.s32 %v4442, %v4444
        %v4446 = vrot.slane %v4432, %v4445
        %v4447 = vcombine.high %v4439, %v4439
        %v4448 = vcombine.high %v4446, %v4446
        %v4449 = vcombine.high %v4001, %v4001
        %v4451 = vunpack.c.l.s4 1983009808
        %v4452 = vunpack.c.0.s8 %v4451
        %v4453 = vlaneseq
        %v4454 = vshrl.u32 %v4453, 7
        %v4455 = vsub.s32 %v4452, %v4454
        %v4456 = vrot.slane %v4001, %v4455
        %v4458 = vunpack.c.l.s4 1983009808
        %v4459 = vunpack.c.0.s8 %v4458
        %v4460 = vlaneseq
        %v4461 = vshrl.u32 %v4460, 7
        %v4462 = vsub.s32 %v4459, %v4461
        %v4463 = vrot.slane %v4449, %v4462
        %v4464 = vcombine.high %v4456, %v4456
        %v4465 = vcombine.high %v4463, %v4463
        %v4466 = vcombine.high %v4002, %v4002
        %v4468 = vunpack.c.l.s4 1983009808
        %v4469 = vunpack.c.0.s8 %v4468
        %v4470 = vlaneseq
        %v4471 = vshrl.u32 %v4470, 7
        %v4472 = vsub.s32 %v4469, %v4471
        %v4473 = vrot.slane %v4002, %v4472
        %v4475 = vunpack.c.l.s4 1983009808
        %v4476 = vunpack.c.0.s8 %v4475
        %v4477 = vlaneseq
        %v4478 = vshrl.u32 %v4477, 7
        %v4479 = vsub.s32 %v4476, %v4478
        %v4480 = vrot.slane %v4466, %v4479
        %v4481 = vcombine.high %v4473, %v4473
        %v4482 = vcombine.high %v4480, %v4480
        %v4483 = vcombine.high %v4003, %v4003
        %v4485 = vunpack.c.l.s4 1983009808
        %v4486 = vunpack.c.0.s8 %v4485
        %v4487 = vlaneseq
        %v4488 = vshrl.u32 %v4487, 7
        %v4489 = vsub.s32 %v4486, %v4488
        %v4490 = vrot.slane %v4003, %v4489
        %v4492 = vunpack.c.l.s4 1983009808
        %v4493 = vunpack.c.0.s8 %v4492
        %v4494 = vlaneseq
        %v4495 = vshrl.u32 %v4494, 7
        %v4496 = vsub.s32 %v4493, %v4495
        %v4497 = vrot.slane %v4483, %v4496
        %v4498 = vcombine.high %v4490, %v4490
        %v4499 = vcombine.high %v4497, %v4497
        %v4500 = vcombine.high %v4004, %v4004
        %v4502 = vunpack.c.l.s4 1983009808
        %v4503 = vunpack.c.0.s8 %v4502
        %v4504 = vlaneseq
        %v4505 = vshrl.u32 %v4504, 7
        %v4506 = vsub.s32 %v4503, %v4505
        %v4507 = vrot.slane %v4004, %v4506
        %v4509 = vunpack.c.l.s4 1983009808
        %v4510 = vunpack.c.0.s8 %v4509
        %v4511 = vlaneseq
        %v4512 = vshrl.u32 %v4511, 7
        %v4513 = vsub.s32 %v4510, %v4512
        %v4514 = vrot.slane %v4500, %v4513
        %v4515 = vcombine.high %v4507, %v4507
        %v4516 = vcombine.high %v4514, %v4514
        %v4517 = vcombine.high %v4005, %v4005
        %v4519 = vunpack.c.l.s4 1983009808
        %v4520 = vunpack.c.0.s8 %v4519
        %v4521 = vlaneseq
        %v4522 = vshrl.u32 %v4521, 7
        %v4523 = vsub.s32 %v4520, %v4522
        %v4524 = vrot.slane %v4005, %v4523
        %v4526 = vunpack.c.l.s4 1983009808
        %v4527 = vunpack.c.0.s8 %v4526
        %v4528 = vlaneseq
        %v4529 = vshrl.u32 %v4528, 7
        %v4530 = vsub.s32 %v4527, %v4529
        %v4531 = vrot.slane %v4517, %v4530
        %v4532 = vcombine.high %v4524, %v4524
        %v4533 = vcombine.high %v4531, %v4531
        %v4534 = vcombine.high %v4006, %v4006
        %v4536 = vunpack.c.l.s4 1983009808
        %v4537 = vunpack.c.0.s8 %v4536
        %v4538 = vlaneseq
        %v4539 = vshrl.u32 %v4538, 7
        %v4540 = vsub.s32 %v4537, %v4539
        %v4541 = vrot.slane %v4006, %v4540
        %v4543 = vunpack.c.l.s4 1983009808
        %v4544 = vunpack.c.0.s8 %v4543
        %v4545 = vlaneseq
        %v4546 = vshrl.u32 %v4545, 7
        %v4547 = vsub.s32 %v4544, %v4546
        %v4548 = vrot.slane %v4534, %v4547
        %v4549 = vcombine.high %v4541, %v4541
        %v4550 = vcombine.high %v4548, %v4548
        %v4551 = vcombine.high %v4007, %v4007
        %v4553 = vunpack.c.l.s4 1983009808
        %v4554 = vunpack.c.0.s8 %v4553
        %v4555 = vlaneseq
        %v4556 = vshrl.u32 %v4555, 7
        %v4557 = vsub.s32 %v4554, %v4556
        %v4558 = vrot.slane %v4007, %v4557
        %v4560 = vunpack.c.l.s4 1983009808
        %v4561 = vunpack.c.0.s8 %v4560
        %v4562 = vlaneseq
        %v4563 = vshrl.u32 %v4562, 7
        %v4564 = vsub.s32 %v4561, %v4563
        %v4565 = vrot.slane %v4551, %v4564
        %v4566 = vcombine.high %v4558, %v4558
        %v4567 = vcombine.high %v4565, %v4565
        %v4568 = vcombine.high %v4008, %v4008
        %v4570 = vunpack.c.l.s4 1983009808
        %v4571 = vunpack.c.0.s8 %v4570
        %v4572 = vlaneseq
        %v4573 = vshrl.u32 %v4572, 7
        %v4574 = vsub.s32 %v4571, %v4573
        %v4575 = vrot.slane %v4008, %v4574
        %v4577 = vunpack.c.l.s4 1983009808
        %v4578 = vunpack.c.0.s8 %v4577
        %v4579 = vlaneseq
        %v4580 = vshrl.u32 %v4579, 7
        %v4581 = vsub.s32 %v4578, %v4580
        %v4582 = vrot.slane %v4568, %v4581
        %v4583 = vcombine.high %v4575, %v4575
        %v4584 = vcombine.high %v4582, %v4582
        %v4713 = vrot.slane %v4048, 7
        %v4714 = vrot.slane %v4713, 2
        %v4715 = vrot.slane %v4056, 7
        %v4716 = vrot.slane %v4715, 2
        %v4717 = vrot.slane %v4055, 7
        %v4718 = vrot.slane %v4717, 2
        %v4719 = vrot.slane %v4057, 7
        %v4720 = vrot.slane %v4719, 2
        %v4721 = vrot.slane %v4065, 7
        %v4722 = vrot.slane %v4721, 2
        %v4723 = vrot.slane %v4073, 7
        %v4724 = vrot.slane %v4723, 2
        %v4725 = vrot.slane %v4072, 7
        %v4726 = vrot.slane %v4725, 2
        %v4727 = vrot.slane %v4074, 7
        %v4728 = vrot.slane %v4727, 2
        %v4729 = vrot.slane %v4082, 7
        %v4730 = vrot.slane %v4729, 2
        %v4731 = vrot.slane %v4090, 7
        %v4732 = vrot.slane %v4731, 2
        %v4733 = vrot.slane %v4089, 7
        %v4734 = vrot.slane %v4733, 2
        %v4735 = vrot.slane %v4091, 7
        %v4736 = vrot.slane %v4735, 2
        %v4737 = vrot.slane %v4099, 7
        %v4738 = vrot.slane %v4737, 2
        %v4739 = vrot.slane %v4107, 7
        %v4740 = vrot.slane %v4739, 2
        %v4741 = vrot.slane %v4106, 7
        %v4742 = vrot.slane %v4741, 2
        %v4743 = vrot.slane %v4108, 7
        %v4744 = vrot.slane %v4743, 2
        %v4745 = vrot.slane %v4116, 7
        %v4746 = vrot.slane %v4745, 2
        %v4747 = vrot.slane %v4124, 7
        %v4748 = vrot.slane %v4747, 2
        %v4749 = vrot.slane %v4123, 7
        %v4750 = vrot.slane %v4749, 2
        %v4751 = vrot.slane %v4125, 7
        %v4752 = vrot.slane %v4751, 2
        %v4753 = vrot.slane %v4133, 7
        %v4754 = vrot.slane %v4753, 2
        %v4755 = vrot.slane %v4141, 7
        %v4756 = vrot.slane %v4755, 2
        %v4757 = vrot.slane %v4140, 7
        %v4758 = vrot.slane %v4757, 2
        %v4759 = vrot.slane %v4142, 7
        %v4760 = vrot.slane %v4759, 2
        %v4761 = vrot.slane %v4150, 7
        %v4762 = vrot.slane %v4761, 2
        %v4763 = vrot.slane %v4158, 7
        %v4764 = vrot.slane %v4763, 2
        %v4765 = vrot.slane %v4157, 7
        %v4766 = vrot.slane %v4765, 2
        %v4767 = vrot.slane %v4159, 7
        %v4768 = vrot.slane %v4767, 2
        %v4769 = vrot.slane %v4167, 7
        %v4770 = vrot.slane %v4769, 2
        %v4771 = vrot.slane %v4175, 7
        %v4772 = vrot.slane %v4771, 2
        %v4773 = vrot.slane %v4174, 7
        %v4774 = vrot.slane %v4773, 2
        %v4775 = vrot.slane %v4176, 7
        %v4776 = vrot.slane %v4775, 2
        %v4777 = vrot.slane %v4184, 7
        %v4778 = vrot.slane %v4777, 2
        %v4779 = vrot.slane %v4192, 7
        %v4780 = vrot.slane %v4779, 2
        %v4781 = vrot.slane %v4191, 7
        %v4782 = vrot.slane %v4781, 2
        %v4783 = vrot.slane %v4193, 7
        %v4784 = vrot.slane %v4783, 2
        %v4785 = vrot.slane %v4201, 7
        %v4786 = vrot.slane %v4785, 2
        %v4787 = vrot.slane %v4209, 7
        %v4788 = vrot.slane %v4787, 2
        %v4789 = vrot.slane %v4208, 7
        %v4790 = vrot.slane %v4789, 2
        %v4791 = vrot.slane %v4210, 7
        %v4792 = vrot.slane %v4791, 2
        %v4793 = vrot.slane %v4218, 7
        %v4794 = vrot.slane %v4793, 2
        %v4795 = vrot.slane %v4226, 7
        %v4796 = vrot.slane %v4795, 2
        %v4797 = vrot.slane %v4225, 7
        %v4798 = vrot.slane %v4797, 2
        %v4799 = vrot.slane %v4227, 7
        %v4800 = vrot.slane %v4799, 2
        %v4801 = vrot.slane %v4235, 7
        %v4802 = vrot.slane %v4801, 2
        %v4803 = vrot.slane %v4243, 7
        %v4804 = vrot.slane %v4803, 2
        %v4805 = vrot.slane %v4242, 7
        %v4806 = vrot.slane %v4805, 2
        %v4807 = vrot.slane %v4244, 7
        %v4808 = vrot.slane %v4807, 2
        %v4809 = vrot.slane %v4252, 7
        %v4810 = vrot.slane %v4809, 2
        %v4811 = vrot.slane %v4260, 7
        %v4812 = vrot.slane %v4811, 2
        %v4813 = vrot.slane %v4259, 7
        %v4814 = vrot.slane %v4813, 2
        %v4815 = vrot.slane %v4261, 7
        %v4816 = vrot.slane %v4815, 2
        %v4817 = vrot.slane %v4269, 7
        %v4818 = vrot.slane %v4817, 2
        %v4819 = vrot.slane %v4277, 7
        %v4820 = vrot.slane %v4819, 2
        %v4821 = vrot.slane %v4276, 7
        %v4822 = vrot.slane %v4821, 2
        %v4823 = vrot.slane %v4278, 7
        %v4824 = vrot.slane %v4823, 2
        %v4825 = vrot.slane %v4286, 7
        %v4826 = vrot.slane %v4825, 2
        %v4827 = vrot.slane %v4294, 7
        %v4828 = vrot.slane %v4827, 2
        %v4829 = vrot.slane %v4293, 7
        %v4830 = vrot.slane %v4829, 2
        %v4831 = vrot.slane %v4295, 7
        %v4832 = vrot.slane %v4831, 2
        %v4833 = vrot.slane %v4303, 7
        %v4834 = vrot.slane %v4833, 2
        %v4835 = vrot.slane %v4311, 7
        %v4836 = vrot.slane %v4835, 2
        %v4837 = vrot.slane %v4310, 7
        %v4838 = vrot.slane %v4837, 2
        %v4839 = vrot.slane %v4312, 7
        %v4840 = vrot.slane %v4839, 2
        %v4841 = vrot.slane %v4320, 7
        %v4842 = vrot.slane %v4841, 2
        %v4843 = vrot.slane %v4328, 7
        %v4844 = vrot.slane %v4843, 2
        %v4845 = vrot.slane %v4327, 7
        %v4846 = vrot.slane %v4845, 2
        %v4847 = vrot.slane %v4329, 7
        %v4848 = vrot.slane %v4847, 2
        %v4849 = vrot.slane %v4337, 7
        %v4850 = vrot.slane %v4849, 2
        %v4851 = vrot.slane %v4345, 7
        %v4852 = vrot.slane %v4851, 2
        %v4853 = vrot.slane %v4344, 7
        %v4854 = vrot.slane %v4853, 2
        %v4855 = vrot.slane %v4346, 7
        %v4856 = vrot.slane %v4855, 2
        %v4857 = vrot.slane %v4354, 7
        %v4858 = vrot.slane %v4857, 2
        %v4859 = vrot.slane %v4362, 7
        %v4860 = vrot.slane %v4859, 2
        %v4861 = vrot.slane %v4361, 7
        %v4862 = vrot.slane %v4861, 2
        %v4863 = vrot.slane %v4363, 7
        %v4864 = vrot.slane %v4863, 2
        %v4865 = vrot.slane %v4371, 7
        %v4866 = vrot.slane %v4865, 2
        %v4867 = vrot.slane %v4379, 7
        %v4868 = vrot.slane %v4867, 2
        %v4869 = vrot.slane %v4378, 7
        %v4870 = vrot.slane %v4869, 2
        %v4871 = vrot.slane %v4380, 7
        %v4872 = vrot.slane %v4871, 2
        %v4873 = vrot.slane %v4388, 7
        %v4874 = vrot.slane %v4873, 2
        %v4875 = vrot.slane %v4396, 7
        %v4876 = vrot.slane %v4875, 2
        %v4877 = vrot.slane %v4395, 7
        %v4878 = vrot.slane %v4877, 2
        %v4879 = vrot.slane %v4397, 7
        %v4880 = vrot.slane %v4879, 2
        %v4881 = vrot.slane %v4405, 7
        %v4882 = vrot.slane %v4881, 2
        %v4883 = vrot.slane %v4413, 7
        %v4884 = vrot.slane %v4883, 2
        %v4885 = vrot.slane %v4412, 7
        %v4886 = vrot.slane %v4885, 2
        %v4887 = vrot.slane %v4414, 7
        %v4888 = vrot.slane %v4887, 2
        %v4889 = vrot.slane %v4422, 7
        %v4890 = vrot.slane %v4889, 2
        %v4891 = vrot.slane %v4430, 7
        %v4892 = vrot.slane %v4891, 2
        %v4893 = vrot.slane %v4429, 7
        %v4894 = vrot.slane %v4893, 2
        %v4895 = vrot.slane %v4431, 7
        %v4896 = vrot.slane %v4895, 2
        %v4897 = vrot.slane %v4439, 7
        %v4898 = vrot.slane %v4897, 2
        %v4899 = vrot.slane %v4447, 7
        %v4900 = vrot.slane %v4899, 2
        %v4901 = vrot.slane %v4446, 7
        %v4902 = vrot.slane %v4901, 2
        %v4903 = vrot.slane %v4448, 7
        %v4904 = vrot.slane %v4903, 2
        %v4905 = vrot.slane %v4456, 7
        %v4906 = vrot.slane %v4905, 2
        %v4907 = vrot.slane %v4464, 7
        %v4908 = vrot.slane %v4907, 2
        %v4909 = vrot.slane %v4463, 7
        %v4910 = vrot.slane %v4909, 2
        %v4911 = vrot.slane %v4465, 7
        %v4912 = vrot.slane %v4911, 2
        %v4913 = vrot.slane %v4473, 7
        %v4914 = vrot.slane %v4913, 2
        %v4915 = vrot.slane %v4481, 7
        %v4916 = vrot.slane %v4915, 2
        %v4917 = vrot.slane %v4480, 7
        %v4918 = vrot.slane %v4917, 2
        %v4919 = vrot.slane %v4482, 7
        %v4920 = vrot.slane %v4919, 2
        %v4921 = vrot.slane %v4490, 7
        %v4922 = vrot.slane %v4921, 2
        %v4923 = vrot.slane %v4498, 7
        %v4924 = vrot.slane %v4923, 2
        %v4925 = vrot.slane %v4497, 7
        %v4926 = vrot.slane %v4925, 2
        %v4927 = vrot.slane %v4499, 7
        %v4928 = vrot.slane %v4927, 2
        %v4929 = vrot.slane %v4507, 7
        %v4930 = vrot.slane %v4929, 2
        %v4931 = vrot.slane %v4515, 7
        %v4932 = vrot.slane %v4931, 2
        %v4933 = vrot.slane %v4514, 7
        %v4934 = vrot.slane %v4933, 2
        %v4935 = vrot.slane %v4516, 7
        %v4936 = vrot.slane %v4935, 2
        %v4937 = vrot.slane %v4524, 7
        %v4938 = vrot.slane %v4937, 2
        %v4939 = vrot.slane %v4532, 7
        %v4940 = vrot.slane %v4939, 2
        %v4941 = vrot.slane %v4531, 7
        %v4942 = vrot.slane %v4941, 2
        %v4943 = vrot.slane %v4533, 7
        %v4944 = vrot.slane %v4943, 2
        %v4945 = vrot.slane %v4541, 7
        %v4946 = vrot.slane %v4945, 2
        %v4947 = vrot.slane %v4549, 7
        %v4948 = vrot.slane %v4947, 2
        %v4949 = vrot.slane %v4548, 7
        %v4950 = vrot.slane %v4949, 2
        %v4951 = vrot.slane %v4550, 7
        %v4952 = vrot.slane %v4951, 2
        %v4953 = vrot.slane %v4558, 7
        %v4954 = vrot.slane %v4953, 2
        %v4955 = vrot.slane %v4566, 7
        %v4956 = vrot.slane %v4955, 2
        %v4957 = vrot.slane %v4565, 7
        %v4958 = vrot.slane %v4957, 2
        %v4959 = vrot.slane %v4567, 7
        %v4960 = vrot.slane %v4959, 2
        %v4961 = vrot.slane %v4575, 7
        %v4962 = vrot.slane %v4961, 2
        %v4963 = vrot.slane %v4583, 7
        %v4964 = vrot.slane %v4963, 2
        %v4965 = vrot.slane %v4582, 7
        %v4966 = vrot.slane %v4965, 2
        %v4967 = vrot.slane %v4584, 7
        %v4968 = vrot.slane %v4967, 2
        %v5097 = vmax.f32 %v4048, %v4714
        %v5098 = vmax.f32 %v4056, %v4716
        %v5099 = vmax.f32 %v4055, %v4718
        %v5100 = vmax.f32 %v4057, %v4720
        %v5101 = vmax.f32 %v4065, %v4722
        %v5102 = vmax.f32 %v4073, %v4724
        %v5103 = vmax.f32 %v4072, %v4726
        %v5104 = vmax.f32 %v4074, %v4728
        %v5105 = vmax.f32 %v4082, %v4730
        %v5106 = vmax.f32 %v4090, %v4732
        %v5107 = vmax.f32 %v4089, %v4734
        %v5108 = vmax.f32 %v4091, %v4736
        %v5109 = vmax.f32 %v4099, %v4738
        %v5110 = vmax.f32 %v4107, %v4740
        %v5111 = vmax.f32 %v4106, %v4742
        %v5112 = vmax.f32 %v4108, %v4744
        %v5113 = vmax.f32 %v4116, %v4746
        %v5114 = vmax.f32 %v4124, %v4748
        %v5115 = vmax.f32 %v4123, %v4750
        %v5116 = vmax.f32 %v4125, %v4752
        %v5117 = vmax.f32 %v4133, %v4754
        %v5118 = vmax.f32 %v4141, %v4756
        %v5119 = vmax.f32 %v4140, %v4758
        %v5120 = vmax.f32 %v4142, %v4760
        %v5121 = vmax.f32 %v4150, %v4762
        %v5122 = vmax.f32 %v4158, %v4764
        %v5123 = vmax.f32 %v4157, %v4766
        %v5124 = vmax.f32 %v4159, %v4768
        %v5125 = vmax.f32 %v4167, %v4770
        %v5126 = vmax.f32 %v4175, %v4772
        %v5127 = vmax.f32 %v4174, %v4774
        %v5128 = vmax.f32 %v4176, %v4776
        %v5129 = vmax.f32 %v4184, %v4778
        %v5130 = vmax.f32 %v4192, %v4780
        %v5131 = vmax.f32 %v4191, %v4782
        %v5132 = vmax.f32 %v4193, %v4784
        %v5133 = vmax.f32 %v4201, %v4786
        %v5134 = vmax.f32 %v4209, %v4788
        %v5135 = vmax.f32 %v4208, %v4790
        %v5136 = vmax.f32 %v4210, %v4792
        %v5137 = vmax.f32 %v4218, %v4794
        %v5138 = vmax.f32 %v4226, %v4796
        %v5139 = vmax.f32 %v4225, %v4798
        %v5140 = vmax.f32 %v4227, %v4800
        %v5141 = vmax.f32 %v4235, %v4802
        %v5142 = vmax.f32 %v4243, %v4804
        %v5143 = vmax.f32 %v4242, %v4806
        %v5144 = vmax.f32 %v4244, %v4808
        %v5145 = vmax.f32 %v4252, %v4810
        %v5146 = vmax.f32 %v4260, %v4812
        %v5147 = vmax.f32 %v4259, %v4814
        %v5148 = vmax.f32 %v4261, %v4816
        %v5149 = vmax.f32 %v4269, %v4818
        %v5150 = vmax.f32 %v4277, %v4820
        %v5151 = vmax.f32 %v4276, %v4822
        %v5152 = vmax.f32 %v4278, %v4824
        %v5153 = vmax.f32 %v4286, %v4826
        %v5154 = vmax.f32 %v4294, %v4828
        %v5155 = vmax.f32 %v4293, %v4830
        %v5156 = vmax.f32 %v4295, %v4832
        %v5157 = vmax.f32 %v4303, %v4834
        %v5158 = vmax.f32 %v4311, %v4836
        %v5159 = vmax.f32 %v4310, %v4838
        %v5160 = vmax.f32 %v4312, %v4840
        %v5161 = vmax.f32 %v4320, %v4842
        %v5162 = vmax.f32 %v4328, %v4844
        %v5163 = vmax.f32 %v4327, %v4846
        %v5164 = vmax.f32 %v4329, %v4848
        %v5165 = vmax.f32 %v4337, %v4850
        %v5166 = vmax.f32 %v4345, %v4852
        %v5167 = vmax.f32 %v4344, %v4854
        %v5168 = vmax.f32 %v4346, %v4856
        %v5169 = vmax.f32 %v4354, %v4858
        %v5170 = vmax.f32 %v4362, %v4860
        %v5171 = vmax.f32 %v4361, %v4862
        %v5172 = vmax.f32 %v4363, %v4864
        %v5173 = vmax.f32 %v4371, %v4866
        %v5174 = vmax.f32 %v4379, %v4868
        %v5175 = vmax.f32 %v4378, %v4870
        %v5176 = vmax.f32 %v4380, %v4872
        %v5177 = vmax.f32 %v4388, %v4874
        %v5178 = vmax.f32 %v4396, %v4876
        %v5179 = vmax.f32 %v4395, %v4878
        %v5180 = vmax.f32 %v4397, %v4880
        %v5181 = vmax.f32 %v4405, %v4882
        %v5182 = vmax.f32 %v4413, %v4884
        %v5183 = vmax.f32 %v4412, %v4886
        %v5184 = vmax.f32 %v4414, %v4888
        %v5185 = vmax.f32 %v4422, %v4890
        %v5186 = vmax.f32 %v4430, %v4892
        %v5187 = vmax.f32 %v4429, %v4894
        %v5188 = vmax.f32 %v4431, %v4896
        %v5189 = vmax.f32 %v4439, %v4898
        %v5190 = vmax.f32 %v4447, %v4900
        %v5191 = vmax.f32 %v4446, %v4902
        %v5192 = vmax.f32 %v4448, %v4904
        %v5193 = vmax.f32 %v4456, %v4906
        %v5194 = vmax.f32 %v4464, %v4908
        %v5195 = vmax.f32 %v4463, %v4910
        %v5196 = vmax.f32 %v4465, %v4912
        %v5197 = vmax.f32 %v4473, %v4914
        %v5198 = vmax.f32 %v4481, %v4916
        %v5199 = vmax.f32 %v4480, %v4918
        %v5200 = vmax.f32 %v4482, %v4920
        %v5201 = vmax.f32 %v4490, %v4922
        %v5202 = vmax.f32 %v4498, %v4924
        %v5203 = vmax.f32 %v4497, %v4926
        %v5204 = vmax.f32 %v4499, %v4928
        %v5205 = vmax.f32 %v4507, %v4930
        %v5206 = vmax.f32 %v4515, %v4932
        %v5207 = vmax.f32 %v4514, %v4934
        %v5208 = vmax.f32 %v4516, %v4936
        %v5209 = vmax.f32 %v4524, %v4938
        %v5210 = vmax.f32 %v4532, %v4940
        %v5211 = vmax.f32 %v4531, %v4942
        %v5212 = vmax.f32 %v4533, %v4944
        %v5213 = vmax.f32 %v4541, %v4946
        %v5214 = vmax.f32 %v4549, %v4948
        %v5215 = vmax.f32 %v4548, %v4950
        %v5216 = vmax.f32 %v4550, %v4952
        %v5217 = vmax.f32 %v4558, %v4954
        %v5218 = vmax.f32 %v4566, %v4956
        %v5219 = vmax.f32 %v4565, %v4958
        %v5220 = vmax.f32 %v4567, %v4960
        %v5221 = vmax.f32 %v4575, %v4962
        %v5222 = vmax.f32 %v4583, %v4964
        %v5223 = vmax.f32 %v4582, %v4966
        %v5224 = vmax.f32 %v4584, %v4968
        %v5225 = vmax.f32 %v5097, %v5105
        %v5226 = vmax.f32 %v5098, %v5106
        %v5227 = vmax.f32 %v5099, %v5107
        %v5228 = vmax.f32 %v5100, %v5108
        %v5229 = vmax.f32 %v5101, %v5109
        %v5230 = vmax.f32 %v5102, %v5110
        %v5231 = vmax.f32 %v5103, %v5111
        %v5232 = vmax.f32 %v5104, %v5112
        %v5233 = vmax.f32 %v5113, %v5121
        %v5234 = vmax.f32 %v5114, %v5122
        %v5235 = vmax.f32 %v5115, %v5123
        %v5236 = vmax.f32 %v5116, %v5124
        %v5237 = vmax.f32 %v5117, %v5125
        %v5238 = vmax.f32 %v5118, %v5126
        %v5239 = vmax.f32 %v5119, %v5127
        %v5240 = vmax.f32 %v5120, %v5128
        %v5241 = vmax.f32 %v5129, %v5137
        %v5242 = vmax.f32 %v5130, %v5138
        %v5243 = vmax.f32 %v5131, %v5139
        %v5244 = vmax.f32 %v5132, %v5140
        %v5245 = vmax.f32 %v5133, %v5141
        %v5246 = vmax.f32 %v5134, %v5142
        %v5247 = vmax.f32 %v5135, %v5143
        %v5248 = vmax.f32 %v5136, %v5144
        %v5249 = vmax.f32 %v5145, %v5153
        %v5250 = vmax.f32 %v5146, %v5154
        %v5251 = vmax.f32 %v5147, %v5155
        %v5252 = vmax.f32 %v5148, %v5156
        %v5253 = vmax.f32 %v5149, %v5157
        %v5254 = vmax.f32 %v5150, %v5158
        %v5255 = vmax.f32 %v5151, %v5159
        %v5256 = vmax.f32 %v5152, %v5160
        %v5257 = vmax.f32 %v5161, %v5169
        %v5258 = vmax.f32 %v5162, %v5170
        %v5259 = vmax.f32 %v5163, %v5171
        %v5260 = vmax.f32 %v5164, %v5172
        %v5261 = vmax.f32 %v5165, %v5173
        %v5262 = vmax.f32 %v5166, %v5174
        %v5263 = vmax.f32 %v5167, %v5175
        %v5264 = vmax.f32 %v5168, %v5176
        %v5265 = vmax.f32 %v5177, %v5185
        %v5266 = vmax.f32 %v5178, %v5186
        %v5267 = vmax.f32 %v5179, %v5187
        %v5268 = vmax.f32 %v5180, %v5188
        %v5269 = vmax.f32 %v5181, %v5189
        %v5270 = vmax.f32 %v5182, %v5190
        %v5271 = vmax.f32 %v5183, %v5191
        %v5272 = vmax.f32 %v5184, %v5192
        %v5273 = vmax.f32 %v5193, %v5201
        %v5274 = vmax.f32 %v5194, %v5202
        %v5275 = vmax.f32 %v5195, %v5203
        %v5276 = vmax.f32 %v5196, %v5204
        %v5277 = vmax.f32 %v5197, %v5205
        %v5278 = vmax.f32 %v5198, %v5206
        %v5279 = vmax.f32 %v5199, %v5207
        %v5280 = vmax.f32 %v5200, %v5208
        %v5281 = vmax.f32 %v5209, %v5217
        %v5282 = vmax.f32 %v5210, %v5218
        %v5283 = vmax.f32 %v5211, %v5219
        %v5284 = vmax.f32 %v5212, %v5220
        %v5285 = vmax.f32 %v5213, %v5221
        %v5286 = vmax.f32 %v5214, %v5222
        %v5287 = vmax.f32 %v5215, %v5223
        %v5288 = vmax.f32 %v5216, %v5224
        %v5353 = vlaneseq
        %v5354 = vshrl.u32 %v5353, 7
        %v5355 = vsub.s32 0, %v5354
        %v5356 = vrot.slane %v5225, %v5355
        %v5357 = vlaneseq
        %v5358 = vshrl.u32 %v5357, 7
        %v5359 = vsub.s32 0, %v5358
        %v5360 = vrot.slane %v5226, %v5359
        %v5361 = vlaneseq
        %v5362 = vshrl.u32 %v5361, 7
        %v5363 = vsub.s32 0, %v5362
        %v5364 = vrot.slane %v5227, %v5363
        %v5365 = vlaneseq
        %v5366 = vshrl.u32 %v5365, 7
        %v5367 = vsub.s32 0, %v5366
        %v5368 = vrot.slane %v5228, %v5367
        %v5369 = vlaneseq
        %v5370 = vshrl.u32 %v5369, 7
        %v5371 = vsub.s32 0, %v5370
        %v5372 = vrot.slane %v5229, %v5371
        %v5373 = vlaneseq
        %v5374 = vshrl.u32 %v5373, 7
        %v5375 = vsub.s32 0, %v5374
        %v5376 = vrot.slane %v5230, %v5375
        %v5377 = vlaneseq
        %v5378 = vshrl.u32 %v5377, 7
        %v5379 = vsub.s32 0, %v5378
        %v5380 = vrot.slane %v5231, %v5379
        %v5381 = vlaneseq
        %v5382 = vshrl.u32 %v5381, 7
        %v5383 = vsub.s32 0, %v5382
        %v5384 = vrot.slane %v5232, %v5383
        %v5385 = vlaneseq
        %v5386 = vshrl.u32 %v5385, 7
        %v5387 = vsub.s32 0, %v5386
        %v5388 = vrot.slane %v5233, %v5387
        %v5389 = vlaneseq
        %v5390 = vshrl.u32 %v5389, 7
        %v5391 = vsub.s32 0, %v5390
        %v5392 = vrot.slane %v5234, %v5391
        %v5393 = vlaneseq
        %v5394 = vshrl.u32 %v5393, 7
        %v5395 = vsub.s32 0, %v5394
        %v5396 = vrot.slane %v5235, %v5395
        %v5397 = vlaneseq
        %v5398 = vshrl.u32 %v5397, 7
        %v5399 = vsub.s32 0, %v5398
        %v5400 = vrot.slane %v5236, %v5399
        %v5401 = vlaneseq
        %v5402 = vshrl.u32 %v5401, 7
        %v5403 = vsub.s32 0, %v5402
        %v5404 = vrot.slane %v5237, %v5403
        %v5405 = vlaneseq
        %v5406 = vshrl.u32 %v5405, 7
        %v5407 = vsub.s32 0, %v5406
        %v5408 = vrot.slane %v5238, %v5407
        %v5409 = vlaneseq
        %v5410 = vshrl.u32 %v5409, 7
        %v5411 = vsub.s32 0, %v5410
        %v5412 = vrot.slane %v5239, %v5411
        %v5413 = vlaneseq
        %v5414 = vshrl.u32 %v5413, 7
        %v5415 = vsub.s32 0, %v5414
        %v5416 = vrot.slane %v5240, %v5415
        %v5417 = vlaneseq
        %v5418 = vshrl.u32 %v5417, 7
        %v5419 = vsub.s32 0, %v5418
        %v5420 = vrot.slane %v5241, %v5419
        %v5421 = vlaneseq
        %v5422 = vshrl.u32 %v5421, 7
        %v5423 = vsub.s32 0, %v5422
        %v5424 = vrot.slane %v5242, %v5423
        %v5425 = vlaneseq
        %v5426 = vshrl.u32 %v5425, 7
        %v5427 = vsub.s32 0, %v5426
        %v5428 = vrot.slane %v5243, %v5427
        %v5429 = vlaneseq
        %v5430 = vshrl.u32 %v5429, 7
        %v5431 = vsub.s32 0, %v5430
        %v5432 = vrot.slane %v5244, %v5431
        %v5433 = vlaneseq
        %v5434 = vshrl.u32 %v5433, 7
        %v5435 = vsub.s32 0, %v5434
        %v5436 = vrot.slane %v5245, %v5435
        %v5437 = vlaneseq
        %v5438 = vshrl.u32 %v5437, 7
        %v5439 = vsub.s32 0, %v5438
        %v5440 = vrot.slane %v5246, %v5439
        %v5441 = vlaneseq
        %v5442 = vshrl.u32 %v5441, 7
        %v5443 = vsub.s32 0, %v5442
        %v5444 = vrot.slane %v5247, %v5443
        %v5445 = vlaneseq
        %v5446 = vshrl.u32 %v5445, 7
        %v5447 = vsub.s32 0, %v5446
        %v5448 = vrot.slane %v5248, %v5447
        %v5449 = vlaneseq
        %v5450 = vshrl.u32 %v5449, 7
        %v5451 = vsub.s32 0, %v5450
        %v5452 = vrot.slane %v5249, %v5451
        %v5453 = vlaneseq
        %v5454 = vshrl.u32 %v5453, 7
        %v5455 = vsub.s32 0, %v5454
        %v5456 = vrot.slane %v5250, %v5455
        %v5457 = vlaneseq
        %v5458 = vshrl.u32 %v5457, 7
        %v5459 = vsub.s32 0, %v5458
        %v5460 = vrot.slane %v5251, %v5459
        %v5461 = vlaneseq
        %v5462 = vshrl.u32 %v5461, 7
        %v5463 = vsub.s32 0, %v5462
        %v5464 = vrot.slane %v5252, %v5463
        %v5465 = vlaneseq
        %v5466 = vshrl.u32 %v5465, 7
        %v5467 = vsub.s32 0, %v5466
        %v5468 = vrot.slane %v5253, %v5467
        %v5469 = vlaneseq
        %v5470 = vshrl.u32 %v5469, 7
        %v5471 = vsub.s32 0, %v5470
        %v5472 = vrot.slane %v5254, %v5471
        %v5473 = vlaneseq
        %v5474 = vshrl.u32 %v5473, 7
        %v5475 = vsub.s32 0, %v5474
        %v5476 = vrot.slane %v5255, %v5475
        %v5477 = vlaneseq
        %v5478 = vshrl.u32 %v5477, 7
        %v5479 = vsub.s32 0, %v5478
        %v5480 = vrot.slane %v5256, %v5479
        %v5481 = vlaneseq
        %v5482 = vshrl.u32 %v5481, 7
        %v5483 = vsub.s32 0, %v5482
        %v5484 = vrot.slane %v5257, %v5483
        %v5485 = vlaneseq
        %v5486 = vshrl.u32 %v5485, 7
        %v5487 = vsub.s32 0, %v5486
        %v5488 = vrot.slane %v5258, %v5487
        %v5489 = vlaneseq
        %v5490 = vshrl.u32 %v5489, 7
        %v5491 = vsub.s32 0, %v5490
        %v5492 = vrot.slane %v5259, %v5491
        %v5493 = vlaneseq
        %v5494 = vshrl.u32 %v5493, 7
        %v5495 = vsub.s32 0, %v5494
        %v5496 = vrot.slane %v5260, %v5495
        %v5497 = vlaneseq
        %v5498 = vshrl.u32 %v5497, 7
        %v5499 = vsub.s32 0, %v5498
        %v5500 = vrot.slane %v5261, %v5499
        %v5501 = vlaneseq
        %v5502 = vshrl.u32 %v5501, 7
        %v5503 = vsub.s32 0, %v5502
        %v5504 = vrot.slane %v5262, %v5503
        %v5505 = vlaneseq
        %v5506 = vshrl.u32 %v5505, 7
        %v5507 = vsub.s32 0, %v5506
        %v5508 = vrot.slane %v5263, %v5507
        %v5509 = vlaneseq
        %v5510 = vshrl.u32 %v5509, 7
        %v5511 = vsub.s32 0, %v5510
        %v5512 = vrot.slane %v5264, %v5511
        %v5513 = vlaneseq
        %v5514 = vshrl.u32 %v5513, 7
        %v5515 = vsub.s32 0, %v5514
        %v5516 = vrot.slane %v5265, %v5515
        %v5517 = vlaneseq
        %v5518 = vshrl.u32 %v5517, 7
        %v5519 = vsub.s32 0, %v5518
        %v5520 = vrot.slane %v5266, %v5519
        %v5521 = vlaneseq
        %v5522 = vshrl.u32 %v5521, 7
        %v5523 = vsub.s32 0, %v5522
        %v5524 = vrot.slane %v5267, %v5523
        %v5525 = vlaneseq
        %v5526 = vshrl.u32 %v5525, 7
        %v5527 = vsub.s32 0, %v5526
        %v5528 = vrot.slane %v5268, %v5527
        %v5529 = vlaneseq
        %v5530 = vshrl.u32 %v5529, 7
        %v5531 = vsub.s32 0, %v5530
        %v5532 = vrot.slane %v5269, %v5531
        %v5533 = vlaneseq
        %v5534 = vshrl.u32 %v5533, 7
        %v5535 = vsub.s32 0, %v5534
        %v5536 = vrot.slane %v5270, %v5535
        %v5537 = vlaneseq
        %v5538 = vshrl.u32 %v5537, 7
        %v5539 = vsub.s32 0, %v5538
        %v5540 = vrot.slane %v5271, %v5539
        %v5541 = vlaneseq
        %v5542 = vshrl.u32 %v5541, 7
        %v5543 = vsub.s32 0, %v5542
        %v5544 = vrot.slane %v5272, %v5543
        %v5545 = vlaneseq
        %v5546 = vshrl.u32 %v5545, 7
        %v5547 = vsub.s32 0, %v5546
        %v5548 = vrot.slane %v5273, %v5547
        %v5549 = vlaneseq
        %v5550 = vshrl.u32 %v5549, 7
        %v5551 = vsub.s32 0, %v5550
        %v5552 = vrot.slane %v5274, %v5551
        %v5553 = vlaneseq
        %v5554 = vshrl.u32 %v5553, 7
        %v5555 = vsub.s32 0, %v5554
        %v5556 = vrot.slane %v5275, %v5555
        %v5557 = vlaneseq
        %v5558 = vshrl.u32 %v5557, 7
        %v5559 = vsub.s32 0, %v5558
        %v5560 = vrot.slane %v5276, %v5559
        %v5561 = vlaneseq
        %v5562 = vshrl.u32 %v5561, 7
        %v5563 = vsub.s32 0, %v5562
        %v5564 = vrot.slane %v5277, %v5563
        %v5565 = vlaneseq
        %v5566 = vshrl.u32 %v5565, 7
        %v5567 = vsub.s32 0, %v5566
        %v5568 = vrot.slane %v5278, %v5567
        %v5569 = vlaneseq
        %v5570 = vshrl.u32 %v5569, 7
        %v5571 = vsub.s32 0, %v5570
        %v5572 = vrot.slane %v5279, %v5571
        %v5573 = vlaneseq
        %v5574 = vshrl.u32 %v5573, 7
        %v5575 = vsub.s32 0, %v5574
        %v5576 = vrot.slane %v5280, %v5575
        %v5577 = vlaneseq
        %v5578 = vshrl.u32 %v5577, 7
        %v5579 = vsub.s32 0, %v5578
        %v5580 = vrot.slane %v5281, %v5579
        %v5581 = vlaneseq
        %v5582 = vshrl.u32 %v5581, 7
        %v5583 = vsub.s32 0, %v5582
        %v5584 = vrot.slane %v5282, %v5583
        %v5585 = vlaneseq
        %v5586 = vshrl.u32 %v5585, 7
        %v5587 = vsub.s32 0, %v5586
        %v5588 = vrot.slane %v5283, %v5587
        %v5589 = vlaneseq
        %v5590 = vshrl.u32 %v5589, 7
        %v5591 = vsub.s32 0, %v5590
        %v5592 = vrot.slane %v5284, %v5591
        %v5593 = vlaneseq
        %v5594 = vshrl.u32 %v5593, 7
        %v5595 = vsub.s32 0, %v5594
        %v5596 = vrot.slane %v5285, %v5595
        %v5597 = vlaneseq
        %v5598 = vshrl.u32 %v5597, 7
        %v5599 = vsub.s32 0, %v5598
        %v5600 = vrot.slane %v5286, %v5599
        %v5601 = vlaneseq
        %v5602 = vshrl.u32 %v5601, 7
        %v5603 = vsub.s32 0, %v5602
        %v5604 = vrot.slane %v5287, %v5603
        %v5605 = vlaneseq
        %v5606 = vshrl.u32 %v5605, 7
        %v5607 = vsub.s32 0, %v5606
        %v5608 = vrot.slane %v5288, %v5607
        %vm5609 = vcmask 1041409
        %v5610 = vsel %vm5609, %v5360, %v5356
        %vm5611 = vcmask 1042434
        %v5612 = vsel %vm5611, %v5364, %v5610
        %vm5613 = vcmask 1043459
        %v5614 = vsel %vm5613, %v5368, %v5612
        %vm5615 = vcmask 1044484
        %v5616 = vsel %vm5615, %v5372, %v5614
        %vm5617 = vcmask 1045509
        %v5618 = vsel %vm5617, %v5376, %v5616
        %vm5619 = vcmask 1046534
        %v5620 = vsel %vm5619, %v5380, %v5618
        %vm5621 = vcmask 1047559
        %v5622 = vsel %vm5621, %v5384, %v5620
        %v5623 = vsel %vm5609, %v5392, %v5388
        %v5624 = vsel %vm5611, %v5396, %v5623
        %v5625 = vsel %vm5613, %v5400, %v5624
        %v5626 = vsel %vm5615, %v5404, %v5625
        %v5627 = vsel %vm5617, %v5408, %v5626
        %v5628 = vsel %vm5619, %v5412, %v5627
        %v5629 = vsel %vm5621, %v5416, %v5628
        %v5630 = vsel %vm5609, %v5424, %v5420
        %v5631 = vsel %vm5611, %v5428, %v5630
        %v5632 = vsel %vm5613, %v5432, %v5631
        %v5633 = vsel %vm5615, %v5436, %v5632
        %v5634 = vsel %vm5617, %v5440, %v5633
        %v5635 = vsel %vm5619, %v5444, %v5634
        %v5636 = vsel %vm5621, %v5448, %v5635
        %v5637 = vsel %vm5609, %v5456, %v5452
        %v5638 = vsel %vm5611, %v5460, %v5637
        %v5639 = vsel %vm5613, %v5464, %v5638
        %v5640 = vsel %vm5615, %v5468, %v5639
        %v5641 = vsel %vm5617, %v5472, %v5640
        %v5642 = vsel %vm5619, %v5476, %v5641
        %v5643 = vsel %vm5621, %v5480, %v5642
        %v5644 = vsel %vm5609, %v5488, %v5484
        %v5645 = vsel %vm5611, %v5492, %v5644
        %v5646 = vsel %vm5613, %v5496, %v5645
        %v5647 = vsel %vm5615, %v5500, %v5646
        %v5648 = vsel %vm5617, %v5504, %v5647
        %v5649 = vsel %vm5619, %v5508, %v5648
        %v5650 = vsel %vm5621, %v5512, %v5649
        %v5651 = vsel %vm5609, %v5520, %v5516
        %v5652 = vsel %vm5611, %v5524, %v5651
        %v5653 = vsel %vm5613, %v5528, %v5652
        %v5654 = vsel %vm5615, %v5532, %v5653
        %v5655 = vsel %vm5617, %v5536, %v5654
        %v5656 = vsel %vm5619, %v5540, %v5655
        %v5657 = vsel %vm5621, %v5544, %v5656
        %v5658 = vsel %vm5609, %v5552, %v5548
        %v5659 = vsel %vm5611, %v5556, %v5658
        %v5660 = vsel %vm5613, %v5560, %v5659
        %v5661 = vsel %vm5615, %v5564, %v5660
        %v5662 = vsel %vm5617, %v5568, %v5661
        %v5663 = vsel %vm5619, %v5572, %v5662
        %v5664 = vsel %vm5621, %v5576, %v5663
        %v5665 = vsel %vm5609, %v5584, %v5580
        %v5666 = vsel %vm5611, %v5588, %v5665
        %v5667 = vsel %vm5613, %v5592, %v5666
        %v5668 = vsel %vm5615, %v5596, %v5667
        %v5669 = vsel %vm5617, %v5600, %v5668
        %v5670 = vsel %vm5619, %v5604, %v5669
        %v5671 = vsel %vm5621, %v5608, %v5670
        %s5680 = scalar_lea.vmem [#allocation3], 16
        %5681 = vst.msk [vmem:[%s5680 + $0x1] sm:$0xff] %vm379, %v5622
        %5682 = vst.msk [vmem:[%s5680 + $0x11] sm:$0xff] %vm379, %v5629
        %5683 = vst.msk [vmem:[%s5680 + $0x21] sm:$0xff] %vm379, %v5636
        %5684 = vst.msk [vmem:[%s5680 + $0x31] sm:$0xff] %vm379, %v5643
        %5685 = vst.msk [vmem:[%s5680 + $0x41] sm:$0xff] %vm379, %v5650
        %5686 = vst.msk [vmem:[%s5680 + $0x51] sm:$0xff] %vm379, %v5657
        %5687 = vst.msk [vmem:[%s5680 + $0x61] sm:$0xff] %vm379, %v5664
        %5688 = vst.msk [vmem:[%s5680 + $0x71] sm:$0xff] %vm379, %v5671
        %v5689 = vld [vmem:[#allocation3] sm:$0xff]
        %v5690 = vld [vmem:[#allocation3 + $0x10] sm:$0xff]
        %v5691 = vld [vmem:[#allocation3 + $0x20] sm:$0xff]
        %v5692 = vld [vmem:[#allocation3 + $0x30] sm:$0xff]
        %v5693 = vld [vmem:[#allocation3 + $0x40] sm:$0xff]
        %v5694 = vld [vmem:[#allocation3 + $0x50] sm:$0xff]
        %v5695 = vld [vmem:[#allocation3 + $0x60] sm:$0xff]
        %v5696 = vld [vmem:[#allocation3 + $0x70] sm:$0xff]
        %v5697 = vld [vmem:[%s3] sm:$0xff]
        %v5698 = vld [vmem:[%s3 + $0x8] sm:$0xff]
        %v5699 = vld [vmem:[%s3 + $0x10] sm:$0xff]
        %v5700 = vld [vmem:[#allocation3 + $0x1] sm:$0xff]
        %v5701 = vld [vmem:[#allocation3 + $0x11] sm:$0xff]
        %v5702 = vld [vmem:[#allocation3 + $0x21] sm:$0xff]
        %v5703 = vld [vmem:[#allocation3 + $0x31] sm:$0xff]
        %v5704 = vld [vmem:[#allocation3 + $0x41] sm:$0xff]
        %v5705 = vld [vmem:[#allocation3 + $0x51] sm:$0xff]
        %v5706 = vld [vmem:[#allocation3 + $0x61] sm:$0xff]
        %v5707 = vld [vmem:[#allocation3 + $0x71] sm:$0xff]
        %s5708 = scalar_lea.vmem %s3, 24
        %v5709 = vld [vmem:[%s5708] sm:$0xff]
        %v5710 = vld [vmem:[%s5708 + $0x8] sm:$0xff]
        %v5711 = vld [vmem:[%s5708 + $0x10] sm:$0xff]
        %v5713 = vsel %vm379, %v5700, 0
        %v5716 = vsel %vm379, %v5701, 0
        %v5719 = vsel %vm379, %v5702, 0
        %v5722 = vsel %vm379, %v5703, 0
        %v5725 = vsel %vm379, %v5704, 0
        %v5728 = vsel %vm379, %v5705, 0
        %v5731 = vsel %vm379, %v5706, 0
        %v5734 = vsel %vm379, %v5707, 0
        %5736 = vmatprep.subr.mxu0 0.0
        %5737 = vmatpush1.msra.mxu0 %v5709
        %5738 = vmatprep.subr.mxu0 0.0
        %5739 = vmatpush1.msra.mxu0 %v5710
        %5740 = vmatprep.subr.mxu0 0.0
        %5741 = vmatpush1.msra.mxu0 %v5711
        %5742 = vmatprep.subr.mxu0 0.0
        %5743 = vmatpush1.msra.mxu0 0.0
        %5744 = vmatprep.subr.mxu0 0.0
        %5745 = vmatpush1.msra.mxu0 0.0
        %5746 = vmatprep.subr.mxu0 0.0
        %5747 = vmatpush1.msra.mxu0 0.0
        %5748 = vmatprep.subr.mxu0 0.0
        %5749 = vmatpush1.msra.mxu0 0.0
        %5750 = vmatprep.subr.mxu0 0.0
        %5751 = vmatpush1.msra.mxu0 0.0
        %5752 = vmatprep.subr.mxu0 0.0
        %5753 = vmatpush1.msra.mxu0 0.0
        %5754 = vmatprep.subr.mxu0 0.0
        %5755 = vmatpush1.msra.mxu0 0.0
        %5756 = vmatprep.subr.mxu0 0.0
        %5757 = vmatpush1.msra.mxu0 0.0
        %5758 = vmatprep.subr.mxu0 0.0
        %5759 = vmatpush1.msra.mxu0 0.0
        %5760 = vmatprep.subr.mxu0 0.0
        %5761 = vmatpush1.msra.mxu0 0.0
        %5762 = vmatprep.subr.mxu0 0.0
        %5763 = vmatpush1.msra.mxu0 0.0
        %5764 = vmatprep.subr.mxu0 0.0
        %5765 = vmatpush1.msra.mxu0 0.0
        %5766 = vmatprep.subr.mxu0 0.0
        %5767 = vmatpush1.msra.mxu0 0.0
        %5768 = vmatprep.subr.mxu0 0.0
        %5769 = vmatpush1.msra.mxu0 0.0
        %5770 = vmatprep.subr.mxu0 0.0
        %5771 = vmatpush1.msra.mxu0 0.0
        %5772 = vmatprep.subr.mxu0 0.0
        %5773 = vmatpush1.msra.mxu0 0.0
        %5774 = vmatprep.subr.mxu0 0.0
        %5775 = vmatpush1.msra.mxu0 0.0
        %5776 = vmatprep.subr.mxu0 0.0
        %5777 = vmatpush1.msra.mxu0 0.0
        %5778 = vmatprep.subr.mxu0 0.0
        %5779 = vmatpush1.msra.mxu0 0.0
        %5780 = vmatprep.subr.mxu0 0.0
        %5781 = vmatpush1.msra.mxu0 0.0
        %5782 = vmatprep.subr.mxu0 0.0
        %5783 = vmatpush1.msra.mxu0 0.0
        %5784 = vmatprep.subr.mxu0 0.0
        %5785 = vmatpush1.msra.mxu0 0.0
        %5786 = vmatprep.subr.mxu0 0.0
        %5787 = vmatpush1.msra.mxu0 0.0
        %5788 = vmatprep.subr.mxu0 0.0
        %5789 = vmatpush1.msra.mxu0 0.0
        %5790 = vmatprep.subr.mxu0 0.0
        %5791 = vmatpush1.msra.mxu0 0.0
        %5792 = vmatprep.subr.mxu0 0.0
        %5793 = vmatpush1.msra.mxu0 0.0
        %5794 = vmatprep.subr.mxu0 0.0
        %5795 = vmatpush1.msra.mxu0 0.0
        %5796 = vmatprep.subr.mxu0 0.0
        %5797 = vmatpush1.msra.mxu0 0.0
        %5798 = vmatprep.subr.mxu0 0.0
        %5799 = vmatpush1.msra.mxu0 0.0
        %5800 = vmatprep.mubr.f32.mxu0 0.0
        %5801 = vmatmul.mubr.f32.gmra.mrb[0].mxu0 %v5713
        %v5802 = vpop.f32.mrb[0].mxu0
        %v5803 = vadd.f32 0.0, %v5802
        %v5804 = vpop.f32.mrb[0].mxu0
        %5805 = vmatprep.mubr.f32.mxu0 0.0
        %5806 = vmatmul.mubr.f32.gmra.mrb[0].mxu0 %v5716
        %v5807 = vpop.f32.mrb[0].mxu0
        %v5808 = vadd.f32 0.0, %v5807
        %v5809 = vpop.f32.mrb[0].mxu0
        %5810 = vmatprep.mubr.f32.mxu0 0.0
        %5811 = vmatmul.mubr.f32.gmra.mrb[0].mxu0 %v5719
        %v5812 = vpop.f32.mrb[0].mxu0
        %v5813 = vadd.f32 0.0, %v5812
        %v5814 = vpop.f32.mrb[0].mxu0
        %5815 = vmatprep.mubr.f32.mxu0 0.0
        %5816 = vmatmul.mubr.f32.gmra.mrb[0].mxu0 %v5722
        %v5817 = vpop.f32.mrb[0].mxu0
        %v5818 = vadd.f32 0.0, %v5817
        %v5819 = vpop.f32.mrb[0].mxu0
        %5820 = vmatprep.mubr.f32.mxu0 0.0
        %5821 = vmatmul.mubr.f32.gmra.mrb[0].mxu0 %v5725
        %v5822 = vpop.f32.mrb[0].mxu0
        %v5823 = vadd.f32 0.0, %v5822
        %v5824 = vpop.f32.mrb[0].mxu0
        %5825 = vmatprep.mubr.f32.mxu0 0.0
        %5826 = vmatmul.mubr.f32.gmra.mrb[0].mxu0 %v5728
        %v5827 = vpop.f32.mrb[0].mxu0
        %v5828 = vadd.f32 0.0, %v5827
        %v5829 = vpop.f32.mrb[0].mxu0
        %5830 = vmatprep.mubr.f32.mxu0 0.0
        %5831 = vmatmul.mubr.f32.gmra.mrb[0].mxu0 %v5731
        %v5832 = vpop.f32.mrb[0].mxu0
        %v5833 = vadd.f32 0.0, %v5832
        %v5834 = vpop.f32.mrb[0].mxu0
        %5835 = vmatprep.mubr.f32.mxu0 0.0
        %5836 = vmatmul.mubr.f32.gmra.mrb[0].mxu0 %v5734
        %v5837 = vpop.f32.mrb[0].mxu0
        %v5838 = vadd.f32 0.0, %v5837
        %v5839 = vpop.f32.mrb[0].mxu0
        %5840 = vdwg.mxu0
        %v5842 = vsel %vm379, %v5689, 0
        %v5845 = vsel %vm379, %v5690, 0
        %v5848 = vsel %vm379, %v5691, 0
        %v5851 = vsel %vm379, %v5692, 0
        %v5854 = vsel %vm379, %v5693, 0
        %v5857 = vsel %vm379, %v5694, 0
        %v5860 = vsel %vm379, %v5695, 0
        %v5863 = vsel %vm379, %v5696, 0
        %5865 = vmatprep.subr.mxu0 0.0
        %5866 = vmatpush1.msra.mxu0 %v5697
        %5867 = vmatprep.subr.mxu0 0.0
        %5868 = vmatpush1.msra.mxu0 %v5698
        %5869 = vmatprep.subr.mxu0 0.0
        %5870 = vmatpush1.msra.mxu0 %v5699
        %5871 = vmatprep.subr.mxu0 0.0
        %5872 = vmatpush1.msra.mxu0 0.0
        %5873 = vmatprep.subr.mxu0 0.0
        %5874 = vmatpush1.msra.mxu0 0.0
        %5875 = vmatprep.subr.mxu0 0.0
        %5876 = vmatpush1.msra.mxu0 0.0
        %5877 = vmatprep.subr.mxu0 0.0
        %5878 = vmatpush1.msra.mxu0 0.0
        %5879 = vmatprep.subr.mxu0 0.0
        %5880 = vmatpush1.msra.mxu0 0.0
        %5881 = vmatprep.subr.mxu0 0.0
        %5882 = vmatpush1.msra.mxu0 0.0
        %5883 = vmatprep.subr.mxu0 0.0
        %5884 = vmatpush1.msra.mxu0 0.0
        %5885 = vmatprep.subr.mxu0 0.0
        %5886 = vmatpush1.msra.mxu0 0.0
        %5887 = vmatprep.subr.mxu0 0.0
        %5888 = vmatpush1.msra.mxu0 0.0
        %5889 = vmatprep.subr.mxu0 0.0
        %5890 = vmatpush1.msra.mxu0 0.0
        %5891 = vmatprep.subr.mxu0 0.0
        %5892 = vmatpush1.msra.mxu0 0.0
        %5893 = vmatprep.subr.mxu0 0.0
        %5894 = vmatpush1.msra.mxu0 0.0
        %5895 = vmatprep.subr.mxu0 0.0
        %5896 = vmatpush1.msra.mxu0 0.0
        %5897 = vmatprep.subr.mxu0 0.0
        %5898 = vmatpush1.msra.mxu0 0.0
        %5899 = vmatprep.subr.mxu0 0.0
        %5900 = vmatpush1.msra.mxu0 0.0
        %5901 = vmatprep.subr.mxu0 0.0
        %5902 = vmatpush1.msra.mxu0 0.0
        %5903 = vmatprep.subr.mxu0 0.0
        %5904 = vmatpush1.msra.mxu0 0.0
        %5905 = vmatprep.subr.mxu0 0.0
        %5906 = vmatpush1.msra.mxu0 0.0
        %5907 = vmatprep.subr.mxu0 0.0
        %5908 = vmatpush1.msra.mxu0 0.0
        %5909 = vmatprep.subr.mxu0 0.0
        %5910 = vmatpush1.msra.mxu0 0.0
        %5911 = vmatprep.subr.mxu0 0.0
        %5912 = vmatpush1.msra.mxu0 0.0
        %5913 = vmatprep.subr.mxu0 0.0
        %5914 = vmatpush1.msra.mxu0 0.0
        %5915 = vmatprep.subr.mxu0 0.0
        %5916 = vmatpush1.msra.mxu0 0.0
        %5917 = vmatprep.subr.mxu0 0.0
        %5918 = vmatpush1.msra.mxu0 0.0
        %5919 = vmatprep.subr.mxu0 0.0
        %5920 = vmatpush1.msra.mxu0 0.0
        %5921 = vmatprep.subr.mxu0 0.0
        %5922 = vmatpush1.msra.mxu0 0.0
        %5923 = vmatprep.subr.mxu0 0.0
        %5924 = vmatpush1.msra.mxu0 0.0
        %5925 = vmatprep.subr.mxu0 0.0
        %5926 = vmatpush1.msra.mxu0 0.0
        %5927 = vmatprep.subr.mxu0 0.0
        %5928 = vmatpush1.msra.mxu0 0.0
        %5929 = vmatprep.mubr.f32.mxu0 0.0
        %5930 = vmatmul.mubr.f32.gmra.mrb[0].mxu0 %v5842
        %v5931 = vpop.f32.mrb[0].mxu0
        %v5932 = vadd.f32 %v5803, %v5931
        %v5933 = vpop.f32.mrb[0].mxu0
        %5934 = vmatprep.mubr.f32.mxu0 0.0
        %5935 = vmatmul.mubr.f32.gmra.mrb[0].mxu0 %v5845
        %v5936 = vpop.f32.mrb[0].mxu0
        %v5937 = vadd.f32 %v5808, %v5936
        %v5938 = vpop.f32.mrb[0].mxu0
        %5939 = vmatprep.mubr.f32.mxu0 0.0
        %5940 = vmatmul.mubr.f32.gmra.mrb[0].mxu0 %v5848
        %v5941 = vpop.f32.mrb[0].mxu0
        %v5942 = vadd.f32 %v5813, %v5941
        %v5943 = vpop.f32.mrb[0].mxu0
        %5944 = vmatprep.mubr.f32.mxu0 0.0
        %5945 = vmatmul.mubr.f32.gmra.mrb[0].mxu0 %v5851
        %v5946 = vpop.f32.mrb[0].mxu0
        %v5947 = vadd.f32 %v5818, %v5946
        %v5948 = vpop.f32.mrb[0].mxu0
        %5949 = vmatprep.mubr.f32.mxu0 0.0
        %5950 = vmatmul.mubr.f32.gmra.mrb[0].mxu0 %v5854
        %v5951 = vpop.f32.mrb[0].mxu0
        %v5952 = vadd.f32 %v5823, %v5951
        %v5953 = vpop.f32.mrb[0].mxu0
        %5954 = vmatprep.mubr.f32.mxu0 0.0
        %5955 = vmatmul.mubr.f32.gmra.mrb[0].mxu0 %v5857
        %v5956 = vpop.f32.mrb[0].mxu0
        %v5957 = vadd.f32 %v5828, %v5956
        %v5958 = vpop.f32.mrb[0].mxu0
        %5959 = vmatprep.mubr.f32.mxu0 0.0
        %5960 = vmatmul.mubr.f32.gmra.mrb[0].mxu0 %v5860
        %v5961 = vpop.f32.mrb[0].mxu0
        %v5962 = vadd.f32 %v5833, %v5961
        %v5963 = vpop.f32.mrb[0].mxu0
        %5964 = vmatprep.mubr.f32.mxu0 0.0
        %5965 = vmatmul.mubr.f32.gmra.mrb[0].mxu0 %v5863
        %v5966 = vpop.f32.mrb[0].mxu0
        %v5967 = vadd.f32 %v5838, %v5966
        %v5968 = vpop.f32.mrb[0].mxu0
        %5969 = vdwg.mxu0
        %v5970 = vld [vmem:[#allocation3 + $0x2] sm:$0xff]
        %v5971 = vld [vmem:[#allocation3 + $0x12] sm:$0xff]
        %v5972 = vld [vmem:[#allocation3 + $0x22] sm:$0xff]
        %v5973 = vld [vmem:[#allocation3 + $0x32] sm:$0xff]
        %v5974 = vld [vmem:[#allocation3 + $0x42] sm:$0xff]
        %v5975 = vld [vmem:[#allocation3 + $0x52] sm:$0xff]
        %v5976 = vld [vmem:[#allocation3 + $0x62] sm:$0xff]
        %v5977 = vld [vmem:[#allocation3 + $0x72] sm:$0xff]
        %s5978 = scalar_lea.vmem %s3, 48
        %v5979 = vld [vmem:[%s5978] sm:$0xff]
        %v5980 = vld [vmem:[%s5978 + $0x8] sm:$0xff]
        %v5981 = vld [vmem:[%s5978 + $0x10] sm:$0xff]
        %v5983 = vsel %vm379, %v5970, 0
        %v5986 = vsel %vm379, %v5971, 0
        %v5989 = vsel %vm379, %v5972, 0
        %v5992 = vsel %vm379, %v5973, 0
        %v5995 = vsel %vm379, %v5974, 0
        %v5998 = vsel %vm379, %v5975, 0
        %v6001 = vsel %vm379, %v5976, 0
        %v6004 = vsel %vm379, %v5977, 0
        %6006 = vmatprep.subr.mxu0 0.0
        %6007 = vmatpush1.msra.mxu0 %v5979
        %6008 = vmatprep.subr.mxu0 0.0
        %6009 = vmatpush1.msra.mxu0 %v5980
        %6010 = vmatprep.subr.mxu0 0.0
        %6011 = vmatpush1.msra.mxu0 %v5981
        %6012 = vmatprep.subr.mxu0 0.0
        %6013 = vmatpush1.msra.mxu0 0.0
        %6014 = vmatprep.subr.mxu0 0.0
        %6015 = vmatpush1.msra.mxu0 0.0
        %6016 = vmatprep.subr.mxu0 0.0
        %6017 = vmatpush1.msra.mxu0 0.0
        %6018 = vmatprep.subr.mxu0 0.0
        %6019 = vmatpush1.msra.mxu0 0.0
        %6020 = vmatprep.subr.mxu0 0.0
        %6021 = vmatpush1.msra.mxu0 0.0
        %6022 = vmatprep.subr.mxu0 0.0
        %6023 = vmatpush1.msra.mxu0 0.0
        %6024 = vmatprep.subr.mxu0 0.0
        %6025 = vmatpush1.msra.mxu0 0.0
        %6026 = vmatprep.subr.mxu0 0.0
        %6027 = vmatpush1.msra.mxu0 0.0
        %6028 = vmatprep.subr.mxu0 0.0
        %6029 = vmatpush1.msra.mxu0 0.0
        %6030 = vmatprep.subr.mxu0 0.0
        %6031 = vmatpush1.msra.mxu0 0.0
        %6032 = vmatprep.subr.mxu0 0.0
        %6033 = vmatpush1.msra.mxu0 0.0
        %6034 = vmatprep.subr.mxu0 0.0
        %6035 = vmatpush1.msra.mxu0 0.0
        %6036 = vmatprep.subr.mxu0 0.0
        %6037 = vmatpush1.msra.mxu0 0.0
        %6038 = vmatprep.subr.mxu0 0.0
        %6039 = vmatpush1.msra.mxu0 0.0
        %6040 = vmatprep.subr.mxu0 0.0
        %6041 = vmatpush1.msra.mxu0 0.0
        %6042 = vmatprep.subr.mxu0 0.0
        %6043 = vmatpush1.msra.mxu0 0.0
        %6044 = vmatprep.subr.mxu0 0.0
        %6045 = vmatpush1.msra.mxu0 0.0
        %6046 = vmatprep.subr.mxu0 0.0
        %6047 = vmatpush1.msra.mxu0 0.0
        %6048 = vmatprep.subr.mxu0 0.0
        %6049 = vmatpush1.msra.mxu0 0.0
        %6050 = vmatprep.subr.mxu0 0.0
        %6051 = vmatpush1.msra.mxu0 0.0
        %6052 = vmatprep.subr.mxu0 0.0
        %6053 = vmatpush1.msra.mxu0 0.0
        %6054 = vmatprep.subr.mxu0 0.0
        %6055 = vmatpush1.msra.mxu0 0.0
        %6056 = vmatprep.subr.mxu0 0.0
        %6057 = vmatpush1.msra.mxu0 0.0
        %6058 = vmatprep.subr.mxu0 0.0
        %6059 = vmatpush1.msra.mxu0 0.0
        %6060 = vmatprep.subr.mxu0 0.0
        %6061 = vmatpush1.msra.mxu0 0.0
        %6062 = vmatprep.subr.mxu0 0.0
        %6063 = vmatpush1.msra.mxu0 0.0
        %6064 = vmatprep.subr.mxu0 0.0
        %6065 = vmatpush1.msra.mxu0 0.0
        %6066 = vmatprep.subr.mxu0 0.0
        %6067 = vmatpush1.msra.mxu0 0.0
        %6068 = vmatprep.subr.mxu0 0.0
        %6069 = vmatpush1.msra.mxu0 0.0
        %6070 = vmatprep.mubr.f32.mxu0 0.0
        %6071 = vmatmul.mubr.f32.gmra.mrb[0].mxu0 %v5983
        %v6072 = vpop.f32.mrb[0].mxu0
        %v6073 = vadd.f32 0.0, %v6072
        %v6074 = vpop.f32.mrb[0].mxu0
        %6075 = vmatprep.mubr.f32.mxu0 0.0
        %6076 = vmatmul.mubr.f32.gmra.mrb[0].mxu0 %v5986
        %v6077 = vpop.f32.mrb[0].mxu0
        %v6078 = vadd.f32 0.0, %v6077
        %v6079 = vpop.f32.mrb[0].mxu0
        %6080 = vmatprep.mubr.f32.mxu0 0.0
        %6081 = vmatmul.mubr.f32.gmra.mrb[0].mxu0 %v5989
        %v6082 = vpop.f32.mrb[0].mxu0
        %v6083 = vadd.f32 0.0, %v6082
        %v6084 = vpop.f32.mrb[0].mxu0
        %6085 = vmatprep.mubr.f32.mxu0 0.0
        %6086 = vmatmul.mubr.f32.gmra.mrb[0].mxu0 %v5992
        %v6087 = vpop.f32.mrb[0].mxu0
        %v6088 = vadd.f32 0.0, %v6087
        %v6089 = vpop.f32.mrb[0].mxu0
        %6090 = vmatprep.mubr.f32.mxu0 0.0
        %6091 = vmatmul.mubr.f32.gmra.mrb[0].mxu0 %v5995
        %v6092 = vpop.f32.mrb[0].mxu0
        %v6093 = vadd.f32 0.0, %v6092
        %v6094 = vpop.f32.mrb[0].mxu0
        %6095 = vmatprep.mubr.f32.mxu0 0.0
        %6096 = vmatmul.mubr.f32.gmra.mrb[0].mxu0 %v5998
        %v6097 = vpop.f32.mrb[0].mxu0
        %v6098 = vadd.f32 0.0, %v6097
        %v6099 = vpop.f32.mrb[0].mxu0
        %6100 = vmatprep.mubr.f32.mxu0 0.0
        %6101 = vmatmul.mubr.f32.gmra.mrb[0].mxu0 %v6001
        %v6102 = vpop.f32.mrb[0].mxu0
        %v6103 = vadd.f32 0.0, %v6102
        %v6104 = vpop.f32.mrb[0].mxu0
        %6105 = vmatprep.mubr.f32.mxu0 0.0
        %6106 = vmatmul.mubr.f32.gmra.mrb[0].mxu0 %v6004
        %v6107 = vpop.f32.mrb[0].mxu0
        %v6108 = vadd.f32 0.0, %v6107
        %v6109 = vpop.f32.mrb[0].mxu0
        %6110 = vdwg.mxu0
        %v6111 = vadd.f32 %v5932, %v6073
        %v6112 = vadd.f32 %v5937, %v6078
        %v6113 = vadd.f32 %v5942, %v6083
        %v6114 = vadd.f32 %v5947, %v6088
        %v6115 = vadd.f32 %v5952, %v6093
        %v6116 = vadd.f32 %v5957, %v6098
        %v6117 = vadd.f32 %v5962, %v6103
        %v6118 = vadd.f32 %v5967, %v6108
        %v6119 = vld [vmem:[%s5680] sm:$0xff]
        %v6120 = vld [vmem:[%s5680 + $0x10] sm:$0xff]
        %v6121 = vld [vmem:[%s5680 + $0x20] sm:$0xff]
        %v6122 = vld [vmem:[%s5680 + $0x30] sm:$0xff]
        %v6123 = vld [vmem:[%s5680 + $0x40] sm:$0xff]
        %v6124 = vld [vmem:[%s5680 + $0x50] sm:$0xff]
        %v6125 = vld [vmem:[%s5680 + $0x60] sm:$0xff]
        %v6126 = vld [vmem:[%s5680 + $0x70] sm:$0xff]
        %s6127 = scalar_lea.vmem %s3, 72
        %v6128 = vld [vmem:[%s6127] sm:$0xff]
        %v6129 = vld [vmem:[%s6127 + $0x8] sm:$0xff]
        %v6130 = vld [vmem:[%s6127 + $0x10] sm:$0xff]
        %v6132 = vsel %vm379, %v6119, 0
        %v6135 = vsel %vm379, %v6120, 0
        %v6138 = vsel %vm379, %v6121, 0
        %v6141 = vsel %vm379, %v6122, 0
        %v6144 = vsel %vm379, %v6123, 0
        %v6147 = vsel %vm379, %v6124, 0
        %v6150 = vsel %vm379, %v6125, 0
        %v6153 = vsel %vm379, %v6126, 0
        %6155 = vmatprep.subr.mxu0 0.0
        %6156 = vmatpush1.msra.mxu0 %v6128
        %6157 = vmatprep.subr.mxu0 0.0
        %6158 = vmatpush1.msra.mxu0 %v6129
        %6159 = vmatprep.subr.mxu0 0.0
        %6160 = vmatpush1.msra.mxu0 %v6130
        %6161 = vmatprep.subr.mxu0 0.0
        %6162 = vmatpush1.msra.mxu0 0.0
        %6163 = vmatprep.subr.mxu0 0.0
        %6164 = vmatpush1.msra.mxu0 0.0
        %6165 = vmatprep.subr.mxu0 0.0
        %6166 = vmatpush1.msra.mxu0 0.0
        %6167 = vmatprep.subr.mxu0 0.0
        %6168 = vmatpush1.msra.mxu0 0.0
        %6169 = vmatprep.subr.mxu0 0.0
        %6170 = vmatpush1.msra.mxu0 0.0
        %6171 = vmatprep.subr.mxu0 0.0
        %6172 = vmatpush1.msra.mxu0 0.0
        %6173 = vmatprep.subr.mxu0 0.0
        %6174 = vmatpush1.msra.mxu0 0.0
        %6175 = vmatprep.subr.mxu0 0.0
        %6176 = vmatpush1.msra.mxu0 0.0
        %6177 = vmatprep.subr.mxu0 0.0
        %6178 = vmatpush1.msra.mxu0 0.0
        %6179 = vmatprep.subr.mxu0 0.0
        %6180 = vmatpush1.msra.mxu0 0.0
        %6181 = vmatprep.subr.mxu0 0.0
        %6182 = vmatpush1.msra.mxu0 0.0
        %6183 = vmatprep.subr.mxu0 0.0
        %6184 = vmatpush1.msra.mxu0 0.0
        %6185 = vmatprep.subr.mxu0 0.0
        %6186 = vmatpush1.msra.mxu0 0.0
        %6187 = vmatprep.subr.mxu0 0.0
        %6188 = vmatpush1.msra.mxu0 0.0
        %6189 = vmatprep.subr.mxu0 0.0
        %6190 = vmatpush1.msra.mxu0 0.0
        %6191 = vmatprep.subr.mxu0 0.0
        %6192 = vmatpush1.msra.mxu0 0.0
        %6193 = vmatprep.subr.mxu0 0.0
        %6194 = vmatpush1.msra.mxu0 0.0
        %6195 = vmatprep.subr.mxu0 0.0
        %6196 = vmatpush1.msra.mxu0 0.0
        %6197 = vmatprep.subr.mxu0 0.0
        %6198 = vmatpush1.msra.mxu0 0.0
        %6199 = vmatprep.subr.mxu0 0.0
        %6200 = vmatpush1.msra.mxu0 0.0
        %6201 = vmatprep.subr.mxu0 0.0
        %6202 = vmatpush1.msra.mxu0 0.0
        %6203 = vmatprep.subr.mxu0 0.0
        %6204 = vmatpush1.msra.mxu0 0.0
        %6205 = vmatprep.subr.mxu0 0.0
        %6206 = vmatpush1.msra.mxu0 0.0
        %6207 = vmatprep.subr.mxu0 0.0
        %6208 = vmatpush1.msra.mxu0 0.0
        %6209 = vmatprep.subr.mxu0 0.0
        %6210 = vmatpush1.msra.mxu0 0.0
        %6211 = vmatprep.subr.mxu0 0.0
        %6212 = vmatpush1.msra.mxu0 0.0
        %6213 = vmatprep.subr.mxu0 0.0
        %6214 = vmatpush1.msra.mxu0 0.0
        %6215 = vmatprep.subr.mxu0 0.0
        %6216 = vmatpush1.msra.mxu0 0.0
        %6217 = vmatprep.subr.mxu0 0.0
        %6218 = vmatpush1.msra.mxu0 0.0
        %6219 = vmatprep.mubr.f32.mxu0 0.0
        %6220 = vmatmul.mubr.f32.gmra.mrb[0].mxu0 %v6132
        %v6221 = vpop.f32.mrb[0].mxu0
        %v6222 = vadd.f32 0.0, %v6221
        %v6223 = vpop.f32.mrb[0].mxu0
        %6224 = vmatprep.mubr.f32.mxu0 0.0
        %6225 = vmatmul.mubr.f32.gmra.mrb[0].mxu0 %v6135
        %v6226 = vpop.f32.mrb[0].mxu0
        %v6227 = vadd.f32 0.0, %v6226
        %v6228 = vpop.f32.mrb[0].mxu0
        %6229 = vmatprep.mubr.f32.mxu0 0.0
        %6230 = vmatmul.mubr.f32.gmra.mrb[0].mxu0 %v6138
        %v6231 = vpop.f32.mrb[0].mxu0
        %v6232 = vadd.f32 0.0, %v6231
        %v6233 = vpop.f32.mrb[0].mxu0
        %6234 = vmatprep.mubr.f32.mxu0 0.0
        %6235 = vmatmul.mubr.f32.gmra.mrb[0].mxu0 %v6141
        %v6236 = vpop.f32.mrb[0].mxu0
        %v6237 = vadd.f32 0.0, %v6236
        %v6238 = vpop.f32.mrb[0].mxu0
        %6239 = vmatprep.mubr.f32.mxu0 0.0
        %6240 = vmatmul.mubr.f32.gmra.mrb[0].mxu0 %v6144
        %v6241 = vpop.f32.mrb[0].mxu0
        %v6242 = vadd.f32 0.0, %v6241
        %v6243 = vpop.f32.mrb[0].mxu0
        %6244 = vmatprep.mubr.f32.mxu0 0.0
        %6245 = vmatmul.mubr.f32.gmra.mrb[0].mxu0 %v6147
        %v6246 = vpop.f32.mrb[0].mxu0
        %v6247 = vadd.f32 0.0, %v6246
        %v6248 = vpop.f32.mrb[0].mxu0
        %6249 = vmatprep.mubr.f32.mxu0 0.0
        %6250 = vmatmul.mubr.f32.gmra.mrb[0].mxu0 %v6150
        %v6251 = vpop.f32.mrb[0].mxu0
        %v6252 = vadd.f32 0.0, %v6251
        %v6253 = vpop.f32.mrb[0].mxu0
        %6254 = vmatprep.mubr.f32.mxu0 0.0
        %6255 = vmatmul.mubr.f32.gmra.mrb[0].mxu0 %v6153
        %v6256 = vpop.f32.mrb[0].mxu0
        %v6257 = vadd.f32 0.0, %v6256
        %v6258 = vpop.f32.mrb[0].mxu0
        %6259 = vdwg.mxu0
        %v6260 = vadd.f32 %v6111, %v6222
        %v6261 = vadd.f32 %v6112, %v6227
        %v6262 = vadd.f32 %v6113, %v6232
        %v6263 = vadd.f32 %v6114, %v6237
        %v6264 = vadd.f32 %v6115, %v6242
        %v6265 = vadd.f32 %v6116, %v6247
        %v6266 = vadd.f32 %v6117, %v6252
        %v6267 = vadd.f32 %v6118, %v6257
        %v6268 = vld [vmem:[%s5680 + $0x1] sm:$0xff]
        %v6269 = vld [vmem:[%s5680 + $0x11] sm:$0xff]
        %v6270 = vld [vmem:[%s5680 + $0x21] sm:$0xff]
        %v6271 = vld [vmem:[%s5680 + $0x31] sm:$0xff]
        %v6272 = vld [vmem:[%s5680 + $0x41] sm:$0xff]
        %v6273 = vld [vmem:[%s5680 + $0x51] sm:$0xff]
        %v6274 = vld [vmem:[%s5680 + $0x61] sm:$0xff]
        %v6275 = vld [vmem:[%s5680 + $0x71] sm:$0xff]
        %s6276 = scalar_lea.vmem %s3, 96
        %v6277 = vld [vmem:[%s6276] sm:$0xff]
        %v6278 = vld [vmem:[%s6276 + $0x8] sm:$0xff]
        %v6279 = vld [vmem:[%s6276 + $0x10] sm:$0xff]
        %v6281 = vsel %vm379, %v6268, 0
        %v6284 = vsel %vm379, %v6269, 0
        %v6287 = vsel %vm379, %v6270, 0
        %v6290 = vsel %vm379, %v6271, 0
        %v6293 = vsel %vm379, %v6272, 0
        %v6296 = vsel %vm379, %v6273, 0
        %v6299 = vsel %vm379, %v6274, 0
        %v6302 = vsel %vm379, %v6275, 0
        %6304 = vmatprep.subr.mxu0 0.0
        %6305 = vmatpush1.msra.mxu0 %v6277
        %6306 = vmatprep.subr.mxu0 0.0
        %6307 = vmatpush1.msra.mxu0 %v6278
        %6308 = vmatprep.subr.mxu0 0.0
        %6309 = vmatpush1.msra.mxu0 %v6279
        %6310 = vmatprep.subr.mxu0 0.0
        %6311 = vmatpush1.msra.mxu0 0.0
        %6312 = vmatprep.subr.mxu0 0.0
        %6313 = vmatpush1.msra.mxu0 0.0
        %6314 = vmatprep.subr.mxu0 0.0
        %6315 = vmatpush1.msra.mxu0 0.0
        %6316 = vmatprep.subr.mxu0 0.0
        %6317 = vmatpush1.msra.mxu0 0.0
        %6318 = vmatprep.subr.mxu0 0.0
        %6319 = vmatpush1.msra.mxu0 0.0
        %6320 = vmatprep.subr.mxu0 0.0
        %6321 = vmatpush1.msra.mxu0 0.0
        %6322 = vmatprep.subr.mxu0 0.0
        %6323 = vmatpush1.msra.mxu0 0.0
        %6324 = vmatprep.subr.mxu0 0.0
        %6325 = vmatpush1.msra.mxu0 0.0
        %6326 = vmatprep.subr.mxu0 0.0
        %6327 = vmatpush1.msra.mxu0 0.0
        %6328 = vmatprep.subr.mxu0 0.0
        %6329 = vmatpush1.msra.mxu0 0.0
        %6330 = vmatprep.subr.mxu0 0.0
        %6331 = vmatpush1.msra.mxu0 0.0
        %6332 = vmatprep.subr.mxu0 0.0
        %6333 = vmatpush1.msra.mxu0 0.0
        %6334 = vmatprep.subr.mxu0 0.0
        %6335 = vmatpush1.msra.mxu0 0.0
        %6336 = vmatprep.subr.mxu0 0.0
        %6337 = vmatpush1.msra.mxu0 0.0
        %6338 = vmatprep.subr.mxu0 0.0
        %6339 = vmatpush1.msra.mxu0 0.0
        %6340 = vmatprep.subr.mxu0 0.0
        %6341 = vmatpush1.msra.mxu0 0.0
        %6342 = vmatprep.subr.mxu0 0.0
        %6343 = vmatpush1.msra.mxu0 0.0
        %6344 = vmatprep.subr.mxu0 0.0
        %6345 = vmatpush1.msra.mxu0 0.0
        %6346 = vmatprep.subr.mxu0 0.0
        %6347 = vmatpush1.msra.mxu0 0.0
        %6348 = vmatprep.subr.mxu0 0.0
        %6349 = vmatpush1.msra.mxu0 0.0
        %6350 = vmatprep.subr.mxu0 0.0
        %6351 = vmatpush1.msra.mxu0 0.0
        %6352 = vmatprep.subr.mxu0 0.0
        %6353 = vmatpush1.msra.mxu0 0.0
        %6354 = vmatprep.subr.mxu0 0.0
        %6355 = vmatpush1.msra.mxu0 0.0
        %6356 = vmatprep.subr.mxu0 0.0
        %6357 = vmatpush1.msra.mxu0 0.0
        %6358 = vmatprep.subr.mxu0 0.0
        %6359 = vmatpush1.msra.mxu0 0.0
        %6360 = vmatprep.subr.mxu0 0.0
        %6361 = vmatpush1.msra.mxu0 0.0
        %6362 = vmatprep.subr.mxu0 0.0
        %6363 = vmatpush1.msra.mxu0 0.0
        %6364 = vmatprep.subr.mxu0 0.0
        %6365 = vmatpush1.msra.mxu0 0.0
        %6366 = vmatprep.subr.mxu0 0.0
        %6367 = vmatpush1.msra.mxu0 0.0
        %6368 = vmatprep.mubr.f32.mxu0 0.0
        %6369 = vmatmul.mubr.f32.gmra.mrb[0].mxu0 %v6281
        %v6370 = vpop.f32.mrb[0].mxu0
        %v6371 = vadd.f32 0.0, %v6370
        %v6372 = vpop.f32.mrb[0].mxu0
        %6373 = vmatprep.mubr.f32.mxu0 0.0
        %6374 = vmatmul.mubr.f32.gmra.mrb[0].mxu0 %v6284
        %v6375 = vpop.f32.mrb[0].mxu0
        %v6376 = vadd.f32 0.0, %v6375
        %v6377 = vpop.f32.mrb[0].mxu0
        %6378 = vmatprep.mubr.f32.mxu0 0.0
        %6379 = vmatmul.mubr.f32.gmra.mrb[0].mxu0 %v6287
        %v6380 = vpop.f32.mrb[0].mxu0
        %v6381 = vadd.f32 0.0, %v6380
        %v6382 = vpop.f32.mrb[0].mxu0
        %6383 = vmatprep.mubr.f32.mxu0 0.0
        %6384 = vmatmul.mubr.f32.gmra.mrb[0].mxu0 %v6290
        %v6385 = vpop.f32.mrb[0].mxu0
        %v6386 = vadd.f32 0.0, %v6385
        %v6387 = vpop.f32.mrb[0].mxu0
        %6388 = vmatprep.mubr.f32.mxu0 0.0
        %6389 = vmatmul.mubr.f32.gmra.mrb[0].mxu0 %v6293
        %v6390 = vpop.f32.mrb[0].mxu0
        %v6391 = vadd.f32 0.0, %v6390
        %v6392 = vpop.f32.mrb[0].mxu0
        %6393 = vmatprep.mubr.f32.mxu0 0.0
        %6394 = vmatmul.mubr.f32.gmra.mrb[0].mxu0 %v6296
        %v6395 = vpop.f32.mrb[0].mxu0
        %v6396 = vadd.f32 0.0, %v6395
        %v6397 = vpop.f32.mrb[0].mxu0
        %6398 = vmatprep.mubr.f32.mxu0 0.0
        %6399 = vmatmul.mubr.f32.gmra.mrb[0].mxu0 %v6299
        %v6400 = vpop.f32.mrb[0].mxu0
        %v6401 = vadd.f32 0.0, %v6400
        %v6402 = vpop.f32.mrb[0].mxu0
        %6403 = vmatprep.mubr.f32.mxu0 0.0
        %6404 = vmatmul.mubr.f32.gmra.mrb[0].mxu0 %v6302
        %v6405 = vpop.f32.mrb[0].mxu0
        %v6406 = vadd.f32 0.0, %v6405
        %v6407 = vpop.f32.mrb[0].mxu0
        %6408 = vdwg.mxu0
        %v6409 = vadd.f32 %v6260, %v6371
        %v6410 = vadd.f32 %v6261, %v6376
        %v6411 = vadd.f32 %v6262, %v6381
        %v6412 = vadd.f32 %v6263, %v6386
        %v6413 = vadd.f32 %v6264, %v6391
        %v6414 = vadd.f32 %v6265, %v6396
        %v6415 = vadd.f32 %v6266, %v6401
        %v6416 = vadd.f32 %v6267, %v6406
        %v6417 = vld [vmem:[%s5680 + $0x2] sm:$0xff]
        %v6418 = vld [vmem:[%s5680 + $0x12] sm:$0xff]
        %v6419 = vld [vmem:[%s5680 + $0x22] sm:$0xff]
        %v6420 = vld [vmem:[%s5680 + $0x32] sm:$0xff]
        %v6421 = vld [vmem:[%s5680 + $0x42] sm:$0xff]
        %v6422 = vld [vmem:[%s5680 + $0x52] sm:$0xff]
        %v6423 = vld [vmem:[%s5680 + $0x62] sm:$0xff]
        %v6424 = vld [vmem:[%s5680 + $0x72] sm:$0xff]
        %s6425 = scalar_lea.vmem %s3, 120
        %v6426 = vld [vmem:[%s6425] sm:$0xff]
        %v6427 = vld [vmem:[%s6425 + $0x8] sm:$0xff]
        %v6428 = vld [vmem:[%s6425 + $0x10] sm:$0xff]
        %v6430 = vsel %vm379, %v6417, 0
        %v6433 = vsel %vm379, %v6418, 0
        %v6436 = vsel %vm379, %v6419, 0
        %v6439 = vsel %vm379, %v6420, 0
        %v6442 = vsel %vm379, %v6421, 0
        %v6445 = vsel %vm379, %v6422, 0
        %v6448 = vsel %vm379, %v6423, 0
        %v6451 = vsel %vm379, %v6424, 0
        %6453 = vmatprep.subr.mxu0 0.0
        %6454 = vmatpush1.msra.mxu0 %v6426
        %6455 = vmatprep.subr.mxu0 0.0
        %6456 = vmatpush1.msra.mxu0 %v6427
        %6457 = vmatprep.subr.mxu0 0.0
        %6458 = vmatpush1.msra.mxu0 %v6428
        %6459 = vmatprep.subr.mxu0 0.0
        %6460 = vmatpush1.msra.mxu0 0.0
        %6461 = vmatprep.subr.mxu0 0.0
        %6462 = vmatpush1.msra.mxu0 0.0
        %6463 = vmatprep.subr.mxu0 0.0
        %6464 = vmatpush1.msra.mxu0 0.0
        %6465 = vmatprep.subr.mxu0 0.0
        %6466 = vmatpush1.msra.mxu0 0.0
        %6467 = vmatprep.subr.mxu0 0.0
        %6468 = vmatpush1.msra.mxu0 0.0
        %6469 = vmatprep.subr.mxu0 0.0
        %6470 = vmatpush1.msra.mxu0 0.0
        %6471 = vmatprep.subr.mxu0 0.0
        %6472 = vmatpush1.msra.mxu0 0.0
        %6473 = vmatprep.subr.mxu0 0.0
        %6474 = vmatpush1.msra.mxu0 0.0
        %6475 = vmatprep.subr.mxu0 0.0
        %6476 = vmatpush1.msra.mxu0 0.0
        %6477 = vmatprep.subr.mxu0 0.0
        %6478 = vmatpush1.msra.mxu0 0.0
        %6479 = vmatprep.subr.mxu0 0.0
        %6480 = vmatpush1.msra.mxu0 0.0
        %6481 = vmatprep.subr.mxu0 0.0
        %6482 = vmatpush1.msra.mxu0 0.0
        %6483 = vmatprep.subr.mxu0 0.0
        %6484 = vmatpush1.msra.mxu0 0.0
        %6485 = vmatprep.subr.mxu0 0.0
        %6486 = vmatpush1.msra.mxu0 0.0
        %6487 = vmatprep.subr.mxu0 0.0
        %6488 = vmatpush1.msra.mxu0 0.0
        %6489 = vmatprep.subr.mxu0 0.0
        %6490 = vmatpush1.msra.mxu0 0.0
        %6491 = vmatprep.subr.mxu0 0.0
        %6492 = vmatpush1.msra.mxu0 0.0
        %6493 = vmatprep.subr.mxu0 0.0
        %6494 = vmatpush1.msra.mxu0 0.0
        %6495 = vmatprep.subr.mxu0 0.0
        %6496 = vmatpush1.msra.mxu0 0.0
        %6497 = vmatprep.subr.mxu0 0.0
        %6498 = vmatpush1.msra.mxu0 0.0
        %6499 = vmatprep.subr.mxu0 0.0
        %6500 = vmatpush1.msra.mxu0 0.0
        %6501 = vmatprep.subr.mxu0 0.0
        %6502 = vmatpush1.msra.mxu0 0.0
        %6503 = vmatprep.subr.mxu0 0.0
        %6504 = vmatpush1.msra.mxu0 0.0
        %6505 = vmatprep.subr.mxu0 0.0
        %6506 = vmatpush1.msra.mxu0 0.0
        %6507 = vmatprep.subr.mxu0 0.0
        %6508 = vmatpush1.msra.mxu0 0.0
        %6509 = vmatprep.subr.mxu0 0.0
        %6510 = vmatpush1.msra.mxu0 0.0
        %6511 = vmatprep.subr.mxu0 0.0
        %6512 = vmatpush1.msra.mxu0 0.0
        %6513 = vmatprep.subr.mxu0 0.0
        %6514 = vmatpush1.msra.mxu0 0.0
        %6515 = vmatprep.subr.mxu0 0.0
        %6516 = vmatpush1.msra.mxu0 0.0
        %6517 = vmatprep.mubr.f32.mxu0 0.0
        %6518 = vmatmul.mubr.f32.gmra.mrb[0].mxu0 %v6430
        %v6519 = vpop.f32.mrb[0].mxu0
        %v6520 = vadd.f32 0.0, %v6519
        %v6521 = vpop.f32.mrb[0].mxu0
        %6522 = vmatprep.mubr.f32.mxu0 0.0
        %6523 = vmatmul.mubr.f32.gmra.mrb[0].mxu0 %v6433
        %v6524 = vpop.f32.mrb[0].mxu0
        %v6525 = vadd.f32 0.0, %v6524
        %v6526 = vpop.f32.mrb[0].mxu0
        %6527 = vmatprep.mubr.f32.mxu0 0.0
        %6528 = vmatmul.mubr.f32.gmra.mrb[0].mxu0 %v6436
        %v6529 = vpop.f32.mrb[0].mxu0
        %v6530 = vadd.f32 0.0, %v6529
        %v6531 = vpop.f32.mrb[0].mxu0
        %6532 = vmatprep.mubr.f32.mxu0 0.0
        %6533 = vmatmul.mubr.f32.gmra.mrb[0].mxu0 %v6439
        %v6534 = vpop.f32.mrb[0].mxu0
        %v6535 = vadd.f32 0.0, %v6534
        %v6536 = vpop.f32.mrb[0].mxu0
        %6537 = vmatprep.mubr.f32.mxu0 0.0
        %6538 = vmatmul.mubr.f32.gmra.mrb[0].mxu0 %v6442
        %v6539 = vpop.f32.mrb[0].mxu0
        %v6540 = vadd.f32 0.0, %v6539
        %v6541 = vpop.f32.mrb[0].mxu0
        %6542 = vmatprep.mubr.f32.mxu0 0.0
        %6543 = vmatmul.mubr.f32.gmra.mrb[0].mxu0 %v6445
        %v6544 = vpop.f32.mrb[0].mxu0
        %v6545 = vadd.f32 0.0, %v6544
        %v6546 = vpop.f32.mrb[0].mxu0
        %6547 = vmatprep.mubr.f32.mxu0 0.0
        %6548 = vmatmul.mubr.f32.gmra.mrb[0].mxu0 %v6448
        %v6549 = vpop.f32.mrb[0].mxu0
        %v6550 = vadd.f32 0.0, %v6549
        %v6551 = vpop.f32.mrb[0].mxu0
        %6552 = vmatprep.mubr.f32.mxu0 0.0
        %6553 = vmatmul.mubr.f32.gmra.mrb[0].mxu0 %v6451
        %v6554 = vpop.f32.mrb[0].mxu0
        %v6555 = vadd.f32 0.0, %v6554
        %v6556 = vpop.f32.mrb[0].mxu0
        %6557 = vdwg.mxu0
        %v6558 = vadd.f32 %v6409, %v6520
        %v6559 = vadd.f32 %v6410, %v6525
        %v6560 = vadd.f32 %v6411, %v6530
        %v6561 = vadd.f32 %v6412, %v6535
        %v6562 = vadd.f32 %v6413, %v6540
        %v6563 = vadd.f32 %v6414, %v6545
        %v6564 = vadd.f32 %v6415, %v6550
        %v6565 = vadd.f32 %v6416, %v6555
        %s6566 = scalar_lea.vmem [#allocation3], 32
        %v6567 = vld [vmem:[%s6566] sm:$0xff]
        %v6568 = vld [vmem:[%s6566 + $0x10] sm:$0xff]
        %v6569 = vld [vmem:[%s6566 + $0x20] sm:$0xff]
        %v6570 = vld [vmem:[%s6566 + $0x30] sm:$0xff]
        %v6571 = vld [vmem:[%s6566 + $0x40] sm:$0xff]
        %v6572 = vld [vmem:[%s6566 + $0x50] sm:$0xff]
        %v6573 = vld [vmem:[%s6566 + $0x60] sm:$0xff]
        %v6574 = vld [vmem:[%s6566 + $0x70] sm:$0xff]
        %s6575 = scalar_lea.vmem %s3, 144
        %v6576 = vld [vmem:[%s6575] sm:$0xff]
        %v6577 = vld [vmem:[%s6575 + $0x8] sm:$0xff]
        %v6578 = vld [vmem:[%s6575 + $0x10] sm:$0xff]
        %v6580 = vsel %vm379, %v6567, 0
        %v6583 = vsel %vm379, %v6568, 0
        %v6586 = vsel %vm379, %v6569, 0
        %v6589 = vsel %vm379, %v6570, 0
        %v6592 = vsel %vm379, %v6571, 0
        %v6595 = vsel %vm379, %v6572, 0
        %v6598 = vsel %vm379, %v6573, 0
        %v6601 = vsel %vm379, %v6574, 0
        %6603 = vmatprep.subr.mxu0 0.0
        %6604 = vmatpush1.msra.mxu0 %v6576
        %6605 = vmatprep.subr.mxu0 0.0
        %6606 = vmatpush1.msra.mxu0 %v6577
        %6607 = vmatprep.subr.mxu0 0.0
        %6608 = vmatpush1.msra.mxu0 %v6578
        %6609 = vmatprep.subr.mxu0 0.0
        %6610 = vmatpush1.msra.mxu0 0.0
        %6611 = vmatprep.subr.mxu0 0.0
        %6612 = vmatpush1.msra.mxu0 0.0
        %6613 = vmatprep.subr.mxu0 0.0
        %6614 = vmatpush1.msra.mxu0 0.0
        %6615 = vmatprep.subr.mxu0 0.0
        %6616 = vmatpush1.msra.mxu0 0.0
        %6617 = vmatprep.subr.mxu0 0.0
        %6618 = vmatpush1.msra.mxu0 0.0
        %6619 = vmatprep.subr.mxu0 0.0
        %6620 = vmatpush1.msra.mxu0 0.0
        %6621 = vmatprep.subr.mxu0 0.0
        %6622 = vmatpush1.msra.mxu0 0.0
        %6623 = vmatprep.subr.mxu0 0.0
        %6624 = vmatpush1.msra.mxu0 0.0
        %6625 = vmatprep.subr.mxu0 0.0
        %6626 = vmatpush1.msra.mxu0 0.0
        %6627 = vmatprep.subr.mxu0 0.0
        %6628 = vmatpush1.msra.mxu0 0.0
        %6629 = vmatprep.subr.mxu0 0.0
        %6630 = vmatpush1.msra.mxu0 0.0
        %6631 = vmatprep.subr.mxu0 0.0
        %6632 = vmatpush1.msra.mxu0 0.0
        %6633 = vmatprep.subr.mxu0 0.0
        %6634 = vmatpush1.msra.mxu0 0.0
        %6635 = vmatprep.subr.mxu0 0.0
        %6636 = vmatpush1.msra.mxu0 0.0
        %6637 = vmatprep.subr.mxu0 0.0
        %6638 = vmatpush1.msra.mxu0 0.0
        %6639 = vmatprep.subr.mxu0 0.0
        %6640 = vmatpush1.msra.mxu0 0.0
        %6641 = vmatprep.subr.mxu0 0.0
        %6642 = vmatpush1.msra.mxu0 0.0
        %6643 = vmatprep.subr.mxu0 0.0
        %6644 = vmatpush1.msra.mxu0 0.0
        %6645 = vmatprep.subr.mxu0 0.0
        %6646 = vmatpush1.msra.mxu0 0.0
        %6647 = vmatprep.subr.mxu0 0.0
        %6648 = vmatpush1.msra.mxu0 0.0
        %6649 = vmatprep.subr.mxu0 0.0
        %6650 = vmatpush1.msra.mxu0 0.0
        %6651 = vmatprep.subr.mxu0 0.0
        %6652 = vmatpush1.msra.mxu0 0.0
        %6653 = vmatprep.subr.mxu0 0.0
        %6654 = vmatpush1.msra.mxu0 0.0
        %6655 = vmatprep.subr.mxu0 0.0
        %6656 = vmatpush1.msra.mxu0 0.0
        %6657 = vmatprep.subr.mxu0 0.0
        %6658 = vmatpush1.msra.mxu0 0.0
        %6659 = vmatprep.subr.mxu0 0.0
        %6660 = vmatpush1.msra.mxu0 0.0
        %6661 = vmatprep.subr.mxu0 0.0
        %6662 = vmatpush1.msra.mxu0 0.0
        %6663 = vmatprep.subr.mxu0 0.0
        %6664 = vmatpush1.msra.mxu0 0.0
        %6665 = vmatprep.subr.mxu0 0.0
        %6666 = vmatpush1.msra.mxu0 0.0
        %6667 = vmatprep.mubr.f32.mxu0 0.0
        %6668 = vmatmul.mubr.f32.gmra.mrb[0].mxu0 %v6580
        %v6669 = vpop.f32.mrb[0].mxu0
        %v6670 = vadd.f32 0.0, %v6669
        %v6671 = vpop.f32.mrb[0].mxu0
        %6672 = vmatprep.mubr.f32.mxu0 0.0
        %6673 = vmatmul.mubr.f32.gmra.mrb[0].mxu0 %v6583
        %v6674 = vpop.f32.mrb[0].mxu0
        %v6675 = vadd.f32 0.0, %v6674
        %v6676 = vpop.f32.mrb[0].mxu0
        %6677 = vmatprep.mubr.f32.mxu0 0.0
        %6678 = vmatmul.mubr.f32.gmra.mrb[0].mxu0 %v6586
        %v6679 = vpop.f32.mrb[0].mxu0
        %v6680 = vadd.f32 0.0, %v6679
        %v6681 = vpop.f32.mrb[0].mxu0
        %6682 = vmatprep.mubr.f32.mxu0 0.0
        %6683 = vmatmul.mubr.f32.gmra.mrb[0].mxu0 %v6589
        %v6684 = vpop.f32.mrb[0].mxu0
        %v6685 = vadd.f32 0.0, %v6684
        %v6686 = vpop.f32.mrb[0].mxu0
        %6687 = vmatprep.mubr.f32.mxu0 0.0
        %6688 = vmatmul.mubr.f32.gmra.mrb[0].mxu0 %v6592
        %v6689 = vpop.f32.mrb[0].mxu0
        %v6690 = vadd.f32 0.0, %v6689
        %v6691 = vpop.f32.mrb[0].mxu0
        %6692 = vmatprep.mubr.f32.mxu0 0.0
        %6693 = vmatmul.mubr.f32.gmra.mrb[0].mxu0 %v6595
        %v6694 = vpop.f32.mrb[0].mxu0
        %v6695 = vadd.f32 0.0, %v6694
        %v6696 = vpop.f32.mrb[0].mxu0
        %6697 = vmatprep.mubr.f32.mxu0 0.0
        %6698 = vmatmul.mubr.f32.gmra.mrb[0].mxu0 %v6598
        %v6699 = vpop.f32.mrb[0].mxu0
        %v6700 = vadd.f32 0.0, %v6699
        %v6701 = vpop.f32.mrb[0].mxu0
        %6702 = vmatprep.mubr.f32.mxu0 0.0
        %6703 = vmatmul.mubr.f32.gmra.mrb[0].mxu0 %v6601
        %v6704 = vpop.f32.mrb[0].mxu0
        %v6705 = vadd.f32 0.0, %v6704
        %v6706 = vpop.f32.mrb[0].mxu0
        %6707 = vdwg.mxu0
        %v6708 = vadd.f32 %v6558, %v6670
        %v6709 = vadd.f32 %v6559, %v6675
        %v6710 = vadd.f32 %v6560, %v6680
        %v6711 = vadd.f32 %v6561, %v6685
        %v6712 = vadd.f32 %v6562, %v6690
        %v6713 = vadd.f32 %v6563, %v6695
        %v6714 = vadd.f32 %v6564, %v6700
        %v6715 = vadd.f32 %v6565, %v6705
        %v6716 = vld [vmem:[%s6566 + $0x1] sm:$0xff]
        %v6717 = vld [vmem:[%s6566 + $0x11] sm:$0xff]
        %v6718 = vld [vmem:[%s6566 + $0x21] sm:$0xff]
        %v6719 = vld [vmem:[%s6566 + $0x31] sm:$0xff]
        %v6720 = vld [vmem:[%s6566 + $0x41] sm:$0xff]
        %v6721 = vld [vmem:[%s6566 + $0x51] sm:$0xff]
        %v6722 = vld [vmem:[%s6566 + $0x61] sm:$0xff]
        %v6723 = vld [vmem:[%s6566 + $0x71] sm:$0xff]
        %s6724 = scalar_lea.vmem %s3, 168
        %v6725 = vld [vmem:[%s6724] sm:$0xff]
        %v6726 = vld [vmem:[%s6724 + $0x8] sm:$0xff]
        %v6727 = vld [vmem:[%s6724 + $0x10] sm:$0xff]
        %v6729 = vsel %vm379, %v6716, 0
        %v6732 = vsel %vm379, %v6717, 0
        %v6735 = vsel %vm379, %v6718, 0
        %v6738 = vsel %vm379, %v6719, 0
        %v6741 = vsel %vm379, %v6720, 0
        %v6744 = vsel %vm379, %v6721, 0
        %v6747 = vsel %vm379, %v6722, 0
        %v6750 = vsel %vm379, %v6723, 0
        %6752 = vmatprep.subr.mxu0 0.0
        %6753 = vmatpush1.msra.mxu0 %v6725
        %6754 = vmatprep.subr.mxu0 0.0
        %6755 = vmatpush1.msra.mxu0 %v6726
        %6756 = vmatprep.subr.mxu0 0.0
        %6757 = vmatpush1.msra.mxu0 %v6727
        %6758 = vmatprep.subr.mxu0 0.0
        %6759 = vmatpush1.msra.mxu0 0.0
        %6760 = vmatprep.subr.mxu0 0.0
        %6761 = vmatpush1.msra.mxu0 0.0
        %6762 = vmatprep.subr.mxu0 0.0
        %6763 = vmatpush1.msra.mxu0 0.0
        %6764 = vmatprep.subr.mxu0 0.0
        %6765 = vmatpush1.msra.mxu0 0.0
        %6766 = vmatprep.subr.mxu0 0.0
        %6767 = vmatpush1.msra.mxu0 0.0
        %6768 = vmatprep.subr.mxu0 0.0
        %6769 = vmatpush1.msra.mxu0 0.0
        %6770 = vmatprep.subr.mxu0 0.0
        %6771 = vmatpush1.msra.mxu0 0.0
        %6772 = vmatprep.subr.mxu0 0.0
        %6773 = vmatpush1.msra.mxu0 0.0
        %6774 = vmatprep.subr.mxu0 0.0
        %6775 = vmatpush1.msra.mxu0 0.0
        %6776 = vmatprep.subr.mxu0 0.0
        %6777 = vmatpush1.msra.mxu0 0.0
        %6778 = vmatprep.subr.mxu0 0.0
        %6779 = vmatpush1.msra.mxu0 0.0
        %6780 = vmatprep.subr.mxu0 0.0
        %6781 = vmatpush1.msra.mxu0 0.0
        %6782 = vmatprep.subr.mxu0 0.0
        %6783 = vmatpush1.msra.mxu0 0.0
        %6784 = vmatprep.subr.mxu0 0.0
        %6785 = vmatpush1.msra.mxu0 0.0
        %6786 = vmatprep.subr.mxu0 0.0
        %6787 = vmatpush1.msra.mxu0 0.0
        %6788 = vmatprep.subr.mxu0 0.0
        %6789 = vmatpush1.msra.mxu0 0.0
        %6790 = vmatprep.subr.mxu0 0.0
        %6791 = vmatpush1.msra.mxu0 0.0
        %6792 = vmatprep.subr.mxu0 0.0
        %6793 = vmatpush1.msra.mxu0 0.0
        %6794 = vmatprep.subr.mxu0 0.0
        %6795 = vmatpush1.msra.mxu0 0.0
        %6796 = vmatprep.subr.mxu0 0.0
        %6797 = vmatpush1.msra.mxu0 0.0
        %6798 = vmatprep.subr.mxu0 0.0
        %6799 = vmatpush1.msra.mxu0 0.0
        %6800 = vmatprep.subr.mxu0 0.0
        %6801 = vmatpush1.msra.mxu0 0.0
        %6802 = vmatprep.subr.mxu0 0.0
        %6803 = vmatpush1.msra.mxu0 0.0
        %6804 = vmatprep.subr.mxu0 0.0
        %6805 = vmatpush1.msra.mxu0 0.0
        %6806 = vmatprep.subr.mxu0 0.0
        %6807 = vmatpush1.msra.mxu0 0.0
        %6808 = vmatprep.subr.mxu0 0.0
        %6809 = vmatpush1.msra.mxu0 0.0
        %6810 = vmatprep.subr.mxu0 0.0
        %6811 = vmatpush1.msra.mxu0 0.0
        %6812 = vmatprep.subr.mxu0 0.0
        %6813 = vmatpush1.msra.mxu0 0.0
        %6814 = vmatprep.subr.mxu0 0.0
        %6815 = vmatpush1.msra.mxu0 0.0
        %6816 = vmatprep.mubr.f32.mxu0 0.0
        %6817 = vmatmul.mubr.f32.gmra.mrb[0].mxu0 %v6729
        %v6818 = vpop.f32.mrb[0].mxu0
        %v6819 = vadd.f32 0.0, %v6818
        %v6820 = vpop.f32.mrb[0].mxu0
        %6821 = vmatprep.mubr.f32.mxu0 0.0
        %6822 = vmatmul.mubr.f32.gmra.mrb[0].mxu0 %v6732
        %v6823 = vpop.f32.mrb[0].mxu0
        %v6824 = vadd.f32 0.0, %v6823
        %v6825 = vpop.f32.mrb[0].mxu0
        %6826 = vmatprep.mubr.f32.mxu0 0.0
        %6827 = vmatmul.mubr.f32.gmra.mrb[0].mxu0 %v6735
        %v6828 = vpop.f32.mrb[0].mxu0
        %v6829 = vadd.f32 0.0, %v6828
        %v6830 = vpop.f32.mrb[0].mxu0
        %6831 = vmatprep.mubr.f32.mxu0 0.0
        %6832 = vmatmul.mubr.f32.gmra.mrb[0].mxu0 %v6738
        %v6833 = vpop.f32.mrb[0].mxu0
        %v6834 = vadd.f32 0.0, %v6833
        %v6835 = vpop.f32.mrb[0].mxu0
        %6836 = vmatprep.mubr.f32.mxu0 0.0
        %6837 = vmatmul.mubr.f32.gmra.mrb[0].mxu0 %v6741
        %v6838 = vpop.f32.mrb[0].mxu0
        %v6839 = vadd.f32 0.0, %v6838
        %v6840 = vpop.f32.mrb[0].mxu0
        %6841 = vmatprep.mubr.f32.mxu0 0.0
        %6842 = vmatmul.mubr.f32.gmra.mrb[0].mxu0 %v6744
        %v6843 = vpop.f32.mrb[0].mxu0
        %v6844 = vadd.f32 0.0, %v6843
        %v6845 = vpop.f32.mrb[0].mxu0
        %6846 = vmatprep.mubr.f32.mxu0 0.0
        %6847 = vmatmul.mubr.f32.gmra.mrb[0].mxu0 %v6747
        %v6848 = vpop.f32.mrb[0].mxu0
        %v6849 = vadd.f32 0.0, %v6848
        %v6850 = vpop.f32.mrb[0].mxu0
        %6851 = vmatprep.mubr.f32.mxu0 0.0
        %6852 = vmatmul.mubr.f32.gmra.mrb[0].mxu0 %v6750
        %v6853 = vpop.f32.mrb[0].mxu0
        %v6854 = vadd.f32 0.0, %v6853
        %v6855 = vpop.f32.mrb[0].mxu0
        %6856 = vdwg.mxu0
        %v6857 = vadd.f32 %v6708, %v6819
        %v6858 = vadd.f32 %v6709, %v6824
        %v6859 = vadd.f32 %v6710, %v6829
        %v6860 = vadd.f32 %v6711, %v6834
        %v6861 = vadd.f32 %v6712, %v6839
        %v6862 = vadd.f32 %v6713, %v6844
        %v6863 = vadd.f32 %v6714, %v6849
        %v6864 = vadd.f32 %v6715, %v6854
        %v6865 = vld [vmem:[%s6566 + $0x2] sm:$0xff]
        %v6866 = vld [vmem:[%s6566 + $0x12] sm:$0xff]
        %v6867 = vld [vmem:[%s6566 + $0x22] sm:$0xff]
        %v6868 = vld [vmem:[%s6566 + $0x32] sm:$0xff]
        %v6869 = vld [vmem:[%s6566 + $0x42] sm:$0xff]
        %v6870 = vld [vmem:[%s6566 + $0x52] sm:$0xff]
        %v6871 = vld [vmem:[%s6566 + $0x62] sm:$0xff]
        %v6872 = vld [vmem:[%s6566 + $0x72] sm:$0xff]
        %s6873 = scalar_lea.vmem %s3, 192
        %v6874 = vld [vmem:[%s6873] sm:$0xff]
        %v6875 = vld [vmem:[%s6873 + $0x8] sm:$0xff]
        %v6876 = vld [vmem:[%s6873 + $0x10] sm:$0xff]
        %v6878 = vsel %vm379, %v6865, 0
        %v6881 = vsel %vm379, %v6866, 0
        %v6884 = vsel %vm379, %v6867, 0
        %v6887 = vsel %vm379, %v6868, 0
        %v6890 = vsel %vm379, %v6869, 0
        %v6893 = vsel %vm379, %v6870, 0
        %v6896 = vsel %vm379, %v6871, 0
        %v6899 = vsel %vm379, %v6872, 0
        %6901 = vmatprep.subr.mxu0 0.0
        %6902 = vmatpush1.msra.mxu0 %v6874
        %6903 = vmatprep.subr.mxu0 0.0
        %6904 = vmatpush1.msra.mxu0 %v6875
        %6905 = vmatprep.subr.mxu0 0.0
        %6906 = vmatpush1.msra.mxu0 %v6876
        %6907 = vmatprep.subr.mxu0 0.0
        %6908 = vmatpush1.msra.mxu0 0.0
        %6909 = vmatprep.subr.mxu0 0.0
        %6910 = vmatpush1.msra.mxu0 0.0
        %6911 = vmatprep.subr.mxu0 0.0
        %6912 = vmatpush1.msra.mxu0 0.0
        %6913 = vmatprep.subr.mxu0 0.0
        %6914 = vmatpush1.msra.mxu0 0.0
        %6915 = vmatprep.subr.mxu0 0.0
        %6916 = vmatpush1.msra.mxu0 0.0
        %6917 = vmatprep.subr.mxu0 0.0
        %6918 = vmatpush1.msra.mxu0 0.0
        %6919 = vmatprep.subr.mxu0 0.0
        %6920 = vmatpush1.msra.mxu0 0.0
        %6921 = vmatprep.subr.mxu0 0.0
        %6922 = vmatpush1.msra.mxu0 0.0
        %6923 = vmatprep.subr.mxu0 0.0
        %6924 = vmatpush1.msra.mxu0 0.0
        %6925 = vmatprep.subr.mxu0 0.0
        %6926 = vmatpush1.msra.mxu0 0.0
        %6927 = vmatprep.subr.mxu0 0.0
        %6928 = vmatpush1.msra.mxu0 0.0
        %6929 = vmatprep.subr.mxu0 0.0
        %6930 = vmatpush1.msra.mxu0 0.0
        %6931 = vmatprep.subr.mxu0 0.0
        %6932 = vmatpush1.msra.mxu0 0.0
        %6933 = vmatprep.subr.mxu0 0.0
        %6934 = vmatpush1.msra.mxu0 0.0
        %6935 = vmatprep.subr.mxu0 0.0
        %6936 = vmatpush1.msra.mxu0 0.0
        %6937 = vmatprep.subr.mxu0 0.0
        %6938 = vmatpush1.msra.mxu0 0.0
        %6939 = vmatprep.subr.mxu0 0.0
        %6940 = vmatpush1.msra.mxu0 0.0
        %6941 = vmatprep.subr.mxu0 0.0
        %6942 = vmatpush1.msra.mxu0 0.0
        %6943 = vmatprep.subr.mxu0 0.0
        %6944 = vmatpush1.msra.mxu0 0.0
        %6945 = vmatprep.subr.mxu0 0.0
        %6946 = vmatpush1.msra.mxu0 0.0
        %6947 = vmatprep.subr.mxu0 0.0
        %6948 = vmatpush1.msra.mxu0 0.0
        %6949 = vmatprep.subr.mxu0 0.0
        %6950 = vmatpush1.msra.mxu0 0.0
        %6951 = vmatprep.subr.mxu0 0.0
        %6952 = vmatpush1.msra.mxu0 0.0
        %6953 = vmatprep.subr.mxu0 0.0
        %6954 = vmatpush1.msra.mxu0 0.0
        %6955 = vmatprep.subr.mxu0 0.0
        %6956 = vmatpush1.msra.mxu0 0.0
        %6957 = vmatprep.subr.mxu0 0.0
        %6958 = vmatpush1.msra.mxu0 0.0
        %6959 = vmatprep.subr.mxu0 0.0
        %6960 = vmatpush1.msra.mxu0 0.0
        %6961 = vmatprep.subr.mxu0 0.0
        %6962 = vmatpush1.msra.mxu0 0.0
        %6963 = vmatprep.subr.mxu0 0.0
        %6964 = vmatpush1.msra.mxu0 0.0
        %6965 = vmatprep.mubr.f32.mxu0 0.0
        %6966 = vmatmul.mubr.f32.gmra.mrb[0].mxu0 %v6878
        %v6967 = vpop.f32.mrb[0].mxu0
        %v6968 = vadd.f32 0.0, %v6967
        %v6969 = vpop.f32.mrb[0].mxu0
        %6970 = vmatprep.mubr.f32.mxu0 0.0
        %6971 = vmatmul.mubr.f32.gmra.mrb[0].mxu0 %v6881
        %v6972 = vpop.f32.mrb[0].mxu0
        %v6973 = vadd.f32 0.0, %v6972
        %v6974 = vpop.f32.mrb[0].mxu0
        %6975 = vmatprep.mubr.f32.mxu0 0.0
        %6976 = vmatmul.mubr.f32.gmra.mrb[0].mxu0 %v6884
        %v6977 = vpop.f32.mrb[0].mxu0
        %v6978 = vadd.f32 0.0, %v6977
        %v6979 = vpop.f32.mrb[0].mxu0
        %6980 = vmatprep.mubr.f32.mxu0 0.0
        %6981 = vmatmul.mubr.f32.gmra.mrb[0].mxu0 %v6887
        %v6982 = vpop.f32.mrb[0].mxu0
        %v6983 = vadd.f32 0.0, %v6982
        %v6984 = vpop.f32.mrb[0].mxu0
        %6985 = vmatprep.mubr.f32.mxu0 0.0
        %6986 = vmatmul.mubr.f32.gmra.mrb[0].mxu0 %v6890
        %v6987 = vpop.f32.mrb[0].mxu0
        %v6988 = vadd.f32 0.0, %v6987
        %v6989 = vpop.f32.mrb[0].mxu0
        %6990 = vmatprep.mubr.f32.mxu0 0.0
        %6991 = vmatmul.mubr.f32.gmra.mrb[0].mxu0 %v6893
        %v6992 = vpop.f32.mrb[0].mxu0
        %v6993 = vadd.f32 0.0, %v6992
        %v6994 = vpop.f32.mrb[0].mxu0
        %6995 = vmatprep.mubr.f32.mxu0 0.0
        %6996 = vmatmul.mubr.f32.gmra.mrb[0].mxu0 %v6896
        %v6997 = vpop.f32.mrb[0].mxu0
        %v6998 = vadd.f32 0.0, %v6997
        %v6999 = vpop.f32.mrb[0].mxu0
        %7000 = vmatprep.mubr.f32.mxu0 0.0
        %7001 = vmatmul.mubr.f32.gmra.mrb[0].mxu0 %v6899
        %v7002 = vpop.f32.mrb[0].mxu0
        %v7003 = vadd.f32 0.0, %v7002
        %v7004 = vpop.f32.mrb[0].mxu0
        %7005 = vdwg.mxu0
        %v7006 = vadd.f32 %v6857, %v6968
        %v7007 = vadd.f32 %v6858, %v6973
        %v7008 = vadd.f32 %v6859, %v6978
        %v7009 = vadd.f32 %v6860, %v6983
        %v7010 = vadd.f32 %v6861, %v6988
        %v7011 = vadd.f32 %v6862, %v6993
        %v7012 = vadd.f32 %v6863, %v6998
        %v7013 = vadd.f32 %v6864, %v7003
        %v7015 = vlaneseq
        %v7016 = vshrl.u32 %v7015, 7
        %v7017 = vsub.s32 0, %v7016
        %v7018 = vrot.slane %v490, %v7017
        %v7020 = vadd.f32 %v7006, %v7018
        %v7021 = vadd.f32 %v7007, %v7018
        %v7022 = vadd.f32 %v7008, %v7018
        %v7023 = vadd.f32 %v7009, %v7018
        %v7024 = vadd.f32 %v7010, %v7018
        %v7025 = vadd.f32 %v7011, %v7018
        %v7026 = vadd.f32 %v7012, %v7018
        %v7027 = vadd.f32 %v7013, %v7018
        %v7028 = vmax.f32 %v7020, 0.0
        %v7029 = vmax.f32 %v7021, 0.0
        %v7030 = vmax.f32 %v7022, 0.0
        %v7031 = vmax.f32 %v7023, 0.0
        %v7032 = vmax.f32 %v7024, 0.0
        %v7033 = vmax.f32 %v7025, 0.0
        %v7034 = vmax.f32 %v7026, 0.0
        %v7035 = vmax.f32 %v7027, 0.0
        %v7044 = vcombine.high %v7028, %v7028
        %v7046 = vunpack.c.l.s4 1983009808
        %v7047 = vunpack.c.0.s8 %v7046
        %v7048 = vlaneseq
        %v7049 = vshrl.u32 %v7048, 7
        %v7050 = vsub.s32 %v7047, %v7049
        %v7051 = vrot.slane %v7028, %v7050
        %v7053 = vunpack.c.l.s4 1983009808
        %v7054 = vunpack.c.0.s8 %v7053
        %v7055 = vlaneseq
        %v7056 = vshrl.u32 %v7055, 7
        %v7057 = vsub.s32 %v7054, %v7056
        %v7058 = vrot.slane %v7044, %v7057
        %v7059 = vcombine.high %v7051, %v7051
        %v7060 = vcombine.high %v7058, %v7058
        %v7061 = vcombine.high %v7029, %v7029
        %v7063 = vunpack.c.l.s4 1983009808
        %v7064 = vunpack.c.0.s8 %v7063
        %v7065 = vlaneseq
        %v7066 = vshrl.u32 %v7065, 7
        %v7067 = vsub.s32 %v7064, %v7066
        %v7068 = vrot.slane %v7029, %v7067
        %v7070 = vunpack.c.l.s4 1983009808
        %v7071 = vunpack.c.0.s8 %v7070
        %v7072 = vlaneseq
        %v7073 = vshrl.u32 %v7072, 7
        %v7074 = vsub.s32 %v7071, %v7073
        %v7075 = vrot.slane %v7061, %v7074
        %v7076 = vcombine.high %v7068, %v7068
        %v7077 = vcombine.high %v7075, %v7075
        %v7078 = vcombine.high %v7030, %v7030
        %v7080 = vunpack.c.l.s4 1983009808
        %v7081 = vunpack.c.0.s8 %v7080
        %v7082 = vlaneseq
        %v7083 = vshrl.u32 %v7082, 7
        %v7084 = vsub.s32 %v7081, %v7083
        %v7085 = vrot.slane %v7030, %v7084
        %v7087 = vunpack.c.l.s4 1983009808
        %v7088 = vunpack.c.0.s8 %v7087
        %v7089 = vlaneseq
        %v7090 = vshrl.u32 %v7089, 7
        %v7091 = vsub.s32 %v7088, %v7090
        %v7092 = vrot.slane %v7078, %v7091
        %v7093 = vcombine.high %v7085, %v7085
        %v7094 = vcombine.high %v7092, %v7092
        %v7095 = vcombine.high %v7031, %v7031
        %v7097 = vunpack.c.l.s4 1983009808
        %v7098 = vunpack.c.0.s8 %v7097
        %v7099 = vlaneseq
        %v7100 = vshrl.u32 %v7099, 7
        %v7101 = vsub.s32 %v7098, %v7100
        %v7102 = vrot.slane %v7031, %v7101
        %v7104 = vunpack.c.l.s4 1983009808
        %v7105 = vunpack.c.0.s8 %v7104
        %v7106 = vlaneseq
        %v7107 = vshrl.u32 %v7106, 7
        %v7108 = vsub.s32 %v7105, %v7107
        %v7109 = vrot.slane %v7095, %v7108
        %v7110 = vcombine.high %v7102, %v7102
        %v7111 = vcombine.high %v7109, %v7109
        %v7112 = vcombine.high %v7032, %v7032
        %v7114 = vunpack.c.l.s4 1983009808
        %v7115 = vunpack.c.0.s8 %v7114
        %v7116 = vlaneseq
        %v7117 = vshrl.u32 %v7116, 7
        %v7118 = vsub.s32 %v7115, %v7117
        %v7119 = vrot.slane %v7032, %v7118
        %v7121 = vunpack.c.l.s4 1983009808
        %v7122 = vunpack.c.0.s8 %v7121
        %v7123 = vlaneseq
        %v7124 = vshrl.u32 %v7123, 7
        %v7125 = vsub.s32 %v7122, %v7124
        %v7126 = vrot.slane %v7112, %v7125
        %v7127 = vcombine.high %v7119, %v7119
        %v7128 = vcombine.high %v7126, %v7126
        %v7129 = vcombine.high %v7033, %v7033
        %v7131 = vunpack.c.l.s4 1983009808
        %v7132 = vunpack.c.0.s8 %v7131
        %v7133 = vlaneseq
        %v7134 = vshrl.u32 %v7133, 7
        %v7135 = vsub.s32 %v7132, %v7134
        %v7136 = vrot.slane %v7033, %v7135
        %v7138 = vunpack.c.l.s4 1983009808
        %v7139 = vunpack.c.0.s8 %v7138
        %v7140 = vlaneseq
        %v7141 = vshrl.u32 %v7140, 7
        %v7142 = vsub.s32 %v7139, %v7141
        %v7143 = vrot.slane %v7129, %v7142
        %v7144 = vcombine.high %v7136, %v7136
        %v7145 = vcombine.high %v7143, %v7143
        %v7146 = vcombine.high %v7034, %v7034
        %v7148 = vunpack.c.l.s4 1983009808
        %v7149 = vunpack.c.0.s8 %v7148
        %v7150 = vlaneseq
        %v7151 = vshrl.u32 %v7150, 7
        %v7152 = vsub.s32 %v7149, %v7151
        %v7153 = vrot.slane %v7034, %v7152
        %v7155 = vunpack.c.l.s4 1983009808
        %v7156 = vunpack.c.0.s8 %v7155
        %v7157 = vlaneseq
        %v7158 = vshrl.u32 %v7157, 7
        %v7159 = vsub.s32 %v7156, %v7158
        %v7160 = vrot.slane %v7146, %v7159
        %v7161 = vcombine.high %v7153, %v7153
        %v7162 = vcombine.high %v7160, %v7160
        %v7163 = vcombine.high %v7035, %v7035
        %v7165 = vunpack.c.l.s4 1983009808
        %v7166 = vunpack.c.0.s8 %v7165
        %v7167 = vlaneseq
        %v7168 = vshrl.u32 %v7167, 7
        %v7169 = vsub.s32 %v7166, %v7168
        %v7170 = vrot.slane %v7035, %v7169
        %v7172 = vunpack.c.l.s4 1983009808
        %v7173 = vunpack.c.0.s8 %v7172
        %v7174 = vlaneseq
        %v7175 = vshrl.u32 %v7174, 7
        %v7176 = vsub.s32 %v7173, %v7175
        %v7177 = vrot.slane %v7163, %v7176
        %v7178 = vcombine.high %v7170, %v7170
        %v7179 = vcombine.high %v7177, %v7177
        %v7212 = vrot.slane %v7051, 7
        %v7213 = vrot.slane %v7212, 2
        %v7214 = vrot.slane %v7059, 7
        %v7215 = vrot.slane %v7214, 2
        %v7216 = vrot.slane %v7058, 7
        %v7217 = vrot.slane %v7216, 2
        %v7218 = vrot.slane %v7060, 7
        %v7219 = vrot.slane %v7218, 2
        %v7220 = vrot.slane %v7068, 7
        %v7221 = vrot.slane %v7220, 2
        %v7222 = vrot.slane %v7076, 7
        %v7223 = vrot.slane %v7222, 2
        %v7224 = vrot.slane %v7075, 7
        %v7225 = vrot.slane %v7224, 2
        %v7226 = vrot.slane %v7077, 7
        %v7227 = vrot.slane %v7226, 2
        %v7228 = vrot.slane %v7085, 7
        %v7229 = vrot.slane %v7228, 2
        %v7230 = vrot.slane %v7093, 7
        %v7231 = vrot.slane %v7230, 2
        %v7232 = vrot.slane %v7092, 7
        %v7233 = vrot.slane %v7232, 2
        %v7234 = vrot.slane %v7094, 7
        %v7235 = vrot.slane %v7234, 2
        %v7236 = vrot.slane %v7102, 7
        %v7237 = vrot.slane %v7236, 2
        %v7238 = vrot.slane %v7110, 7
        %v7239 = vrot.slane %v7238, 2
        %v7240 = vrot.slane %v7109, 7
        %v7241 = vrot.slane %v7240, 2
        %v7242 = vrot.slane %v7111, 7
        %v7243 = vrot.slane %v7242, 2
        %v7244 = vrot.slane %v7119, 7
        %v7245 = vrot.slane %v7244, 2
        %v7246 = vrot.slane %v7127, 7
        %v7247 = vrot.slane %v7246, 2
        %v7248 = vrot.slane %v7126, 7
        %v7249 = vrot.slane %v7248, 2
        %v7250 = vrot.slane %v7128, 7
        %v7251 = vrot.slane %v7250, 2
        %v7252 = vrot.slane %v7136, 7
        %v7253 = vrot.slane %v7252, 2
        %v7254 = vrot.slane %v7144, 7
        %v7255 = vrot.slane %v7254, 2
        %v7256 = vrot.slane %v7143, 7
        %v7257 = vrot.slane %v7256, 2
        %v7258 = vrot.slane %v7145, 7
        %v7259 = vrot.slane %v7258, 2
        %v7260 = vrot.slane %v7153, 7
        %v7261 = vrot.slane %v7260, 2
        %v7262 = vrot.slane %v7161, 7
        %v7263 = vrot.slane %v7262, 2
        %v7264 = vrot.slane %v7160, 7
        %v7265 = vrot.slane %v7264, 2
        %v7266 = vrot.slane %v7162, 7
        %v7267 = vrot.slane %v7266, 2
        %v7268 = vrot.slane %v7170, 7
        %v7269 = vrot.slane %v7268, 2
        %v7270 = vrot.slane %v7178, 7
        %v7271 = vrot.slane %v7270, 2
        %v7272 = vrot.slane %v7177, 7
        %v7273 = vrot.slane %v7272, 2
        %v7274 = vrot.slane %v7179, 7
        %v7275 = vrot.slane %v7274, 2
        %v7308 = vmax.f32 %v7051, %v7213
        %v7309 = vmax.f32 %v7059, %v7215
        %v7310 = vmax.f32 %v7058, %v7217
        %v7311 = vmax.f32 %v7060, %v7219
        %v7312 = vmax.f32 %v7068, %v7221
        %v7313 = vmax.f32 %v7076, %v7223
        %v7314 = vmax.f32 %v7075, %v7225
        %v7315 = vmax.f32 %v7077, %v7227
        %v7316 = vmax.f32 %v7085, %v7229
        %v7317 = vmax.f32 %v7093, %v7231
        %v7318 = vmax.f32 %v7092, %v7233
        %v7319 = vmax.f32 %v7094, %v7235
        %v7320 = vmax.f32 %v7102, %v7237
        %v7321 = vmax.f32 %v7110, %v7239
        %v7322 = vmax.f32 %v7109, %v7241
        %v7323 = vmax.f32 %v7111, %v7243
        %v7324 = vmax.f32 %v7119, %v7245
        %v7325 = vmax.f32 %v7127, %v7247
        %v7326 = vmax.f32 %v7126, %v7249
        %v7327 = vmax.f32 %v7128, %v7251
        %v7328 = vmax.f32 %v7136, %v7253
        %v7329 = vmax.f32 %v7144, %v7255
        %v7330 = vmax.f32 %v7143, %v7257
        %v7331 = vmax.f32 %v7145, %v7259
        %v7332 = vmax.f32 %v7153, %v7261
        %v7333 = vmax.f32 %v7161, %v7263
        %v7334 = vmax.f32 %v7160, %v7265
        %v7335 = vmax.f32 %v7162, %v7267
        %v7336 = vmax.f32 %v7170, %v7269
        %v7337 = vmax.f32 %v7178, %v7271
        %v7338 = vmax.f32 %v7177, %v7273
        %v7339 = vmax.f32 %v7179, %v7275
        %v7340 = vmax.f32 %v7308, %v7312
        %v7341 = vmax.f32 %v7309, %v7313
        %v7342 = vmax.f32 %v7310, %v7314
        %v7343 = vmax.f32 %v7311, %v7315
        %v7344 = vmax.f32 %v7316, %v7320
        %v7345 = vmax.f32 %v7317, %v7321
        %v7346 = vmax.f32 %v7318, %v7322
        %v7347 = vmax.f32 %v7319, %v7323
        %v7348 = vmax.f32 %v7324, %v7328
        %v7349 = vmax.f32 %v7325, %v7329
        %v7350 = vmax.f32 %v7326, %v7330
        %v7351 = vmax.f32 %v7327, %v7331
        %v7352 = vmax.f32 %v7332, %v7336
        %v7353 = vmax.f32 %v7333, %v7337
        %v7354 = vmax.f32 %v7334, %v7338
        %v7355 = vmax.f32 %v7335, %v7339
        %v7372 = vlaneseq
        %v7373 = vshrl.u32 %v7372, 7
        %v7374 = vsub.s32 0, %v7373
        %v7375 = vrot.slane %v7340, %v7374
        %v7376 = vlaneseq
        %v7377 = vshrl.u32 %v7376, 7
        %v7378 = vsub.s32 0, %v7377
        %v7379 = vrot.slane %v7341, %v7378
        %v7380 = vlaneseq
        %v7381 = vshrl.u32 %v7380, 7
        %v7382 = vsub.s32 0, %v7381
        %v7383 = vrot.slane %v7342, %v7382
        %v7384 = vlaneseq
        %v7385 = vshrl.u32 %v7384, 7
        %v7386 = vsub.s32 0, %v7385
        %v7387 = vrot.slane %v7343, %v7386
        %v7388 = vlaneseq
        %v7389 = vshrl.u32 %v7388, 7
        %v7390 = vsub.s32 0, %v7389
        %v7391 = vrot.slane %v7344, %v7390
        %v7392 = vlaneseq
        %v7393 = vshrl.u32 %v7392, 7
        %v7394 = vsub.s32 0, %v7393
        %v7395 = vrot.slane %v7345, %v7394
        %v7396 = vlaneseq
        %v7397 = vshrl.u32 %v7396, 7
        %v7398 = vsub.s32 0, %v7397
        %v7399 = vrot.slane %v7346, %v7398
        %v7400 = vlaneseq
        %v7401 = vshrl.u32 %v7400, 7
        %v7402 = vsub.s32 0, %v7401
        %v7403 = vrot.slane %v7347, %v7402
        %v7404 = vlaneseq
        %v7405 = vshrl.u32 %v7404, 7
        %v7406 = vsub.s32 0, %v7405
        %v7407 = vrot.slane %v7348, %v7406
        %v7408 = vlaneseq
        %v7409 = vshrl.u32 %v7408, 7
        %v7410 = vsub.s32 0, %v7409
        %v7411 = vrot.slane %v7349, %v7410
        %v7412 = vlaneseq
        %v7413 = vshrl.u32 %v7412, 7
        %v7414 = vsub.s32 0, %v7413
        %v7415 = vrot.slane %v7350, %v7414
        %v7416 = vlaneseq
        %v7417 = vshrl.u32 %v7416, 7
        %v7418 = vsub.s32 0, %v7417
        %v7419 = vrot.slane %v7351, %v7418
        %v7420 = vlaneseq
        %v7421 = vshrl.u32 %v7420, 7
        %v7422 = vsub.s32 0, %v7421
        %v7423 = vrot.slane %v7352, %v7422
        %v7424 = vlaneseq
        %v7425 = vshrl.u32 %v7424, 7
        %v7426 = vsub.s32 0, %v7425
        %v7427 = vrot.slane %v7353, %v7426
        %v7428 = vlaneseq
        %v7429 = vshrl.u32 %v7428, 7
        %v7430 = vsub.s32 0, %v7429
        %v7431 = vrot.slane %v7354, %v7430
        %v7432 = vlaneseq
        %v7433 = vshrl.u32 %v7432, 7
        %v7434 = vsub.s32 0, %v7433
        %v7435 = vrot.slane %v7355, %v7434
        %v7436 = vsel %vm5609, %v7379, %v7375
        %v7437 = vsel %vm5611, %v7383, %v7436
        %v7438 = vsel %vm5613, %v7387, %v7437
        %v7439 = vsel %vm5609, %v7395, %v7391
        %v7440 = vsel %vm5611, %v7399, %v7439
        %v7441 = vsel %vm5613, %v7403, %v7440
        %v7442 = vsel %vm5609, %v7411, %v7407
        %v7443 = vsel %vm5611, %v7415, %v7442
        %v7444 = vsel %vm5613, %v7419, %v7443
        %v7445 = vsel %vm5609, %v7427, %v7423
        %v7446 = vsel %vm5611, %v7431, %v7445
        %v7447 = vsel %vm5613, %v7435, %v7446
        %s7452 = scalar_lea.vmem [#allocation4], 8
        %vm7453 = vcmask 388096
        %7454 = vst.msk [vmem:[%s7452 + $0x1] sm:$0xf] %vm7453, %v7438
        %7455 = vst.msk [vmem:[%s7452 + $0x9] sm:$0xf] %vm7453, %v7441
        %7456 = vst.msk [vmem:[%s7452 + $0x11] sm:$0xf] %vm7453, %v7444
        %7457 = vst.msk [vmem:[%s7452 + $0x19] sm:$0xf] %vm7453, %v7447
        %v7458 = vld [vmem:[#allocation4] sm:$0xf]
        %v7459 = vld [vmem:[#allocation4 + $0x8] sm:$0xf]
        %v7460 = vld [vmem:[#allocation4 + $0x10] sm:$0xf]
        %v7461 = vld [vmem:[#allocation4 + $0x18] sm:$0xf]
        %v7462 = vld [vmem:[%s5] sm:$0xff]
        %v7463 = vld [vmem:[%s5 + $0x8] sm:$0xff]
        %v7464 = vld [vmem:[%s5 + $0x10] sm:$0xff]
        %v7465 = vld [vmem:[%s5 + $0x18] sm:$0xff]
        %v7466 = vld [vmem:[%s5 + $0x20] sm:$0xff]
        %v7467 = vld [vmem:[%s5 + $0x28] sm:$0xff]
        %v7468 = vld [vmem:[#allocation4 + $0x1] sm:$0xf]
        %v7469 = vld [vmem:[#allocation4 + $0x9] sm:$0xf]
        %v7470 = vld [vmem:[#allocation4 + $0x11] sm:$0xf]
        %v7471 = vld [vmem:[#allocation4 + $0x19] sm:$0xf]
        %s7472 = scalar_lea.vmem %s5, 48
        %v7473 = vld [vmem:[%s7472] sm:$0xff]
        %v7474 = vld [vmem:[%s7472 + $0x8] sm:$0xff]
        %v7475 = vld [vmem:[%s7472 + $0x10] sm:$0xff]
        %v7476 = vld [vmem:[%s7472 + $0x18] sm:$0xff]
        %v7477 = vld [vmem:[%s7472 + $0x20] sm:$0xff]
        %v7478 = vld [vmem:[%s7472 + $0x28] sm:$0xff]
        %v7483 = vcombine.low %v7468, %v7469
        %v7484 = vcombine.low %v7470, %v7471
        %vm7485 = vcmask 392192
        %v7486 = vsel %vm7485, %v7483, 0
        %v7488 = vsel %vm7485, %v7484, 0
        %7490 = vmatprep.subr.mxu0 0.0
        %7491 = vmatpush1.msra.mxu0 %v7473
        %7492 = vmatprep.subr.mxu0 0.0
        %7493 = vmatpush1.msra.mxu0 %v7474
        %7494 = vmatprep.subr.mxu0 0.0
        %7495 = vmatpush1.msra.mxu0 %v7475
        %7496 = vmatprep.subr.mxu0 0.0
        %7497 = vmatpush1.msra.mxu0 %v7476
        %7498 = vmatprep.subr.mxu0 0.0
        %7499 = vmatpush1.msra.mxu0 %v7477
        %7500 = vmatprep.subr.mxu0 0.0
        %7501 = vmatpush1.msra.mxu0 %v7478
        %7502 = vmatprep.subr.mxu0 0.0
        %7503 = vmatpush1.msra.mxu0 0.0
        %7504 = vmatprep.subr.mxu0 0.0
        %7505 = vmatpush1.msra.mxu0 0.0
        %7506 = vmatprep.subr.mxu0 0.0
        %7507 = vmatpush1.msra.mxu0 0.0
        %7508 = vmatprep.subr.mxu0 0.0
        %7509 = vmatpush1.msra.mxu0 0.0
        %7510 = vmatprep.subr.mxu0 0.0
        %7511 = vmatpush1.msra.mxu0 0.0
        %7512 = vmatprep.subr.mxu0 0.0
        %7513 = vmatpush1.msra.mxu0 0.0
        %7514 = vmatprep.subr.mxu0 0.0
        %7515 = vmatpush1.msra.mxu0 0.0
        %7516 = vmatprep.subr.mxu0 0.0
        %7517 = vmatpush1.msra.mxu0 0.0
        %7518 = vmatprep.subr.mxu0 0.0
        %7519 = vmatpush1.msra.mxu0 0.0
        %7520 = vmatprep.subr.mxu0 0.0
        %7521 = vmatpush1.msra.mxu0 0.0
        %7522 = vmatprep.subr.mxu0 0.0
        %7523 = vmatpush1.msra.mxu0 0.0
        %7524 = vmatprep.subr.mxu0 0.0
        %7525 = vmatpush1.msra.mxu0 0.0
        %7526 = vmatprep.subr.mxu0 0.0
        %7527 = vmatpush1.msra.mxu0 0.0
        %7528 = vmatprep.subr.mxu0 0.0
        %7529 = vmatpush1.msra.mxu0 0.0
        %7530 = vmatprep.subr.mxu0 0.0
        %7531 = vmatpush1.msra.mxu0 0.0
        %7532 = vmatprep.subr.mxu0 0.0
        %7533 = vmatpush1.msra.mxu0 0.0
        %7534 = vmatprep.subr.mxu0 0.0
        %7535 = vmatpush1.msra.mxu0 0.0
        %7536 = vmatprep.subr.mxu0 0.0
        %7537 = vmatpush1.msra.mxu0 0.0
        %7538 = vmatprep.subr.mxu0 0.0
        %7539 = vmatpush1.msra.mxu0 0.0
        %7540 = vmatprep.subr.mxu0 0.0
        %7541 = vmatpush1.msra.mxu0 0.0
        %7542 = vmatprep.subr.mxu0 0.0
        %7543 = vmatpush1.msra.mxu0 0.0
        %7544 = vmatprep.subr.mxu0 0.0
        %7545 = vmatpush1.msra.mxu0 0.0
        %7546 = vmatprep.subr.mxu0 0.0
        %7547 = vmatpush1.msra.mxu0 0.0
        %7548 = vmatprep.subr.mxu0 0.0
        %7549 = vmatpush1.msra.mxu0 0.0
        %7550 = vmatprep.subr.mxu0 0.0
        %7551 = vmatpush1.msra.mxu0 0.0
        %7552 = vmatprep.subr.mxu0 0.0
        %7553 = vmatpush1.msra.mxu0 0.0
        %7554 = vmatprep.mubr.f32.mxu0 0.0
        %7555 = vmatmul.mubr.f32.gmra.mrb[0].mxu0 %v7486
        %v7556 = vpop.f32.mrb[0].mxu0
        %v7557 = vadd.f32 0.0, %v7556
        %v7558 = vpop.f32.mrb[0].mxu0
        %7559 = vmatprep.mubr.f32.mxu0 0.0
        %7560 = vmatmul.mubr.f32.gmra.mrb[0].mxu0 %v7488
        %v7561 = vpop.f32.mrb[0].mxu0
        %v7562 = vadd.f32 0.0, %v7561
        %v7563 = vpop.f32.mrb[0].mxu0
        %7564 = vdwg.mxu0
        %v7569 = vcombine.low %v7458, %v7459
        %v7570 = vcombine.low %v7460, %v7461
        %v7571 = vsel %vm7485, %v7569, 0
        %v7573 = vsel %vm7485, %v7570, 0
        %7575 = vmatprep.subr.mxu0 0.0
        %7576 = vmatpush1.msra.mxu0 %v7462
        %7577 = vmatprep.subr.mxu0 0.0
        %7578 = vmatpush1.msra.mxu0 %v7463
        %7579 = vmatprep.subr.mxu0 0.0
        %7580 = vmatpush1.msra.mxu0 %v7464
        %7581 = vmatprep.subr.mxu0 0.0
        %7582 = vmatpush1.msra.mxu0 %v7465
        %7583 = vmatprep.subr.mxu0 0.0
        %7584 = vmatpush1.msra.mxu0 %v7466
        %7585 = vmatprep.subr.mxu0 0.0
        %7586 = vmatpush1.msra.mxu0 %v7467
        %7587 = vmatprep.subr.mxu0 0.0
        %7588 = vmatpush1.msra.mxu0 0.0
        %7589 = vmatprep.subr.mxu0 0.0
        %7590 = vmatpush1.msra.mxu0 0.0
        %7591 = vmatprep.subr.mxu0 0.0
        %7592 = vmatpush1.msra.mxu0 0.0
        %7593 = vmatprep.subr.mxu0 0.0
        %7594 = vmatpush1.msra.mxu0 0.0
        %7595 = vmatprep.subr.mxu0 0.0
        %7596 = vmatpush1.msra.mxu0 0.0
        %7597 = vmatprep.subr.mxu0 0.0
        %7598 = vmatpush1.msra.mxu0 0.0
        %7599 = vmatprep.subr.mxu0 0.0
        %7600 = vmatpush1.msra.mxu0 0.0
        %7601 = vmatprep.subr.mxu0 0.0
        %7602 = vmatpush1.msra.mxu0 0.0
        %7603 = vmatprep.subr.mxu0 0.0
        %7604 = vmatpush1.msra.mxu0 0.0
        %7605 = vmatprep.subr.mxu0 0.0
        %7606 = vmatpush1.msra.mxu0 0.0
        %7607 = vmatprep.subr.mxu0 0.0
        %7608 = vmatpush1.msra.mxu0 0.0
        %7609 = vmatprep.subr.mxu0 0.0
        %7610 = vmatpush1.msra.mxu0 0.0
        %7611 = vmatprep.subr.mxu0 0.0
        %7612 = vmatpush1.msra.mxu0 0.0
        %7613 = vmatprep.subr.mxu0 0.0
        %7614 = vmatpush1.msra.mxu0 0.0
        %7615 = vmatprep.subr.mxu0 0.0
        %7616 = vmatpush1.msra.mxu0 0.0
        %7617 = vmatprep.subr.mxu0 0.0
        %7618 = vmatpush1.msra.mxu0 0.0
        %7619 = vmatprep.subr.mxu0 0.0
        %7620 = vmatpush1.msra.mxu0 0.0
        %7621 = vmatprep.subr.mxu0 0.0
        %7622 = vmatpush1.msra.mxu0 0.0
        %7623 = vmatprep.subr.mxu0 0.0
        %7624 = vmatpush1.msra.mxu0 0.0
        %7625 = vmatprep.subr.mxu0 0.0
        %7626 = vmatpush1.msra.mxu0 0.0
        %7627 = vmatprep.subr.mxu0 0.0
        %7628 = vmatpush1.msra.mxu0 0.0
        %7629 = vmatprep.subr.mxu0 0.0
        %7630 = vmatpush1.msra.mxu0 0.0
        %7631 = vmatprep.subr.mxu0 0.0
        %7632 = vmatpush1.msra.mxu0 0.0
        %7633 = vmatprep.subr.mxu0 0.0
        %7634 = vmatpush1.msra.mxu0 0.0
        %7635 = vmatprep.subr.mxu0 0.0
        %7636 = vmatpush1.msra.mxu0 0.0
        %7637 = vmatprep.subr.mxu0 0.0
        %7638 = vmatpush1.msra.mxu0 0.0
        %7639 = vmatprep.mubr.f32.mxu0 0.0
        %7640 = vmatmul.mubr.f32.gmra.mrb[0].mxu0 %v7571
        %v7641 = vpop.f32.mrb[0].mxu0
        %v7642 = vadd.f32 %v7557, %v7641
        %v7643 = vpop.f32.mrb[0].mxu0
        %7644 = vmatprep.mubr.f32.mxu0 0.0
        %7645 = vmatmul.mubr.f32.gmra.mrb[0].mxu0 %v7573
        %v7646 = vpop.f32.mrb[0].mxu0
        %v7647 = vadd.f32 %v7562, %v7646
        %v7648 = vpop.f32.mrb[0].mxu0
        %7649 = vdwg.mxu0
        %v7650 = vld [vmem:[#allocation4 + $0x2] sm:$0xf]
        %v7651 = vld [vmem:[#allocation4 + $0xa] sm:$0xf]
        %v7652 = vld [vmem:[#allocation4 + $0x12] sm:$0xf]
        %v7653 = vld [vmem:[#allocation4 + $0x1a] sm:$0xf]
        %s7654 = scalar_lea.vmem %s5, 96
        %v7655 = vld [vmem:[%s7654] sm:$0xff]
        %v7656 = vld [vmem:[%s7654 + $0x8] sm:$0xff]
        %v7657 = vld [vmem:[%s7654 + $0x10] sm:$0xff]
        %v7658 = vld [vmem:[%s7654 + $0x18] sm:$0xff]
        %v7659 = vld [vmem:[%s7654 + $0x20] sm:$0xff]
        %v7660 = vld [vmem:[%s7654 + $0x28] sm:$0xff]
        %v7665 = vcombine.low %v7650, %v7651
        %v7666 = vcombine.low %v7652, %v7653
        %v7667 = vsel %vm7485, %v7665, 0
        %v7669 = vsel %vm7485, %v7666, 0
        %7671 = vmatprep.subr.mxu0 0.0
        %7672 = vmatpush1.msra.mxu0 %v7655
        %7673 = vmatprep.subr.mxu0 0.0
        %7674 = vmatpush1.msra.mxu0 %v7656
        %7675 = vmatprep.subr.mxu0 0.0
        %7676 = vmatpush1.msra.mxu0 %v7657
        %7677 = vmatprep.subr.mxu0 0.0
        %7678 = vmatpush1.msra.mxu0 %v7658
        %7679 = vmatprep.subr.mxu0 0.0
        %7680 = vmatpush1.msra.mxu0 %v7659
        %7681 = vmatprep.subr.mxu0 0.0
        %7682 = vmatpush1.msra.mxu0 %v7660
        %7683 = vmatprep.subr.mxu0 0.0
        %7684 = vmatpush1.msra.mxu0 0.0
        %7685 = vmatprep.subr.mxu0 0.0
        %7686 = vmatpush1.msra.mxu0 0.0
        %7687 = vmatprep.subr.mxu0 0.0
        %7688 = vmatpush1.msra.mxu0 0.0
        %7689 = vmatprep.subr.mxu0 0.0
        %7690 = vmatpush1.msra.mxu0 0.0
        %7691 = vmatprep.subr.mxu0 0.0
        %7692 = vmatpush1.msra.mxu0 0.0
        %7693 = vmatprep.subr.mxu0 0.0
        %7694 = vmatpush1.msra.mxu0 0.0
        %7695 = vmatprep.subr.mxu0 0.0
        %7696 = vmatpush1.msra.mxu0 0.0
        %7697 = vmatprep.subr.mxu0 0.0
        %7698 = vmatpush1.msra.mxu0 0.0
        %7699 = vmatprep.subr.mxu0 0.0
        %7700 = vmatpush1.msra.mxu0 0.0
        %7701 = vmatprep.subr.mxu0 0.0
        %7702 = vmatpush1.msra.mxu0 0.0
        %7703 = vmatprep.subr.mxu0 0.0
        %7704 = vmatpush1.msra.mxu0 0.0
        %7705 = vmatprep.subr.mxu0 0.0
        %7706 = vmatpush1.msra.mxu0 0.0
        %7707 = vmatprep.subr.mxu0 0.0
        %7708 = vmatpush1.msra.mxu0 0.0
        %7709 = vmatprep.subr.mxu0 0.0
        %7710 = vmatpush1.msra.mxu0 0.0
        %7711 = vmatprep.subr.mxu0 0.0
        %7712 = vmatpush1.msra.mxu0 0.0
        %7713 = vmatprep.subr.mxu0 0.0
        %7714 = vmatpush1.msra.mxu0 0.0
        %7715 = vmatprep.subr.mxu0 0.0
        %7716 = vmatpush1.msra.mxu0 0.0
        %7717 = vmatprep.subr.mxu0 0.0
        %7718 = vmatpush1.msra.mxu0 0.0
        %7719 = vmatprep.subr.mxu0 0.0
        %7720 = vmatpush1.msra.mxu0 0.0
        %7721 = vmatprep.subr.mxu0 0.0
        %7722 = vmatpush1.msra.mxu0 0.0
        %7723 = vmatprep.subr.mxu0 0.0
        %7724 = vmatpush1.msra.mxu0 0.0
        %7725 = vmatprep.subr.mxu0 0.0
        %7726 = vmatpush1.msra.mxu0 0.0
        %7727 = vmatprep.subr.mxu0 0.0
        %7728 = vmatpush1.msra.mxu0 0.0
        %7729 = vmatprep.subr.mxu0 0.0
        %7730 = vmatpush1.msra.mxu0 0.0
        %7731 = vmatprep.subr.mxu0 0.0
        %7732 = vmatpush1.msra.mxu0 0.0
        %7733 = vmatprep.subr.mxu0 0.0
        %7734 = vmatpush1.msra.mxu0 0.0
        %7735 = vmatprep.mubr.f32.mxu0 0.0
        %7736 = vmatmul.mubr.f32.gmra.mrb[0].mxu0 %v7667
        %v7737 = vpop.f32.mrb[0].mxu0
        %v7738 = vadd.f32 0.0, %v7737
        %v7739 = vpop.f32.mrb[0].mxu0
        %7740 = vmatprep.mubr.f32.mxu0 0.0
        %7741 = vmatmul.mubr.f32.gmra.mrb[0].mxu0 %v7669
        %v7742 = vpop.f32.mrb[0].mxu0
        %v7743 = vadd.f32 0.0, %v7742
        %v7744 = vpop.f32.mrb[0].mxu0
        %7745 = vdwg.mxu0
        %v7746 = vadd.f32 %v7642, %v7738
        %v7747 = vadd.f32 %v7647, %v7743
        %v7748 = vld [vmem:[%s7452] sm:$0xf]
        %v7749 = vld [vmem:[%s7452 + $0x8] sm:$0xf]
        %v7750 = vld [vmem:[%s7452 + $0x10] sm:$0xf]
        %v7751 = vld [vmem:[%s7452 + $0x18] sm:$0xf]
        %s7752 = scalar_lea.vmem %s5, 144
        %v7753 = vld [vmem:[%s7752] sm:$0xff]
        %v7754 = vld [vmem:[%s7752 + $0x8] sm:$0xff]
        %v7755 = vld [vmem:[%s7752 + $0x10] sm:$0xff]
        %v7756 = vld [vmem:[%s7752 + $0x18] sm:$0xff]
        %v7757 = vld [vmem:[%s7752 + $0x20] sm:$0xff]
        %v7758 = vld [vmem:[%s7752 + $0x28] sm:$0xff]
        %v7763 = vcombine.low %v7748, %v7749
        %v7764 = vcombine.low %v7750, %v7751
        %v7765 = vsel %vm7485, %v7763, 0
        %v7767 = vsel %vm7485, %v7764, 0
        %7769 = vmatprep.subr.mxu0 0.0
        %7770 = vmatpush1.msra.mxu0 %v7753
        %7771 = vmatprep.subr.mxu0 0.0
        %7772 = vmatpush1.msra.mxu0 %v7754
        %7773 = vmatprep.subr.mxu0 0.0
        %7774 = vmatpush1.msra.mxu0 %v7755
        %7775 = vmatprep.subr.mxu0 0.0
        %7776 = vmatpush1.msra.mxu0 %v7756
        %7777 = vmatprep.subr.mxu0 0.0
        %7778 = vmatpush1.msra.mxu0 %v7757
        %7779 = vmatprep.subr.mxu0 0.0
        %7780 = vmatpush1.msra.mxu0 %v7758
        %7781 = vmatprep.subr.mxu0 0.0
        %7782 = vmatpush1.msra.mxu0 0.0
        %7783 = vmatprep.subr.mxu0 0.0
        %7784 = vmatpush1.msra.mxu0 0.0
        %7785 = vmatprep.subr.mxu0 0.0
        %7786 = vmatpush1.msra.mxu0 0.0
        %7787 = vmatprep.subr.mxu0 0.0
        %7788 = vmatpush1.msra.mxu0 0.0
        %7789 = vmatprep.subr.mxu0 0.0
        %7790 = vmatpush1.msra.mxu0 0.0
        %7791 = vmatprep.subr.mxu0 0.0
        %7792 = vmatpush1.msra.mxu0 0.0
        %7793 = vmatprep.subr.mxu0 0.0
        %7794 = vmatpush1.msra.mxu0 0.0
        %7795 = vmatprep.subr.mxu0 0.0
        %7796 = vmatpush1.msra.mxu0 0.0
        %7797 = vmatprep.subr.mxu0 0.0
        %7798 = vmatpush1.msra.mxu0 0.0
        %7799 = vmatprep.subr.mxu0 0.0
        %7800 = vmatpush1.msra.mxu0 0.0
        %7801 = vmatprep.subr.mxu0 0.0
        %7802 = vmatpush1.msra.mxu0 0.0
        %7803 = vmatprep.subr.mxu0 0.0
        %7804 = vmatpush1.msra.mxu0 0.0
        %7805 = vmatprep.subr.mxu0 0.0
        %7806 = vmatpush1.msra.mxu0 0.0
        %7807 = vmatprep.subr.mxu0 0.0
        %7808 = vmatpush1.msra.mxu0 0.0
        %7809 = vmatprep.subr.mxu0 0.0
        %7810 = vmatpush1.msra.mxu0 0.0
        %7811 = vmatprep.subr.mxu0 0.0
        %7812 = vmatpush1.msra.mxu0 0.0
        %7813 = vmatprep.subr.mxu0 0.0
        %7814 = vmatpush1.msra.mxu0 0.0
        %7815 = vmatprep.subr.mxu0 0.0
        %7816 = vmatpush1.msra.mxu0 0.0
        %7817 = vmatprep.subr.mxu0 0.0
        %7818 = vmatpush1.msra.mxu0 0.0
        %7819 = vmatprep.subr.mxu0 0.0
        %7820 = vmatpush1.msra.mxu0 0.0
        %7821 = vmatprep.subr.mxu0 0.0
        %7822 = vmatpush1.msra.mxu0 0.0
        %7823 = vmatprep.subr.mxu0 0.0
        %7824 = vmatpush1.msra.mxu0 0.0
        %7825 = vmatprep.subr.mxu0 0.0
        %7826 = vmatpush1.msra.mxu0 0.0
        %7827 = vmatprep.subr.mxu0 0.0
        %7828 = vmatpush1.msra.mxu0 0.0
        %7829 = vmatprep.subr.mxu0 0.0
        %7830 = vmatpush1.msra.mxu0 0.0
        %7831 = vmatprep.subr.mxu0 0.0
        %7832 = vmatpush1.msra.mxu0 0.0
        %7833 = vmatprep.mubr.f32.mxu0 0.0
        %7834 = vmatmul.mubr.f32.gmra.mrb[0].mxu0 %v7765
        %v7835 = vpop.f32.mrb[0].mxu0
        %v7836 = vadd.f32 0.0, %v7835
        %v7837 = vpop.f32.mrb[0].mxu0
        %7838 = vmatprep.mubr.f32.mxu0 0.0
        %7839 = vmatmul.mubr.f32.gmra.mrb[0].mxu0 %v7767
        %v7840 = vpop.f32.mrb[0].mxu0
        %v7841 = vadd.f32 0.0, %v7840
        %v7842 = vpop.f32.mrb[0].mxu0
        %7843 = vdwg.mxu0
        %v7844 = vadd.f32 %v7746, %v7836
        %v7845 = vadd.f32 %v7747, %v7841
        %v7846 = vld [vmem:[%s7452 + $0x1] sm:$0xf]
        %v7847 = vld [vmem:[%s7452 + $0x9] sm:$0xf]
        %v7848 = vld [vmem:[%s7452 + $0x11] sm:$0xf]
        %v7849 = vld [vmem:[%s7452 + $0x19] sm:$0xf]
        %s7850 = scalar_lea.vmem %s5, 192
        %v7851 = vld [vmem:[%s7850] sm:$0xff]
        %v7852 = vld [vmem:[%s7850 + $0x8] sm:$0xff]
        %v7853 = vld [vmem:[%s7850 + $0x10] sm:$0xff]
        %v7854 = vld [vmem:[%s7850 + $0x18] sm:$0xff]
        %v7855 = vld [vmem:[%s7850 + $0x20] sm:$0xff]
        %v7856 = vld [vmem:[%s7850 + $0x28] sm:$0xff]
        %v7861 = vcombine.low %v7846, %v7847
        %v7862 = vcombine.low %v7848, %v7849
        %v7863 = vsel %vm7485, %v7861, 0
        %v7865 = vsel %vm7485, %v7862, 0
        %7867 = vmatprep.subr.mxu0 0.0
        %7868 = vmatpush1.msra.mxu0 %v7851
        %7869 = vmatprep.subr.mxu0 0.0
        %7870 = vmatpush1.msra.mxu0 %v7852
        %7871 = vmatprep.subr.mxu0 0.0
        %7872 = vmatpush1.msra.mxu0 %v7853
        %7873 = vmatprep.subr.mxu0 0.0
        %7874 = vmatpush1.msra.mxu0 %v7854
        %7875 = vmatprep.subr.mxu0 0.0
        %7876 = vmatpush1.msra.mxu0 %v7855
        %7877 = vmatprep.subr.mxu0 0.0
        %7878 = vmatpush1.msra.mxu0 %v7856
        %7879 = vmatprep.subr.mxu0 0.0
        %7880 = vmatpush1.msra.mxu0 0.0
        %7881 = vmatprep.subr.mxu0 0.0
        %7882 = vmatpush1.msra.mxu0 0.0
        %7883 = vmatprep.subr.mxu0 0.0
        %7884 = vmatpush1.msra.mxu0 0.0
        %7885 = vmatprep.subr.mxu0 0.0
        %7886 = vmatpush1.msra.mxu0 0.0
        %7887 = vmatprep.subr.mxu0 0.0
        %7888 = vmatpush1.msra.mxu0 0.0
        %7889 = vmatprep.subr.mxu0 0.0
        %7890 = vmatpush1.msra.mxu0 0.0
        %7891 = vmatprep.subr.mxu0 0.0
        %7892 = vmatpush1.msra.mxu0 0.0
        %7893 = vmatprep.subr.mxu0 0.0
        %7894 = vmatpush1.msra.mxu0 0.0
        %7895 = vmatprep.subr.mxu0 0.0
        %7896 = vmatpush1.msra.mxu0 0.0
        %7897 = vmatprep.subr.mxu0 0.0
        %7898 = vmatpush1.msra.mxu0 0.0
        %7899 = vmatprep.subr.mxu0 0.0
        %7900 = vmatpush1.msra.mxu0 0.0
        %7901 = vmatprep.subr.mxu0 0.0
        %7902 = vmatpush1.msra.mxu0 0.0
        %7903 = vmatprep.subr.mxu0 0.0
        %7904 = vmatpush1.msra.mxu0 0.0
        %7905 = vmatprep.subr.mxu0 0.0
        %7906 = vmatpush1.msra.mxu0 0.0
        %7907 = vmatprep.subr.mxu0 0.0
        %7908 = vmatpush1.msra.mxu0 0.0
        %7909 = vmatprep.subr.mxu0 0.0
        %7910 = vmatpush1.msra.mxu0 0.0
        %7911 = vmatprep.subr.mxu0 0.0
        %7912 = vmatpush1.msra.mxu0 0.0
        %7913 = vmatprep.subr.mxu0 0.0
        %7914 = vmatpush1.msra.mxu0 0.0
        %7915 = vmatprep.subr.mxu0 0.0
        %7916 = vmatpush1.msra.mxu0 0.0
        %7917 = vmatprep.subr.mxu0 0.0
        %7918 = vmatpush1.msra.mxu0 0.0
        %7919 = vmatprep.subr.mxu0 0.0
        %7920 = vmatpush1.msra.mxu0 0.0
        %7921 = vmatprep.subr.mxu0 0.0
        %7922 = vmatpush1.msra.mxu0 0.0
        %7923 = vmatprep.subr.mxu0 0.0
        %7924 = vmatpush1.msra.mxu0 0.0
        %7925 = vmatprep.subr.mxu0 0.0
        %7926 = vmatpush1.msra.mxu0 0.0
        %7927 = vmatprep.subr.mxu0 0.0
        %7928 = vmatpush1.msra.mxu0 0.0
        %7929 = vmatprep.subr.mxu0 0.0
        %7930 = vmatpush1.msra.mxu0 0.0
        %7931 = vmatprep.mubr.f32.mxu0 0.0
        %7932 = vmatmul.mubr.f32.gmra.mrb[0].mxu0 %v7863
        %v7933 = vpop.f32.mrb[0].mxu0
        %v7934 = vadd.f32 0.0, %v7933
        %v7935 = vpop.f32.mrb[0].mxu0
        %7936 = vmatprep.mubr.f32.mxu0 0.0
        %7937 = vmatmul.mubr.f32.gmra.mrb[0].mxu0 %v7865
        %v7938 = vpop.f32.mrb[0].mxu0
        %v7939 = vadd.f32 0.0, %v7938
        %v7940 = vpop.f32.mrb[0].mxu0
        %7941 = vdwg.mxu0
        %v7942 = vadd.f32 %v7844, %v7934
        %v7943 = vadd.f32 %v7845, %v7939
        %v7944 = vld [vmem:[%s7452 + $0x2] sm:$0xf]
        %v7945 = vld [vmem:[%s7452 + $0xa] sm:$0xf]
        %v7946 = vld [vmem:[%s7452 + $0x12] sm:$0xf]
        %v7947 = vld [vmem:[%s7452 + $0x1a] sm:$0xf]
        %s7948 = scalar_lea.vmem %s5, 240
        %v7949 = vld [vmem:[%s7948] sm:$0xff]
        %v7950 = vld [vmem:[%s7948 + $0x8] sm:$0xff]
        %v7951 = vld [vmem:[%s7948 + $0x10] sm:$0xff]
        %v7952 = vld [vmem:[%s7948 + $0x18] sm:$0xff]
        %v7953 = vld [vmem:[%s7948 + $0x20] sm:$0xff]
        %v7954 = vld [vmem:[%s7948 + $0x28] sm:$0xff]
        %v7959 = vcombine.low %v7944, %v7945
        %v7960 = vcombine.low %v7946, %v7947
        %v7961 = vsel %vm7485, %v7959, 0
        %v7963 = vsel %vm7485, %v7960, 0
        %7965 = vmatprep.subr.mxu0 0.0
        %7966 = vmatpush1.msra.mxu0 %v7949
        %7967 = vmatprep.subr.mxu0 0.0
        %7968 = vmatpush1.msra.mxu0 %v7950
        %7969 = vmatprep.subr.mxu0 0.0
        %7970 = vmatpush1.msra.mxu0 %v7951
        %7971 = vmatprep.subr.mxu0 0.0
        %7972 = vmatpush1.msra.mxu0 %v7952
        %7973 = vmatprep.subr.mxu0 0.0
        %7974 = vmatpush1.msra.mxu0 %v7953
        %7975 = vmatprep.subr.mxu0 0.0
        %7976 = vmatpush1.msra.mxu0 %v7954
        %7977 = vmatprep.subr.mxu0 0.0
        %7978 = vmatpush1.msra.mxu0 0.0
        %7979 = vmatprep.subr.mxu0 0.0
        %7980 = vmatpush1.msra.mxu0 0.0
        %7981 = vmatprep.subr.mxu0 0.0
        %7982 = vmatpush1.msra.mxu0 0.0
        %7983 = vmatprep.subr.mxu0 0.0
        %7984 = vmatpush1.msra.mxu0 0.0
        %7985 = vmatprep.subr.mxu0 0.0
        %7986 = vmatpush1.msra.mxu0 0.0
        %7987 = vmatprep.subr.mxu0 0.0
        %7988 = vmatpush1.msra.mxu0 0.0
        %7989 = vmatprep.subr.mxu0 0.0
        %7990 = vmatpush1.msra.mxu0 0.0
        %7991 = vmatprep.subr.mxu0 0.0
        %7992 = vmatpush1.msra.mxu0 0.0
        %7993 = vmatprep.subr.mxu0 0.0
        %7994 = vmatpush1.msra.mxu0 0.0
        %7995 = vmatprep.subr.mxu0 0.0
        %7996 = vmatpush1.msra.mxu0 0.0
        %7997 = vmatprep.subr.mxu0 0.0
        %7998 = vmatpush1.msra.mxu0 0.0
        %7999 = vmatprep.subr.mxu0 0.0
        %8000 = vmatpush1.msra.mxu0 0.0
        %8001 = vmatprep.subr.mxu0 0.0
        %8002 = vmatpush1.msra.mxu0 0.0
        %8003 = vmatprep.subr.mxu0 0.0
        %8004 = vmatpush1.msra.mxu0 0.0
        %8005 = vmatprep.subr.mxu0 0.0
        %8006 = vmatpush1.msra.mxu0 0.0
        %8007 = vmatprep.subr.mxu0 0.0
        %8008 = vmatpush1.msra.mxu0 0.0
        %8009 = vmatprep.subr.mxu0 0.0
        %8010 = vmatpush1.msra.mxu0 0.0
        %8011 = vmatprep.subr.mxu0 0.0
        %8012 = vmatpush1.msra.mxu0 0.0
        %8013 = vmatprep.subr.mxu0 0.0
        %8014 = vmatpush1.msra.mxu0 0.0
        %8015 = vmatprep.subr.mxu0 0.0
        %8016 = vmatpush1.msra.mxu0 0.0
        %8017 = vmatprep.subr.mxu0 0.0
        %8018 = vmatpush1.msra.mxu0 0.0
        %8019 = vmatprep.subr.mxu0 0.0
        %8020 = vmatpush1.msra.mxu0 0.0
        %8021 = vmatprep.subr.mxu0 0.0
        %8022 = vmatpush1.msra.mxu0 0.0
        %8023 = vmatprep.subr.mxu0 0.0
        %8024 = vmatpush1.msra.mxu0 0.0
        %8025 = vmatprep.subr.mxu0 0.0
        %8026 = vmatpush1.msra.mxu0 0.0
        %8027 = vmatprep.subr.mxu0 0.0
        %8028 = vmatpush1.msra.mxu0 0.0
        %8029 = vmatprep.mubr.f32.mxu0 0.0
        %8030 = vmatmul.mubr.f32.gmra.mrb[0].mxu0 %v7961
        %v8031 = vpop.f32.mrb[0].mxu0
        %v8032 = vadd.f32 0.0, %v8031
        %v8033 = vpop.f32.mrb[0].mxu0
        %8034 = vmatprep.mubr.f32.mxu0 0.0
        %8035 = vmatmul.mubr.f32.gmra.mrb[0].mxu0 %v7963
        %v8036 = vpop.f32.mrb[0].mxu0
        %v8037 = vadd.f32 0.0, %v8036
        %v8038 = vpop.f32.mrb[0].mxu0
        %8039 = vdwg.mxu0
        %v8040 = vadd.f32 %v7942, %v8032
        %v8041 = vadd.f32 %v7943, %v8037
        %s8042 = scalar_lea.vmem [#allocation4], 16
        %v8043 = vld [vmem:[%s8042] sm:$0xf]
        %v8044 = vld [vmem:[%s8042 + $0x8] sm:$0xf]
        %v8045 = vld [vmem:[%s8042 + $0x10] sm:$0xf]
        %v8046 = vld [vmem:[%s8042 + $0x18] sm:$0xf]
        %s8047 = scalar_lea.vmem %s5, 288
        %v8048 = vld [vmem:[%s8047] sm:$0xff]
        %v8049 = vld [vmem:[%s8047 + $0x8] sm:$0xff]
        %v8050 = vld [vmem:[%s8047 + $0x10] sm:$0xff]
        %v8051 = vld [vmem:[%s8047 + $0x18] sm:$0xff]
        %v8052 = vld [vmem:[%s8047 + $0x20] sm:$0xff]
        %v8053 = vld [vmem:[%s8047 + $0x28] sm:$0xff]
        %v8058 = vcombine.low %v8043, %v8044
        %v8059 = vcombine.low %v8045, %v8046
        %v8060 = vsel %vm7485, %v8058, 0
        %v8062 = vsel %vm7485, %v8059, 0
        %8064 = vmatprep.subr.mxu0 0.0
        %8065 = vmatpush1.msra.mxu0 %v8048
        %8066 = vmatprep.subr.mxu0 0.0
        %8067 = vmatpush1.msra.mxu0 %v8049
        %8068 = vmatprep.subr.mxu0 0.0
        %8069 = vmatpush1.msra.mxu0 %v8050
        %8070 = vmatprep.subr.mxu0 0.0
        %8071 = vmatpush1.msra.mxu0 %v8051
        %8072 = vmatprep.subr.mxu0 0.0
        %8073 = vmatpush1.msra.mxu0 %v8052
        %8074 = vmatprep.subr.mxu0 0.0
        %8075 = vmatpush1.msra.mxu0 %v8053
        %8076 = vmatprep.subr.mxu0 0.0
        %8077 = vmatpush1.msra.mxu0 0.0
        %8078 = vmatprep.subr.mxu0 0.0
        %8079 = vmatpush1.msra.mxu0 0.0
        %8080 = vmatprep.subr.mxu0 0.0
        %8081 = vmatpush1.msra.mxu0 0.0
        %8082 = vmatprep.subr.mxu0 0.0
        %8083 = vmatpush1.msra.mxu0 0.0
        %8084 = vmatprep.subr.mxu0 0.0
        %8085 = vmatpush1.msra.mxu0 0.0
        %8086 = vmatprep.subr.mxu0 0.0
        %8087 = vmatpush1.msra.mxu0 0.0
        %8088 = vmatprep.subr.mxu0 0.0
        %8089 = vmatpush1.msra.mxu0 0.0
        %8090 = vmatprep.subr.mxu0 0.0
        %8091 = vmatpush1.msra.mxu0 0.0
        %8092 = vmatprep.subr.mxu0 0.0
        %8093 = vmatpush1.msra.mxu0 0.0
        %8094 = vmatprep.subr.mxu0 0.0
        %8095 = vmatpush1.msra.mxu0 0.0
        %8096 = vmatprep.subr.mxu0 0.0
        %8097 = vmatpush1.msra.mxu0 0.0
        %8098 = vmatprep.subr.mxu0 0.0
        %8099 = vmatpush1.msra.mxu0 0.0
        %8100 = vmatprep.subr.mxu0 0.0
        %8101 = vmatpush1.msra.mxu0 0.0
        %8102 = vmatprep.subr.mxu0 0.0
        %8103 = vmatpush1.msra.mxu0 0.0
        %8104 = vmatprep.subr.mxu0 0.0
        %8105 = vmatpush1.msra.mxu0 0.0
        %8106 = vmatprep.subr.mxu0 0.0
        %8107 = vmatpush1.msra.mxu0 0.0
        %8108 = vmatprep.subr.mxu0 0.0
        %8109 = vmatpush1.msra.mxu0 0.0
        %8110 = vmatprep.subr.mxu0 0.0
        %8111 = vmatpush1.msra.mxu0 0.0
        %8112 = vmatprep.subr.mxu0 0.0
        %8113 = vmatpush1.msra.mxu0 0.0
        %8114 = vmatprep.subr.mxu0 0.0
        %8115 = vmatpush1.msra.mxu0 0.0
        %8116 = vmatprep.subr.mxu0 0.0
        %8117 = vmatpush1.msra.mxu0 0.0
        %8118 = vmatprep.subr.mxu0 0.0
        %8119 = vmatpush1.msra.mxu0 0.0
        %8120 = vmatprep.subr.mxu0 0.0
        %8121 = vmatpush1.msra.mxu0 0.0
        %8122 = vmatprep.subr.mxu0 0.0
        %8123 = vmatpush1.msra.mxu0 0.0
        %8124 = vmatprep.subr.mxu0 0.0
        %8125 = vmatpush1.msra.mxu0 0.0
        %8126 = vmatprep.subr.mxu0 0.0
        %8127 = vmatpush1.msra.mxu0 0.0
        %8128 = vmatprep.mubr.f32.mxu0 0.0
        %8129 = vmatmul.mubr.f32.gmra.mrb[0].mxu0 %v8060
        %v8130 = vpop.f32.mrb[0].mxu0
        %v8131 = vadd.f32 0.0, %v8130
        %v8132 = vpop.f32.mrb[0].mxu0
        %8133 = vmatprep.mubr.f32.mxu0 0.0
        %8134 = vmatmul.mubr.f32.gmra.mrb[0].mxu0 %v8062
        %v8135 = vpop.f32.mrb[0].mxu0
        %v8136 = vadd.f32 0.0, %v8135
        %v8137 = vpop.f32.mrb[0].mxu0
        %8138 = vdwg.mxu0
        %v8139 = vadd.f32 %v8040, %v8131
        %v8140 = vadd.f32 %v8041, %v8136
        %v8141 = vld [vmem:[%s8042 + $0x1] sm:$0xf]
        %v8142 = vld [vmem:[%s8042 + $0x9] sm:$0xf]
        %v8143 = vld [vmem:[%s8042 + $0x11] sm:$0xf]
        %v8144 = vld [vmem:[%s8042 + $0x19] sm:$0xf]
        %s8145 = scalar_lea.vmem %s5, 336
        %v8146 = vld [vmem:[%s8145] sm:$0xff]
        %v8147 = vld [vmem:[%s8145 + $0x8] sm:$0xff]
        %v8148 = vld [vmem:[%s8145 + $0x10] sm:$0xff]
        %v8149 = vld [vmem:[%s8145 + $0x18] sm:$0xff]
        %v8150 = vld [vmem:[%s8145 + $0x20] sm:$0xff]
        %v8151 = vld [vmem:[%s8145 + $0x28] sm:$0xff]
        %v8156 = vcombine.low %v8141, %v8142
        %v8157 = vcombine.low %v8143, %v8144
        %v8158 = vsel %vm7485, %v8156, 0
        %v8160 = vsel %vm7485, %v8157, 0
        %8162 = vmatprep.subr.mxu0 0.0
        %8163 = vmatpush1.msra.mxu0 %v8146
        %8164 = vmatprep.subr.mxu0 0.0
        %8165 = vmatpush1.msra.mxu0 %v8147
        %8166 = vmatprep.subr.mxu0 0.0
        %8167 = vmatpush1.msra.mxu0 %v8148
        %8168 = vmatprep.subr.mxu0 0.0
        %8169 = vmatpush1.msra.mxu0 %v8149
        %8170 = vmatprep.subr.mxu0 0.0
        %8171 = vmatpush1.msra.mxu0 %v8150
        %8172 = vmatprep.subr.mxu0 0.0
        %8173 = vmatpush1.msra.mxu0 %v8151
        %8174 = vmatprep.subr.mxu0 0.0
        %8175 = vmatpush1.msra.mxu0 0.0
        %8176 = vmatprep.subr.mxu0 0.0
        %8177 = vmatpush1.msra.mxu0 0.0
        %8178 = vmatprep.subr.mxu0 0.0
        %8179 = vmatpush1.msra.mxu0 0.0
        %8180 = vmatprep.subr.mxu0 0.0
        %8181 = vmatpush1.msra.mxu0 0.0
        %8182 = vmatprep.subr.mxu0 0.0
        %8183 = vmatpush1.msra.mxu0 0.0
        %8184 = vmatprep.subr.mxu0 0.0
        %8185 = vmatpush1.msra.mxu0 0.0
        %8186 = vmatprep.subr.mxu0 0.0
        %8187 = vmatpush1.msra.mxu0 0.0
        %8188 = vmatprep.subr.mxu0 0.0
        %8189 = vmatpush1.msra.mxu0 0.0
        %8190 = vmatprep.subr.mxu0 0.0
        %8191 = vmatpush1.msra.mxu0 0.0
        %8192 = vmatprep.subr.mxu0 0.0
        %8193 = vmatpush1.msra.mxu0 0.0
        %8194 = vmatprep.subr.mxu0 0.0
        %8195 = vmatpush1.msra.mxu0 0.0
        %8196 = vmatprep.subr.mxu0 0.0
        %8197 = vmatpush1.msra.mxu0 0.0
        %8198 = vmatprep.subr.mxu0 0.0
        %8199 = vmatpush1.msra.mxu0 0.0
        %8200 = vmatprep.subr.mxu0 0.0
        %8201 = vmatpush1.msra.mxu0 0.0
        %8202 = vmatprep.subr.mxu0 0.0
        %8203 = vmatpush1.msra.mxu0 0.0
        %8204 = vmatprep.subr.mxu0 0.0
        %8205 = vmatpush1.msra.mxu0 0.0
        %8206 = vmatprep.subr.mxu0 0.0
        %8207 = vmatpush1.msra.mxu0 0.0
        %8208 = vmatprep.subr.mxu0 0.0
        %8209 = vmatpush1.msra.mxu0 0.0
        %8210 = vmatprep.subr.mxu0 0.0
        %8211 = vmatpush1.msra.mxu0 0.0
        %8212 = vmatprep.subr.mxu0 0.0
        %8213 = vmatpush1.msra.mxu0 0.0
        %8214 = vmatprep.subr.mxu0 0.0
        %8215 = vmatpush1.msra.mxu0 0.0
        %8216 = vmatprep.subr.mxu0 0.0
        %8217 = vmatpush1.msra.mxu0 0.0
        %8218 = vmatprep.subr.mxu0 0.0
        %8219 = vmatpush1.msra.mxu0 0.0
        %8220 = vmatprep.subr.mxu0 0.0
        %8221 = vmatpush1.msra.mxu0 0.0
        %8222 = vmatprep.subr.mxu0 0.0
        %8223 = vmatpush1.msra.mxu0 0.0
        %8224 = vmatprep.subr.mxu0 0.0
        %8225 = vmatpush1.msra.mxu0 0.0
        %8226 = vmatprep.mubr.f32.mxu0 0.0
        %8227 = vmatmul.mubr.f32.gmra.mrb[0].mxu0 %v8158
        %v8228 = vpop.f32.mrb[0].mxu0
        %v8229 = vadd.f32 0.0, %v8228
        %v8230 = vpop.f32.mrb[0].mxu0
        %8231 = vmatprep.mubr.f32.mxu0 0.0
        %8232 = vmatmul.mubr.f32.gmra.mrb[0].mxu0 %v8160
        %v8233 = vpop.f32.mrb[0].mxu0
        %v8234 = vadd.f32 0.0, %v8233
        %v8235 = vpop.f32.mrb[0].mxu0
        %8236 = vdwg.mxu0
        %v8237 = vadd.f32 %v8139, %v8229
        %v8238 = vadd.f32 %v8140, %v8234
        %v8239 = vld [vmem:[%s8042 + $0x2] sm:$0xf]
        %v8240 = vld [vmem:[%s8042 + $0xa] sm:$0xf]
        %v8241 = vld [vmem:[%s8042 + $0x12] sm:$0xf]
        %v8242 = vld [vmem:[%s8042 + $0x1a] sm:$0xf]
        %s8243 = scalar_lea.vmem %s5, 384
        %v8244 = vld [vmem:[%s8243] sm:$0xff]
        %v8245 = vld [vmem:[%s8243 + $0x8] sm:$0xff]
        %v8246 = vld [vmem:[%s8243 + $0x10] sm:$0xff]
        %v8247 = vld [vmem:[%s8243 + $0x18] sm:$0xff]
        %v8248 = vld [vmem:[%s8243 + $0x20] sm:$0xff]
        %v8249 = vld [vmem:[%s8243 + $0x28] sm:$0xff]
        %v8254 = vcombine.low %v8239, %v8240
        %v8255 = vcombine.low %v8241, %v8242
        %v8256 = vsel %vm7485, %v8254, 0
        %v8258 = vsel %vm7485, %v8255, 0
        %8260 = vmatprep.subr.mxu0 0.0
        %8261 = vmatpush1.msra.mxu0 %v8244
        %8262 = vmatprep.subr.mxu0 0.0
        %8263 = vmatpush1.msra.mxu0 %v8245
        %8264 = vmatprep.subr.mxu0 0.0
        %8265 = vmatpush1.msra.mxu0 %v8246
        %8266 = vmatprep.subr.mxu0 0.0
        %8267 = vmatpush1.msra.mxu0 %v8247
        %8268 = vmatprep.subr.mxu0 0.0
        %8269 = vmatpush1.msra.mxu0 %v8248
        %8270 = vmatprep.subr.mxu0 0.0
        %8271 = vmatpush1.msra.mxu0 %v8249
        %8272 = vmatprep.subr.mxu0 0.0
        %8273 = vmatpush1.msra.mxu0 0.0
        %8274 = vmatprep.subr.mxu0 0.0
        %8275 = vmatpush1.msra.mxu0 0.0
        %8276 = vmatprep.subr.mxu0 0.0
        %8277 = vmatpush1.msra.mxu0 0.0
        %8278 = vmatprep.subr.mxu0 0.0
        %8279 = vmatpush1.msra.mxu0 0.0
        %8280 = vmatprep.subr.mxu0 0.0
        %8281 = vmatpush1.msra.mxu0 0.0
        %8282 = vmatprep.subr.mxu0 0.0
        %8283 = vmatpush1.msra.mxu0 0.0
        %8284 = vmatprep.subr.mxu0 0.0
        %8285 = vmatpush1.msra.mxu0 0.0
        %8286 = vmatprep.subr.mxu0 0.0
        %8287 = vmatpush1.msra.mxu0 0.0
        %8288 = vmatprep.subr.mxu0 0.0
        %8289 = vmatpush1.msra.mxu0 0.0
        %8290 = vmatprep.subr.mxu0 0.0
        %8291 = vmatpush1.msra.mxu0 0.0
        %8292 = vmatprep.subr.mxu0 0.0
        %8293 = vmatpush1.msra.mxu0 0.0
        %8294 = vmatprep.subr.mxu0 0.0
        %8295 = vmatpush1.msra.mxu0 0.0
        %8296 = vmatprep.subr.mxu0 0.0
        %8297 = vmatpush1.msra.mxu0 0.0
        %8298 = vmatprep.subr.mxu0 0.0
        %8299 = vmatpush1.msra.mxu0 0.0
        %8300 = vmatprep.subr.mxu0 0.0
        %8301 = vmatpush1.msra.mxu0 0.0
        %8302 = vmatprep.subr.mxu0 0.0
        %8303 = vmatpush1.msra.mxu0 0.0
        %8304 = vmatprep.subr.mxu0 0.0
        %8305 = vmatpush1.msra.mxu0 0.0
        %8306 = vmatprep.subr.mxu0 0.0
        %8307 = vmatpush1.msra.mxu0 0.0
        %8308 = vmatprep.subr.mxu0 0.0
        %8309 = vmatpush1.msra.mxu0 0.0
        %8310 = vmatprep.subr.mxu0 0.0
        %8311 = vmatpush1.msra.mxu0 0.0
        %8312 = vmatprep.subr.mxu0 0.0
        %8313 = vmatpush1.msra.mxu0 0.0
        %8314 = vmatprep.subr.mxu0 0.0
        %8315 = vmatpush1.msra.mxu0 0.0
        %8316 = vmatprep.subr.mxu0 0.0
        %8317 = vmatpush1.msra.mxu0 0.0
        %8318 = vmatprep.subr.mxu0 0.0
        %8319 = vmatpush1.msra.mxu0 0.0
        %8320 = vmatprep.subr.mxu0 0.0
        %8321 = vmatpush1.msra.mxu0 0.0
        %8322 = vmatprep.subr.mxu0 0.0
        %8323 = vmatpush1.msra.mxu0 0.0
        %8324 = vmatprep.mubr.f32.mxu0 0.0
        %8325 = vmatmul.mubr.f32.gmra.mrb[0].mxu0 %v8256
        %v8326 = vpop.f32.mrb[0].mxu0
        %v8327 = vadd.f32 0.0, %v8326
        %v8328 = vpop.f32.mrb[0].mxu0
        %8329 = vmatprep.mubr.f32.mxu0 0.0
        %8330 = vmatmul.mubr.f32.gmra.mrb[0].mxu0 %v8258
        %v8331 = vpop.f32.mrb[0].mxu0
        %v8332 = vadd.f32 0.0, %v8331
        %v8333 = vpop.f32.mrb[0].mxu0
        %8334 = vdwg.mxu0
        %v8335 = vadd.f32 %v8237, %v8327
        %v8336 = vadd.f32 %v8238, %v8332
        %v8338 = vlaneseq
        %v8339 = vshrl.u32 %v8338, 7
        %v8340 = vsub.s32 0, %v8339
        %v8341 = vrot.slane %v491, %v8340
        %v8343 = vadd.f32 %v8335, %v8341
        %v8344 = vadd.f32 %v8336, %v8341
        %v8345 = vmax.f32 %v8343, 0.0
        %v8346 = vmax.f32 %v8344, 0.0
        %v8349 = vcombine.high %v8345, %v8345
        %v8350 = vcombine.high %v8346, %v8346
        %v8353 = vld [vmem:[%s7] sm:$0x1]
        %v8355 = vlaneseq
        %v8356 = vshrl.u32 %v8355, 7
        %v8357 = vsub.s32 0, %v8356
        %v8358 = vrot.slane %v8353, %v8357
        %v8360 = vmul.f32 %v8345, %v8358
        %v8361 = vmul.f32 %v8349, %v8358
        %v8362 = vmul.f32 %v8346, %v8358
        %v8363 = vmul.f32 %v8350, %v8358
        %vm8364 = vcmask 191488
        %v8365 = vsel %vm8364, %v8360, 0.0
        %8366 = vadd.xlane.f32.xlu0 %v8365
        %v8367 = vpop.xlane.xlu0 %8366
        %v8368 = vsel %vm8364, %v8361, 0.0
        %8369 = vadd.xlane.f32.xlu0 %v8368
        %v8370 = vpop.xlane.xlu0 %8369
        %v8371 = vsel %vm8364, %v8362, 0.0
        %8372 = vadd.xlane.f32.xlu0 %v8371
        %v8373 = vpop.xlane.xlu0 %8372
        %v8374 = vsel %vm8364, %v8363, 0.0
        %8375 = vadd.xlane.f32.xlu0 %v8374
        %v8376 = vpop.xlane.xlu0 %8375
        %v8377 = vld [vmem:[#allocation5] sm:$0x1]
        %v8379 = vlaneseq
        %v8380 = vshrl.u32 %v8379, 7
        %v8381 = vsub.s32 0, %v8380
        %v8382 = vrot.slane %v8377, %v8381
        %8383 = vset.pattern.permute.xlu0 0
        %8384 = vperm.xlu0 %8383, %v8382
        %v8385 = vpop.permute.xlu0 %8384
        %v8387 = vadd.f32 %v8367, %v8385
        %v8388 = vadd.f32 %v8370, %v8385
        %v8389 = vadd.f32 %v8373, %v8385
        %v8390 = vadd.f32 %v8376, %v8385
        %v8395 = vlaneseq
        %v8396 = vand.u32 %v8395, 127
        %v8397 = vlaneseq
        %v8398 = vshrl.u32 %v8397, 7
        %v8399 = vsub.s32 %v8396, %v8398
        %v8400 = vrot.slane %v8387, %v8399
        %v8401 = vlaneseq
        %v8402 = vshrl.u32 %v8401, 7
        %v8403 = vsub.s32 %v8396, %v8402
        %v8404 = vrot.slane %v8388, %v8403
        %v8405 = vlaneseq
        %v8406 = vshrl.u32 %v8405, 7
        %v8407 = vsub.s32 %v8396, %v8406
        %v8408 = vrot.slane %v8389, %v8407
        %v8409 = vlaneseq
        %v8410 = vshrl.u32 %v8409, 7
        %v8411 = vsub.s32 %v8396, %v8410
        %v8412 = vrot.slane %v8390, %v8411
        %v8413 = vsel %vm5609, %v8404, %v8400
        %v8414 = vsel %vm5611, %v8408, %v8413
        %v8415 = vsel %vm5613, %v8412, %v8414
        %vm8417 = vcmask 27648
        %8418 = vst.msk [vmem:[%s327] sm:$0xf] %vm8417, %v8415
        %s8419 = sand.u32 %s227, 1
        %s8420 = scalar_lea.sflag [#allocation7], %s8419
        %s8421 = sand.u32 %s227, 1
        %s8422 = smul.addr %s8421, 4
        %s8423 = scalar_lea.vmem [#allocation6], %s8422
        // Predicated region
        $region57: #{simple_cnn_forward.1} parent=55 // pred_check
          %p8424 = pneg %p237
        $region58: #{simple_cnn_forward.1} parent=55 // pred_check_branch
          %8426 = sbr.rel (%p8424) target = $region60
        $region59: #{simple_cnn_forward.1} parent=55 // pred_region
          %s8428 = ssub.s32 64, 64
          %8429 = vsyncadd %s8420, %s8428
          %s8430 = smul.addr %s25, 64
          %s8431 = scalar_lea.hbm %s9, %s8430
          %s8433 = sshll.u32 %s8423, 4
          %s8434 = int_to_ptr.vmem [resolvable:$true] %s8433
          %8436 = dma.vmem_to_hbm [thread:$0]  %s8434, 64, %s8431, %s8420
        $region60: #{simple_cnn_forward.1} parent=55 // pred_fallthru
          _
      $region56: #{simple_cnn_forward.1} parent=5 // pred_fallthru
        _
      %p8437 = scmp.le.s32.totalorder 2, %s20
      // Predicated region
      $region61: #{simple_cnn_forward.1} parent=5 // pred_check
        %p8438 = pneg %p8437
      $region62: #{simple_cnn_forward.1} parent=5 // pred_check_branch
        %8440 = sbr.rel (%p8438) target = $region64
      $region63: #{simple_cnn_forward.1} parent=5 // pred_region
        %s8441 = ssub.s32 %s20, 2
        // Predicated region
        $region65: #{simple_cnn_forward.1} parent=63 // pred_check
          %p8442 = pneg %p243
        $region66: #{simple_cnn_forward.1} parent=63 // pred_check_branch
          %8444 = sbr.rel (%p8442) target = $region68
        $region67: #{simple_cnn_forward.1} parent=63 // pred_region
          %s8445 = sand.u32 %s228, 1
          %s8446 = scalar_lea.sflag [#allocation7], %s8445
          %s8447 = sand.u32 %s228, 1
          %s8448 = smul.addr %s8447, 4
          %s8449 = scalar_lea.vmem [#allocation6], %s8448
          %8450 = dma.done %s8446, 64
        $region68: #{simple_cnn_forward.1} parent=63 // pred_fallthru
          _
      $region64: #{simple_cnn_forward.1} parent=5 // pred_fallthru
        _
    $region6: #{simple_cnn_forward.1} parent=1 // loop_footer
      %s24 = sadd.s32 1, %s20
    $region7: #{simple_cnn_forward.1} parent=1 // loop_footer_branch
      %19 = sbr.rel target = $region3
    $region8: #{simple_cnn_forward.1} parent=1 // loop_exit
      _
    %8451 = vsyncpa [#allocation7], 1
    %s8452 = scalar_lea.sflag [#allocation7], 1
    %8453 = vsyncpa %s8452, 1

</llo_original>
